<compile_context>
chip_gen: v7x
topology: tpu7x:2x2x1
jax: 0.10.0
libtpu: 0.0.40
codegen_flags: <defaults>
</compile_context>

<pallas_src>
import functools

import jax
import jax.numpy as jnp
from jax.experimental import pallas as pl
from jax.experimental.pallas import tpu as pltpu


# ----------------------------- configuration -------------------------------
class ModelConfig:
    PAD = 0
    vocab_size = 20
    max_seq_len = 32
    encoder_dim = 32
    decoder_dim = 32
    encoder_head = 2
    encoder_n_layer = 2
    decoder_n_layer = 2
    encoder_conv1d_filter_size = 64
    fft_conv1d_kernel = (9, 1)
    fft_conv1d_padding = (4, 0)
    dropout = 0.1  # identity here (eval semantics)


class MelConfig:
    num_mels = 24


model_config = ModelConfig()
mel_config = MelConfig()

PRED_HID = 16                                   # variance-predictor hidden
MEL_PAD = 4 * model_config.encoder_dim          # lane-dense output width (128)
PITCH_LANE = MEL_PAD - 3
ENERGY_LANE = MEL_PAD - 2
DUR_LANE = MEL_PAD - 1

assert MEL_PAD == 128
assert mel_config.num_mels <= PITCH_LANE
assert 3 * PRED_HID <= MEL_PAD


# --------------------------- shared forward math -----------------------------
# _forward_one is used both inside the Pallas kernel (on values loaded from
# VMEM refs) and by the pure-JAX reference, so both paths compute identical ops
# (only the softmax reciprocal is gated on `in_pallas`).
def _forward_one(act, w_attn, w_conv, sm, *, T_src, T_mel, D, H, d_k, K, pad,
                 dhid, n_enc, n_dec, in_pallas):
    """Forward for one batch element on packed slabs.

    act    : (T_src + T_mel + 4, 128) f32  activation / mask / cumsum slab
    w_attn : (L + 2, D, 4*D)        bf16  per-layer qkv_w|fc_w, mel_w, pw1
    w_conv : (L, K*D + dhid, dhid)  bf16  per-layer conv1 (tap-major) ; conv2
    sm     : (8*L + 10, 128)        f32   per-layer biases + LN, mel_b,
                                          predictor pw2 / pb1 / pb2
    """
    f32, bf = jnp.float32, jnp.bfloat16
    L = n_enc + n_dec
    R0 = T_src + T_mel
    eps = 1e-5

    # -------- unpack the activation slab (all static slices) --------
    x0 = act[0:T_src, 0:D]
    enc_npm = act[0:T_src, D:2 * D]              # pre-broadcast to D lanes
    dpos = act[T_src:R0, 0:D]
    dec_npm = act[T_src:R0, D:2 * D]
    enc_npm_row = act[R0:R0 + 1, 0:T_src]
    dec_npm_row = act[R0 + 1:R0 + 2, 0:T_mel]
    cum_row = act[R0 + 2:R0 + 3, 0:T_src]
    cume_row = act[R0 + 3:R0 + 4, 0:T_src]

    # Additive key-pad bias rows (0 for real keys, -1e9 for PAD keys).  -1e9
    # instead of -inf keeps any fully-padded query row NaN-free; padded query
    # rows are zeroed by the non-pad mask afterwards (matches PyTorch output).
    enc_bias = (enc_npm_row - 1.0) * 1e9
    dec_bias = (dec_npm_row - 1.0) * 1e9

    def recip(v):        # EUP reciprocal in the kernel, exact divide in ref
        return pl.reciprocal(v, approx=True) if in_pallas else 1.0 / v

    def shift_mats(T):
        # 0/1 tap-shift matrices S_k with S_k[t, s] = (s == t + k - pad); the
        # sequence-range check is implicit (s in [0, T)), so the conv never
        # leaks across sequence boundaries.  Built once per sequence length,
        # reused by every layer, applied on the (idle) MXU instead of building
        # an im2col with lane concatenations.
        r = jax.lax.broadcasted_iota(jnp.int32, (T, T), 0)
        c = jax.lax.broadcasted_iota(jnp.int32, (T, T), 1)
        return [(c == r + (k - pad)).astype(bf) for k in range(K)]

    S_enc = shift_mats(T_src)
    S_dec = shift_mats(T_mel)

    def fft_block(x, npm, bias, S, li):
        T = x.shape[0]
        qkv_w = w_attn[li, :, 0:3 * D]
        fc_w = w_attn[li, :, 3 * D:4 * D]
        c1_w = w_conv[li, 0:K * D, :]
        c2_w = w_conv[li, K * D:K * D + dhid, 0:D]
        r = 8 * li
        qkv_b = sm[r + 0:r + 1, 0:3 * D]
        fc_b = sm[r + 1:r + 2, 0:D]
        c1_b = sm[r + 2:r + 3, 0:dhid]
        c2_b = sm[r + 3:r + 4, 0:D]
        g1 = sm[r + 4:r + 5, 0:D]
        b1 = sm[r + 5:r + 6, 0:D]
        g2 = sm[r + 6:r + 7, 0:D]
        b2 = sm[r + 7:r + 8, 0:D]

        # LayerNorm 1
        mu = jnp.mean(x, axis=-1, keepdims=True)
        var = jnp.mean(jnp.square(x - mu), axis=-1, keepdims=True)
        xn = (x - mu) * jax.lax.rsqrt(var + eps) * g1 + b1

        # Multi-head self-attention (residual = normed input, as in PyTorch
        # MultiHeadAttention where residual = q).
        xn_bf = xn.astype(bf)
        qkv = jnp.dot(xn_bf, qkv_w, preferred_element_type=f32) + qkv_b
        qkv_bf = qkv.astype(bf)          # single cast; heads are bf16 slices
        HD = H * d_k
        inv_temp = 1.0 / (d_k ** 0.5)
        ctxs = []
        for h in range(H):
            qh = qkv_bf[:, h * d_k:(h + 1) * d_k]
            kh = qkv_bf[:, HD + h * d_k:HD + (h + 1) * d_k]
            vh = qkv_bf[:, 2 * HD + h * d_k:2 * HD + (h + 1) * d_k]
            # contract last dims of both operands -> no explicit .T relayout
            s = jax.lax.dot_general(qh, kh, (((1,), (1,)), ((), ())),
                                    preferred_element_type=f32)
            s = s * inv_temp + bias
            s = s - jnp.max(s, axis=-1, keepdims=True)
            p = jnp.exp(s)
            p = p * recip(jnp.sum(p, axis=-1, keepdims=True))
            ctxs.append(jnp.dot(p.astype(bf), vh, preferred_element_type=f32))
        ctx = jnp.concatenate(ctxs, axis=1)           # (T, H*d_k)
        mha = jnp.dot(ctx.astype(bf), fc_w,
                      preferred_element_type=f32) + fc_b + xn

        # LayerNorm 2 + non-pad mask
        mu2 = jnp.mean(mha, axis=-1, keepdims=True)
        var2 = jnp.mean(jnp.square(mha - mu2), axis=-1, keepdims=True)
        y = ((mha - mu2) * jax.lax.rsqrt(var2 + eps) * g2 + b2) * npm

        # Position-wise FFN: Conv1d(K, pad) via per-tap shift matmuls + ReLU +
        # Conv1d(1).  Zero-padded sequence ends come from the shift matrices.
        y_bf = y.astype(bf)
        h1 = jnp.zeros((T, dhid), f32) + c1_b
        for k in range(K):
            ys = jnp.dot(S[k], y_bf, preferred_element_type=f32)
            h1 = h1 + jnp.dot(ys.astype(bf), c1_w[k * D:(k + 1) * D, :],
                              preferred_element_type=f32)
        h1 = jnp.maximum(h1, 0.0)
        out = jnp.dot(h1.astype(bf), c2_w, preferred_element_type=f32) + c2_b
        return (out + y) * npm

    def predictor(z_bf, i, mask_col):
        base = 8 * L + 1 + 3 * i
        pw1 = w_attn[L + 1, :, i * PRED_HID:(i + 1) * PRED_HID]
        pw2 = sm[base:base + 1, 0:PRED_HID]
        pb1 = sm[base + 1:base + 2, 0:PRED_HID]
        pb2 = sm[base + 2:base + 3, 0:1]
        hidden = jnp.maximum(
            jnp.dot(z_bf, pw1, preferred_element_type=f32) + pb1, 0.0)
        return (jnp.sum(hidden * pw2, axis=-1, keepdims=True) + pb2) * mask_col

    # ----- Encoder -----
    x = x0
    for li in range(n_enc):
        x = fft_block(x, enc_npm, enc_bias, S_enc, li)

    # ----- Variance adapter -----
    # TODO(synk): VarianceAdapter source not provided; FastSpeech2-style
    # duration/pitch/energy predictors + target-duration length regulator;
    # pitch/energy embedding addition omitted.
    x_bf = x.astype(bf)
    dur = predictor(x_bf, 0, enc_npm[:, 0:1])                 # (T_src, 1)
    m = jax.lax.broadcasted_iota(jnp.int32, (T_mel, T_src), 0).astype(f32)
    G = jnp.logical_and(m >= cume_row, m < cum_row).astype(bf)
    expanded = jnp.dot(G, x_bf, preferred_element_type=f32)   # (T_mel, D)
    exp_bf = expanded.astype(bf)
    pitch = predictor(exp_bf, 1, dec_npm[:, 0:1])
    energy = predictor(exp_bf, 2, dec_npm[:, 0:1])

    # ----- Decoder -----
    out = expanded + dpos
    for li in range(n_dec):
        out = fft_block(out, dec_npm, dec_bias, S_dec, n_enc + li)

    # ----- mask_tensor + mel linear -----
    # mask_tensor's length mask equals dec_npm because mel_pos is 1..len with 0
    # padding, so the separate `keep` input was dropped (review note).
    out = out * dec_npm
    mel_w = w_attn[L]                       # (D, MEL_PAD), zero cols >= num_mels
    mel_b = sm[8 * L:8 * L + 1, 0:MEL_PAD]
    slab = jnp.dot(out.astype(bf), mel_w, preferred_element_type=f32) + mel_b

    # Pack duration / pitch / energy into spare lanes of the mel slab so the
    # kernel does one lane-dense store and one writeback DMA.
    if T_mel > T_src:
        dur_col = jnp.concatenate(
            [dur, jnp.zeros((T_mel - T_src, 1), f32)], axis=0)
    else:
        dur_col = dur[:T_mel]
    lane = jax.lax.broadcasted_iota(jnp.int32, (T_mel, MEL_PAD), 1)
    slab = (slab
            + jnp.where(lane == PITCH_LANE, pitch, 0.0)
            + jnp.where(lane == ENERGY_LANE, energy, 0.0)
            + jnp.where(lane == DUR_LANE, dur_col, 0.0))
    return slab


# ------------------------------ Pallas kernel --------------------------------
def _fastspeech_kernel(act_ref, w_attn_ref, w_conv_ref, w_small_ref, out_ref,
                       **dims):
    out_ref[0] = _forward_one(act_ref[0], w_attn_ref[...], w_conv_ref[...],
                              w_small_ref[...], in_pallas=True, **dims)


# ------------------------------- parameters ----------------------------------
def init_params(key):
    mc, melc = model_config, mel_config
    D = mc.encoder_dim
    L = mc.encoder_n_layer + mc.decoder_n_layer
    dhid = mc.encoder_conv1d_filter_size
    K = mc.fft_conv1d_kernel[0]
    bf = jnp.bfloat16
    keys = iter(jax.random.split(key, 64))

    def rnd(shape, scale=0.1):
        return jax.random.normal(next(keys), shape, jnp.float32) * scale

    def emb(n, d):
        e = rnd((n, d), 1.0)
        return e.at[mc.PAD].set(0.0)            # padding_idx row is zero

    ln_one = jnp.stack([jnp.ones((D,), jnp.float32),
                        jnp.zeros((D,), jnp.float32),
                        jnp.ones((D,), jnp.float32),
                        jnp.zeros((D,), jnp.float32)])

    return {
        "word_emb": emb(mc.vocab_size, D),
        "enc_pos_emb": emb(mc.max_seq_len + 1, D),
        "dec_pos_emb": emb(mc.max_seq_len + 1, D),
        # stacked FFT-layer weights: encoder layers first, then decoder layers
        "qkv_w": jnp.stack([rnd((D, 3 * D)) for _ in range(L)]).astype(bf),
        "qkv_b": jnp.zeros((L, 1, 3 * D), jnp.float32),
        "fc_w": jnp.stack([rnd((D, D)) for _ in range(L)]).astype(bf),
        "fc_b": jnp.zeros((L, 1, D), jnp.float32),
        "ln": jnp.stack([ln_one for _ in range(L)]),
        # conv1 weight packed tap-major as (K*D, d_hid); conv2 kernel size 1
        "c1_w": jnp.stack([rnd((K * D, dhid)) for _ in range(L)]).astype(bf),
        "c1_b": jnp.zeros((L, 1, dhid), jnp.float32),
        "c2_w": jnp.stack([rnd((dhid, D)) for _ in range(L)]).astype(bf),
        "c2_b": jnp.zeros((L, 1, D), jnp.float32),
        # variance predictors: 0=duration, 1=pitch, 2=energy
        "pw1": jnp.stack([rnd((D, PRED_HID)) for _ in range(3)]).astype(bf),
        "pb1": jnp.zeros((3, 1, PRED_HID), jnp.float32),
        "pw2": jnp.stack([rnd((1, PRED_HID)) for _ in range(3)]),
        "pb2": jnp.zeros((3, 1, 1), jnp.float32),
        # mel linear, channel-padded to MEL_PAD lanes (sliced outside)
        "mel_w": jnp.pad(rnd((D, melc.num_mels)),
                         ((0, 0), (0, MEL_PAD - melc.num_mels))).astype(bf),
        "mel_b": jnp.zeros((1, MEL_PAD), jnp.float32),
    }


def pack_params(params):
    """Pack per-layer weights into the few lane-dense slabs the kernel DMAs."""
    mc = model_config
    D = mc.encoder_dim
    L = mc.encoder_n_layer + mc.decoder_n_layer
    dhid = mc.encoder_conv1d_filter_size
    bf = jnp.bfloat16

    # bf16 slab 1: per layer qkv_w|fc_w (D, 4D); extra layers: mel_w, pw1.
    attn = jnp.concatenate([params["qkv_w"], params["fc_w"]], axis=2)
    mel_layer = params["mel_w"][None]                         # (1, D, 4D)
    pw1_flat = jnp.transpose(params["pw1"], (1, 0, 2)).reshape(D, 3 * PRED_HID)
    pred_layer = jnp.zeros((1, D, 4 * D), bf)
    pred_layer = pred_layer.at[0, :, :3 * PRED_HID].set(pw1_flat)
    w_attn = jnp.concatenate([attn, mel_layer, pred_layer], axis=0).astype(bf)

    # bf16 slab 2: conv1 (tap-major rows) stacked over conv2 (lanes padded).
    c2_pad = jnp.pad(params["c2_w"], ((0, 0), (0, 0), (0, dhid - D)))
    w_conv = jnp.concatenate([params["c1_w"], c2_pad], axis=1).astype(bf)

    # f32 slab: 8 rows per layer (qkv_b, fc_b, c1_b, c2_b, g1, b1, g2, b2),
    # then mel_b, then per predictor (pw2, pb1, pb2).
    def row(v):
        v = jnp.asarray(v, jnp.float32).reshape(-1)
        return jnp.pad(v, (0, 128 - v.shape[0]))[None, :]

    rows = []
    for li in range(L):
        rows += [row(params["qkv_b"][li]), row(params["fc_b"][li]),
                 row(params["c1_b"][li]), row(params["c2_b"][li]),
                 row(params["ln"][li, 0]), row(params["ln"][li, 1]),
                 row(params["ln"][li, 2]), row(params["ln"][li, 3])]
    rows.append(row(params["mel_b"]))
    for i in range(3):
        rows += [row(params["pw2"][i]), row(params["pb1"][i]),
                 row(params["pb2"][i])]
    w_small = jnp.concatenate(rows, axis=0)                   # (8L+10, 128)

    return {"word_emb": params["word_emb"],
            "enc_pos_emb": params["enc_pos_emb"],
            "dec_pos_emb": params["dec_pos_emb"],
            "w_attn": w_attn, "w_conv": w_conv, "w_small": w_small}


# ------------------------------ input packing --------------------------------
def _build_act_slab(packed, src_seq, src_pos, mel_pos, length_target, T_mel):
    """Host-side glue: embedding lookups + packed per-batch activation slab."""
    mc = model_config
    f32 = jnp.float32
    B, T_src = src_seq.shape
    D = mc.encoder_dim
    R_in = T_src + T_mel + 4

    x0 = (packed["word_emb"][src_seq]
          + packed["enc_pos_emb"][src_pos]).astype(f32)       # (B, T_src, D)
    dpos = packed["dec_pos_emb"][mel_pos].astype(f32)         # (B, T_mel, D)
    enc_npm = (src_seq != mc.PAD).astype(f32)                 # (B, T_src)
    dec_npm = (mel_pos != mc.PAD).astype(f32)                 # (B, T_mel)
    lt = length_target.astype(f32)
    cum = jnp.cumsum(lt, axis=1)
    cume = cum - lt

    acts = jnp.zeros((B, R_in, 128), f32)
    acts = acts.at[:, :T_src, :D].set(x0)
    acts = acts.at[:, :T_src, D:2 * D].set(
        jnp.broadcast_to(enc_npm[:, :, None], (B, T_src, D)))
    acts = acts.at[:, T_src:T_src + T_mel, :D].set(dpos)
    acts = acts.at[:, T_src:T_src + T_mel, D:2 * D].set(
        jnp.broadcast_to(dec_npm[:, :, None], (B, T_mel, D)))
    R0 = T_src + T_mel
    acts = acts.at[:, R0, :T_src].set(enc_npm)                # row forms
    acts = acts.at[:, R0 + 1, :T_mel].set(dec_npm)
    acts = acts.at[:, R0 + 2, :T_src].set(cum)
    acts = acts.at[:, R0 + 3, :T_src].set(cume)
    return acts


# ------------------------------ full forward ---------------------------------
def fastspeech_forward(packed, src_seq, src_pos, mel_pos, mel_max_length,
                       length_target, use_pallas=True):
    mc, melc = model_config, mel_config
    B, T_src = src_seq.shape
    T_mel = int(mel_max_length)
    assert T_src <= T_mel, "duration-lane packing assumes T_src <= T_mel"
    D = mc.encoder_dim
    dims = dict(T_src=T_src, T_mel=T_mel, D=D, H=mc.encoder_head,
                d_k=D // mc.encoder_head, K=mc.fft_conv1d_kernel[0],
                pad=mc.fft_conv1d_padding[0],
                dhid=mc.encoder_conv1d_filter_size,
                n_enc=mc.encoder_n_layer, n_dec=mc.decoder_n_layer)

    acts = _build_act_slab(packed, src_seq, src_pos, mel_pos, length_target,
                           T_mel)
    w_attn, w_conv, w_small = (packed["w_attn"], packed["w_conv"],
                               packed["w_small"])

    if use_pallas:
        kernel = functools.partial(_fastspeech_kernel, **dims)
        slab = pl.pallas_call(
            kernel,
            out_shape=jax.ShapeDtypeStruct((B, T_mel, MEL_PAD), jnp.float32),
            grid=(B,),
            in_specs=[
                # per-batch activation slab
                pl.BlockSpec((1,) + acts.shape[1:], lambda b: (b, 0, 0)),
                # weight slabs: constant block index -> fetched once
                pl.BlockSpec(w_attn.shape, lambda b: (0, 0, 0)),
                pl.BlockSpec(w_conv.shape, lambda b: (0, 0, 0)),
                pl.BlockSpec(w_small.shape, lambda b: (0, 0)),
            ],
            out_specs=pl.BlockSpec((1, T_mel, MEL_PAD), lambda b: (b, 0, 0)),
            compiler_params=pltpu.CompilerParams(
                dimension_semantics=("parallel",)),
        )(acts, w_attn, w_conv, w_small)
    else:
        slab = jnp.stack([
            _forward_one(acts[b], w_attn, w_conv, w_small, in_pallas=False,
                         **dims) for b in range(B)])

    mel = slab[:, :, :melc.num_mels]
    dur = slab[:, :T_src, DUR_LANE]
    pitch = slab[:, :, PITCH_LANE]
    energy = slab[:, :, ENERGY_LANE]
    return mel, dur, pitch, energy


# ---------------------------------- main --------------------------------------
if __name__ == "__main__":
    params = init_params(jax.random.PRNGKey(0))
    packed = pack_params(params)

    B, T_src, mel_max = 2, 8, 16
    src_seq = jnp.array([[3, 5, 7, 2, 9, 4, 6, 8],
                         [11, 2, 13, 4, 15, 6, 0, 0]], dtype=jnp.int32)
    src_pos = jnp.array([[1, 2, 3, 4, 5, 6, 7, 8],
                         [1, 2, 3, 4, 5, 6, 0, 0]], dtype=jnp.int32)
    length_target = jnp.array([[2, 2, 2, 2, 2, 2, 2, 2],
                               [2, 2, 2, 2, 2, 2, 0, 0]], dtype=jnp.int32)
    mel_pos = jnp.array([[i + 1 for i in range(mel_max)],
                         [i + 1 if i < 12 else 0 for i in range(mel_max)]],
                        dtype=jnp.int32)

    fwd_pallas = jax.jit(functools.partial(fastspeech_forward, use_pallas=True),
                         static_argnums=(4,))

    mel_p, dur_p, pit_p, ene_p = fwd_pallas(packed, src_seq, src_pos, mel_pos,
                                            mel_max, length_target)
    jax.block_until_ready(mel_p)

    mel_r, dur_r, pit_r, ene_r = fastspeech_forward(
        packed, src_seq, src_pos, mel_pos, mel_max, length_target,
        use_pallas=False)
    jax.block_until_ready(mel_r)

    assert mel_p.shape == (B, mel_max, mel_config.num_mels)
    max_diff = max(float(jnp.max(jnp.abs(a - b)))
                   for a, b in ((mel_p, mel_r), (dur_p, dur_r),
                                (pit_p, pit_r), (ene_p, ene_r)))
    # Kernel and reference share all math except the softmax reciprocal
    # (pl.reciprocal(approx=True) on the EUP in the Pallas path only).
    assert max_diff < 2e-2, f"mismatch vs reference: {max_diff}"
    print("KERNEL_OK")
</pallas_src>

<mosaic_0001>
module attributes {stable_mosaic.version = 11 : i64} {
  func.func @_fastspeech_kernel(%arg0: i32, %arg1: memref<1x28x128xf32, #tpu.memory_space<vmem>>, %arg2: memref<6x32x128xbf16, #tpu.memory_space<vmem>>, %arg3: memref<4x352x64xbf16, #tpu.memory_space<vmem>>, %arg4: memref<42x128xf32, #tpu.memory_space<vmem>>, %arg5: memref<1x16x128xf32, #tpu.memory_space<vmem>>) attributes {dimension_semantics = [#tpu.dimension_semantics<parallel>], iteration_bounds = array<i64: 2>, scalar_prefetch = 0 : i64, scratch_operands = 0 : i64, tpu.core_type = #tpu.core_type<tc>, window_params = [{transform_indices = @transform_0, window_bounds = array<i64: 1, 28, 128>}, {pipeline_mode = #tpu.pipeline_mode<synchronous>, transform_indices = @transform_1, window_bounds = array<i64: 6, 32, 128>}, {pipeline_mode = #tpu.pipeline_mode<synchronous>, transform_indices = @transform_2, window_bounds = array<i64: 4, 352, 64>}, {pipeline_mode = #tpu.pipeline_mode<synchronous>, transform_indices = @transform_3, window_bounds = array<i64: 42, 128>}, {transform_indices = @transform_4, window_bounds = array<i64: 1, 16, 128>}]} {
    %c0 = arith.constant 0 : index
    %c0_0 = arith.constant 0 : index
    %c0_1 = arith.constant 0 : index
    %0 = vector.load %arg1[%c0, %c0_0, %c0_1] : memref<1x28x128xf32, #tpu.memory_space<vmem>>, vector<1x28x128xf32>
    %1 = vector.shape_cast %0 : vector<1x28x128xf32> to vector<28x128xf32>
    %c0_2 = arith.constant 0 : index
    %c0_3 = arith.constant 0 : index
    %c0_4 = arith.constant 0 : index
    %2 = vector.load %arg2[%c0_2, %c0_3, %c0_4] : memref<6x32x128xbf16, #tpu.memory_space<vmem>>, vector<6x32x128xbf16>
    %c0_5 = arith.constant 0 : index
    %c0_6 = arith.constant 0 : index
    %c0_7 = arith.constant 0 : index
    %3 = vector.load %arg3[%c0_5, %c0_6, %c0_7] : memref<4x352x64xbf16, #tpu.memory_space<vmem>>, vector<4x352x64xbf16>
    %c0_8 = arith.constant 0 : index
    %c0_9 = arith.constant 0 : index
    %4 = vector.load %arg4[%c0_8, %c0_9] : memref<42x128xf32, #tpu.memory_space<vmem>>, vector<42x128xf32>
    %5 = vector.extract_strided_slice %1 {offsets = [0, 0], sizes = [8, 32], strides = [1, 1]} : vector<28x128xf32> to vector<8x32xf32>
    %6 = vector.extract_strided_slice %1 {offsets = [0, 32], sizes = [8, 32], strides = [1, 1]} : vector<28x128xf32> to vector<8x32xf32>
    %7 = vector.extract_strided_slice %1 {offsets = [8, 0], sizes = [16, 32], strides = [1, 1]} : vector<28x128xf32> to vector<16x32xf32>
    %8 = vector.extract_strided_slice %1 {offsets = [8, 32], sizes = [16, 32], strides = [1, 1]} : vector<28x128xf32> to vector<16x32xf32>
    %9 = vector.extract_strided_slice %1 {offsets = [24, 0], sizes = [1, 8], strides = [1, 1]} : vector<28x128xf32> to vector<1x8xf32>
    %10 = vector.extract_strided_slice %1 {offsets = [25, 0], sizes = [1, 16], strides = [1, 1]} : vector<28x128xf32> to vector<1x16xf32>
    %11 = vector.extract_strided_slice %1 {offsets = [26, 0], sizes = [1, 8], strides = [1, 1]} : vector<28x128xf32> to vector<1x8xf32>
    %12 = vector.extract_strided_slice %1 {offsets = [27, 0], sizes = [1, 8], strides = [1, 1]} : vector<28x128xf32> to vector<1x8xf32>
    %cst = arith.constant 1.000000e+00 : f32
    %13 = vector.broadcast %cst : f32 to vector<1x8xf32>
    %14 = arith.subf %9, %13 : vector<1x8xf32>
    %cst_10 = arith.constant 1.000000e+09 : f32
    %15 = vector.broadcast %cst_10 : f32 to vector<1x8xf32>
    %16 = arith.mulf %14, %15 : vector<1x8xf32>
    %cst_11 = arith.constant 1.000000e+00 : f32
    %17 = vector.broadcast %cst_11 : f32 to vector<1x16xf32>
    %18 = arith.subf %10, %17 : vector<1x16xf32>
    %cst_12 = arith.constant 1.000000e+09 : f32
    %19 = vector.broadcast %cst_12 : f32 to vector<1x16xf32>
    %20 = arith.mulf %18, %19 : vector<1x16xf32>
    %21 = tpu.iota {dimensions = array<i32: 0>} : vector<8x8xi32>
    %22 = tpu.iota {dimensions = array<i32: 1>} : vector<8x8xi32>
    %c-4_i32 = arith.constant -4 : i32
    %23 = vector.broadcast %c-4_i32 : i32 to vector<8x8xi32>
    %24 = arith.addi %21, %23 : vector<8x8xi32>
    %25 = arith.cmpi eq, %22, %24 : vector<8x8xi32>
    %26 = arith.extui %25 : vector<8x8xi1> to vector<8x8xi32>
    %27 = arith.sitofp %26 : vector<8x8xi32> to vector<8x8xf32>
    %28 = arith.truncf %27 : vector<8x8xf32> to vector<8x8xbf16>
    %c-3_i32 = arith.constant -3 : i32
    %29 = vector.broadcast %c-3_i32 : i32 to vector<8x8xi32>
    %30 = arith.addi %21, %29 : vector<8x8xi32>
    %31 = arith.cmpi eq, %22, %30 : vector<8x8xi32>
    %32 = arith.extui %31 : vector<8x8xi1> to vector<8x8xi32>
    %33 = arith.sitofp %32 : vector<8x8xi32> to vector<8x8xf32>
    %34 = arith.truncf %33 : vector<8x8xf32> to vector<8x8xbf16>
    %c-2_i32 = arith.constant -2 : i32
    %35 = vector.broadcast %c-2_i32 : i32 to vector<8x8xi32>
    %36 = arith.addi %21, %35 : vector<8x8xi32>
    %37 = arith.cmpi eq, %22, %36 : vector<8x8xi32>
    %38 = arith.extui %37 : vector<8x8xi1> to vector<8x8xi32>
    %39 = arith.sitofp %38 : vector<8x8xi32> to vector<8x8xf32>
    %40 = arith.truncf %39 : vector<8x8xf32> to vector<8x8xbf16>
    %c-1_i32 = arith.constant -1 : i32
    %41 = vector.broadcast %c-1_i32 : i32 to vector<8x8xi32>
    %42 = arith.addi %21, %41 : vector<8x8xi32>
    %43 = arith.cmpi eq, %22, %42 : vector<8x8xi32>
    %44 = arith.extui %43 : vector<8x8xi1> to vector<8x8xi32>
    %45 = arith.sitofp %44 : vector<8x8xi32> to vector<8x8xf32>
    %46 = arith.truncf %45 : vector<8x8xf32> to vector<8x8xbf16>
    %c0_i32 = arith.constant 0 : i32
    %47 = vector.broadcast %c0_i32 : i32 to vector<8x8xi32>
    %48 = arith.addi %21, %47 : vector<8x8xi32>
    %49 = arith.cmpi eq, %22, %48 : vector<8x8xi32>
    %50 = arith.extui %49 : vector<8x8xi1> to vector<8x8xi32>
    %51 = arith.sitofp %50 : vector<8x8xi32> to vector<8x8xf32>
    %52 = arith.truncf %51 : vector<8x8xf32> to vector<8x8xbf16>
    %c1_i32 = arith.constant 1 : i32
    %53 = vector.broadcast %c1_i32 : i32 to vector<8x8xi32>
    %54 = arith.addi %21, %53 : vector<8x8xi32>
    %55 = arith.cmpi eq, %22, %54 : vector<8x8xi32>
    %56 = arith.extui %55 : vector<8x8xi1> to vector<8x8xi32>
    %57 = arith.sitofp %56 : vector<8x8xi32> to vector<8x8xf32>
    %58 = arith.truncf %57 : vector<8x8xf32> to vector<8x8xbf16>
    %c2_i32 = arith.constant 2 : i32
    %59 = vector.broadcast %c2_i32 : i32 to vector<8x8xi32>
    %60 = arith.addi %21, %59 : vector<8x8xi32>
    %61 = arith.cmpi eq, %22, %60 : vector<8x8xi32>
    %62 = arith.extui %61 : vector<8x8xi1> to vector<8x8xi32>
    %63 = arith.sitofp %62 : vector<8x8xi32> to vector<8x8xf32>
    %64 = arith.truncf %63 : vector<8x8xf32> to vector<8x8xbf16>
    %c3_i32 = arith.constant 3 : i32
    %65 = vector.broadcast %c3_i32 : i32 to vector<8x8xi32>
    %66 = arith.addi %21, %65 : vector<8x8xi32>
    %67 = arith.cmpi eq, %22, %66 : vector<8x8xi32>
    %68 = arith.extui %67 : vector<8x8xi1> to vector<8x8xi32>
    %69 = arith.sitofp %68 : vector<8x8xi32> to vector<8x8xf32>
    %70 = arith.truncf %69 : vector<8x8xf32> to vector<8x8xbf16>
    %c4_i32 = arith.constant 4 : i32
    %71 = vector.broadcast %c4_i32 : i32 to vector<8x8xi32>
    %72 = arith.addi %21, %71 : vector<8x8xi32>
    %73 = arith.cmpi eq, %22, %72 : vector<8x8xi32>
    %74 = arith.extui %73 : vector<8x8xi1> to vector<8x8xi32>
    %75 = arith.sitofp %74 : vector<8x8xi32> to vector<8x8xf32>
    %76 = arith.truncf %75 : vector<8x8xf32> to vector<8x8xbf16>
    %77 = tpu.iota {dimensions = array<i32: 0>} : vector<16x16xi32>
    %78 = tpu.iota {dimensions = array<i32: 1>} : vector<16x16xi32>
    %c-4_i32_13 = arith.constant -4 : i32
    %79 = vector.broadcast %c-4_i32_13 : i32 to vector<16x16xi32>
    %80 = arith.addi %77, %79 : vector<16x16xi32>
    %81 = arith.cmpi eq, %78, %80 : vector<16x16xi32>
    %82 = arith.extui %81 : vector<16x16xi1> to vector<16x16xi32>
    %83 = arith.sitofp %82 : vector<16x16xi32> to vector<16x16xf32>
    %84 = arith.truncf %83 : vector<16x16xf32> to vector<16x16xbf16>
    %c-3_i32_14 = arith.constant -3 : i32
    %85 = vector.broadcast %c-3_i32_14 : i32 to vector<16x16xi32>
    %86 = arith.addi %77, %85 : vector<16x16xi32>
    %87 = arith.cmpi eq, %78, %86 : vector<16x16xi32>
    %88 = arith.extui %87 : vector<16x16xi1> to vector<16x16xi32>
    %89 = arith.sitofp %88 : vector<16x16xi32> to vector<16x16xf32>
    %90 = arith.truncf %89 : vector<16x16xf32> to vector<16x16xbf16>
    %c-2_i32_15 = arith.constant -2 : i32
    %91 = vector.broadcast %c-2_i32_15 : i32 to vector<16x16xi32>
    %92 = arith.addi %77, %91 : vector<16x16xi32>
    %93 = arith.cmpi eq, %78, %92 : vector<16x16xi32>
    %94 = arith.extui %93 : vector<16x16xi1> to vector<16x16xi32>
    %95 = arith.sitofp %94 : vector<16x16xi32> to vector<16x16xf32>
    %96 = arith.truncf %95 : vector<16x16xf32> to vector<16x16xbf16>
    %c-1_i32_16 = arith.constant -1 : i32
    %97 = vector.broadcast %c-1_i32_16 : i32 to vector<16x16xi32>
    %98 = arith.addi %77, %97 : vector<16x16xi32>
    %99 = arith.cmpi eq, %78, %98 : vector<16x16xi32>
    %100 = arith.extui %99 : vector<16x16xi1> to vector<16x16xi32>
    %101 = arith.sitofp %100 : vector<16x16xi32> to vector<16x16xf32>
    %102 = arith.truncf %101 : vector<16x16xf32> to vector<16x16xbf16>
    %c0_i32_17 = arith.constant 0 : i32
    %103 = vector.broadcast %c0_i32_17 : i32 to vector<16x16xi32>
    %104 = arith.addi %77, %103 : vector<16x16xi32>
    %105 = arith.cmpi eq, %78, %104 : vector<16x16xi32>
    %106 = arith.extui %105 : vector<16x16xi1> to vector<16x16xi32>
    %107 = arith.sitofp %106 : vector<16x16xi32> to vector<16x16xf32>
    %108 = arith.truncf %107 : vector<16x16xf32> to vector<16x16xbf16>
    %c1_i32_18 = arith.constant 1 : i32
    %109 = vector.broadcast %c1_i32_18 : i32 to vector<16x16xi32>
    %110 = arith.addi %77, %109 : vector<16x16xi32>
    %111 = arith.cmpi eq, %78, %110 : vector<16x16xi32>
    %112 = arith.extui %111 : vector<16x16xi1> to vector<16x16xi32>
    %113 = arith.sitofp %112 : vector<16x16xi32> to vector<16x16xf32>
    %114 = arith.truncf %113 : vector<16x16xf32> to vector<16x16xbf16>
    %c2_i32_19 = arith.constant 2 : i32
    %115 = vector.broadcast %c2_i32_19 : i32 to vector<16x16xi32>
    %116 = arith.addi %77, %115 : vector<16x16xi32>
    %117 = arith.cmpi eq, %78, %116 : vector<16x16xi32>
    %118 = arith.extui %117 : vector<16x16xi1> to vector<16x16xi32>
    %119 = arith.sitofp %118 : vector<16x16xi32> to vector<16x16xf32>
    %120 = arith.truncf %119 : vector<16x16xf32> to vector<16x16xbf16>
    %c3_i32_20 = arith.constant 3 : i32
    %121 = vector.broadcast %c3_i32_20 : i32 to vector<16x16xi32>
    %122 = arith.addi %77, %121 : vector<16x16xi32>
    %123 = arith.cmpi eq, %78, %122 : vector<16x16xi32>
    %124 = arith.extui %123 : vector<16x16xi1> to vector<16x16xi32>
    %125 = arith.sitofp %124 : vector<16x16xi32> to vector<16x16xf32>
    %126 = arith.truncf %125 : vector<16x16xf32> to vector<16x16xbf16>
    %c4_i32_21 = arith.constant 4 : i32
    %127 = vector.broadcast %c4_i32_21 : i32 to vector<16x16xi32>
    %128 = arith.addi %77, %127 : vector<16x16xi32>
    %129 = arith.cmpi eq, %78, %128 : vector<16x16xi32>
    %130 = arith.extui %129 : vector<16x16xi1> to vector<16x16xi32>
    %131 = arith.sitofp %130 : vector<16x16xi32> to vector<16x16xf32>
    %132 = arith.truncf %131 : vector<16x16xf32> to vector<16x16xbf16>
    %133 = vector.extract_strided_slice %2 {offsets = [0, 0, 0], sizes = [1, 32, 96], strides = [1, 1, 1]} : vector<6x32x128xbf16> to vector<1x32x96xbf16>
    %134 = vector.shape_cast %133 : vector<1x32x96xbf16> to vector<32x96xbf16>
    %135 = vector.extract_strided_slice %2 {offsets = [0, 0, 96], sizes = [1, 32, 32], strides = [1, 1, 1]} : vector<6x32x128xbf16> to vector<1x32x32xbf16>
    %136 = vector.shape_cast %135 : vector<1x32x32xbf16> to vector<32x32xbf16>
    %137 = vector.extract_strided_slice %3 {offsets = [0, 0, 0], sizes = [1, 288, 64], strides = [1, 1, 1]} : vector<4x352x64xbf16> to vector<1x288x64xbf16>
    %138 = vector.shape_cast %137 : vector<1x288x64xbf16> to vector<288x64xbf16>
    %139 = vector.extract_strided_slice %3 {offsets = [0, 288, 0], sizes = [1, 64, 32], strides = [1, 1, 1]} : vector<4x352x64xbf16> to vector<1x64x32xbf16>
    %140 = vector.shape_cast %139 : vector<1x64x32xbf16> to vector<64x32xbf16>
    %141 = vector.extract_strided_slice %4 {offsets = [0, 0], sizes = [1, 96], strides = [1, 1]} : vector<42x128xf32> to vector<1x96xf32>
    %142 = vector.extract_strided_slice %4 {offsets = [1, 0], sizes = [1, 32], strides = [1, 1]} : vector<42x128xf32> to vector<1x32xf32>
    %143 = vector.extract_strided_slice %4 {offsets = [2, 0], sizes = [1, 64], strides = [1, 1]} : vector<42x128xf32> to vector<1x64xf32>
    %144 = vector.extract_strided_slice %4 {offsets = [3, 0], sizes = [1, 32], strides = [1, 1]} : vector<42x128xf32> to vector<1x32xf32>
    %145 = vector.extract_strided_slice %4 {offsets = [4, 0], sizes = [1, 32], strides = [1, 1]} : vector<42x128xf32> to vector<1x32xf32>
    %146 = vector.extract_strided_slice %4 {offsets = [5, 0], sizes = [1, 32], strides = [1, 1]} : vector<42x128xf32> to vector<1x32xf32>
    %147 = vector.extract_strided_slice %4 {offsets = [6, 0], sizes = [1, 32], strides = [1, 1]} : vector<42x128xf32> to vector<1x32xf32>
    %148 = vector.extract_strided_slice %4 {offsets = [7, 0], sizes = [1, 32], strides = [1, 1]} : vector<42x128xf32> to vector<1x32xf32>
    %cst_22 = arith.constant dense<0.000000e+00> : vector<8xf32>
    %149 = vector.multi_reduction <add>, %5, %cst_22 [1] : vector<8x32xf32> to vector<8xf32>
    %150 = vector.shape_cast %149 : vector<8xf32> to vector<8x1xf32>
    %cst_23 = arith.constant 3.200000e+01 : f32
    %151 = vector.broadcast %cst_23 : f32 to vector<8x1xf32>
    %152 = arith.divf %150, %151 : vector<8x1xf32>
    %153 = vector.broadcast %152 : vector<8x1xf32> to vector<8x32xf32>
    %154 = arith.subf %5, %153 : vector<8x32xf32>
    %155 = arith.mulf %154, %154 : vector<8x32xf32>
    %cst_24 = arith.constant dense<0.000000e+00> : vector<8xf32>
    %156 = vector.multi_reduction <add>, %155, %cst_24 [1] : vector<8x32xf32> to vector<8xf32>
    %157 = vector.shape_cast %156 : vector<8xf32> to vector<8x1xf32>
    %cst_25 = arith.constant 3.200000e+01 : f32
    %158 = vector.broadcast %cst_25 : f32 to vector<8x1xf32>
    %159 = arith.divf %157, %158 : vector<8x1xf32>
    %160 = vector.broadcast %152 : vector<8x1xf32> to vector<8x32xf32>
    %161 = arith.subf %5, %160 : vector<8x32xf32>
    %cst_26 = arith.constant 9.99999974E-6 : f32
    %162 = vector.broadcast %cst_26 : f32 to vector<8x1xf32>
    %163 = arith.addf %159, %162 : vector<8x1xf32>
    %164 = math.rsqrt %163 : vector<8x1xf32>
    %165 = vector.broadcast %164 : vector<8x1xf32> to vector<8x32xf32>
    %166 = arith.mulf %161, %165 : vector<8x32xf32>
    %167 = vector.broadcast %145 : vector<1x32xf32> to vector<8x32xf32>
    %168 = arith.mulf %166, %167 : vector<8x32xf32>
    %169 = vector.broadcast %146 : vector<1x32xf32> to vector<8x32xf32>
    %170 = arith.addf %168, %169 : vector<8x32xf32>
    %171 = arith.truncf %170 : vector<8x32xf32> to vector<8x32xbf16>
    %cst_27 = arith.constant dense<0.000000e+00> : vector<8x96xf32>
    %172 = tpu.matmul %171, %134, %cst_27 {dimension_numbers = #tpu.dot_dimension_numbers<[1], [0], [0], [1], [0, 0, 1, 1], [], []>} : vector<8x32xbf16>, vector<32x96xbf16>, vector<8x96xf32> -> vector<8x96xf32>
    %173 = vector.broadcast %141 : vector<1x96xf32> to vector<8x96xf32>
    %174 = arith.addf %172, %173 : vector<8x96xf32>
    %175 = arith.truncf %174 : vector<8x96xf32> to vector<8x96xbf16>
    %176 = vector.extract_strided_slice %175 {offsets = [0, 0], sizes = [8, 16], strides = [1, 1]} : vector<8x96xbf16> to vector<8x16xbf16>
    %177 = vector.extract_strided_slice %175 {offsets = [0, 32], sizes = [8, 16], strides = [1, 1]} : vector<8x96xbf16> to vector<8x16xbf16>
    %178 = vector.extract_strided_slice %175 {offsets = [0, 64], sizes = [8, 16], strides = [1, 1]} : vector<8x96xbf16> to vector<8x16xbf16>
    %cst_28 = arith.constant dense<0.000000e+00> : vector<8x8xf32>
    %179 = tpu.matmul %176, %177, %cst_28 {dimension_numbers = #tpu.dot_dimension_numbers<[1], [1], [0], [0], [0, 0, 1, 0], [], []>} : vector<8x16xbf16>, vector<8x16xbf16>, vector<8x8xf32> -> vector<8x8xf32>
    %cst_29 = arith.constant 2.500000e-01 : f32
    %180 = vector.broadcast %cst_29 : f32 to vector<8x8xf32>
    %181 = arith.mulf %179, %180 : vector<8x8xf32>
    %182 = vector.broadcast %16 : vector<1x8xf32> to vector<8x8xf32>
    %183 = arith.addf %181, %182 : vector<8x8xf32>
    %cst_30 = arith.constant dense<0xFF800000> : vector<8xf32>
    %184 = vector.multi_reduction <maximumf>, %183, %cst_30 [1] : vector<8x8xf32> to vector<8xf32>
    %185 = vector.shape_cast %184 : vector<8xf32> to vector<8x1xf32>
    %186 = vector.broadcast %185 : vector<8x1xf32> to vector<8x8xf32>
    %187 = arith.subf %183, %186 : vector<8x8xf32>
    %188 = math.exp %187 : vector<8x8xf32>
    %cst_31 = arith.constant dense<0.000000e+00> : vector<8xf32>
    %189 = vector.multi_reduction <add>, %188, %cst_31 [1] : vector<8x8xf32> to vector<8xf32>
    %190 = vector.shape_cast %189 : vector<8xf32> to vector<8x1xf32>
    %191 = tpu.reciprocal %190 {approx = true} : vector<8x1xf32> -> vector<8x1xf32>
    %192 = vector.broadcast %191 : vector<8x1xf32> to vector<8x8xf32>
    %193 = arith.mulf %188, %192 : vector<8x8xf32>
    %194 = arith.truncf %193 : vector<8x8xf32> to vector<8x8xbf16>
    %cst_32 = arith.constant dense<0.000000e+00> : vector<8x16xf32>
    %195 = tpu.matmul %194, %178, %cst_32 {dimension_numbers = #tpu.dot_dimension_numbers<[1], [0], [0], [1], [0, 0, 1, 1], [], []>} : vector<8x8xbf16>, vector<8x16xbf16>, vector<8x16xf32> -> vector<8x16xf32>
    %196 = vector.extract_strided_slice %175 {offsets = [0, 16], sizes = [8, 16], strides = [1, 1]} : vector<8x96xbf16> to vector<8x16xbf16>
    %197 = vector.extract_strided_slice %175 {offsets = [0, 48], sizes = [8, 16], strides = [1, 1]} : vector<8x96xbf16> to vector<8x16xbf16>
    %198 = vector.extract_strided_slice %175 {offsets = [0, 80], sizes = [8, 16], strides = [1, 1]} : vector<8x96xbf16> to vector<8x16xbf16>
    %cst_33 = arith.constant dense<0.000000e+00> : vector<8x8xf32>
    %199 = tpu.matmul %196, %197, %cst_33 {dimension_numbers = #tpu.dot_dimension_numbers<[1], [1], [0], [0], [0, 0, 1, 0], [], []>} : vector<8x16xbf16>, vector<8x16xbf16>, vector<8x8xf32> -> vector<8x8xf32>
    %cst_34 = arith.constant 2.500000e-01 : f32
    %200 = vector.broadcast %cst_34 : f32 to vector<8x8xf32>
    %201 = arith.mulf %199, %200 : vector<8x8xf32>
    %202 = vector.broadcast %16 : vector<1x8xf32> to vector<8x8xf32>
    %203 = arith.addf %201, %202 : vector<8x8xf32>
    %cst_35 = arith.constant dense<0xFF800000> : vector<8xf32>
    %204 = vector.multi_reduction <maximumf>, %203, %cst_35 [1] : vector<8x8xf32> to vector<8xf32>
    %205 = vector.shape_cast %204 : vector<8xf32> to vector<8x1xf32>
    %206 = vector.broadcast %205 : vector<8x1xf32> to vector<8x8xf32>
    %207 = arith.subf %203, %206 : vector<8x8xf32>
    %208 = math.exp %207 : vector<8x8xf32>
    %cst_36 = arith.constant dense<0.000000e+00> : vector<8xf32>
    %209 = vector.multi_reduction <add>, %208, %cst_36 [1] : vector<8x8xf32> to vector<8xf32>
    %210 = vector.shape_cast %209 : vector<8xf32> to vector<8x1xf32>
    %211 = tpu.reciprocal %210 {approx = true} : vector<8x1xf32> -> vector<8x1xf32>
    %212 = vector.broadcast %211 : vector<8x1xf32> to vector<8x8xf32>
    %213 = arith.mulf %208, %212 : vector<8x8xf32>
    %214 = arith.truncf %213 : vector<8x8xf32> to vector<8x8xbf16>
    %cst_37 = arith.constant dense<0.000000e+00> : vector<8x16xf32>
    %215 = tpu.matmul %214, %198, %cst_37 {dimension_numbers = #tpu.dot_dimension_numbers<[1], [0], [0], [1], [0, 0, 1, 1], [], []>} : vector<8x8xbf16>, vector<8x16xbf16>, vector<8x16xf32> -> vector<8x16xf32>
    %216 = tpu.concatenate %195, %215 in 1 : vector<8x16xf32>, vector<8x16xf32> -> vector<8x32xf32>
    %217 = arith.truncf %216 : vector<8x32xf32> to vector<8x32xbf16>
    %cst_38 = arith.constant dense<0.000000e+00> : vector<8x32xf32>
    %218 = tpu.matmul %217, %136, %cst_38 {dimension_numbers = #tpu.dot_dimension_numbers<[1], [0], [0], [1], [0, 0, 1, 1], [], []>} : vector<8x32xbf16>, vector<32x32xbf16>, vector<8x32xf32> -> vector<8x32xf32>
    %219 = vector.broadcast %142 : vector<1x32xf32> to vector<8x32xf32>
    %220 = arith.addf %218, %219 : vector<8x32xf32>
    %221 = arith.addf %220, %170 : vector<8x32xf32>
    %cst_39 = arith.constant dense<0.000000e+00> : vector<8xf32>
    %222 = vector.multi_reduction <add>, %221, %cst_39 [1] : vector<8x32xf32> to vector<8xf32>
    %223 = vector.shape_cast %222 : vector<8xf32> to vector<8x1xf32>
    %cst_40 = arith.constant 3.200000e+01 : f32
    %224 = vector.broadcast %cst_40 : f32 to vector<8x1xf32>
    %225 = arith.divf %223, %224 : vector<8x1xf32>
    %226 = vector.broadcast %225 : vector<8x1xf32> to vector<8x32xf32>
    %227 = arith.subf %221, %226 : vector<8x32xf32>
    %228 = arith.mulf %227, %227 : vector<8x32xf32>
    %cst_41 = arith.constant dense<0.000000e+00> : vector<8xf32>
    %229 = vector.multi_reduction <add>, %228, %cst_41 [1] : vector<8x32xf32> to vector<8xf32>
    %230 = vector.shape_cast %229 : vector<8xf32> to vector<8x1xf32>
    %cst_42 = arith.constant 3.200000e+01 : f32
    %231 = vector.broadcast %cst_42 : f32 to vector<8x1xf32>
    %232 = arith.divf %230, %231 : vector<8x1xf32>
    %233 = vector.broadcast %225 : vector<8x1xf32> to vector<8x32xf32>
    %234 = arith.subf %221, %233 : vector<8x32xf32>
    %cst_43 = arith.constant 9.99999974E-6 : f32
    %235 = vector.broadcast %cst_43 : f32 to vector<8x1xf32>
    %236 = arith.addf %232, %235 : vector<8x1xf32>
    %237 = math.rsqrt %236 : vector<8x1xf32>
    %238 = vector.broadcast %237 : vector<8x1xf32> to vector<8x32xf32>
    %239 = arith.mulf %234, %238 : vector<8x32xf32>
    %240 = vector.broadcast %147 : vector<1x32xf32> to vector<8x32xf32>
    %241 = arith.mulf %239, %240 : vector<8x32xf32>
    %242 = vector.broadcast %148 : vector<1x32xf32> to vector<8x32xf32>
    %243 = arith.addf %241, %242 : vector<8x32xf32>
    %244 = arith.mulf %243, %6 : vector<8x32xf32>
    %245 = arith.truncf %244 : vector<8x32xf32> to vector<8x32xbf16>
    %cst_44 = arith.constant 0.000000e+00 : f32
    %246 = vector.broadcast %cst_44 : f32 to vector<8x64xf32>
    %247 = vector.broadcast %143 : vector<1x64xf32> to vector<8x64xf32>
    %248 = arith.addf %246, %247 : vector<8x64xf32>
    %cst_45 = arith.constant dense<0.000000e+00> : vector<8x32xf32>
    %249 = tpu.matmul %28, %245, %cst_45 {dimension_numbers = #tpu.dot_dimension_numbers<[1], [0], [0], [1], [0, 0, 1, 1], [], []>} : vector<8x8xbf16>, vector<8x32xbf16>, vector<8x32xf32> -> vector<8x32xf32>
    %250 = arith.truncf %249 : vector<8x32xf32> to vector<8x32xbf16>
    %251 = vector.extract_strided_slice %138 {offsets = [0, 0], sizes = [32, 64], strides = [1, 1]} : vector<288x64xbf16> to vector<32x64xbf16>
    %cst_46 = arith.constant dense<0.000000e+00> : vector<8x64xf32>
    %252 = tpu.matmul %250, %251, %cst_46 {dimension_numbers = #tpu.dot_dimension_numbers<[1], [0], [0], [1], [0, 0, 1, 1], [], []>} : vector<8x32xbf16>, vector<32x64xbf16>, vector<8x64xf32> -> vector<8x64xf32>
    %253 = arith.addf %248, %252 : vector<8x64xf32>
    %cst_47 = arith.constant dense<0.000000e+00> : vector<8x32xf32>
    %254 = tpu.matmul %34, %245, %cst_47 {dimension_numbers = #tpu.dot_dimension_numbers<[1], [0], [0], [1], [0, 0, 1, 1], [], []>} : vector<8x8xbf16>, vector<8x32xbf16>, vector<8x32xf32> -> vector<8x32xf32>
    %255 = arith.truncf %254 : vector<8x32xf32> to vector<8x32xbf16>
    %256 = vector.extract_strided_slice %138 {offsets = [32, 0], sizes = [32, 64], strides = [1, 1]} : vector<288x64xbf16> to vector<32x64xbf16>
    %cst_48 = arith.constant dense<0.000000e+00> : vector<8x64xf32>
    %257 = tpu.matmul %255, %256, %cst_48 {dimension_numbers = #tpu.dot_dimension_numbers<[1], [0], [0], [1], [0, 0, 1, 1], [], []>} : vector<8x32xbf16>, vector<32x64xbf16>, vector<8x64xf32> -> vector<8x64xf32>
    %258 = arith.addf %253, %257 : vector<8x64xf32>
    %cst_49 = arith.constant dense<0.000000e+00> : vector<8x32xf32>
    %259 = tpu.matmul %40, %245, %cst_49 {dimension_numbers = #tpu.dot_dimension_numbers<[1], [0], [0], [1], [0, 0, 1, 1], [], []>} : vector<8x8xbf16>, vector<8x32xbf16>, vector<8x32xf32> -> vector<8x32xf32>
    %260 = arith.truncf %259 : vector<8x32xf32> to vector<8x32xbf16>
    %261 = vector.extract_strided_slice %138 {offsets = [64, 0], sizes = [32, 64], strides = [1, 1]} : vector<288x64xbf16> to vector<32x64xbf16>
    %cst_50 = arith.constant dense<0.000000e+00> : vector<8x64xf32>
    %262 = tpu.matmul %260, %261, %cst_50 {dimension_numbers = #tpu.dot_dimension_numbers<[1], [0], [0], [1], [0, 0, 1, 1], [], []>} : vector<8x32xbf16>, vector<32x64xbf16>, vector<8x64xf32> -> vector<8x64xf32>
    %263 = arith.addf %258, %262 : vector<8x64xf32>
    %cst_51 = arith.constant dense<0.000000e+00> : vector<8x32xf32>
    %264 = tpu.matmul %46, %245, %cst_51 {dimension_numbers = #tpu.dot_dimension_numbers<[1], [0], [0], [1], [0, 0, 1, 1], [], []>} : vector<8x8xbf16>, vector<8x32xbf16>, vector<8x32xf32> -> vector<8x32xf32>
    %265 = arith.truncf %264 : vector<8x32xf32> to vector<8x32xbf16>
    %266 = vector.extract_strided_slice %138 {offsets = [96, 0], sizes = [32, 64], strides = [1, 1]} : vector<288x64xbf16> to vector<32x64xbf16>
    %cst_52 = arith.constant dense<0.000000e+00> : vector<8x64xf32>
    %267 = tpu.matmul %265, %266, %cst_52 {dimension_numbers = #tpu.dot_dimension_numbers<[1], [0], [0], [1], [0, 0, 1, 1], [], []>} : vector<8x32xbf16>, vector<32x64xbf16>, vector<8x64xf32> -> vector<8x64xf32>
    %268 = arith.addf %263, %267 : vector<8x64xf32>
    %cst_53 = arith.constant dense<0.000000e+00> : vector<8x32xf32>
    %269 = tpu.matmul %52, %245, %cst_53 {dimension_numbers = #tpu.dot_dimension_numbers<[1], [0], [0], [1], [0, 0, 1, 1], [], []>} : vector<8x8xbf16>, vector<8x32xbf16>, vector<8x32xf32> -> vector<8x32xf32>
    %270 = arith.truncf %269 : vector<8x32xf32> to vector<8x32xbf16>
    %271 = vector.extract_strided_slice %138 {offsets = [128, 0], sizes = [32, 64], strides = [1, 1]} : vector<288x64xbf16> to vector<32x64xbf16>
    %cst_54 = arith.constant dense<0.000000e+00> : vector<8x64xf32>
    %272 = tpu.matmul %270, %271, %cst_54 {dimension_numbers = #tpu.dot_dimension_numbers<[1], [0], [0], [1], [0, 0, 1, 1], [], []>} : vector<8x32xbf16>, vector<32x64xbf16>, vector<8x64xf32> -> vector<8x64xf32>
    %273 = arith.addf %268, %272 : vector<8x64xf32>
    %cst_55 = arith.constant dense<0.000000e+00> : vector<8x32xf32>
    %274 = tpu.matmul %58, %245, %cst_55 {dimension_numbers = #tpu.dot_dimension_numbers<[1], [0], [0], [1], [0, 0, 1, 1], [], []>} : vector<8x8xbf16>, vector<8x32xbf16>, vector<8x32xf32> -> vector<8x32xf32>
    %275 = arith.truncf %274 : vector<8x32xf32> to vector<8x32xbf16>
    %276 = vector.extract_strided_slice %138 {offsets = [160, 0], sizes = [32, 64], strides = [1, 1]} : vector<288x64xbf16> to vector<32x64xbf16>
    %cst_56 = arith.constant dense<0.000000e+00> : vector<8x64xf32>
    %277 = tpu.matmul %275, %276, %cst_56 {dimension_numbers = #tpu.dot_dimension_numbers<[1], [0], [0], [1], [0, 0, 1, 1], [], []>} : vector<8x32xbf16>, vector<32x64xbf16>, vector<8x64xf32> -> vector<8x64xf32>
    %278 = arith.addf %273, %277 : vector<8x64xf32>
    %cst_57 = arith.constant dense<0.000000e+00> : vector<8x32xf32>
    %279 = tpu.matmul %64, %245, %cst_57 {dimension_numbers = #tpu.dot_dimension_numbers<[1], [0], [0], [1], [0, 0, 1, 1], [], []>} : vector<8x8xbf16>, vector<8x32xbf16>, vector<8x32xf32> -> vector<8x32xf32>
    %280 = arith.truncf %279 : vector<8x32xf32> to vector<8x32xbf16>
    %281 = vector.extract_strided_slice %138 {offsets = [192, 0], sizes = [32, 64], strides = [1, 1]} : vector<288x64xbf16> to vector<32x64xbf16>
    %cst_58 = arith.constant dense<0.000000e+00> : vector<8x64xf32>
    %282 = tpu.matmul %280, %281, %cst_58 {dimension_numbers = #tpu.dot_dimension_numbers<[1], [0], [0], [1], [0, 0, 1, 1], [], []>} : vector<8x32xbf16>, vector<32x64xbf16>, vector<8x64xf32> -> vector<8x64xf32>
    %283 = arith.addf %278, %282 : vector<8x64xf32>
    %cst_59 = arith.constant dense<0.000000e+00> : vector<8x32xf32>
    %284 = tpu.matmul %70, %245, %cst_59 {dimension_numbers = #tpu.dot_dimension_numbers<[1], [0], [0], [1], [0, 0, 1, 1], [], []>} : vector<8x8xbf16>, vector<8x32xbf16>, vector<8x32xf32> -> vector<8x32xf32>
    %285 = arith.truncf %284 : vector<8x32xf32> to vector<8x32xbf16>
    %286 = vector.extract_strided_slice %138 {offsets = [224, 0], sizes = [32, 64], strides = [1, 1]} : vector<288x64xbf16> to vector<32x64xbf16>
    %cst_60 = arith.constant dense<0.000000e+00> : vector<8x64xf32>
    %287 = tpu.matmul %285, %286, %cst_60 {dimension_numbers = #tpu.dot_dimension_numbers<[1], [0], [0], [1], [0, 0, 1, 1], [], []>} : vector<8x32xbf16>, vector<32x64xbf16>, vector<8x64xf32> -> vector<8x64xf32>
    %288 = arith.addf %283, %287 : vector<8x64xf32>
    %cst_61 = arith.constant dense<0.000000e+00> : vector<8x32xf32>
    %289 = tpu.matmul %76, %245, %cst_61 {dimension_numbers = #tpu.dot_dimension_numbers<[1], [0], [0], [1], [0, 0, 1, 1], [], []>} : vector<8x8xbf16>, vector<8x32xbf16>, vector<8x32xf32> -> vector<8x32xf32>
    %290 = arith.truncf %289 : vector<8x32xf32> to vector<8x32xbf16>
    %291 = vector.extract_strided_slice %138 {offsets = [256, 0], sizes = [32, 64], strides = [1, 1]} : vector<288x64xbf16> to vector<32x64xbf16>
    %cst_62 = arith.constant dense<0.000000e+00> : vector<8x64xf32>
    %292 = tpu.matmul %290, %291, %cst_62 {dimension_numbers = #tpu.dot_dimension_numbers<[1], [0], [0], [1], [0, 0, 1, 1], [], []>} : vector<8x32xbf16>, vector<32x64xbf16>, vector<8x64xf32> -> vector<8x64xf32>
    %293 = arith.addf %288, %292 : vector<8x64xf32>
    %cst_63 = arith.constant 0.000000e+00 : f32
    %294 = vector.broadcast %cst_63 : f32 to vector<8x64xf32>
    %295 = arith.maximumf %293, %294 : vector<8x64xf32>
    %296 = arith.truncf %295 : vector<8x64xf32> to vector<8x64xbf16>
    %cst_64 = arith.constant dense<0.000000e+00> : vector<8x32xf32>
    %297 = tpu.matmul %296, %140, %cst_64 {dimension_numbers = #tpu.dot_dimension_numbers<[1], [0], [0], [1], [0, 0, 1, 1], [], []>} : vector<8x64xbf16>, vector<64x32xbf16>, vector<8x32xf32> -> vector<8x32xf32>
    %298 = vector.broadcast %144 : vector<1x32xf32> to vector<8x32xf32>
    %299 = arith.addf %297, %298 : vector<8x32xf32>
    %300 = arith.addf %299, %244 : vector<8x32xf32>
    %301 = arith.mulf %300, %6 : vector<8x32xf32>
    %302 = vector.extract_strided_slice %2 {offsets = [1, 0, 0], sizes = [1, 32, 96], strides = [1, 1, 1]} : vector<6x32x128xbf16> to vector<1x32x96xbf16>
    %303 = vector.shape_cast %302 : vector<1x32x96xbf16> to vector<32x96xbf16>
    %304 = vector.extract_strided_slice %2 {offsets = [1, 0, 96], sizes = [1, 32, 32], strides = [1, 1, 1]} : vector<6x32x128xbf16> to vector<1x32x32xbf16>
    %305 = vector.shape_cast %304 : vector<1x32x32xbf16> to vector<32x32xbf16>
    %306 = vector.extract_strided_slice %3 {offsets = [1, 0, 0], sizes = [1, 288, 64], strides = [1, 1, 1]} : vector<4x352x64xbf16> to vector<1x288x64xbf16>
    %307 = vector.shape_cast %306 : vector<1x288x64xbf16> to vector<288x64xbf16>
    %308 = vector.extract_strided_slice %3 {offsets = [1, 288, 0], sizes = [1, 64, 32], strides = [1, 1, 1]} : vector<4x352x64xbf16> to vector<1x64x32xbf16>
    %309 = vector.shape_cast %308 : vector<1x64x32xbf16> to vector<64x32xbf16>
    %310 = vector.extract_strided_slice %4 {offsets = [8, 0], sizes = [1, 96], strides = [1, 1]} : vector<42x128xf32> to vector<1x96xf32>
    %311 = vector.extract_strided_slice %4 {offsets = [9, 0], sizes = [1, 32], strides = [1, 1]} : vector<42x128xf32> to vector<1x32xf32>
    %312 = vector.extract_strided_slice %4 {offsets = [10, 0], sizes = [1, 64], strides = [1, 1]} : vector<42x128xf32> to vector<1x64xf32>
    %313 = vector.extract_strided_slice %4 {offsets = [11, 0], sizes = [1, 32], strides = [1, 1]} : vector<42x128xf32> to vector<1x32xf32>
    %314 = vector.extract_strided_slice %4 {offsets = [12, 0], sizes = [1, 32], strides = [1, 1]} : vector<42x128xf32> to vector<1x32xf32>
    %315 = vector.extract_strided_slice %4 {offsets = [13, 0], sizes = [1, 32], strides = [1, 1]} : vector<42x128xf32> to vector<1x32xf32>
    %316 = vector.extract_strided_slice %4 {offsets = [14, 0], sizes = [1, 32], strides = [1, 1]} : vector<42x128xf32> to vector<1x32xf32>
    %317 = vector.extract_strided_slice %4 {offsets = [15, 0], sizes = [1, 32], strides = [1, 1]} : vector<42x128xf32> to vector<1x32xf32>
    %cst_65 = arith.constant dense<0.000000e+00> : vector<8xf32>
    %318 = vector.multi_reduction <add>, %301, %cst_65 [1] : vector<8x32xf32> to vector<8xf32>
    %319 = vector.shape_cast %318 : vector<8xf32> to vector<8x1xf32>
    %cst_66 = arith.constant 3.200000e+01 : f32
    %320 = vector.broadcast %cst_66 : f32 to vector<8x1xf32>
    %321 = arith.divf %319, %320 : vector<8x1xf32>
    %322 = vector.broadcast %321 : vector<8x1xf32> to vector<8x32xf32>
    %323 = arith.subf %301, %322 : vector<8x32xf32>
    %324 = arith.mulf %323, %323 : vector<8x32xf32>
    %cst_67 = arith.constant dense<0.000000e+00> : vector<8xf32>
    %325 = vector.multi_reduction <add>, %324, %cst_67 [1] : vector<8x32xf32> to vector<8xf32>
    %326 = vector.shape_cast %325 : vector<8xf32> to vector<8x1xf32>
    %cst_68 = arith.constant 3.200000e+01 : f32
    %327 = vector.broadcast %cst_68 : f32 to vector<8x1xf32>
    %328 = arith.divf %326, %327 : vector<8x1xf32>
    %329 = vector.broadcast %321 : vector<8x1xf32> to vector<8x32xf32>
    %330 = arith.subf %301, %329 : vector<8x32xf32>
    %cst_69 = arith.constant 9.99999974E-6 : f32
    %331 = vector.broadcast %cst_69 : f32 to vector<8x1xf32>
    %332 = arith.addf %328, %331 : vector<8x1xf32>
    %333 = math.rsqrt %332 : vector<8x1xf32>
    %334 = vector.broadcast %333 : vector<8x1xf32> to vector<8x32xf32>
    %335 = arith.mulf %330, %334 : vector<8x32xf32>
    %336 = vector.broadcast %314 : vector<1x32xf32> to vector<8x32xf32>
    %337 = arith.mulf %335, %336 : vector<8x32xf32>
    %338 = vector.broadcast %315 : vector<1x32xf32> to vector<8x32xf32>
    %339 = arith.addf %337, %338 : vector<8x32xf32>
    %340 = arith.truncf %339 : vector<8x32xf32> to vector<8x32xbf16>
    %cst_70 = arith.constant dense<0.000000e+00> : vector<8x96xf32>
    %341 = tpu.matmul %340, %303, %cst_70 {dimension_numbers = #tpu.dot_dimension_numbers<[1], [0], [0], [1], [0, 0, 1, 1], [], []>} : vector<8x32xbf16>, vector<32x96xbf16>, vector<8x96xf32> -> vector<8x96xf32>
    %342 = vector.broadcast %310 : vector<1x96xf32> to vector<8x96xf32>
    %343 = arith.addf %341, %342 : vector<8x96xf32>
    %344 = arith.truncf %343 : vector<8x96xf32> to vector<8x96xbf16>
    %345 = vector.extract_strided_slice %344 {offsets = [0, 0], sizes = [8, 16], strides = [1, 1]} : vector<8x96xbf16> to vector<8x16xbf16>
    %346 = vector.extract_strided_slice %344 {offsets = [0, 32], sizes = [8, 16], strides = [1, 1]} : vector<8x96xbf16> to vector<8x16xbf16>
    %347 = vector.extract_strided_slice %344 {offsets = [0, 64], sizes = [8, 16], strides = [1, 1]} : vector<8x96xbf16> to vector<8x16xbf16>
    %cst_71 = arith.constant dense<0.000000e+00> : vector<8x8xf32>
    %348 = tpu.matmul %345, %346, %cst_71 {dimension_numbers = #tpu.dot_dimension_numbers<[1], [1], [0], [0], [0, 0, 1, 0], [], []>} : vector<8x16xbf16>, vector<8x16xbf16>, vector<8x8xf32> -> vector<8x8xf32>
    %cst_72 = arith.constant 2.500000e-01 : f32
    %349 = vector.broadcast %cst_72 : f32 to vector<8x8xf32>
    %350 = arith.mulf %348, %349 : vector<8x8xf32>
    %351 = vector.broadcast %16 : vector<1x8xf32> to vector<8x8xf32>
    %352 = arith.addf %350, %351 : vector<8x8xf32>
    %cst_73 = arith.constant dense<0xFF800000> : vector<8xf32>
    %353 = vector.multi_reduction <maximumf>, %352, %cst_73 [1] : vector<8x8xf32> to vector<8xf32>
    %354 = vector.shape_cast %353 : vector<8xf32> to vector<8x1xf32>
    %355 = vector.broadcast %354 : vector<8x1xf32> to vector<8x8xf32>
    %356 = arith.subf %352, %355 : vector<8x8xf32>
    %357 = math.exp %356 : vector<8x8xf32>
    %cst_74 = arith.constant dense<0.000000e+00> : vector<8xf32>
    %358 = vector.multi_reduction <add>, %357, %cst_74 [1] : vector<8x8xf32> to vector<8xf32>
    %359 = vector.shape_cast %358 : vector<8xf32> to vector<8x1xf32>
    %360 = tpu.reciprocal %359 {approx = true} : vector<8x1xf32> -> vector<8x1xf32>
    %361 = vector.broadcast %360 : vector<8x1xf32> to vector<8x8xf32>
    %362 = arith.mulf %357, %361 : vector<8x8xf32>
    %363 = arith.truncf %362 : vector<8x8xf32> to vector<8x8xbf16>
    %cst_75 = arith.constant dense<0.000000e+00> : vector<8x16xf32>
    %364 = tpu.matmul %363, %347, %cst_75 {dimension_numbers = #tpu.dot_dimension_numbers<[1], [0], [0], [1], [0, 0, 1, 1], [], []>} : vector<8x8xbf16>, vector<8x16xbf16>, vector<8x16xf32> -> vector<8x16xf32>
    %365 = vector.extract_strided_slice %344 {offsets = [0, 16], sizes = [8, 16], strides = [1, 1]} : vector<8x96xbf16> to vector<8x16xbf16>
    %366 = vector.extract_strided_slice %344 {offsets = [0, 48], sizes = [8, 16], strides = [1, 1]} : vector<8x96xbf16> to vector<8x16xbf16>
    %367 = vector.extract_strided_slice %344 {offsets = [0, 80], sizes = [8, 16], strides = [1, 1]} : vector<8x96xbf16> to vector<8x16xbf16>
    %cst_76 = arith.constant dense<0.000000e+00> : vector<8x8xf32>
    %368 = tpu.matmul %365, %366, %cst_76 {dimension_numbers = #tpu.dot_dimension_numbers<[1], [1], [0], [0], [0, 0, 1, 0], [], []>} : vector<8x16xbf16>, vector<8x16xbf16>, vector<8x8xf32> -> vector<8x8xf32>
    %cst_77 = arith.constant 2.500000e-01 : f32
    %369 = vector.broadcast %cst_77 : f32 to vector<8x8xf32>
    %370 = arith.mulf %368, %369 : vector<8x8xf32>
    %371 = vector.broadcast %16 : vector<1x8xf32> to vector<8x8xf32>
    %372 = arith.addf %370, %371 : vector<8x8xf32>
    %cst_78 = arith.constant dense<0xFF800000> : vector<8xf32>
    %373 = vector.multi_reduction <maximumf>, %372, %cst_78 [1] : vector<8x8xf32> to vector<8xf32>
    %374 = vector.shape_cast %373 : vector<8xf32> to vector<8x1xf32>
    %375 = vector.broadcast %374 : vector<8x1xf32> to vector<8x8xf32>
    %376 = arith.subf %372, %375 : vector<8x8xf32>
    %377 = math.exp %376 : vector<8x8xf32>
    %cst_79 = arith.constant dense<0.000000e+00> : vector<8xf32>
    %378 = vector.multi_reduction <add>, %377, %cst_79 [1] : vector<8x8xf32> to vector<8xf32>
    %379 = vector.shape_cast %378 : vector<8xf32> to vector<8x1xf32>
    %380 = tpu.reciprocal %379 {approx = true} : vector<8x1xf32> -> vector<8x1xf32>
    %381 = vector.broadcast %380 : vector<8x1xf32> to vector<8x8xf32>
    %382 = arith.mulf %377, %381 : vector<8x8xf32>
    %383 = arith.truncf %382 : vector<8x8xf32> to vector<8x8xbf16>
    %cst_80 = arith.constant dense<0.000000e+00> : vector<8x16xf32>
    %384 = tpu.matmul %383, %367, %cst_80 {dimension_numbers = #tpu.dot_dimension_numbers<[1], [0], [0], [1], [0, 0, 1, 1], [], []>} : vector<8x8xbf16>, vector<8x16xbf16>, vector<8x16xf32> -> vector<8x16xf32>
    %385 = tpu.concatenate %364, %384 in 1 : vector<8x16xf32>, vector<8x16xf32> -> vector<8x32xf32>
    %386 = arith.truncf %385 : vector<8x32xf32> to vector<8x32xbf16>
    %cst_81 = arith.constant dense<0.000000e+00> : vector<8x32xf32>
    %387 = tpu.matmul %386, %305, %cst_81 {dimension_numbers = #tpu.dot_dimension_numbers<[1], [0], [0], [1], [0, 0, 1, 1], [], []>} : vector<8x32xbf16>, vector<32x32xbf16>, vector<8x32xf32> -> vector<8x32xf32>
    %388 = vector.broadcast %311 : vector<1x32xf32> to vector<8x32xf32>
    %389 = arith.addf %387, %388 : vector<8x32xf32>
    %390 = arith.addf %389, %339 : vector<8x32xf32>
    %cst_82 = arith.constant dense<0.000000e+00> : vector<8xf32>
    %391 = vector.multi_reduction <add>, %390, %cst_82 [1] : vector<8x32xf32> to vector<8xf32>
    %392 = vector.shape_cast %391 : vector<8xf32> to vector<8x1xf32>
    %cst_83 = arith.constant 3.200000e+01 : f32
    %393 = vector.broadcast %cst_83 : f32 to vector<8x1xf32>
    %394 = arith.divf %392, %393 : vector<8x1xf32>
    %395 = vector.broadcast %394 : vector<8x1xf32> to vector<8x32xf32>
    %396 = arith.subf %390, %395 : vector<8x32xf32>
    %397 = arith.mulf %396, %396 : vector<8x32xf32>
    %cst_84 = arith.constant dense<0.000000e+00> : vector<8xf32>
    %398 = vector.multi_reduction <add>, %397, %cst_84 [1] : vector<8x32xf32> to vector<8xf32>
    %399 = vector.shape_cast %398 : vector<8xf32> to vector<8x1xf32>
    %cst_85 = arith.constant 3.200000e+01 : f32
    %400 = vector.broadcast %cst_85 : f32 to vector<8x1xf32>
    %401 = arith.divf %399, %400 : vector<8x1xf32>
    %402 = vector.broadcast %394 : vector<8x1xf32> to vector<8x32xf32>
    %403 = arith.subf %390, %402 : vector<8x32xf32>
    %cst_86 = arith.constant 9.99999974E-6 : f32
    %404 = vector.broadcast %cst_86 : f32 to vector<8x1xf32>
    %405 = arith.addf %401, %404 : vector<8x1xf32>
    %406 = math.rsqrt %405 : vector<8x1xf32>
    %407 = vector.broadcast %406 : vector<8x1xf32> to vector<8x32xf32>
    %408 = arith.mulf %403, %407 : vector<8x32xf32>
    %409 = vector.broadcast %316 : vector<1x32xf32> to vector<8x32xf32>
    %410 = arith.mulf %408, %409 : vector<8x32xf32>
    %411 = vector.broadcast %317 : vector<1x32xf32> to vector<8x32xf32>
    %412 = arith.addf %410, %411 : vector<8x32xf32>
    %413 = arith.mulf %412, %6 : vector<8x32xf32>
    %414 = arith.truncf %413 : vector<8x32xf32> to vector<8x32xbf16>
    %cst_87 = arith.constant 0.000000e+00 : f32
    %415 = vector.broadcast %cst_87 : f32 to vector<8x64xf32>
    %416 = vector.broadcast %312 : vector<1x64xf32> to vector<8x64xf32>
    %417 = arith.addf %415, %416 : vector<8x64xf32>
    %cst_88 = arith.constant dense<0.000000e+00> : vector<8x32xf32>
    %418 = tpu.matmul %28, %414, %cst_88 {dimension_numbers = #tpu.dot_dimension_numbers<[1], [0], [0], [1], [0, 0, 1, 1], [], []>} : vector<8x8xbf16>, vector<8x32xbf16>, vector<8x32xf32> -> vector<8x32xf32>
    %419 = arith.truncf %418 : vector<8x32xf32> to vector<8x32xbf16>
    %420 = vector.extract_strided_slice %307 {offsets = [0, 0], sizes = [32, 64], strides = [1, 1]} : vector<288x64xbf16> to vector<32x64xbf16>
    %cst_89 = arith.constant dense<0.000000e+00> : vector<8x64xf32>
    %421 = tpu.matmul %419, %420, %cst_89 {dimension_numbers = #tpu.dot_dimension_numbers<[1], [0], [0], [1], [0, 0, 1, 1], [], []>} : vector<8x32xbf16>, vector<32x64xbf16>, vector<8x64xf32> -> vector<8x64xf32>
    %422 = arith.addf %417, %421 : vector<8x64xf32>
    %cst_90 = arith.constant dense<0.000000e+00> : vector<8x32xf32>
    %423 = tpu.matmul %34, %414, %cst_90 {dimension_numbers = #tpu.dot_dimension_numbers<[1], [0], [0], [1], [0, 0, 1, 1], [], []>} : vector<8x8xbf16>, vector<8x32xbf16>, vector<8x32xf32> -> vector<8x32xf32>
    %424 = arith.truncf %423 : vector<8x32xf32> to vector<8x32xbf16>
    %425 = vector.extract_strided_slice %307 {offsets = [32, 0], sizes = [32, 64], strides = [1, 1]} : vector<288x64xbf16> to vector<32x64xbf16>
    %cst_91 = arith.constant dense<0.000000e+00> : vector<8x64xf32>
    %426 = tpu.matmul %424, %425, %cst_91 {dimension_numbers = #tpu.dot_dimension_numbers<[1], [0], [0], [1], [0, 0, 1, 1], [], []>} : vector<8x32xbf16>, vector<32x64xbf16>, vector<8x64xf32> -> vector<8x64xf32>
    %427 = arith.addf %422, %426 : vector<8x64xf32>
    %cst_92 = arith.constant dense<0.000000e+00> : vector<8x32xf32>
    %428 = tpu.matmul %40, %414, %cst_92 {dimension_numbers = #tpu.dot_dimension_numbers<[1], [0], [0], [1], [0, 0, 1, 1], [], []>} : vector<8x8xbf16>, vector<8x32xbf16>, vector<8x32xf32> -> vector<8x32xf32>
    %429 = arith.truncf %428 : vector<8x32xf32> to vector<8x32xbf16>
    %430 = vector.extract_strided_slice %307 {offsets = [64, 0], sizes = [32, 64], strides = [1, 1]} : vector<288x64xbf16> to vector<32x64xbf16>
    %cst_93 = arith.constant dense<0.000000e+00> : vector<8x64xf32>
    %431 = tpu.matmul %429, %430, %cst_93 {dimension_numbers = #tpu.dot_dimension_numbers<[1], [0], [0], [1], [0, 0, 1, 1], [], []>} : vector<8x32xbf16>, vector<32x64xbf16>, vector<8x64xf32> -> vector<8x64xf32>
    %432 = arith.addf %427, %431 : vector<8x64xf32>
    %cst_94 = arith.constant dense<0.000000e+00> : vector<8x32xf32>
    %433 = tpu.matmul %46, %414, %cst_94 {dimension_numbers = #tpu.dot_dimension_numbers<[1], [0], [0], [1], [0, 0, 1, 1], [], []>} : vector<8x8xbf16>, vector<8x32xbf16>, vector<8x32xf32> -> vector<8x32xf32>
    %434 = arith.truncf %433 : vector<8x32xf32> to vector<8x32xbf16>
    %435 = vector.extract_strided_slice %307 {offsets = [96, 0], sizes = [32, 64], strides = [1, 1]} : vector<288x64xbf16> to vector<32x64xbf16>
    %cst_95 = arith.constant dense<0.000000e+00> : vector<8x64xf32>
    %436 = tpu.matmul %434, %435, %cst_95 {dimension_numbers = #tpu.dot_dimension_numbers<[1], [0], [0], [1], [0, 0, 1, 1], [], []>} : vector<8x32xbf16>, vector<32x64xbf16>, vector<8x64xf32> -> vector<8x64xf32>
    %437 = arith.addf %432, %436 : vector<8x64xf32>
    %cst_96 = arith.constant dense<0.000000e+00> : vector<8x32xf32>
    %438 = tpu.matmul %52, %414, %cst_96 {dimension_numbers = #tpu.dot_dimension_numbers<[1], [0], [0], [1], [0, 0, 1, 1], [], []>} : vector<8x8xbf16>, vector<8x32xbf16>, vector<8x32xf32> -> vector<8x32xf32>
    %439 = arith.truncf %438 : vector<8x32xf32> to vector<8x32xbf16>
    %440 = vector.extract_strided_slice %307 {offsets = [128, 0], sizes = [32, 64], strides = [1, 1]} : vector<288x64xbf16> to vector<32x64xbf16>
    %cst_97 = arith.constant dense<0.000000e+00> : vector<8x64xf32>
    %441 = tpu.matmul %439, %440, %cst_97 {dimension_numbers = #tpu.dot_dimension_numbers<[1], [0], [0], [1], [0, 0, 1, 1], [], []>} : vector<8x32xbf16>, vector<32x64xbf16>, vector<8x64xf32> -> vector<8x64xf32>
    %442 = arith.addf %437, %441 : vector<8x64xf32>
    %cst_98 = arith.constant dense<0.000000e+00> : vector<8x32xf32>
    %443 = tpu.matmul %58, %414, %cst_98 {dimension_numbers = #tpu.dot_dimension_numbers<[1], [0], [0], [1], [0, 0, 1, 1], [], []>} : vector<8x8xbf16>, vector<8x32xbf16>, vector<8x32xf32> -> vector<8x32xf32>
    %444 = arith.truncf %443 : vector<8x32xf32> to vector<8x32xbf16>
    %445 = vector.extract_strided_slice %307 {offsets = [160, 0], sizes = [32, 64], strides = [1, 1]} : vector<288x64xbf16> to vector<32x64xbf16>
    %cst_99 = arith.constant dense<0.000000e+00> : vector<8x64xf32>
    %446 = tpu.matmul %444, %445, %cst_99 {dimension_numbers = #tpu.dot_dimension_numbers<[1], [0], [0], [1], [0, 0, 1, 1], [], []>} : vector<8x32xbf16>, vector<32x64xbf16>, vector<8x64xf32> -> vector<8x64xf32>
    %447 = arith.addf %442, %446 : vector<8x64xf32>
    %cst_100 = arith.constant dense<0.000000e+00> : vector<8x32xf32>
    %448 = tpu.matmul %64, %414, %cst_100 {dimension_numbers = #tpu.dot_dimension_numbers<[1], [0], [0], [1], [0, 0, 1, 1], [], []>} : vector<8x8xbf16>, vector<8x32xbf16>, vector<8x32xf32> -> vector<8x32xf32>
    %449 = arith.truncf %448 : vector<8x32xf32> to vector<8x32xbf16>
    %450 = vector.extract_strided_slice %307 {offsets = [192, 0], sizes = [32, 64], strides = [1, 1]} : vector<288x64xbf16> to vector<32x64xbf16>
    %cst_101 = arith.constant dense<0.000000e+00> : vector<8x64xf32>
    %451 = tpu.matmul %449, %450, %cst_101 {dimension_numbers = #tpu.dot_dimension_numbers<[1], [0], [0], [1], [0, 0, 1, 1], [], []>} : vector<8x32xbf16>, vector<32x64xbf16>, vector<8x64xf32> -> vector<8x64xf32>
    %452 = arith.addf %447, %451 : vector<8x64xf32>
    %cst_102 = arith.constant dense<0.000000e+00> : vector<8x32xf32>
    %453 = tpu.matmul %70, %414, %cst_102 {dimension_numbers = #tpu.dot_dimension_numbers<[1], [0], [0], [1], [0, 0, 1, 1], [], []>} : vector<8x8xbf16>, vector<8x32xbf16>, vector<8x32xf32> -> vector<8x32xf32>
    %454 = arith.truncf %453 : vector<8x32xf32> to vector<8x32xbf16>
    %455 = vector.extract_strided_slice %307 {offsets = [224, 0], sizes = [32, 64], strides = [1, 1]} : vector<288x64xbf16> to vector<32x64xbf16>
    %cst_103 = arith.constant dense<0.000000e+00> : vector<8x64xf32>
    %456 = tpu.matmul %454, %455, %cst_103 {dimension_numbers = #tpu.dot_dimension_numbers<[1], [0], [0], [1], [0, 0, 1, 1], [], []>} : vector<8x32xbf16>, vector<32x64xbf16>, vector<8x64xf32> -> vector<8x64xf32>
    %457 = arith.addf %452, %456 : vector<8x64xf32>
    %cst_104 = arith.constant dense<0.000000e+00> : vector<8x32xf32>
    %458 = tpu.matmul %76, %414, %cst_104 {dimension_numbers = #tpu.dot_dimension_numbers<[1], [0], [0], [1], [0, 0, 1, 1], [], []>} : vector<8x8xbf16>, vector<8x32xbf16>, vector<8x32xf32> -> vector<8x32xf32>
    %459 = arith.truncf %458 : vector<8x32xf32> to vector<8x32xbf16>
    %460 = vector.extract_strided_slice %307 {offsets = [256, 0], sizes = [32, 64], strides = [1, 1]} : vector<288x64xbf16> to vector<32x64xbf16>
    %cst_105 = arith.constant dense<0.000000e+00> : vector<8x64xf32>
    %461 = tpu.matmul %459, %460, %cst_105 {dimension_numbers = #tpu.dot_dimension_numbers<[1], [0], [0], [1], [0, 0, 1, 1], [], []>} : vector<8x32xbf16>, vector<32x64xbf16>, vector<8x64xf32> -> vector<8x64xf32>
    %462 = arith.addf %457, %461 : vector<8x64xf32>
    %cst_106 = arith.constant 0.000000e+00 : f32
    %463 = vector.broadcast %cst_106 : f32 to vector<8x64xf32>
    %464 = arith.maximumf %462, %463 : vector<8x64xf32>
    %465 = arith.truncf %464 : vector<8x64xf32> to vector<8x64xbf16>
    %cst_107 = arith.constant dense<0.000000e+00> : vector<8x32xf32>
    %466 = tpu.matmul %465, %309, %cst_107 {dimension_numbers = #tpu.dot_dimension_numbers<[1], [0], [0], [1], [0, 0, 1, 1], [], []>} : vector<8x64xbf16>, vector<64x32xbf16>, vector<8x32xf32> -> vector<8x32xf32>
    %467 = vector.broadcast %313 : vector<1x32xf32> to vector<8x32xf32>
    %468 = arith.addf %466, %467 : vector<8x32xf32>
    %469 = arith.addf %468, %413 : vector<8x32xf32>
    %470 = arith.mulf %469, %6 : vector<8x32xf32>
    %471 = arith.truncf %470 : vector<8x32xf32> to vector<8x32xbf16>
    %472 = vector.extract_strided_slice %6 {offsets = [0, 0], sizes = [8, 1], strides = [1, 1]} : vector<8x32xf32> to vector<8x1xf32>
    %473 = vector.extract_strided_slice %2 {offsets = [5, 0, 0], sizes = [1, 32, 16], strides = [1, 1, 1]} : vector<6x32x128xbf16> to vector<1x32x16xbf16>
    %474 = vector.shape_cast %473 : vector<1x32x16xbf16> to vector<32x16xbf16>
    %475 = vector.extract_strided_slice %4 {offsets = [33, 0], sizes = [1, 16], strides = [1, 1]} : vector<42x128xf32> to vector<1x16xf32>
    %476 = vector.extract_strided_slice %4 {offsets = [34, 0], sizes = [1, 16], strides = [1, 1]} : vector<42x128xf32> to vector<1x16xf32>
    %477 = vector.extract_strided_slice %4 {offsets = [35, 0], sizes = [1, 1], strides = [1, 1]} : vector<42x128xf32> to vector<1x1xf32>
    %cst_108 = arith.constant dense<0.000000e+00> : vector<8x16xf32>
    %478 = tpu.matmul %471, %474, %cst_108 {dimension_numbers = #tpu.dot_dimension_numbers<[1], [0], [0], [1], [0, 0, 1, 1], [], []>} : vector<8x32xbf16>, vector<32x16xbf16>, vector<8x16xf32> -> vector<8x16xf32>
    %479 = vector.broadcast %476 : vector<1x16xf32> to vector<8x16xf32>
    %480 = arith.addf %478, %479 : vector<8x16xf32>
    %cst_109 = arith.constant 0.000000e+00 : f32
    %481 = vector.broadcast %cst_109 : f32 to vector<8x16xf32>
    %482 = arith.maximumf %480, %481 : vector<8x16xf32>
    %483 = vector.broadcast %475 : vector<1x16xf32> to vector<8x16xf32>
    %484 = arith.mulf %482, %483 : vector<8x16xf32>
    %cst_110 = arith.constant dense<0.000000e+00> : vector<8xf32>
    %485 = vector.multi_reduction <add>, %484, %cst_110 [1] : vector<8x16xf32> to vector<8xf32>
    %486 = vector.shape_cast %485 : vector<8xf32> to vector<8x1xf32>
    %487 = vector.broadcast %477 : vector<1x1xf32> to vector<8x1xf32>
    %488 = arith.addf %486, %487 : vector<8x1xf32>
    %489 = arith.mulf %488, %472 : vector<8x1xf32>
    %490 = tpu.iota {dimensions = array<i32: 0>} : vector<16x8xi32>
    %491 = arith.sitofp %490 : vector<16x8xi32> to vector<16x8xf32>
    %492 = vector.broadcast %12 : vector<1x8xf32> to vector<16x8xf32>
    %493 = arith.cmpf oge, %491, %492 : vector<16x8xf32>
    %494 = vector.broadcast %11 : vector<1x8xf32> to vector<16x8xf32>
    %495 = arith.cmpf olt, %491, %494 : vector<16x8xf32>
    %496 = arith.andi %493, %495 : vector<16x8xi1>
    %497 = arith.extui %496 : vector<16x8xi1> to vector<16x8xi32>
    %498 = arith.sitofp %497 : vector<16x8xi32> to vector<16x8xf32>
    %499 = arith.truncf %498 : vector<16x8xf32> to vector<16x8xbf16>
    %cst_111 = arith.constant dense<0.000000e+00> : vector<16x32xf32>
    %500 = tpu.matmul %499, %471, %cst_111 {dimension_numbers = #tpu.dot_dimension_numbers<[1], [0], [0], [1], [0, 0, 1, 1], [], []>} : vector<16x8xbf16>, vector<8x32xbf16>, vector<16x32xf32> -> vector<16x32xf32>
    %501 = arith.truncf %500 : vector<16x32xf32> to vector<16x32xbf16>
    %502 = vector.extract_strided_slice %8 {offsets = [0, 0], sizes = [16, 1], strides = [1, 1]} : vector<16x32xf32> to vector<16x1xf32>
    %503 = vector.extract_strided_slice %2 {offsets = [5, 0, 16], sizes = [1, 32, 16], strides = [1, 1, 1]} : vector<6x32x128xbf16> to vector<1x32x16xbf16>
    %504 = vector.shape_cast %503 : vector<1x32x16xbf16> to vector<32x16xbf16>
    %505 = vector.extract_strided_slice %4 {offsets = [36, 0], sizes = [1, 16], strides = [1, 1]} : vector<42x128xf32> to vector<1x16xf32>
    %506 = vector.extract_strided_slice %4 {offsets = [37, 0], sizes = [1, 16], strides = [1, 1]} : vector<42x128xf32> to vector<1x16xf32>
    %507 = vector.extract_strided_slice %4 {offsets = [38, 0], sizes = [1, 1], strides = [1, 1]} : vector<42x128xf32> to vector<1x1xf32>
    %cst_112 = arith.constant dense<0.000000e+00> : vector<16x16xf32>
    %508 = tpu.matmul %501, %504, %cst_112 {dimension_numbers = #tpu.dot_dimension_numbers<[1], [0], [0], [1], [0, 0, 1, 1], [], []>} : vector<16x32xbf16>, vector<32x16xbf16>, vector<16x16xf32> -> vector<16x16xf32>
    %509 = vector.broadcast %506 : vector<1x16xf32> to vector<16x16xf32>
    %510 = arith.addf %508, %509 : vector<16x16xf32>
    %cst_113 = arith.constant 0.000000e+00 : f32
    %511 = vector.broadcast %cst_113 : f32 to vector<16x16xf32>
    %512 = arith.maximumf %510, %511 : vector<16x16xf32>
    %513 = vector.broadcast %505 : vector<1x16xf32> to vector<16x16xf32>
    %514 = arith.mulf %512, %513 : vector<16x16xf32>
    %cst_114 = arith.constant dense<0.000000e+00> : vector<16xf32>
    %515 = vector.multi_reduction <add>, %514, %cst_114 [1] : vector<16x16xf32> to vector<16xf32>
    %516 = vector.shape_cast %515 : vector<16xf32> to vector<16x1xf32>
    %517 = vector.broadcast %507 : vector<1x1xf32> to vector<16x1xf32>
    %518 = arith.addf %516, %517 : vector<16x1xf32>
    %519 = arith.mulf %518, %502 : vector<16x1xf32>
    %520 = vector.extract_strided_slice %8 {offsets = [0, 0], sizes = [16, 1], strides = [1, 1]} : vector<16x32xf32> to vector<16x1xf32>
    %521 = vector.extract_strided_slice %2 {offsets = [5, 0, 32], sizes = [1, 32, 16], strides = [1, 1, 1]} : vector<6x32x128xbf16> to vector<1x32x16xbf16>
    %522 = vector.shape_cast %521 : vector<1x32x16xbf16> to vector<32x16xbf16>
    %523 = vector.extract_strided_slice %4 {offsets = [39, 0], sizes = [1, 16], strides = [1, 1]} : vector<42x128xf32> to vector<1x16xf32>
    %524 = vector.extract_strided_slice %4 {offsets = [40, 0], sizes = [1, 16], strides = [1, 1]} : vector<42x128xf32> to vector<1x16xf32>
    %525 = vector.extract_strided_slice %4 {offsets = [41, 0], sizes = [1, 1], strides = [1, 1]} : vector<42x128xf32> to vector<1x1xf32>
    %cst_115 = arith.constant dense<0.000000e+00> : vector<16x16xf32>
    %526 = tpu.matmul %501, %522, %cst_115 {dimension_numbers = #tpu.dot_dimension_numbers<[1], [0], [0], [1], [0, 0, 1, 1], [], []>} : vector<16x32xbf16>, vector<32x16xbf16>, vector<16x16xf32> -> vector<16x16xf32>
    %527 = vector.broadcast %524 : vector<1x16xf32> to vector<16x16xf32>
    %528 = arith.addf %526, %527 : vector<16x16xf32>
    %cst_116 = arith.constant 0.000000e+00 : f32
    %529 = vector.broadcast %cst_116 : f32 to vector<16x16xf32>
    %530 = arith.maximumf %528, %529 : vector<16x16xf32>
    %531 = vector.broadcast %523 : vector<1x16xf32> to vector<16x16xf32>
    %532 = arith.mulf %530, %531 : vector<16x16xf32>
    %cst_117 = arith.constant dense<0.000000e+00> : vector<16xf32>
    %533 = vector.multi_reduction <add>, %532, %cst_117 [1] : vector<16x16xf32> to vector<16xf32>
    %534 = vector.shape_cast %533 : vector<16xf32> to vector<16x1xf32>
    %535 = vector.broadcast %525 : vector<1x1xf32> to vector<16x1xf32>
    %536 = arith.addf %534, %535 : vector<16x1xf32>
    %537 = arith.mulf %536, %520 : vector<16x1xf32>
    %538 = arith.addf %500, %7 : vector<16x32xf32>
    %539 = vector.extract_strided_slice %2 {offsets = [2, 0, 0], sizes = [1, 32, 96], strides = [1, 1, 1]} : vector<6x32x128xbf16> to vector<1x32x96xbf16>
    %540 = vector.shape_cast %539 : vector<1x32x96xbf16> to vector<32x96xbf16>
    %541 = vector.extract_strided_slice %2 {offsets = [2, 0, 96], sizes = [1, 32, 32], strides = [1, 1, 1]} : vector<6x32x128xbf16> to vector<1x32x32xbf16>
    %542 = vector.shape_cast %541 : vector<1x32x32xbf16> to vector<32x32xbf16>
    %543 = vector.extract_strided_slice %3 {offsets = [2, 0, 0], sizes = [1, 288, 64], strides = [1, 1, 1]} : vector<4x352x64xbf16> to vector<1x288x64xbf16>
    %544 = vector.shape_cast %543 : vector<1x288x64xbf16> to vector<288x64xbf16>
    %545 = vector.extract_strided_slice %3 {offsets = [2, 288, 0], sizes = [1, 64, 32], strides = [1, 1, 1]} : vector<4x352x64xbf16> to vector<1x64x32xbf16>
    %546 = vector.shape_cast %545 : vector<1x64x32xbf16> to vector<64x32xbf16>
    %547 = vector.extract_strided_slice %4 {offsets = [16, 0], sizes = [1, 96], strides = [1, 1]} : vector<42x128xf32> to vector<1x96xf32>
    %548 = vector.extract_strided_slice %4 {offsets = [17, 0], sizes = [1, 32], strides = [1, 1]} : vector<42x128xf32> to vector<1x32xf32>
    %549 = vector.extract_strided_slice %4 {offsets = [18, 0], sizes = [1, 64], strides = [1, 1]} : vector<42x128xf32> to vector<1x64xf32>
    %550 = vector.extract_strided_slice %4 {offsets = [19, 0], sizes = [1, 32], strides = [1, 1]} : vector<42x128xf32> to vector<1x32xf32>
    %551 = vector.extract_strided_slice %4 {offsets = [20, 0], sizes = [1, 32], strides = [1, 1]} : vector<42x128xf32> to vector<1x32xf32>
    %552 = vector.extract_strided_slice %4 {offsets = [21, 0], sizes = [1, 32], strides = [1, 1]} : vector<42x128xf32> to vector<1x32xf32>
    %553 = vector.extract_strided_slice %4 {offsets = [22, 0], sizes = [1, 32], strides = [1, 1]} : vector<42x128xf32> to vector<1x32xf32>
    %554 = vector.extract_strided_slice %4 {offsets = [23, 0], sizes = [1, 32], strides = [1, 1]} : vector<42x128xf32> to vector<1x32xf32>
    %cst_118 = arith.constant dense<0.000000e+00> : vector<16xf32>
    %555 = vector.multi_reduction <add>, %538, %cst_118 [1] : vector<16x32xf32> to vector<16xf32>
    %556 = vector.shape_cast %555 : vector<16xf32> to vector<16x1xf32>
    %cst_119 = arith.constant 3.200000e+01 : f32
    %557 = vector.broadcast %cst_119 : f32 to vector<16x1xf32>
    %558 = arith.divf %556, %557 : vector<16x1xf32>
    %559 = vector.broadcast %558 : vector<16x1xf32> to vector<16x32xf32>
    %560 = arith.subf %538, %559 : vector<16x32xf32>
    %561 = arith.mulf %560, %560 : vector<16x32xf32>
    %cst_120 = arith.constant dense<0.000000e+00> : vector<16xf32>
    %562 = vector.multi_reduction <add>, %561, %cst_120 [1] : vector<16x32xf32> to vector<16xf32>
    %563 = vector.shape_cast %562 : vector<16xf32> to vector<16x1xf32>
    %cst_121 = arith.constant 3.200000e+01 : f32
    %564 = vector.broadcast %cst_121 : f32 to vector<16x1xf32>
    %565 = arith.divf %563, %564 : vector<16x1xf32>
    %566 = vector.broadcast %558 : vector<16x1xf32> to vector<16x32xf32>
    %567 = arith.subf %538, %566 : vector<16x32xf32>
    %cst_122 = arith.constant 9.99999974E-6 : f32
    %568 = vector.broadcast %cst_122 : f32 to vector<16x1xf32>
    %569 = arith.addf %565, %568 : vector<16x1xf32>
    %570 = math.rsqrt %569 : vector<16x1xf32>
    %571 = vector.broadcast %570 : vector<16x1xf32> to vector<16x32xf32>
    %572 = arith.mulf %567, %571 : vector<16x32xf32>
    %573 = vector.broadcast %551 : vector<1x32xf32> to vector<16x32xf32>
    %574 = arith.mulf %572, %573 : vector<16x32xf32>
    %575 = vector.broadcast %552 : vector<1x32xf32> to vector<16x32xf32>
    %576 = arith.addf %574, %575 : vector<16x32xf32>
    %577 = arith.truncf %576 : vector<16x32xf32> to vector<16x32xbf16>
    %cst_123 = arith.constant dense<0.000000e+00> : vector<16x96xf32>
    %578 = tpu.matmul %577, %540, %cst_123 {dimension_numbers = #tpu.dot_dimension_numbers<[1], [0], [0], [1], [0, 0, 1, 1], [], []>} : vector<16x32xbf16>, vector<32x96xbf16>, vector<16x96xf32> -> vector<16x96xf32>
    %579 = vector.broadcast %547 : vector<1x96xf32> to vector<16x96xf32>
    %580 = arith.addf %578, %579 : vector<16x96xf32>
    %581 = arith.truncf %580 : vector<16x96xf32> to vector<16x96xbf16>
    %582 = vector.extract_strided_slice %581 {offsets = [0, 0], sizes = [16, 16], strides = [1, 1]} : vector<16x96xbf16> to vector<16x16xbf16>
    %583 = vector.extract_strided_slice %581 {offsets = [0, 32], sizes = [16, 16], strides = [1, 1]} : vector<16x96xbf16> to vector<16x16xbf16>
    %584 = vector.extract_strided_slice %581 {offsets = [0, 64], sizes = [16, 16], strides = [1, 1]} : vector<16x96xbf16> to vector<16x16xbf16>
    %cst_124 = arith.constant dense<0.000000e+00> : vector<16x16xf32>
    %585 = tpu.matmul %582, %583, %cst_124 {dimension_numbers = #tpu.dot_dimension_numbers<[1], [1], [0], [0], [0, 0, 1, 0], [], []>} : vector<16x16xbf16>, vector<16x16xbf16>, vector<16x16xf32> -> vector<16x16xf32>
    %cst_125 = arith.constant 2.500000e-01 : f32
    %586 = vector.broadcast %cst_125 : f32 to vector<16x16xf32>
    %587 = arith.mulf %585, %586 : vector<16x16xf32>
    %588 = vector.broadcast %20 : vector<1x16xf32> to vector<16x16xf32>
    %589 = arith.addf %587, %588 : vector<16x16xf32>
    %cst_126 = arith.constant dense<0xFF800000> : vector<16xf32>
    %590 = vector.multi_reduction <maximumf>, %589, %cst_126 [1] : vector<16x16xf32> to vector<16xf32>
    %591 = vector.shape_cast %590 : vector<16xf32> to vector<16x1xf32>
    %592 = vector.broadcast %591 : vector<16x1xf32> to vector<16x16xf32>
    %593 = arith.subf %589, %592 : vector<16x16xf32>
    %594 = math.exp %593 : vector<16x16xf32>
    %cst_127 = arith.constant dense<0.000000e+00> : vector<16xf32>
    %595 = vector.multi_reduction <add>, %594, %cst_127 [1] : vector<16x16xf32> to vector<16xf32>
    %596 = vector.shape_cast %595 : vector<16xf32> to vector<16x1xf32>
    %597 = tpu.reciprocal %596 {approx = true} : vector<16x1xf32> -> vector<16x1xf32>
    %598 = vector.broadcast %597 : vector<16x1xf32> to vector<16x16xf32>
    %599 = arith.mulf %594, %598 : vector<16x16xf32>
    %600 = arith.truncf %599 : vector<16x16xf32> to vector<16x16xbf16>
    %cst_128 = arith.constant dense<0.000000e+00> : vector<16x16xf32>
    %601 = tpu.matmul %600, %584, %cst_128 {dimension_numbers = #tpu.dot_dimension_numbers<[1], [0], [0], [1], [0, 0, 1, 1], [], []>} : vector<16x16xbf16>, vector<16x16xbf16>, vector<16x16xf32> -> vector<16x16xf32>
    %602 = vector.extract_strided_slice %581 {offsets = [0, 16], sizes = [16, 16], strides = [1, 1]} : vector<16x96xbf16> to vector<16x16xbf16>
    %603 = vector.extract_strided_slice %581 {offsets = [0, 48], sizes = [16, 16], strides = [1, 1]} : vector<16x96xbf16> to vector<16x16xbf16>
    %604 = vector.extract_strided_slice %581 {offsets = [0, 80], sizes = [16, 16], strides = [1, 1]} : vector<16x96xbf16> to vector<16x16xbf16>
    %cst_129 = arith.constant dense<0.000000e+00> : vector<16x16xf32>
    %605 = tpu.matmul %602, %603, %cst_129 {dimension_numbers = #tpu.dot_dimension_numbers<[1], [1], [0], [0], [0, 0, 1, 0], [], []>} : vector<16x16xbf16>, vector<16x16xbf16>, vector<16x16xf32> -> vector<16x16xf32>
    %cst_130 = arith.constant 2.500000e-01 : f32
    %606 = vector.broadcast %cst_130 : f32 to vector<16x16xf32>
    %607 = arith.mulf %605, %606 : vector<16x16xf32>
    %608 = vector.broadcast %20 : vector<1x16xf32> to vector<16x16xf32>
    %609 = arith.addf %607, %608 : vector<16x16xf32>
    %cst_131 = arith.constant dense<0xFF800000> : vector<16xf32>
    %610 = vector.multi_reduction <maximumf>, %609, %cst_131 [1] : vector<16x16xf32> to vector<16xf32>
    %611 = vector.shape_cast %610 : vector<16xf32> to vector<16x1xf32>
    %612 = vector.broadcast %611 : vector<16x1xf32> to vector<16x16xf32>
    %613 = arith.subf %609, %612 : vector<16x16xf32>
    %614 = math.exp %613 : vector<16x16xf32>
    %cst_132 = arith.constant dense<0.000000e+00> : vector<16xf32>
    %615 = vector.multi_reduction <add>, %614, %cst_132 [1] : vector<16x16xf32> to vector<16xf32>
    %616 = vector.shape_cast %615 : vector<16xf32> to vector<16x1xf32>
    %617 = tpu.reciprocal %616 {approx = true} : vector<16x1xf32> -> vector<16x1xf32>
    %618 = vector.broadcast %617 : vector<16x1xf32> to vector<16x16xf32>
    %619 = arith.mulf %614, %618 : vector<16x16xf32>
    %620 = arith.truncf %619 : vector<16x16xf32> to vector<16x16xbf16>
    %cst_133 = arith.constant dense<0.000000e+00> : vector<16x16xf32>
    %621 = tpu.matmul %620, %604, %cst_133 {dimension_numbers = #tpu.dot_dimension_numbers<[1], [0], [0], [1], [0, 0, 1, 1], [], []>} : vector<16x16xbf16>, vector<16x16xbf16>, vector<16x16xf32> -> vector<16x16xf32>
    %622 = tpu.concatenate %601, %621 in 1 : vector<16x16xf32>, vector<16x16xf32> -> vector<16x32xf32>
    %623 = arith.truncf %622 : vector<16x32xf32> to vector<16x32xbf16>
    %cst_134 = arith.constant dense<0.000000e+00> : vector<16x32xf32>
    %624 = tpu.matmul %623, %542, %cst_134 {dimension_numbers = #tpu.dot_dimension_numbers<[1], [0], [0], [1], [0, 0, 1, 1], [], []>} : vector<16x32xbf16>, vector<32x32xbf16>, vector<16x32xf32> -> vector<16x32xf32>
    %625 = vector.broadcast %548 : vector<1x32xf32> to vector<16x32xf32>
    %626 = arith.addf %624, %625 : vector<16x32xf32>
    %627 = arith.addf %626, %576 : vector<16x32xf32>
    %cst_135 = arith.constant dense<0.000000e+00> : vector<16xf32>
    %628 = vector.multi_reduction <add>, %627, %cst_135 [1] : vector<16x32xf32> to vector<16xf32>
    %629 = vector.shape_cast %628 : vector<16xf32> to vector<16x1xf32>
    %cst_136 = arith.constant 3.200000e+01 : f32
    %630 = vector.broadcast %cst_136 : f32 to vector<16x1xf32>
    %631 = arith.divf %629, %630 : vector<16x1xf32>
    %632 = vector.broadcast %631 : vector<16x1xf32> to vector<16x32xf32>
    %633 = arith.subf %627, %632 : vector<16x32xf32>
    %634 = arith.mulf %633, %633 : vector<16x32xf32>
    %cst_137 = arith.constant dense<0.000000e+00> : vector<16xf32>
    %635 = vector.multi_reduction <add>, %634, %cst_137 [1] : vector<16x32xf32> to vector<16xf32>
    %636 = vector.shape_cast %635 : vector<16xf32> to vector<16x1xf32>
    %cst_138 = arith.constant 3.200000e+01 : f32
    %637 = vector.broadcast %cst_138 : f32 to vector<16x1xf32>
    %638 = arith.divf %636, %637 : vector<16x1xf32>
    %639 = vector.broadcast %631 : vector<16x1xf32> to vector<16x32xf32>
    %640 = arith.subf %627, %639 : vector<16x32xf32>
    %cst_139 = arith.constant 9.99999974E-6 : f32
    %641 = vector.broadcast %cst_139 : f32 to vector<16x1xf32>
    %642 = arith.addf %638, %641 : vector<16x1xf32>
    %643 = math.rsqrt %642 : vector<16x1xf32>
    %644 = vector.broadcast %643 : vector<16x1xf32> to vector<16x32xf32>
    %645 = arith.mulf %640, %644 : vector<16x32xf32>
    %646 = vector.broadcast %553 : vector<1x32xf32> to vector<16x32xf32>
    %647 = arith.mulf %645, %646 : vector<16x32xf32>
    %648 = vector.broadcast %554 : vector<1x32xf32> to vector<16x32xf32>
    %649 = arith.addf %647, %648 : vector<16x32xf32>
    %650 = arith.mulf %649, %8 : vector<16x32xf32>
    %651 = arith.truncf %650 : vector<16x32xf32> to vector<16x32xbf16>
    %cst_140 = arith.constant 0.000000e+00 : f32
    %652 = vector.broadcast %cst_140 : f32 to vector<16x64xf32>
    %653 = vector.broadcast %549 : vector<1x64xf32> to vector<16x64xf32>
    %654 = arith.addf %652, %653 : vector<16x64xf32>
    %cst_141 = arith.constant dense<0.000000e+00> : vector<16x32xf32>
    %655 = tpu.matmul %84, %651, %cst_141 {dimension_numbers = #tpu.dot_dimension_numbers<[1], [0], [0], [1], [0, 0, 1, 1], [], []>} : vector<16x16xbf16>, vector<16x32xbf16>, vector<16x32xf32> -> vector<16x32xf32>
    %656 = arith.truncf %655 : vector<16x32xf32> to vector<16x32xbf16>
    %657 = vector.extract_strided_slice %544 {offsets = [0, 0], sizes = [32, 64], strides = [1, 1]} : vector<288x64xbf16> to vector<32x64xbf16>
    %cst_142 = arith.constant dense<0.000000e+00> : vector<16x64xf32>
    %658 = tpu.matmul %656, %657, %cst_142 {dimension_numbers = #tpu.dot_dimension_numbers<[1], [0], [0], [1], [0, 0, 1, 1], [], []>} : vector<16x32xbf16>, vector<32x64xbf16>, vector<16x64xf32> -> vector<16x64xf32>
    %659 = arith.addf %654, %658 : vector<16x64xf32>
    %cst_143 = arith.constant dense<0.000000e+00> : vector<16x32xf32>
    %660 = tpu.matmul %90, %651, %cst_143 {dimension_numbers = #tpu.dot_dimension_numbers<[1], [0], [0], [1], [0, 0, 1, 1], [], []>} : vector<16x16xbf16>, vector<16x32xbf16>, vector<16x32xf32> -> vector<16x32xf32>
    %661 = arith.truncf %660 : vector<16x32xf32> to vector<16x32xbf16>
    %662 = vector.extract_strided_slice %544 {offsets = [32, 0], sizes = [32, 64], strides = [1, 1]} : vector<288x64xbf16> to vector<32x64xbf16>
    %cst_144 = arith.constant dense<0.000000e+00> : vector<16x64xf32>
    %663 = tpu.matmul %661, %662, %cst_144 {dimension_numbers = #tpu.dot_dimension_numbers<[1], [0], [0], [1], [0, 0, 1, 1], [], []>} : vector<16x32xbf16>, vector<32x64xbf16>, vector<16x64xf32> -> vector<16x64xf32>
    %664 = arith.addf %659, %663 : vector<16x64xf32>
    %cst_145 = arith.constant dense<0.000000e+00> : vector<16x32xf32>
    %665 = tpu.matmul %96, %651, %cst_145 {dimension_numbers = #tpu.dot_dimension_numbers<[1], [0], [0], [1], [0, 0, 1, 1], [], []>} : vector<16x16xbf16>, vector<16x32xbf16>, vector<16x32xf32> -> vector<16x32xf32>
    %666 = arith.truncf %665 : vector<16x32xf32> to vector<16x32xbf16>
    %667 = vector.extract_strided_slice %544 {offsets = [64, 0], sizes = [32, 64], strides = [1, 1]} : vector<288x64xbf16> to vector<32x64xbf16>
    %cst_146 = arith.constant dense<0.000000e+00> : vector<16x64xf32>
    %668 = tpu.matmul %666, %667, %cst_146 {dimension_numbers = #tpu.dot_dimension_numbers<[1], [0], [0], [1], [0, 0, 1, 1], [], []>} : vector<16x32xbf16>, vector<32x64xbf16>, vector<16x64xf32> -> vector<16x64xf32>
    %669 = arith.addf %664, %668 : vector<16x64xf32>
    %cst_147 = arith.constant dense<0.000000e+00> : vector<16x32xf32>
    %670 = tpu.matmul %102, %651, %cst_147 {dimension_numbers = #tpu.dot_dimension_numbers<[1], [0], [0], [1], [0, 0, 1, 1], [], []>} : vector<16x16xbf16>, vector<16x32xbf16>, vector<16x32xf32> -> vector<16x32xf32>
    %671 = arith.truncf %670 : vector<16x32xf32> to vector<16x32xbf16>
    %672 = vector.extract_strided_slice %544 {offsets = [96, 0], sizes = [32, 64], strides = [1, 1]} : vector<288x64xbf16> to vector<32x64xbf16>
    %cst_148 = arith.constant dense<0.000000e+00> : vector<16x64xf32>
    %673 = tpu.matmul %671, %672, %cst_148 {dimension_numbers = #tpu.dot_dimension_numbers<[1], [0], [0], [1], [0, 0, 1, 1], [], []>} : vector<16x32xbf16>, vector<32x64xbf16>, vector<16x64xf32> -> vector<16x64xf32>
    %674 = arith.addf %669, %673 : vector<16x64xf32>
    %cst_149 = arith.constant dense<0.000000e+00> : vector<16x32xf32>
    %675 = tpu.matmul %108, %651, %cst_149 {dimension_numbers = #tpu.dot_dimension_numbers<[1], [0], [0], [1], [0, 0, 1, 1], [], []>} : vector<16x16xbf16>, vector<16x32xbf16>, vector<16x32xf32> -> vector<16x32xf32>
    %676 = arith.truncf %675 : vector<16x32xf32> to vector<16x32xbf16>
    %677 = vector.extract_strided_slice %544 {offsets = [128, 0], sizes = [32, 64], strides = [1, 1]} : vector<288x64xbf16> to vector<32x64xbf16>
    %cst_150 = arith.constant dense<0.000000e+00> : vector<16x64xf32>
    %678 = tpu.matmul %676, %677, %cst_150 {dimension_numbers = #tpu.dot_dimension_numbers<[1], [0], [0], [1], [0, 0, 1, 1], [], []>} : vector<16x32xbf16>, vector<32x64xbf16>, vector<16x64xf32> -> vector<16x64xf32>
    %679 = arith.addf %674, %678 : vector<16x64xf32>
    %cst_151 = arith.constant dense<0.000000e+00> : vector<16x32xf32>
    %680 = tpu.matmul %114, %651, %cst_151 {dimension_numbers = #tpu.dot_dimension_numbers<[1], [0], [0], [1], [0, 0, 1, 1], [], []>} : vector<16x16xbf16>, vector<16x32xbf16>, vector<16x32xf32> -> vector<16x32xf32>
    %681 = arith.truncf %680 : vector<16x32xf32> to vector<16x32xbf16>
    %682 = vector.extract_strided_slice %544 {offsets = [160, 0], sizes = [32, 64], strides = [1, 1]} : vector<288x64xbf16> to vector<32x64xbf16>
    %cst_152 = arith.constant dense<0.000000e+00> : vector<16x64xf32>
    %683 = tpu.matmul %681, %682, %cst_152 {dimension_numbers = #tpu.dot_dimension_numbers<[1], [0], [0], [1], [0, 0, 1, 1], [], []>} : vector<16x32xbf16>, vector<32x64xbf16>, vector<16x64xf32> -> vector<16x64xf32>
    %684 = arith.addf %679, %683 : vector<16x64xf32>
    %cst_153 = arith.constant dense<0.000000e+00> : vector<16x32xf32>
    %685 = tpu.matmul %120, %651, %cst_153 {dimension_numbers = #tpu.dot_dimension_numbers<[1], [0], [0], [1], [0, 0, 1, 1], [], []>} : vector<16x16xbf16>, vector<16x32xbf16>, vector<16x32xf32> -> vector<16x32xf32>
    %686 = arith.truncf %685 : vector<16x32xf32> to vector<16x32xbf16>
    %687 = vector.extract_strided_slice %544 {offsets = [192, 0], sizes = [32, 64], strides = [1, 1]} : vector<288x64xbf16> to vector<32x64xbf16>
    %cst_154 = arith.constant dense<0.000000e+00> : vector<16x64xf32>
    %688 = tpu.matmul %686, %687, %cst_154 {dimension_numbers = #tpu.dot_dimension_numbers<[1], [0], [0], [1], [0, 0, 1, 1], [], []>} : vector<16x32xbf16>, vector<32x64xbf16>, vector<16x64xf32> -> vector<16x64xf32>
    %689 = arith.addf %684, %688 : vector<16x64xf32>
    %cst_155 = arith.constant dense<0.000000e+00> : vector<16x32xf32>
    %690 = tpu.matmul %126, %651, %cst_155 {dimension_numbers = #tpu.dot_dimension_numbers<[1], [0], [0], [1], [0, 0, 1, 1], [], []>} : vector<16x16xbf16>, vector<16x32xbf16>, vector<16x32xf32> -> vector<16x32xf32>
    %691 = arith.truncf %690 : vector<16x32xf32> to vector<16x32xbf16>
    %692 = vector.extract_strided_slice %544 {offsets = [224, 0], sizes = [32, 64], strides = [1, 1]} : vector<288x64xbf16> to vector<32x64xbf16>
    %cst_156 = arith.constant dense<0.000000e+00> : vector<16x64xf32>
    %693 = tpu.matmul %691, %692, %cst_156 {dimension_numbers = #tpu.dot_dimension_numbers<[1], [0], [0], [1], [0, 0, 1, 1], [], []>} : vector<16x32xbf16>, vector<32x64xbf16>, vector<16x64xf32> -> vector<16x64xf32>
    %694 = arith.addf %689, %693 : vector<16x64xf32>
    %cst_157 = arith.constant dense<0.000000e+00> : vector<16x32xf32>
    %695 = tpu.matmul %132, %651, %cst_157 {dimension_numbers = #tpu.dot_dimension_numbers<[1], [0], [0], [1], [0, 0, 1, 1], [], []>} : vector<16x16xbf16>, vector<16x32xbf16>, vector<16x32xf32> -> vector<16x32xf32>
    %696 = arith.truncf %695 : vector<16x32xf32> to vector<16x32xbf16>
    %697 = vector.extract_strided_slice %544 {offsets = [256, 0], sizes = [32, 64], strides = [1, 1]} : vector<288x64xbf16> to vector<32x64xbf16>
    %cst_158 = arith.constant dense<0.000000e+00> : vector<16x64xf32>
    %698 = tpu.matmul %696, %697, %cst_158 {dimension_numbers = #tpu.dot_dimension_numbers<[1], [0], [0], [1], [0, 0, 1, 1], [], []>} : vector<16x32xbf16>, vector<32x64xbf16>, vector<16x64xf32> -> vector<16x64xf32>
    %699 = arith.addf %694, %698 : vector<16x64xf32>
    %cst_159 = arith.constant 0.000000e+00 : f32
    %700 = vector.broadcast %cst_159 : f32 to vector<16x64xf32>
    %701 = arith.maximumf %699, %700 : vector<16x64xf32>
    %702 = arith.truncf %701 : vector<16x64xf32> to vector<16x64xbf16>
    %cst_160 = arith.constant dense<0.000000e+00> : vector<16x32xf32>
    %703 = tpu.matmul %702, %546, %cst_160 {dimension_numbers = #tpu.dot_dimension_numbers<[1], [0], [0], [1], [0, 0, 1, 1], [], []>} : vector<16x64xbf16>, vector<64x32xbf16>, vector<16x32xf32> -> vector<16x32xf32>
    %704 = vector.broadcast %550 : vector<1x32xf32> to vector<16x32xf32>
    %705 = arith.addf %703, %704 : vector<16x32xf32>
    %706 = arith.addf %705, %650 : vector<16x32xf32>
    %707 = arith.mulf %706, %8 : vector<16x32xf32>
    %708 = vector.extract_strided_slice %2 {offsets = [3, 0, 0], sizes = [1, 32, 96], strides = [1, 1, 1]} : vector<6x32x128xbf16> to vector<1x32x96xbf16>
    %709 = vector.shape_cast %708 : vector<1x32x96xbf16> to vector<32x96xbf16>
    %710 = vector.extract_strided_slice %2 {offsets = [3, 0, 96], sizes = [1, 32, 32], strides = [1, 1, 1]} : vector<6x32x128xbf16> to vector<1x32x32xbf16>
    %711 = vector.shape_cast %710 : vector<1x32x32xbf16> to vector<32x32xbf16>
    %712 = vector.extract_strided_slice %3 {offsets = [3, 0, 0], sizes = [1, 288, 64], strides = [1, 1, 1]} : vector<4x352x64xbf16> to vector<1x288x64xbf16>
    %713 = vector.shape_cast %712 : vector<1x288x64xbf16> to vector<288x64xbf16>
    %714 = vector.extract_strided_slice %3 {offsets = [3, 288, 0], sizes = [1, 64, 32], strides = [1, 1, 1]} : vector<4x352x64xbf16> to vector<1x64x32xbf16>
    %715 = vector.shape_cast %714 : vector<1x64x32xbf16> to vector<64x32xbf16>
    %716 = vector.extract_strided_slice %4 {offsets = [24, 0], sizes = [1, 96], strides = [1, 1]} : vector<42x128xf32> to vector<1x96xf32>
    %717 = vector.extract_strided_slice %4 {offsets = [25, 0], sizes = [1, 32], strides = [1, 1]} : vector<42x128xf32> to vector<1x32xf32>
    %718 = vector.extract_strided_slice %4 {offsets = [26, 0], sizes = [1, 64], strides = [1, 1]} : vector<42x128xf32> to vector<1x64xf32>
    %719 = vector.extract_strided_slice %4 {offsets = [27, 0], sizes = [1, 32], strides = [1, 1]} : vector<42x128xf32> to vector<1x32xf32>
    %720 = vector.extract_strided_slice %4 {offsets = [28, 0], sizes = [1, 32], strides = [1, 1]} : vector<42x128xf32> to vector<1x32xf32>
    %721 = vector.extract_strided_slice %4 {offsets = [29, 0], sizes = [1, 32], strides = [1, 1]} : vector<42x128xf32> to vector<1x32xf32>
    %722 = vector.extract_strided_slice %4 {offsets = [30, 0], sizes = [1, 32], strides = [1, 1]} : vector<42x128xf32> to vector<1x32xf32>
    %723 = vector.extract_strided_slice %4 {offsets = [31, 0], sizes = [1, 32], strides = [1, 1]} : vector<42x128xf32> to vector<1x32xf32>
    %cst_161 = arith.constant dense<0.000000e+00> : vector<16xf32>
    %724 = vector.multi_reduction <add>, %707, %cst_161 [1] : vector<16x32xf32> to vector<16xf32>
    %725 = vector.shape_cast %724 : vector<16xf32> to vector<16x1xf32>
    %cst_162 = arith.constant 3.200000e+01 : f32
    %726 = vector.broadcast %cst_162 : f32 to vector<16x1xf32>
    %727 = arith.divf %725, %726 : vector<16x1xf32>
    %728 = vector.broadcast %727 : vector<16x1xf32> to vector<16x32xf32>
    %729 = arith.subf %707, %728 : vector<16x32xf32>
    %730 = arith.mulf %729, %729 : vector<16x32xf32>
    %cst_163 = arith.constant dense<0.000000e+00> : vector<16xf32>
    %731 = vector.multi_reduction <add>, %730, %cst_163 [1] : vector<16x32xf32> to vector<16xf32>
    %732 = vector.shape_cast %731 : vector<16xf32> to vector<16x1xf32>
    %cst_164 = arith.constant 3.200000e+01 : f32
    %733 = vector.broadcast %cst_164 : f32 to vector<16x1xf32>
    %734 = arith.divf %732, %733 : vector<16x1xf32>
    %735 = vector.broadcast %727 : vector<16x1xf32> to vector<16x32xf32>
    %736 = arith.subf %707, %735 : vector<16x32xf32>
    %cst_165 = arith.constant 9.99999974E-6 : f32
    %737 = vector.broadcast %cst_165 : f32 to vector<16x1xf32>
    %738 = arith.addf %734, %737 : vector<16x1xf32>
    %739 = math.rsqrt %738 : vector<16x1xf32>
    %740 = vector.broadcast %739 : vector<16x1xf32> to vector<16x32xf32>
    %741 = arith.mulf %736, %740 : vector<16x32xf32>
    %742 = vector.broadcast %720 : vector<1x32xf32> to vector<16x32xf32>
    %743 = arith.mulf %741, %742 : vector<16x32xf32>
    %744 = vector.broadcast %721 : vector<1x32xf32> to vector<16x32xf32>
    %745 = arith.addf %743, %744 : vector<16x32xf32>
    %746 = arith.truncf %745 : vector<16x32xf32> to vector<16x32xbf16>
    %cst_166 = arith.constant dense<0.000000e+00> : vector<16x96xf32>
    %747 = tpu.matmul %746, %709, %cst_166 {dimension_numbers = #tpu.dot_dimension_numbers<[1], [0], [0], [1], [0, 0, 1, 1], [], []>} : vector<16x32xbf16>, vector<32x96xbf16>, vector<16x96xf32> -> vector<16x96xf32>
    %748 = vector.broadcast %716 : vector<1x96xf32> to vector<16x96xf32>
    %749 = arith.addf %747, %748 : vector<16x96xf32>
    %750 = arith.truncf %749 : vector<16x96xf32> to vector<16x96xbf16>
    %751 = vector.extract_strided_slice %750 {offsets = [0, 0], sizes = [16, 16], strides = [1, 1]} : vector<16x96xbf16> to vector<16x16xbf16>
    %752 = vector.extract_strided_slice %750 {offsets = [0, 32], sizes = [16, 16], strides = [1, 1]} : vector<16x96xbf16> to vector<16x16xbf16>
    %753 = vector.extract_strided_slice %750 {offsets = [0, 64], sizes = [16, 16], strides = [1, 1]} : vector<16x96xbf16> to vector<16x16xbf16>
    %cst_167 = arith.constant dense<0.000000e+00> : vector<16x16xf32>
    %754 = tpu.matmul %751, %752, %cst_167 {dimension_numbers = #tpu.dot_dimension_numbers<[1], [1], [0], [0], [0, 0, 1, 0], [], []>} : vector<16x16xbf16>, vector<16x16xbf16>, vector<16x16xf32> -> vector<16x16xf32>
    %cst_168 = arith.constant 2.500000e-01 : f32
    %755 = vector.broadcast %cst_168 : f32 to vector<16x16xf32>
    %756 = arith.mulf %754, %755 : vector<16x16xf32>
    %757 = vector.broadcast %20 : vector<1x16xf32> to vector<16x16xf32>
    %758 = arith.addf %756, %757 : vector<16x16xf32>
    %cst_169 = arith.constant dense<0xFF800000> : vector<16xf32>
    %759 = vector.multi_reduction <maximumf>, %758, %cst_169 [1] : vector<16x16xf32> to vector<16xf32>
    %760 = vector.shape_cast %759 : vector<16xf32> to vector<16x1xf32>
    %761 = vector.broadcast %760 : vector<16x1xf32> to vector<16x16xf32>
    %762 = arith.subf %758, %761 : vector<16x16xf32>
    %763 = math.exp %762 : vector<16x16xf32>
    %cst_170 = arith.constant dense<0.000000e+00> : vector<16xf32>
    %764 = vector.multi_reduction <add>, %763, %cst_170 [1] : vector<16x16xf32> to vector<16xf32>
    %765 = vector.shape_cast %764 : vector<16xf32> to vector<16x1xf32>
    %766 = tpu.reciprocal %765 {approx = true} : vector<16x1xf32> -> vector<16x1xf32>
    %767 = vector.broadcast %766 : vector<16x1xf32> to vector<16x16xf32>
    %768 = arith.mulf %763, %767 : vector<16x16xf32>
    %769 = arith.truncf %768 : vector<16x16xf32> to vector<16x16xbf16>
    %cst_171 = arith.constant dense<0.000000e+00> : vector<16x16xf32>
    %770 = tpu.matmul %769, %753, %cst_171 {dimension_numbers = #tpu.dot_dimension_numbers<[1], [0], [0], [1], [0, 0, 1, 1], [], []>} : vector<16x16xbf16>, vector<16x16xbf16>, vector<16x16xf32> -> vector<16x16xf32>
    %771 = vector.extract_strided_slice %750 {offsets = [0, 16], sizes = [16, 16], strides = [1, 1]} : vector<16x96xbf16> to vector<16x16xbf16>
    %772 = vector.extract_strided_slice %750 {offsets = [0, 48], sizes = [16, 16], strides = [1, 1]} : vector<16x96xbf16> to vector<16x16xbf16>
    %773 = vector.extract_strided_slice %750 {offsets = [0, 80], sizes = [16, 16], strides = [1, 1]} : vector<16x96xbf16> to vector<16x16xbf16>
    %cst_172 = arith.constant dense<0.000000e+00> : vector<16x16xf32>
    %774 = tpu.matmul %771, %772, %cst_172 {dimension_numbers = #tpu.dot_dimension_numbers<[1], [1], [0], [0], [0, 0, 1, 0], [], []>} : vector<16x16xbf16>, vector<16x16xbf16>, vector<16x16xf32> -> vector<16x16xf32>
    %cst_173 = arith.constant 2.500000e-01 : f32
    %775 = vector.broadcast %cst_173 : f32 to vector<16x16xf32>
    %776 = arith.mulf %774, %775 : vector<16x16xf32>
    %777 = vector.broadcast %20 : vector<1x16xf32> to vector<16x16xf32>
    %778 = arith.addf %776, %777 : vector<16x16xf32>
    %cst_174 = arith.constant dense<0xFF800000> : vector<16xf32>
    %779 = vector.multi_reduction <maximumf>, %778, %cst_174 [1] : vector<16x16xf32> to vector<16xf32>
    %780 = vector.shape_cast %779 : vector<16xf32> to vector<16x1xf32>
    %781 = vector.broadcast %780 : vector<16x1xf32> to vector<16x16xf32>
    %782 = arith.subf %778, %781 : vector<16x16xf32>
    %783 = math.exp %782 : vector<16x16xf32>
    %cst_175 = arith.constant dense<0.000000e+00> : vector<16xf32>
    %784 = vector.multi_reduction <add>, %783, %cst_175 [1] : vector<16x16xf32> to vector<16xf32>
    %785 = vector.shape_cast %784 : vector<16xf32> to vector<16x1xf32>
    %786 = tpu.reciprocal %785 {approx = true} : vector<16x1xf32> -> vector<16x1xf32>
    %787 = vector.broadcast %786 : vector<16x1xf32> to vector<16x16xf32>
    %788 = arith.mulf %783, %787 : vector<16x16xf32>
    %789 = arith.truncf %788 : vector<16x16xf32> to vector<16x16xbf16>
    %cst_176 = arith.constant dense<0.000000e+00> : vector<16x16xf32>
    %790 = tpu.matmul %789, %773, %cst_176 {dimension_numbers = #tpu.dot_dimension_numbers<[1], [0], [0], [1], [0, 0, 1, 1], [], []>} : vector<16x16xbf16>, vector<16x16xbf16>, vector<16x16xf32> -> vector<16x16xf32>
    %791 = tpu.concatenate %770, %790 in 1 : vector<16x16xf32>, vector<16x16xf32> -> vector<16x32xf32>
    %792 = arith.truncf %791 : vector<16x32xf32> to vector<16x32xbf16>
    %cst_177 = arith.constant dense<0.000000e+00> : vector<16x32xf32>
    %793 = tpu.matmul %792, %711, %cst_177 {dimension_numbers = #tpu.dot_dimension_numbers<[1], [0], [0], [1], [0, 0, 1, 1], [], []>} : vector<16x32xbf16>, vector<32x32xbf16>, vector<16x32xf32> -> vector<16x32xf32>
    %794 = vector.broadcast %717 : vector<1x32xf32> to vector<16x32xf32>
    %795 = arith.addf %793, %794 : vector<16x32xf32>
    %796 = arith.addf %795, %745 : vector<16x32xf32>
    %cst_178 = arith.constant dense<0.000000e+00> : vector<16xf32>
    %797 = vector.multi_reduction <add>, %796, %cst_178 [1] : vector<16x32xf32> to vector<16xf32>
    %798 = vector.shape_cast %797 : vector<16xf32> to vector<16x1xf32>
    %cst_179 = arith.constant 3.200000e+01 : f32
    %799 = vector.broadcast %cst_179 : f32 to vector<16x1xf32>
    %800 = arith.divf %798, %799 : vector<16x1xf32>
    %801 = vector.broadcast %800 : vector<16x1xf32> to vector<16x32xf32>
    %802 = arith.subf %796, %801 : vector<16x32xf32>
    %803 = arith.mulf %802, %802 : vector<16x32xf32>
    %cst_180 = arith.constant dense<0.000000e+00> : vector<16xf32>
    %804 = vector.multi_reduction <add>, %803, %cst_180 [1] : vector<16x32xf32> to vector<16xf32>
    %805 = vector.shape_cast %804 : vector<16xf32> to vector<16x1xf32>
    %cst_181 = arith.constant 3.200000e+01 : f32
    %806 = vector.broadcast %cst_181 : f32 to vector<16x1xf32>
    %807 = arith.divf %805, %806 : vector<16x1xf32>
    %808 = vector.broadcast %800 : vector<16x1xf32> to vector<16x32xf32>
    %809 = arith.subf %796, %808 : vector<16x32xf32>
    %cst_182 = arith.constant 9.99999974E-6 : f32
    %810 = vector.broadcast %cst_182 : f32 to vector<16x1xf32>
    %811 = arith.addf %807, %810 : vector<16x1xf32>
    %812 = math.rsqrt %811 : vector<16x1xf32>
    %813 = vector.broadcast %812 : vector<16x1xf32> to vector<16x32xf32>
    %814 = arith.mulf %809, %813 : vector<16x32xf32>
    %815 = vector.broadcast %722 : vector<1x32xf32> to vector<16x32xf32>
    %816 = arith.mulf %814, %815 : vector<16x32xf32>
    %817 = vector.broadcast %723 : vector<1x32xf32> to vector<16x32xf32>
    %818 = arith.addf %816, %817 : vector<16x32xf32>
    %819 = arith.mulf %818, %8 : vector<16x32xf32>
    %820 = arith.truncf %819 : vector<16x32xf32> to vector<16x32xbf16>
    %cst_183 = arith.constant 0.000000e+00 : f32
    %821 = vector.broadcast %cst_183 : f32 to vector<16x64xf32>
    %822 = vector.broadcast %718 : vector<1x64xf32> to vector<16x64xf32>
    %823 = arith.addf %821, %822 : vector<16x64xf32>
    %cst_184 = arith.constant dense<0.000000e+00> : vector<16x32xf32>
    %824 = tpu.matmul %84, %820, %cst_184 {dimension_numbers = #tpu.dot_dimension_numbers<[1], [0], [0], [1], [0, 0, 1, 1], [], []>} : vector<16x16xbf16>, vector<16x32xbf16>, vector<16x32xf32> -> vector<16x32xf32>
    %825 = arith.truncf %824 : vector<16x32xf32> to vector<16x32xbf16>
    %826 = vector.extract_strided_slice %713 {offsets = [0, 0], sizes = [32, 64], strides = [1, 1]} : vector<288x64xbf16> to vector<32x64xbf16>
    %cst_185 = arith.constant dense<0.000000e+00> : vector<16x64xf32>
    %827 = tpu.matmul %825, %826, %cst_185 {dimension_numbers = #tpu.dot_dimension_numbers<[1], [0], [0], [1], [0, 0, 1, 1], [], []>} : vector<16x32xbf16>, vector<32x64xbf16>, vector<16x64xf32> -> vector<16x64xf32>
    %828 = arith.addf %823, %827 : vector<16x64xf32>
    %cst_186 = arith.constant dense<0.000000e+00> : vector<16x32xf32>
    %829 = tpu.matmul %90, %820, %cst_186 {dimension_numbers = #tpu.dot_dimension_numbers<[1], [0], [0], [1], [0, 0, 1, 1], [], []>} : vector<16x16xbf16>, vector<16x32xbf16>, vector<16x32xf32> -> vector<16x32xf32>
    %830 = arith.truncf %829 : vector<16x32xf32> to vector<16x32xbf16>
    %831 = vector.extract_strided_slice %713 {offsets = [32, 0], sizes = [32, 64], strides = [1, 1]} : vector<288x64xbf16> to vector<32x64xbf16>
    %cst_187 = arith.constant dense<0.000000e+00> : vector<16x64xf32>
    %832 = tpu.matmul %830, %831, %cst_187 {dimension_numbers = #tpu.dot_dimension_numbers<[1], [0], [0], [1], [0, 0, 1, 1], [], []>} : vector<16x32xbf16>, vector<32x64xbf16>, vector<16x64xf32> -> vector<16x64xf32>
    %833 = arith.addf %828, %832 : vector<16x64xf32>
    %cst_188 = arith.constant dense<0.000000e+00> : vector<16x32xf32>
    %834 = tpu.matmul %96, %820, %cst_188 {dimension_numbers = #tpu.dot_dimension_numbers<[1], [0], [0], [1], [0, 0, 1, 1], [], []>} : vector<16x16xbf16>, vector<16x32xbf16>, vector<16x32xf32> -> vector<16x32xf32>
    %835 = arith.truncf %834 : vector<16x32xf32> to vector<16x32xbf16>
    %836 = vector.extract_strided_slice %713 {offsets = [64, 0], sizes = [32, 64], strides = [1, 1]} : vector<288x64xbf16> to vector<32x64xbf16>
    %cst_189 = arith.constant dense<0.000000e+00> : vector<16x64xf32>
    %837 = tpu.matmul %835, %836, %cst_189 {dimension_numbers = #tpu.dot_dimension_numbers<[1], [0], [0], [1], [0, 0, 1, 1], [], []>} : vector<16x32xbf16>, vector<32x64xbf16>, vector<16x64xf32> -> vector<16x64xf32>
    %838 = arith.addf %833, %837 : vector<16x64xf32>
    %cst_190 = arith.constant dense<0.000000e+00> : vector<16x32xf32>
    %839 = tpu.matmul %102, %820, %cst_190 {dimension_numbers = #tpu.dot_dimension_numbers<[1], [0], [0], [1], [0, 0, 1, 1], [], []>} : vector<16x16xbf16>, vector<16x32xbf16>, vector<16x32xf32> -> vector<16x32xf32>
    %840 = arith.truncf %839 : vector<16x32xf32> to vector<16x32xbf16>
    %841 = vector.extract_strided_slice %713 {offsets = [96, 0], sizes = [32, 64], strides = [1, 1]} : vector<288x64xbf16> to vector<32x64xbf16>
    %cst_191 = arith.constant dense<0.000000e+00> : vector<16x64xf32>
    %842 = tpu.matmul %840, %841, %cst_191 {dimension_numbers = #tpu.dot_dimension_numbers<[1], [0], [0], [1], [0, 0, 1, 1], [], []>} : vector<16x32xbf16>, vector<32x64xbf16>, vector<16x64xf32> -> vector<16x64xf32>
    %843 = arith.addf %838, %842 : vector<16x64xf32>
    %cst_192 = arith.constant dense<0.000000e+00> : vector<16x32xf32>
    %844 = tpu.matmul %108, %820, %cst_192 {dimension_numbers = #tpu.dot_dimension_numbers<[1], [0], [0], [1], [0, 0, 1, 1], [], []>} : vector<16x16xbf16>, vector<16x32xbf16>, vector<16x32xf32> -> vector<16x32xf32>
    %845 = arith.truncf %844 : vector<16x32xf32> to vector<16x32xbf16>
    %846 = vector.extract_strided_slice %713 {offsets = [128, 0], sizes = [32, 64], strides = [1, 1]} : vector<288x64xbf16> to vector<32x64xbf16>
    %cst_193 = arith.constant dense<0.000000e+00> : vector<16x64xf32>
    %847 = tpu.matmul %845, %846, %cst_193 {dimension_numbers = #tpu.dot_dimension_numbers<[1], [0], [0], [1], [0, 0, 1, 1], [], []>} : vector<16x32xbf16>, vector<32x64xbf16>, vector<16x64xf32> -> vector<16x64xf32>
    %848 = arith.addf %843, %847 : vector<16x64xf32>
    %cst_194 = arith.constant dense<0.000000e+00> : vector<16x32xf32>
    %849 = tpu.matmul %114, %820, %cst_194 {dimension_numbers = #tpu.dot_dimension_numbers<[1], [0], [0], [1], [0, 0, 1, 1], [], []>} : vector<16x16xbf16>, vector<16x32xbf16>, vector<16x32xf32> -> vector<16x32xf32>
    %850 = arith.truncf %849 : vector<16x32xf32> to vector<16x32xbf16>
    %851 = vector.extract_strided_slice %713 {offsets = [160, 0], sizes = [32, 64], strides = [1, 1]} : vector<288x64xbf16> to vector<32x64xbf16>
    %cst_195 = arith.constant dense<0.000000e+00> : vector<16x64xf32>
    %852 = tpu.matmul %850, %851, %cst_195 {dimension_numbers = #tpu.dot_dimension_numbers<[1], [0], [0], [1], [0, 0, 1, 1], [], []>} : vector<16x32xbf16>, vector<32x64xbf16>, vector<16x64xf32> -> vector<16x64xf32>
    %853 = arith.addf %848, %852 : vector<16x64xf32>
    %cst_196 = arith.constant dense<0.000000e+00> : vector<16x32xf32>
    %854 = tpu.matmul %120, %820, %cst_196 {dimension_numbers = #tpu.dot_dimension_numbers<[1], [0], [0], [1], [0, 0, 1, 1], [], []>} : vector<16x16xbf16>, vector<16x32xbf16>, vector<16x32xf32> -> vector<16x32xf32>
    %855 = arith.truncf %854 : vector<16x32xf32> to vector<16x32xbf16>
    %856 = vector.extract_strided_slice %713 {offsets = [192, 0], sizes = [32, 64], strides = [1, 1]} : vector<288x64xbf16> to vector<32x64xbf16>
    %cst_197 = arith.constant dense<0.000000e+00> : vector<16x64xf32>
    %857 = tpu.matmul %855, %856, %cst_197 {dimension_numbers = #tpu.dot_dimension_numbers<[1], [0], [0], [1], [0, 0, 1, 1], [], []>} : vector<16x32xbf16>, vector<32x64xbf16>, vector<16x64xf32> -> vector<16x64xf32>
    %858 = arith.addf %853, %857 : vector<16x64xf32>
    %cst_198 = arith.constant dense<0.000000e+00> : vector<16x32xf32>
    %859 = tpu.matmul %126, %820, %cst_198 {dimension_numbers = #tpu.dot_dimension_numbers<[1], [0], [0], [1], [0, 0, 1, 1], [], []>} : vector<16x16xbf16>, vector<16x32xbf16>, vector<16x32xf32> -> vector<16x32xf32>
    %860 = arith.truncf %859 : vector<16x32xf32> to vector<16x32xbf16>
    %861 = vector.extract_strided_slice %713 {offsets = [224, 0], sizes = [32, 64], strides = [1, 1]} : vector<288x64xbf16> to vector<32x64xbf16>
    %cst_199 = arith.constant dense<0.000000e+00> : vector<16x64xf32>
    %862 = tpu.matmul %860, %861, %cst_199 {dimension_numbers = #tpu.dot_dimension_numbers<[1], [0], [0], [1], [0, 0, 1, 1], [], []>} : vector<16x32xbf16>, vector<32x64xbf16>, vector<16x64xf32> -> vector<16x64xf32>
    %863 = arith.addf %858, %862 : vector<16x64xf32>
    %cst_200 = arith.constant dense<0.000000e+00> : vector<16x32xf32>
    %864 = tpu.matmul %132, %820, %cst_200 {dimension_numbers = #tpu.dot_dimension_numbers<[1], [0], [0], [1], [0, 0, 1, 1], [], []>} : vector<16x16xbf16>, vector<16x32xbf16>, vector<16x32xf32> -> vector<16x32xf32>
    %865 = arith.truncf %864 : vector<16x32xf32> to vector<16x32xbf16>
    %866 = vector.extract_strided_slice %713 {offsets = [256, 0], sizes = [32, 64], strides = [1, 1]} : vector<288x64xbf16> to vector<32x64xbf16>
    %cst_201 = arith.constant dense<0.000000e+00> : vector<16x64xf32>
    %867 = tpu.matmul %865, %866, %cst_201 {dimension_numbers = #tpu.dot_dimension_numbers<[1], [0], [0], [1], [0, 0, 1, 1], [], []>} : vector<16x32xbf16>, vector<32x64xbf16>, vector<16x64xf32> -> vector<16x64xf32>
    %868 = arith.addf %863, %867 : vector<16x64xf32>
    %cst_202 = arith.constant 0.000000e+00 : f32
    %869 = vector.broadcast %cst_202 : f32 to vector<16x64xf32>
    %870 = arith.maximumf %868, %869 : vector<16x64xf32>
    %871 = arith.truncf %870 : vector<16x64xf32> to vector<16x64xbf16>
    %cst_203 = arith.constant dense<0.000000e+00> : vector<16x32xf32>
    %872 = tpu.matmul %871, %715, %cst_203 {dimension_numbers = #tpu.dot_dimension_numbers<[1], [0], [0], [1], [0, 0, 1, 1], [], []>} : vector<16x64xbf16>, vector<64x32xbf16>, vector<16x32xf32> -> vector<16x32xf32>
    %873 = vector.broadcast %719 : vector<1x32xf32> to vector<16x32xf32>
    %874 = arith.addf %872, %873 : vector<16x32xf32>
    %875 = arith.addf %874, %819 : vector<16x32xf32>
    %876 = arith.mulf %875, %8 : vector<16x32xf32>
    %877 = arith.mulf %876, %8 : vector<16x32xf32>
    %878 = vector.extract_strided_slice %2 {offsets = [4, 0, 0], sizes = [1, 32, 128], strides = [1, 1, 1]} : vector<6x32x128xbf16> to vector<1x32x128xbf16>
    %879 = vector.shape_cast %878 : vector<1x32x128xbf16> to vector<32x128xbf16>
    %880 = vector.extract_strided_slice %4 {offsets = [32, 0], sizes = [1, 128], strides = [1, 1]} : vector<42x128xf32> to vector<1x128xf32>
    %881 = arith.truncf %877 : vector<16x32xf32> to vector<16x32xbf16>
    %cst_204 = arith.constant dense<0.000000e+00> : vector<16x128xf32>
    %882 = tpu.matmul %881, %879, %cst_204 {dimension_numbers = #tpu.dot_dimension_numbers<[1], [0], [0], [1], [0, 0, 1, 1], [], []>} : vector<16x32xbf16>, vector<32x128xbf16>, vector<16x128xf32> -> vector<16x128xf32>
    %883 = vector.broadcast %880 : vector<1x128xf32> to vector<16x128xf32>
    %884 = arith.addf %882, %883 : vector<16x128xf32>
    %cst_205 = arith.constant 0.000000e+00 : f32
    %885 = vector.broadcast %cst_205 : f32 to vector<8x1xf32>
    %886 = tpu.concatenate %489, %885 in 0 : vector<8x1xf32>, vector<8x1xf32> -> vector<16x1xf32>
    %887 = tpu.iota {dimensions = array<i32: 1>} : vector<16x128xi32>
    %c125_i32 = arith.constant 125 : i32
    %888 = vector.broadcast %c125_i32 : i32 to vector<16x128xi32>
    %889 = arith.cmpi eq, %887, %888 : vector<16x128xi32>
    %cst_206 = arith.constant 0.000000e+00 : f32
    %890 = vector.shape_cast %519 : vector<16x1xf32> to vector<16x1xf32>
    %891 = vector.broadcast %890 : vector<16x1xf32> to vector<16x128xf32>
    %892 = vector.broadcast %cst_206 : f32 to vector<16x128xf32>
    %893 = arith.select %889, %891, %892 : vector<16x128xi1>, vector<16x128xf32>
    %894 = arith.addf %884, %893 : vector<16x128xf32>
    %c126_i32 = arith.constant 126 : i32
    %895 = vector.broadcast %c126_i32 : i32 to vector<16x128xi32>
    %896 = arith.cmpi eq, %887, %895 : vector<16x128xi32>
    %cst_207 = arith.constant 0.000000e+00 : f32
    %897 = vector.shape_cast %537 : vector<16x1xf32> to vector<16x1xf32>
    %898 = vector.broadcast %897 : vector<16x1xf32> to vector<16x128xf32>
    %899 = vector.broadcast %cst_207 : f32 to vector<16x128xf32>
    %900 = arith.select %896, %898, %899 : vector<16x128xi1>, vector<16x128xf32>
    %901 = arith.addf %894, %900 : vector<16x128xf32>
    %c127_i32 = arith.constant 127 : i32
    %902 = vector.broadcast %c127_i32 : i32 to vector<16x128xi32>
    %903 = arith.cmpi eq, %887, %902 : vector<16x128xi32>
    %cst_208 = arith.constant 0.000000e+00 : f32
    %904 = vector.shape_cast %886 : vector<16x1xf32> to vector<16x1xf32>
    %905 = vector.broadcast %904 : vector<16x1xf32> to vector<16x128xf32>
    %906 = vector.broadcast %cst_208 : f32 to vector<16x128xf32>
    %907 = arith.select %903, %905, %906 : vector<16x128xi1>, vector<16x128xf32>
    %908 = arith.addf %901, %907 : vector<16x128xf32>
    %c0_209 = arith.constant 0 : index
    %c0_210 = arith.constant 0 : index
    %c0_211 = arith.constant 0 : index
    %909 = vector.load %arg5[%c0_209, %c0_210, %c0_211] : memref<1x16x128xf32, #tpu.memory_space<vmem>>, vector<1x16x128xf32>
    %910 = vector.shape_cast %909 : vector<1x16x128xf32> to vector<16x128xf32>
    %911 = vector.shape_cast %908 : vector<16x128xf32> to vector<1x16x128xf32>
    tpu.vector_store %arg5[%c0_209, %c0_210, %c0_211], %911 {strides = array<i32>} : memref<1x16x128xf32, #tpu.memory_space<vmem>>, vector<1x16x128xf32>,
    return
  }
  func.func @transform_0(%arg0: i32) -> (i32, i32, i32) {
    %c0_i32 = arith.constant 0 : i32
    %c0_i32_0 = arith.constant 0 : i32
    %c0_i32_1 = arith.constant 0 : i32
    return %arg0, %c0_i32, %c0_i32_0 : i32, i32, i32
  }
  func.func @transform_1(%arg0: i32) -> (i32, i32, i32) {
    %c0_i32 = arith.constant 0 : i32
    %c0_i32_0 = arith.constant 0 : i32
    %c0_i32_1 = arith.constant 0 : i32
    %c0_i32_2 = arith.constant 0 : i32
    return %c0_i32, %c0_i32_0, %c0_i32_1 : i32, i32, i32
  }
  func.func @transform_2(%arg0: i32) -> (i32, i32, i32) {
    %c0_i32 = arith.constant 0 : i32
    %c0_i32_0 = arith.constant 0 : i32
    %c0_i32_1 = arith.constant 0 : i32
    %c0_i32_2 = arith.constant 0 : i32
    return %c0_i32, %c0_i32_0, %c0_i32_1 : i32, i32, i32
  }
  func.func @transform_3(%arg0: i32) -> (i32, i32) {
    %c0_i32 = arith.constant 0 : i32
    %c0_i32_0 = arith.constant 0 : i32
    %c0_i32_1 = arith.constant 0 : i32
    return %c0_i32, %c0_i32_0 : i32, i32
  }
  func.func @transform_4(%arg0: i32) -> (i32, i32, i32) {
    %c0_i32 = arith.constant 0 : i32
    %c0_i32_0 = arith.constant 0 : i32
    %c0_i32_1 = arith.constant 0 : i32
    return %arg0, %c0_i32, %c0_i32_0 : i32, i32, i32
  }
}

</mosaic_0001>

<llo_original>
// kernel: fastspeech_forward.1
$region0: #{fastspeech_forward.1}
  #allocation0 [shape = 'u32[]', space=smem, size = 0x4, offset = 0x4, fixed_abs, tag = 'smem constant byte address 0x4 - core index']
  #allocation1 [shape = 'u32[144,128]{1,0:T(1,128)}', space=vmem, size = 0x12000, scoped, tag = 'internal scratch']
  %s0 = inlined_call_operand.vmem [shape: f32[2,28,128], index: 0, kind: input, shape index: {}]
  %s1 = inlined_call_operand.vmem [shape: bf16[6,32,128], index: 1, kind: input, shape index: {}]
  %s2 = inlined_call_operand.vmem [shape: bf16[4,352,64], index: 2, kind: input, shape index: {}]
  %s3 = inlined_call_operand.vmem [shape: f32[42,128], index: 3, kind: input, shape index: {}]
  %s4 = inlined_call_operand.vmem [shape: f32[2,16,128], index: 4, kind: output, shape index: {}]
  %s5 = sld [smem:[#allocation0]]
  $region49: #{fastspeech_forward.1} parent=0
    _
  %s7 = ssub.s32 1, %s5
  %s8 = scalar_select 0, %s7, %s5
  loop: start=0, step=1, limit=4
  $region2: #{fastspeech_forward.1} parent=0 // loop_pre_header
    _
  $region3: #{fastspeech_forward.1} parent=0 // loop_header
    %s10 = sphi 0, %s14
    %p11 = scmp.ge.s32.totalorder %s10, 4
    %s20 = sphi 0, %s22
    %s23 = sphi 0, %s20
    %s24 = sphi 0, %s23
    %s40 = sphi 0, %s24
    %s44 = sphi 0, %s44
    %s46 = sphi 0, %s44
    %s47 = sphi 0, %s46
    %s61 = sphi 0, %s47
    %s65 = sphi 0, %s65
    %s67 = sphi 0, %s65
    %s68 = sphi 0, %s67
    %s82 = sphi 0, %s68
    %s86 = sphi 0, %s86
    %s88 = sphi 0, %s86
    %s89 = sphi 0, %s88
    %s103 = sphi 0, %s89
    %s109 = sphi 0, %s111
    %s112 = sphi 0, %s109
    %s113 = sphi 0, %s112
    %s129 = sphi 0, %s113
  $region4: #{fastspeech_forward.1} parent=0 // loop_header_branch
    %13 = sbr.rel (%p11) target = $region8
  $region5: #{fastspeech_forward.1} parent=0 // loop_body
    %s15 = ssub.s32 %s10, 1
    %s16 = ssub.s32 %s10, 2
    %s17 = sadd.s32 %s10, 1
    %s18 = ssub.s32 %s10, %s17
    %p19 = scmp.eq.s32.totalorder %s18, 0
    %s21 = sadd.s32 %s20, 1
    %s22 = scalar_select %p19, %s20, %s21
    %p25 = pneg %p19
    %p26 = scmp.eq.s32.totalorder %s10, 1
    %p27 = por %p25, %p26
    %p28 = scmp.ne.s32.totalorder %s20, %s23
    %p29 = scmp.eq.s32.totalorder %s10, 0
    %p30 = por %p28, %p29
    %p31 = scmp.ne.s32.totalorder %s20, %s23
    %p32 = scmp.eq.s32.totalorder %s15, 1
    %p33 = por %p31, %p32
    %p34 = scmp.ne.s32.totalorder %s23, %s24
    %p35 = scmp.eq.s32.totalorder %s15, 0
    %p36 = por %p34, %p35
    %p37 = scmp.ne.s32.totalorder %s23, %s24
    %p38 = scmp.eq.s32.totalorder %s16, 1
    %p39 = por %p37, %p38
    %p41 = scmp.ne.s32.totalorder %s24, %s40
    %p42 = scmp.eq.s32.totalorder %s16, 0
    %p43 = por %p41, %p42
    %s45 = sadd.s32 %s44, 1
    %p48 = scmp.eq.s32.totalorder %s10, 1
    %p49 = scmp.ne.s32.totalorder %s44, %s46
    %p50 = scmp.eq.s32.totalorder %s10, 0
    %p51 = por %p49, %p50
    %p52 = scmp.ne.s32.totalorder %s44, %s46
    %p53 = scmp.eq.s32.totalorder %s15, 1
    %p54 = por %p52, %p53
    %p55 = scmp.ne.s32.totalorder %s46, %s47
    %p56 = scmp.eq.s32.totalorder %s15, 0
    %p57 = por %p55, %p56
    %p58 = scmp.ne.s32.totalorder %s46, %s47
    %p59 = scmp.eq.s32.totalorder %s16, 1
    %p60 = por %p58, %p59
    %p62 = scmp.ne.s32.totalorder %s47, %s61
    %p63 = scmp.eq.s32.totalorder %s16, 0
    %p64 = por %p62, %p63
    %s66 = sadd.s32 %s65, 1
    %p69 = scmp.eq.s32.totalorder %s10, 1
    %p70 = scmp.ne.s32.totalorder %s65, %s67
    %p71 = scmp.eq.s32.totalorder %s10, 0
    %p72 = por %p70, %p71
    %p73 = scmp.ne.s32.totalorder %s65, %s67
    %p74 = scmp.eq.s32.totalorder %s15, 1
    %p75 = por %p73, %p74
    %p76 = scmp.ne.s32.totalorder %s67, %s68
    %p77 = scmp.eq.s32.totalorder %s15, 0
    %p78 = por %p76, %p77
    %p79 = scmp.ne.s32.totalorder %s67, %s68
    %p80 = scmp.eq.s32.totalorder %s16, 1
    %p81 = por %p79, %p80
    %p83 = scmp.ne.s32.totalorder %s68, %s82
    %p84 = scmp.eq.s32.totalorder %s16, 0
    %p85 = por %p83, %p84
    %s87 = sadd.s32 %s86, 1
    %p90 = scmp.eq.s32.totalorder %s10, 1
    %p91 = scmp.ne.s32.totalorder %s86, %s88
    %p92 = scmp.eq.s32.totalorder %s10, 0
    %p93 = por %p91, %p92
    %p94 = scmp.ne.s32.totalorder %s86, %s88
    %p95 = scmp.eq.s32.totalorder %s15, 1
    %p96 = por %p94, %p95
    %p97 = scmp.ne.s32.totalorder %s88, %s89
    %p98 = scmp.eq.s32.totalorder %s15, 0
    %p99 = por %p97, %p98
    %p100 = scmp.ne.s32.totalorder %s88, %s89
    %p101 = scmp.eq.s32.totalorder %s16, 1
    %p102 = por %p100, %p101
    %p104 = scmp.ne.s32.totalorder %s89, %s103
    %p105 = scmp.eq.s32.totalorder %s16, 0
    %p106 = por %p104, %p105
    %s107 = ssub.s32 %s10, %s17
    %p108 = scmp.eq.s32.totalorder %s107, 0
    %s110 = sadd.s32 %s109, 1
    %s111 = scalar_select %p108, %s109, %s110
    %p114 = pneg %p108
    %p115 = scmp.eq.s32.totalorder %s10, 1
    %p116 = por %p114, %p115
    %p117 = scmp.ne.s32.totalorder %s109, %s112
    %p118 = scmp.eq.s32.totalorder %s10, 0
    %p119 = por %p117, %p118
    %p120 = scmp.ne.s32.totalorder %s109, %s112
    %p121 = scmp.eq.s32.totalorder %s15, 1
    %p122 = por %p120, %p121
    %p123 = scmp.ne.s32.totalorder %s112, %s113
    %p124 = scmp.eq.s32.totalorder %s15, 0
    %p125 = por %p123, %p124
    %p126 = scmp.ne.s32.totalorder %s112, %s113
    %p127 = scmp.eq.s32.totalorder %s16, 1
    %p128 = por %p126, %p127
    %p130 = scmp.ne.s32.totalorder %s113, %s129
    %p131 = scmp.eq.s32.totalorder %s16, 0
    %p132 = por %p130, %p131
    %p133 = scmp.le.s32.totalorder 1, %s10
    %p134 = scmp.lt.s32.totalorder %s10, 3
    %p135 = pnand %p133, %p134
    %p136 = pneg %p135
    // Predicated region
    $region9: #{fastspeech_forward.1} parent=5 // pred_check
      _
    $region10: #{fastspeech_forward.1} parent=5 // pred_check_branch
      %138 = sbr.rel (%p135) target = $region12
    $region11: #{fastspeech_forward.1} parent=5 // pred_region
      %s139 = ssub.s32 %s10, 1
      // Predicated region
      $region13: #{fastspeech_forward.1} parent=11 // pred_check
        %p140 = pneg %p57
      $region14: #{fastspeech_forward.1} parent=11 // pred_check_branch
        %142 = sbr.rel (%p140) target = $region16
      $region15: #{fastspeech_forward.1} parent=11 // pred_region
        _
      $region16: #{fastspeech_forward.1} parent=11 // pred_fallthru
        _
      // Predicated region
      $region17: #{fastspeech_forward.1} parent=11 // pred_check
        %p143 = pneg %p78
      $region18: #{fastspeech_forward.1} parent=11 // pred_check_branch
        %145 = sbr.rel (%p143) target = $region20
      $region19: #{fastspeech_forward.1} parent=11 // pred_region
        _
      $region20: #{fastspeech_forward.1} parent=11 // pred_fallthru
        _
      // Predicated region
      $region21: #{fastspeech_forward.1} parent=11 // pred_check
        %p146 = pneg %p99
      $region22: #{fastspeech_forward.1} parent=11 // pred_check_branch
        %148 = sbr.rel (%p146) target = $region24
      $region23: #{fastspeech_forward.1} parent=11 // pred_region
        _
      $region24: #{fastspeech_forward.1} parent=11 // pred_fallthru
        _
    $region12: #{fastspeech_forward.1} parent=5 // pred_fallthru
      _
    %p149 = scmp.lt.s32.totalorder %s10, 2
    // Predicated region
    $region25: #{fastspeech_forward.1} parent=5 // pred_check
      %p150 = pneg %p149
    $region26: #{fastspeech_forward.1} parent=5 // pred_check_branch
      %152 = sbr.rel (%p150) target = $region28
    $region27: #{fastspeech_forward.1} parent=5 // pred_region
      // Predicated region
      $region29: #{fastspeech_forward.1} parent=27 // pred_check
        %p153 = pneg %p30
      $region30: #{fastspeech_forward.1} parent=27 // pred_check_branch
        %155 = sbr.rel (%p153) target = $region32
      $region31: #{fastspeech_forward.1} parent=27 // pred_region
        %p156 = scmp.lt.s32.totalorder %s10, 1
        %s157 = scalar_select %p156, %s10, 1
        %s158 = smul.addr %s157, 4
        %s159 = smul.addr %s158, 8
        %s160 = scalar_lea.vmem %s0, %s159
      $region32: #{fastspeech_forward.1} parent=27 // pred_fallthru
        _
    $region28: #{fastspeech_forward.1} parent=5 // pred_fallthru
      _
    %p161 = scmp.le.s32.totalorder 1, %s10
    %p162 = scmp.lt.s32.totalorder %s10, 3
    %p163 = pnand %p161, %p162
    %p164 = pneg %p163
    // Predicated region
    $region33: #{fastspeech_forward.1} parent=5 // pred_check
      _
    $region34: #{fastspeech_forward.1} parent=5 // pred_check_branch
      %166 = sbr.rel (%p163) target = $region36
    $region35: #{fastspeech_forward.1} parent=5 // pred_region
      %s167 = ssub.s32 %s10, 1
      %p168 = scmp.lt.s32.totalorder %s15, 1
      %s169 = scalar_select %p168, %s15, 1
      %s170 = smul.addr %s169, 4
      %s171 = smul.addr %s170, 8
      %s172 = scalar_lea.vmem %s0, %s171
      %p173 = pneg %p36
      %p174 = pneg %p33
      %p175 = pneg %p57
      %p176 = pneg %p54
      %p177 = pneg %p78
      %p178 = pneg %p75
      %p179 = pneg %p99
      %p180 = pneg %p96
      %p181 = pneg %p125
      %p182 = pneg %p122
      %p183 = scmp.lt.s32.totalorder %s15, 1
      %s184 = scalar_select %p183, %s15, 1
      %s185 = smul.addr %s184, 2
      %s186 = smul.addr %s185, 8
      %s187 = scalar_lea.vmem %s4, %s186
      %p188 = scmp.lt.s32.totalorder %s15, 1
      %s189 = scalar_select %p188, %s15, 1
      %s190 = smul.addr %s189, 4
      %s191 = smul.addr %s190, 8
      %s192 = scalar_lea.vmem %s0, %s191
      %p193 = scmp.lt.s32.totalorder %s15, 1
      %s194 = scalar_select %p193, %s15, 1
      %s195 = smul.addr %s194, 2
      %s196 = smul.addr %s195, 8
      %s197 = scalar_lea.vmem %s4, %s196
      %v199 = vld [vmem:[%s192] sm:$0xff]
      %v200 = vld [vmem:[%s192 + $0x8] sm:$0xff]
      %v201 = vld [vmem:[%s192 + $0x10] sm:$0xff]
      %v202 = vld [vmem:[%s192 + $0x18] sm:$0xf]
      %v203 = vld [vmem:[%s1] sm:$0xf]
      %v204 = vld [vmem:[%s1 + $0x4] sm:$0xf]
      %v205 = vld [vmem:[%s1 + $0x8] sm:$0xf]
      %v206 = vld [vmem:[%s1 + $0xc] sm:$0xf]
      %v207 = vld [vmem:[%s1 + $0x10] sm:$0xf]
      %v208 = vld [vmem:[%s1 + $0x14] sm:$0xf]
      %v209 = vld [vmem:[%s1 + $0x18] sm:$0xf]
      %v210 = vld [vmem:[%s1 + $0x1c] sm:$0xf]
      %v211 = vld [vmem:[%s1 + $0x20] sm:$0xf]
      %v212 = vld [vmem:[%s1 + $0x24] sm:$0xf]
      %v213 = vld [vmem:[%s1 + $0x28] sm:$0xf]
      %v214 = vld [vmem:[%s1 + $0x2c] sm:$0xf]
      %v215 = vld [vmem:[%s1 + $0x30] sm:$0xf]
      %v216 = vld [vmem:[%s1 + $0x34] sm:$0xf]
      %v217 = vld [vmem:[%s1 + $0x38] sm:$0xf]
      %v218 = vld [vmem:[%s1 + $0x3c] sm:$0xf]
      %v219 = vld [vmem:[%s1 + $0x40] sm:$0xf]
      %v220 = vld [vmem:[%s1 + $0x44] sm:$0xf]
      %v221 = vld [vmem:[%s1 + $0x48] sm:$0xf]
      %v222 = vld [vmem:[%s1 + $0x4c] sm:$0xf]
      %v223 = vld [vmem:[%s1 + $0x50] sm:$0xf]
      %v224 = vld [vmem:[%s1 + $0x54] sm:$0xf]
      %v225 = vld [vmem:[%s1 + $0x58] sm:$0xf]
      %v226 = vld [vmem:[%s1 + $0x5c] sm:$0xf]
      %v227 = vld [vmem:[%s2] sm:$0xf]
      %v228 = vld [vmem:[%s2 + $0x4] sm:$0xf]
      %v229 = vld [vmem:[%s2 + $0x8] sm:$0xf]
      %v230 = vld [vmem:[%s2 + $0xc] sm:$0xf]
      %v231 = vld [vmem:[%s2 + $0x10] sm:$0xf]
      %v232 = vld [vmem:[%s2 + $0x14] sm:$0xf]
      %v233 = vld [vmem:[%s2 + $0x18] sm:$0xf]
      %v234 = vld [vmem:[%s2 + $0x1c] sm:$0xf]
      %v235 = vld [vmem:[%s2 + $0x20] sm:$0xf]
      %v236 = vld [vmem:[%s2 + $0x24] sm:$0xf]
      %v237 = vld [vmem:[%s2 + $0x28] sm:$0xf]
      %v238 = vld [vmem:[%s2 + $0x2c] sm:$0xf]
      %v239 = vld [vmem:[%s2 + $0x30] sm:$0xf]
      %v240 = vld [vmem:[%s2 + $0x34] sm:$0xf]
      %v241 = vld [vmem:[%s2 + $0x38] sm:$0xf]
      %v242 = vld [vmem:[%s2 + $0x3c] sm:$0xf]
      %v243 = vld [vmem:[%s2 + $0x40] sm:$0xf]
      %v244 = vld [vmem:[%s2 + $0x44] sm:$0xf]
      %v245 = vld [vmem:[%s2 + $0x48] sm:$0xf]
      %v246 = vld [vmem:[%s2 + $0x4c] sm:$0xf]
      %v247 = vld [vmem:[%s2 + $0x50] sm:$0xf]
      %v248 = vld [vmem:[%s2 + $0x54] sm:$0xf]
      %v249 = vld [vmem:[%s2 + $0x58] sm:$0xf]
      %v250 = vld [vmem:[%s2 + $0x5c] sm:$0xf]
      %v251 = vld [vmem:[%s2 + $0x60] sm:$0xf]
      %v252 = vld [vmem:[%s2 + $0x64] sm:$0xf]
      %v253 = vld [vmem:[%s2 + $0x68] sm:$0xf]
      %v254 = vld [vmem:[%s2 + $0x6c] sm:$0xf]
      %v255 = vld [vmem:[%s2 + $0x70] sm:$0xf]
      %v256 = vld [vmem:[%s2 + $0x74] sm:$0xf]
      %v257 = vld [vmem:[%s2 + $0x78] sm:$0xf]
      %v258 = vld [vmem:[%s2 + $0x7c] sm:$0xf]
      %v259 = vld [vmem:[%s2 + $0x80] sm:$0xf]
      %v260 = vld [vmem:[%s2 + $0x84] sm:$0xf]
      %v261 = vld [vmem:[%s2 + $0x88] sm:$0xf]
      %v262 = vld [vmem:[%s2 + $0x8c] sm:$0xf]
      %v263 = vld [vmem:[%s2 + $0x90] sm:$0xf]
      %v264 = vld [vmem:[%s2 + $0x94] sm:$0xf]
      %v265 = vld [vmem:[%s2 + $0x98] sm:$0xf]
      %v266 = vld [vmem:[%s2 + $0x9c] sm:$0xf]
      %v267 = vld [vmem:[%s2 + $0xa0] sm:$0xf]
      %v268 = vld [vmem:[%s2 + $0xa4] sm:$0xf]
      %v269 = vld [vmem:[%s2 + $0xa8] sm:$0xf]
      %v270 = vld [vmem:[%s2 + $0xac] sm:$0xf]
      %v271 = vld [vmem:[%s2 + $0xb0] sm:$0xf]
      %v272 = vld [vmem:[%s2 + $0xb4] sm:$0xf]
      %v273 = vld [vmem:[%s2 + $0xb8] sm:$0xf]
      %v274 = vld [vmem:[%s2 + $0xbc] sm:$0xf]
      %v275 = vld [vmem:[%s2 + $0xc0] sm:$0xf]
      %v276 = vld [vmem:[%s2 + $0xc4] sm:$0xf]
      %v277 = vld [vmem:[%s2 + $0xc8] sm:$0xf]
      %v278 = vld [vmem:[%s2 + $0xcc] sm:$0xf]
      %v279 = vld [vmem:[%s2 + $0xd0] sm:$0xf]
      %v280 = vld [vmem:[%s2 + $0xd4] sm:$0xf]
      %v281 = vld [vmem:[%s2 + $0xd8] sm:$0xf]
      %v282 = vld [vmem:[%s2 + $0xdc] sm:$0xf]
      %v283 = vld [vmem:[%s2 + $0xe0] sm:$0xf]
      %v284 = vld [vmem:[%s2 + $0xe4] sm:$0xf]
      %v285 = vld [vmem:[%s2 + $0xe8] sm:$0xf]
      %v286 = vld [vmem:[%s2 + $0xec] sm:$0xf]
      %v287 = vld [vmem:[%s2 + $0xf0] sm:$0xf]
      %v288 = vld [vmem:[%s2 + $0xf4] sm:$0xf]
      %v289 = vld [vmem:[%s2 + $0xf8] sm:$0xf]
      %v290 = vld [vmem:[%s2 + $0xfc] sm:$0xf]
      %v291 = vld [vmem:[%s2 + $0x100] sm:$0xf]
      %v292 = vld [vmem:[%s2 + $0x104] sm:$0xf]
      %v293 = vld [vmem:[%s2 + $0x108] sm:$0xf]
      %v294 = vld [vmem:[%s2 + $0x10c] sm:$0xf]
      %v295 = vld [vmem:[%s2 + $0x110] sm:$0xf]
      %v296 = vld [vmem:[%s2 + $0x114] sm:$0xf]
      %v297 = vld [vmem:[%s2 + $0x118] sm:$0xf]
      %v298 = vld [vmem:[%s2 + $0x11c] sm:$0xf]
      %v299 = vld [vmem:[%s2 + $0x120] sm:$0xf]
      %v300 = vld [vmem:[%s2 + $0x124] sm:$0xf]
      %v301 = vld [vmem:[%s2 + $0x128] sm:$0xf]
      %v302 = vld [vmem:[%s2 + $0x12c] sm:$0xf]
      %v303 = vld [vmem:[%s2 + $0x130] sm:$0xf]
      %v304 = vld [vmem:[%s2 + $0x134] sm:$0xf]
      %v305 = vld [vmem:[%s2 + $0x138] sm:$0xf]
      %v306 = vld [vmem:[%s2 + $0x13c] sm:$0xf]
      %v307 = vld [vmem:[%s2 + $0x140] sm:$0xf]
      %v308 = vld [vmem:[%s2 + $0x144] sm:$0xf]
      %v309 = vld [vmem:[%s2 + $0x148] sm:$0xf]
      %v310 = vld [vmem:[%s2 + $0x14c] sm:$0xf]
      %v311 = vld [vmem:[%s2 + $0x150] sm:$0xf]
      %v312 = vld [vmem:[%s2 + $0x154] sm:$0xf]
      %v313 = vld [vmem:[%s2 + $0x158] sm:$0xf]
      %v314 = vld [vmem:[%s2 + $0x15c] sm:$0xf]
      %v315 = vld [vmem:[%s2 + $0x160] sm:$0xf]
      %v316 = vld [vmem:[%s2 + $0x164] sm:$0xf]
      %v317 = vld [vmem:[%s2 + $0x168] sm:$0xf]
      %v318 = vld [vmem:[%s2 + $0x16c] sm:$0xf]
      %v319 = vld [vmem:[%s2 + $0x170] sm:$0xf]
      %v320 = vld [vmem:[%s2 + $0x174] sm:$0xf]
      %v321 = vld [vmem:[%s2 + $0x178] sm:$0xf]
      %v322 = vld [vmem:[%s2 + $0x17c] sm:$0xf]
      %v323 = vld [vmem:[%s2 + $0x180] sm:$0xf]
      %v324 = vld [vmem:[%s2 + $0x184] sm:$0xf]
      %v325 = vld [vmem:[%s2 + $0x188] sm:$0xf]
      %v326 = vld [vmem:[%s2 + $0x18c] sm:$0xf]
      %v327 = vld [vmem:[%s2 + $0x190] sm:$0xf]
      %v328 = vld [vmem:[%s2 + $0x194] sm:$0xf]
      %v329 = vld [vmem:[%s2 + $0x198] sm:$0xf]
      %v330 = vld [vmem:[%s2 + $0x19c] sm:$0xf]
      %v331 = vld [vmem:[%s2 + $0x1a0] sm:$0xf]
      %v332 = vld [vmem:[%s2 + $0x1a4] sm:$0xf]
      %v333 = vld [vmem:[%s2 + $0x1a8] sm:$0xf]
      %v334 = vld [vmem:[%s2 + $0x1ac] sm:$0xf]
      %v335 = vld [vmem:[%s2 + $0x1b0] sm:$0xf]
      %v336 = vld [vmem:[%s2 + $0x1b4] sm:$0xf]
      %v337 = vld [vmem:[%s2 + $0x1b8] sm:$0xf]
      %v338 = vld [vmem:[%s2 + $0x1bc] sm:$0xf]
      %v339 = vld [vmem:[%s2 + $0x1c0] sm:$0xf]
      %v340 = vld [vmem:[%s2 + $0x1c4] sm:$0xf]
      %v341 = vld [vmem:[%s2 + $0x1c8] sm:$0xf]
      %v342 = vld [vmem:[%s2 + $0x1cc] sm:$0xf]
      %v343 = vld [vmem:[%s2 + $0x1d0] sm:$0xf]
      %v344 = vld [vmem:[%s2 + $0x1d4] sm:$0xf]
      %v345 = vld [vmem:[%s2 + $0x1d8] sm:$0xf]
      %v346 = vld [vmem:[%s2 + $0x1dc] sm:$0xf]
      %v347 = vld [vmem:[%s2 + $0x1e0] sm:$0xf]
      %v348 = vld [vmem:[%s2 + $0x1e4] sm:$0xf]
      %v349 = vld [vmem:[%s2 + $0x1e8] sm:$0xf]
      %v350 = vld [vmem:[%s2 + $0x1ec] sm:$0xf]
      %v351 = vld [vmem:[%s2 + $0x1f0] sm:$0xf]
      %v352 = vld [vmem:[%s2 + $0x1f4] sm:$0xf]
      %v353 = vld [vmem:[%s2 + $0x1f8] sm:$0xf]
      %v354 = vld [vmem:[%s2 + $0x1fc] sm:$0xf]
      %v355 = vld [vmem:[%s2 + $0x200] sm:$0xf]
      %v356 = vld [vmem:[%s2 + $0x204] sm:$0xf]
      %v357 = vld [vmem:[%s2 + $0x208] sm:$0xf]
      %v358 = vld [vmem:[%s2 + $0x20c] sm:$0xf]
      %v359 = vld [vmem:[%s2 + $0x210] sm:$0xf]
      %v360 = vld [vmem:[%s2 + $0x214] sm:$0xf]
      %v361 = vld [vmem:[%s2 + $0x218] sm:$0xf]
      %v362 = vld [vmem:[%s2 + $0x21c] sm:$0xf]
      %v363 = vld [vmem:[%s2 + $0x220] sm:$0xf]
      %v364 = vld [vmem:[%s2 + $0x224] sm:$0xf]
      %v365 = vld [vmem:[%s2 + $0x228] sm:$0xf]
      %v366 = vld [vmem:[%s2 + $0x22c] sm:$0xf]
      %v367 = vld [vmem:[%s2 + $0x230] sm:$0xf]
      %v368 = vld [vmem:[%s2 + $0x234] sm:$0xf]
      %v369 = vld [vmem:[%s2 + $0x238] sm:$0xf]
      %v370 = vld [vmem:[%s2 + $0x23c] sm:$0xf]
      %v371 = vld [vmem:[%s2 + $0x240] sm:$0xf]
      %v372 = vld [vmem:[%s2 + $0x244] sm:$0xf]
      %v373 = vld [vmem:[%s2 + $0x248] sm:$0xf]
      %v374 = vld [vmem:[%s2 + $0x24c] sm:$0xf]
      %v375 = vld [vmem:[%s2 + $0x250] sm:$0xf]
      %v376 = vld [vmem:[%s2 + $0x254] sm:$0xf]
      %v377 = vld [vmem:[%s2 + $0x258] sm:$0xf]
      %v378 = vld [vmem:[%s2 + $0x25c] sm:$0xf]
      %v379 = vld [vmem:[%s2 + $0x260] sm:$0xf]
      %v380 = vld [vmem:[%s2 + $0x264] sm:$0xf]
      %v381 = vld [vmem:[%s2 + $0x268] sm:$0xf]
      %v382 = vld [vmem:[%s2 + $0x26c] sm:$0xf]
      %v383 = vld [vmem:[%s2 + $0x270] sm:$0xf]
      %v384 = vld [vmem:[%s2 + $0x274] sm:$0xf]
      %v385 = vld [vmem:[%s2 + $0x278] sm:$0xf]
      %v386 = vld [vmem:[%s2 + $0x27c] sm:$0xf]
      %v387 = vld [vmem:[%s2 + $0x280] sm:$0xf]
      %v388 = vld [vmem:[%s2 + $0x284] sm:$0xf]
      %v389 = vld [vmem:[%s2 + $0x288] sm:$0xf]
      %v390 = vld [vmem:[%s2 + $0x28c] sm:$0xf]
      %v391 = vld [vmem:[%s2 + $0x290] sm:$0xf]
      %v392 = vld [vmem:[%s2 + $0x294] sm:$0xf]
      %v393 = vld [vmem:[%s2 + $0x298] sm:$0xf]
      %v394 = vld [vmem:[%s2 + $0x29c] sm:$0xf]
      %v395 = vld [vmem:[%s2 + $0x2a0] sm:$0xf]
      %v396 = vld [vmem:[%s2 + $0x2a4] sm:$0xf]
      %v397 = vld [vmem:[%s2 + $0x2a8] sm:$0xf]
      %v398 = vld [vmem:[%s2 + $0x2ac] sm:$0xf]
      %v399 = vld [vmem:[%s2 + $0x2b0] sm:$0xf]
      %v400 = vld [vmem:[%s2 + $0x2b4] sm:$0xf]
      %v401 = vld [vmem:[%s2 + $0x2b8] sm:$0xf]
      %v402 = vld [vmem:[%s2 + $0x2bc] sm:$0xf]
      %v403 = vld [vmem:[%s3] sm:$0xff]
      %v404 = vld [vmem:[%s3 + $0x8] sm:$0xff]
      %v405 = vld [vmem:[%s3 + $0x10] sm:$0xff]
      %v406 = vld [vmem:[%s3 + $0x18] sm:$0xff]
      %v407 = vld [vmem:[%s3 + $0x20] sm:$0xff]
      %v408 = vld [vmem:[%s3 + $0x28] sm:$0x3]
      %v409 = vsub.f32 %v202, 1.0
      %v410 = vmul.f32 %v409, 1e+09
      %v411 = vlaneseq
      %v412 = vshrl.u32 %v411, 7
      %v413 = vlaneseq
      %v414 = vand.u32 %v413, 127
      %v415 = vadd.s32 %v412, 4294967292
      %vm416 = vcmp.eq.s32.totalorder %v414, %v415
      %v417 = vsel %vm416, 1, 0
      %v418 = vcvt.s32.f32 %v417
      %v419 = vpack.c.bf16 %v418, %v418
      %v420 = vadd.s32 %v412, 4294967293
      %vm421 = vcmp.eq.s32.totalorder %v414, %v420
      %v422 = vsel %vm421, 1, 0
      %v423 = vcvt.s32.f32 %v422
      %v424 = vpack.c.bf16 %v423, %v423
      %v425 = vadd.s32 %v412, 4294967294
      %vm426 = vcmp.eq.s32.totalorder %v414, %v425
      %v427 = vsel %vm426, 1, 0
      %v428 = vcvt.s32.f32 %v427
      %v429 = vpack.c.bf16 %v428, %v428
      %v430 = vadd.s32 %v412, 4294967295
      %vm431 = vcmp.eq.s32.totalorder %v414, %v430
      %v432 = vsel %vm431, 1, 0
      %v433 = vcvt.s32.f32 %v432
      %v434 = vpack.c.bf16 %v433, %v433
      %vm435 = vcmp.eq.s32.totalorder %v414, %v412
      %v436 = vsel %vm435, 1, 0
      %v437 = vcvt.s32.f32 %v436
      %v438 = vpack.c.bf16 %v437, %v437
      %v439 = vadd.s32 %v412, 1
      %vm440 = vcmp.eq.s32.totalorder %v414, %v439
      %v441 = vsel %vm440, 1, 0
      %v442 = vcvt.s32.f32 %v441
      %v443 = vpack.c.bf16 %v442, %v442
      %v444 = vadd.s32 %v412, 2
      %vm445 = vcmp.eq.s32.totalorder %v414, %v444
      %v446 = vsel %vm445, 1, 0
      %v447 = vcvt.s32.f32 %v446
      %v448 = vpack.c.bf16 %v447, %v447
      %v449 = vadd.s32 %v412, 3
      %vm450 = vcmp.eq.s32.totalorder %v414, %v449
      %v451 = vsel %vm450, 1, 0
      %v452 = vcvt.s32.f32 %v451
      %v453 = vpack.c.bf16 %v452, %v452
      %v454 = vadd.s32 %v412, 4
      %vm455 = vcmp.eq.s32.totalorder %v414, %v454
      %v456 = vsel %vm455, 1, 0
      %v457 = vcvt.s32.f32 %v456
      %v458 = vpack.c.bf16 %v457, %v457
      %v459 = vadd.s32 %v412, 8
      %v460 = vadd.s32 %v459, 4294967292
      %vm461 = vcmp.eq.s32.totalorder %v414, %v460
      %v462 = vsel %vm461, 1, 0
      %v463 = vcvt.s32.f32 %v462
      %v464 = vpack.c.bf16 %v463, %v418
      %v465 = vadd.s32 %v459, 4294967293
      %vm466 = vcmp.eq.s32.totalorder %v414, %v465
      %v467 = vsel %vm466, 1, 0
      %v468 = vcvt.s32.f32 %v467
      %v469 = vpack.c.bf16 %v468, %v423
      %v470 = vadd.s32 %v459, 4294967294
      %vm471 = vcmp.eq.s32.totalorder %v414, %v470
      %v472 = vsel %vm471, 1, 0
      %v473 = vcvt.s32.f32 %v472
      %v474 = vpack.c.bf16 %v473, %v428
      %v475 = vadd.s32 %v459, 4294967295
      %vm476 = vcmp.eq.s32.totalorder %v414, %v475
      %v477 = vsel %vm476, 1, 0
      %v478 = vcvt.s32.f32 %v477
      %v479 = vpack.c.bf16 %v478, %v433
      %vm480 = vcmp.eq.s32.totalorder %v414, %v459
      %v481 = vsel %vm480, 1, 0
      %v482 = vcvt.s32.f32 %v481
      %v483 = vpack.c.bf16 %v482, %v437
      %v484 = vadd.s32 %v459, 1
      %vm485 = vcmp.eq.s32.totalorder %v414, %v484
      %v486 = vsel %vm485, 1, 0
      %v487 = vcvt.s32.f32 %v486
      %v488 = vpack.c.bf16 %v487, %v442
      %v489 = vadd.s32 %v459, 2
      %vm490 = vcmp.eq.s32.totalorder %v414, %v489
      %v491 = vsel %vm490, 1, 0
      %v492 = vcvt.s32.f32 %v491
      %v493 = vpack.c.bf16 %v492, %v447
      %v494 = vadd.s32 %v459, 3
      %vm495 = vcmp.eq.s32.totalorder %v414, %v494
      %v496 = vsel %vm495, 1, 0
      %v497 = vcvt.s32.f32 %v496
      %v498 = vpack.c.bf16 %v497, %v452
      %v499 = vadd.s32 %v459, 4
      %vm500 = vcmp.eq.s32.totalorder %v414, %v499
      %v501 = vsel %vm500, 1, 0
      %v502 = vcvt.s32.f32 %v501
      %v503 = vpack.c.bf16 %v502, %v457
      %vm504 = vcmask 261120
      %v505 = vsel %vm504, %v199, 0.0
      %506 = vadd.xlane.f32.xlu0 %v505
      %v507 = vpop.xlane.xlu0 %506
      %v508 = vrcp.pop 32.0
      %v509 = vmul.f32 %v507, %v508
      %v510 = vsub.f32 %v199, %v509
      %v511 = vmul.f32 %v510, %v510
      %v512 = vsel %vm504, %v511, 0.0
      %513 = vadd.xlane.f32.xlu0 %v512
      %v514 = vpop.xlane.xlu0 %513
      %v515 = vmul.f32 %v514, %v508
      %v516 = vadd.f32 %v515, 1e-05
      %v517 = vrsqrt.pop %v516
      %v518 = vmul.f32 %v510, %v517
      %v519 = vlaneseq
      %v520 = vshrl.u32 %v519, 7
      %v521 = vsub.s32 4, %v520
      %v522 = vrot.slane %v403, %v521
      %v523 = vmul.f32 %v518, %v522
      %v524 = vlaneseq
      %v525 = vshrl.u32 %v524, 7
      %v526 = vsub.s32 5, %v525
      %v527 = vrot.slane %v403, %v526
      %v528 = vadd.f32 %v523, %v527
      %v529 = vpack.c.bf16 %v528, %v528
      %v530 = vlaneseq
      %v531 = vshrl.u32 %v530, 7
      %v532 = vsub.s32 0, %v531
      %v533 = vrot.slane %v403, %v532
      %v538 = vunpack.c.l.b16 %v203
      %v539 = vunpack.c.l.b16 %v204
      %v540 = vunpack.c.l.b16 %v205
      %v541 = vunpack.c.l.b16 %v206
      %v542 = vpack.c.b16 %v539, %v538
      %v543 = vpack.c.b16 %v541, %v540
      %v547 = vsel %vm504, %v529, 0
      %549 = vmatprep.subr.bf16.mxu0 0
      %550 = vmatpush1.bf16.msra.mxu0 %v542
      %551 = vmatprep.subr.bf16.mxu0 0
      %552 = vmatpush1.bf16.msra.mxu0 %v543
      %553 = vmatprep.subr.bf16.mxu0 0
      %554 = vmatpush1.bf16.msra.mxu0 0
      %555 = vmatprep.subr.bf16.mxu0 0
      %556 = vmatpush1.bf16.msra.mxu0 0
      %557 = vmatprep.subr.bf16.mxu0 0
      %558 = vmatpush1.bf16.msra.mxu0 0
      %559 = vmatprep.subr.bf16.mxu0 0
      %560 = vmatpush1.bf16.msra.mxu0 0
      %561 = vmatprep.subr.bf16.mxu0 0
      %562 = vmatpush1.bf16.msra.mxu0 0
      %563 = vmatprep.subr.bf16.mxu0 0
      %564 = vmatpush1.bf16.msra.mxu0 0
      %565 = vmatprep.subr.bf16.mxu0 0
      %566 = vmatpush1.bf16.msra.mxu0 0
      %567 = vmatprep.subr.bf16.mxu0 0
      %568 = vmatpush1.bf16.msra.mxu0 0
      %569 = vmatprep.subr.bf16.mxu0 0
      %570 = vmatpush1.bf16.msra.mxu0 0
      %571 = vmatprep.subr.bf16.mxu0 0
      %572 = vmatpush1.bf16.msra.mxu0 0
      %573 = vmatprep.subr.bf16.mxu0 0
      %574 = vmatpush1.bf16.msra.mxu0 0
      %575 = vmatprep.subr.bf16.mxu0 0
      %576 = vmatpush1.bf16.msra.mxu0 0
      %577 = vmatprep.subr.bf16.mxu0 0
      %578 = vmatpush1.bf16.msra.mxu0 0
      %579 = vmatprep.subr.bf16.mxu0 0
      %580 = vmatpush1.bf16.msra.mxu0 0
      %581 = vmatprep.mubr.bf16.mxu0 0
      %582 = vmatmul.mubr.bf16.gmra.mrb[0].mxu0 %v547
      %v583 = vpop.f32.mrb[0].mxu0
      %v584 = vadd.f32 %v533, %v583
      %v585 = vpop.f32.mrb[0].mxu0
      %v586 = vpop.f32.mrb[0].mxu0
      %v587 = vpop.f32.mrb[0].mxu0
      %588 = vdwg.mxu0
      %v589 = vpack.c.bf16 %v584, %v584
      %591 = vrot.lane.b32.xlu0 %v589, 96
      %v592 = vpop.permute.xlu0 %591
      %vm593 = vcmask 130048
      %v595 = vsel %vm593, %v589, 0
      %v598 = vsel %vm593, %v592, 0
      %600 = vmatprep.subr.bf16.mxu0 0
      %601 = vmatpush1.bf16.xpose.msra.mxu0 %v598
      %602 = vmatprep.subr.bf16.mxu0 0
      %603 = vmatpush1.bf16.xpose.msra.mxu0 0
      %604 = vmatprep.subr.bf16.mxu0 0
      %605 = vmatpush1.bf16.xpose.msra.mxu0 0
      %606 = vmatprep.subr.bf16.mxu0 0
      %607 = vmatpush1.bf16.xpose.msra.mxu0 0
      %608 = vmatprep.subr.bf16.mxu0 0
      %609 = vmatpush1.bf16.xpose.msra.mxu0 0
      %610 = vmatprep.subr.bf16.mxu0 0
      %611 = vmatpush1.bf16.xpose.msra.mxu0 0
      %612 = vmatprep.subr.bf16.mxu0 0
      %613 = vmatpush1.bf16.xpose.msra.mxu0 0
      %614 = vmatprep.subr.bf16.mxu0 0
      %615 = vmatpush1.bf16.xpose.msra.mxu0 0
      %616 = vmatprep.subr.bf16.mxu0 0
      %617 = vmatpush1.bf16.xpose.msra.mxu0 0
      %618 = vmatprep.subr.bf16.mxu0 0
      %619 = vmatpush1.bf16.xpose.msra.mxu0 0
      %620 = vmatprep.subr.bf16.mxu0 0
      %621 = vmatpush1.bf16.xpose.msra.mxu0 0
      %622 = vmatprep.subr.bf16.mxu0 0
      %623 = vmatpush1.bf16.xpose.msra.mxu0 0
      %624 = vmatprep.subr.bf16.mxu0 0
      %625 = vmatpush1.bf16.xpose.msra.mxu0 0
      %626 = vmatprep.subr.bf16.mxu0 0
      %627 = vmatpush1.bf16.xpose.msra.mxu0 0
      %628 = vmatprep.subr.bf16.mxu0 0
      %629 = vmatpush1.bf16.xpose.msra.mxu0 0
      %630 = vmatprep.subr.bf16.mxu0 0
      %631 = vmatpush1.bf16.xpose.msra.mxu0 0
      %632 = vmatprep.mubr.bf16.mxu0 0
      %633 = vmatmul.mubr.bf16.gmra.mrb[0].mxu0 %v595
      %v634 = vpop.f32.mrb[0].mxu0
      %v635 = vadd.f32 0.0, %v634
      %v636 = vpop.f32.mrb[0].mxu0
      %v637 = vpop.f32.mrb[0].mxu0
      %v638 = vpop.f32.mrb[0].mxu0
      %639 = vdwg.mxu0
      %v640 = vmul.f32 %v635, 0.25
      %v641 = vlaneseq
      %v642 = vshrl.u32 %v641, 7
      %v643 = vsub.s32 0, %v642
      %v644 = vrot.slane %v410, %v643
      %v645 = vadd.f32 %v640, %v644
      %vm646 = vcmask 64512
      %v647 = vsel %vm646, %v645, -inf
      %648 = vmax.xlane.f32.xlu0 %v647
      %v649 = vpop.xlane.xlu0 %648
      %v650 = vsub.f32 %v645, %v649
      %v651 = vmul.f32 %v650, 1.442695
      %v652 = vpow.pop %v651
      %v653 = vsel %vm646, %v652, 0.0
      %654 = vadd.xlane.f32.xlu0 %v653
      %v655 = vpop.xlane.xlu0 %654
      %v656 = vrcp.pop %v655
      %v657 = vmul.f32 %v652, %v656
      %v658 = vpack.c.bf16 %v657, %v657
      %659 = vrot.lane.b32.xlu0 %v589, 64
      %v660 = vpop.permute.xlu0 %659
      %v662 = vsel %vm646, %v658, 0
      %vm664 = vcmask 1043456
      %v666 = vsel %vm664, %v660, 0
      %668 = vmatprep.subr.bf16.mxu0 0
      %669 = vmatpush1.bf16.msra.mxu0 %v666
      %670 = vmatprep.subr.bf16.mxu0 0
      %671 = vmatpush1.bf16.msra.mxu0 0
      %672 = vmatprep.subr.bf16.mxu0 0
      %673 = vmatpush1.bf16.msra.mxu0 0
      %674 = vmatprep.subr.bf16.mxu0 0
      %675 = vmatpush1.bf16.msra.mxu0 0
      %676 = vmatprep.subr.bf16.mxu0 0
      %677 = vmatpush1.bf16.msra.mxu0 0
      %678 = vmatprep.subr.bf16.mxu0 0
      %679 = vmatpush1.bf16.msra.mxu0 0
      %680 = vmatprep.subr.bf16.mxu0 0
      %681 = vmatpush1.bf16.msra.mxu0 0
      %682 = vmatprep.subr.bf16.mxu0 0
      %683 = vmatpush1.bf16.msra.mxu0 0
      %684 = vmatprep.subr.bf16.mxu0 0
      %685 = vmatpush1.bf16.msra.mxu0 0
      %686 = vmatprep.subr.bf16.mxu0 0
      %687 = vmatpush1.bf16.msra.mxu0 0
      %688 = vmatprep.subr.bf16.mxu0 0
      %689 = vmatpush1.bf16.msra.mxu0 0
      %690 = vmatprep.subr.bf16.mxu0 0
      %691 = vmatpush1.bf16.msra.mxu0 0
      %692 = vmatprep.subr.bf16.mxu0 0
      %693 = vmatpush1.bf16.msra.mxu0 0
      %694 = vmatprep.subr.bf16.mxu0 0
      %695 = vmatpush1.bf16.msra.mxu0 0
      %696 = vmatprep.subr.bf16.mxu0 0
      %697 = vmatpush1.bf16.msra.mxu0 0
      %698 = vmatprep.subr.bf16.mxu0 0
      %699 = vmatpush1.bf16.msra.mxu0 0
      %700 = vmatprep.mubr.bf16.mxu0 0
      %701 = vmatmul.mubr.bf16.gmra.mrb[0].mxu0 %v662
      %v702 = vpop.f32.mrb[0].mxu0
      %v703 = vadd.f32 0.0, %v702
      %v704 = vpop.f32.mrb[0].mxu0
      %v705 = vpop.f32.mrb[0].mxu0
      %v706 = vpop.f32.mrb[0].mxu0
      %707 = vdwg.mxu0
      %708 = vrot.lane.b32.xlu0 %v589, 112
      %v709 = vpop.permute.xlu0 %708
      %710 = vrot.lane.b32.xlu0 %v589, 80
      %v711 = vpop.permute.xlu0 %710
      %v713 = vsel %vm593, %v709, 0
      %v716 = vsel %vm593, %v711, 0
      %718 = vmatprep.subr.bf16.mxu0 0
      %719 = vmatpush1.bf16.xpose.msra.mxu0 %v716
      %720 = vmatprep.subr.bf16.mxu0 0
      %721 = vmatpush1.bf16.xpose.msra.mxu0 0
      %722 = vmatprep.subr.bf16.mxu0 0
      %723 = vmatpush1.bf16.xpose.msra.mxu0 0
      %724 = vmatprep.subr.bf16.mxu0 0
      %725 = vmatpush1.bf16.xpose.msra.mxu0 0
      %726 = vmatprep.subr.bf16.mxu0 0
      %727 = vmatpush1.bf16.xpose.msra.mxu0 0
      %728 = vmatprep.subr.bf16.mxu0 0
      %729 = vmatpush1.bf16.xpose.msra.mxu0 0
      %730 = vmatprep.subr.bf16.mxu0 0
      %731 = vmatpush1.bf16.xpose.msra.mxu0 0
      %732 = vmatprep.subr.bf16.mxu0 0
      %733 = vmatpush1.bf16.xpose.msra.mxu0 0
      %734 = vmatprep.subr.bf16.mxu0 0
      %735 = vmatpush1.bf16.xpose.msra.mxu0 0
      %736 = vmatprep.subr.bf16.mxu0 0
      %737 = vmatpush1.bf16.xpose.msra.mxu0 0
      %738 = vmatprep.subr.bf16.mxu0 0
      %739 = vmatpush1.bf16.xpose.msra.mxu0 0
      %740 = vmatprep.subr.bf16.mxu0 0
      %741 = vmatpush1.bf16.xpose.msra.mxu0 0
      %742 = vmatprep.subr.bf16.mxu0 0
      %743 = vmatpush1.bf16.xpose.msra.mxu0 0
      %744 = vmatprep.subr.bf16.mxu0 0
      %745 = vmatpush1.bf16.xpose.msra.mxu0 0
      %746 = vmatprep.subr.bf16.mxu0 0
      %747 = vmatpush1.bf16.xpose.msra.mxu0 0
      %748 = vmatprep.subr.bf16.mxu0 0
      %749 = vmatpush1.bf16.xpose.msra.mxu0 0
      %750 = vmatprep.mubr.bf16.mxu0 0
      %751 = vmatmul.mubr.bf16.gmra.mrb[0].mxu0 %v713
      %v752 = vpop.f32.mrb[0].mxu0
      %v753 = vadd.f32 0.0, %v752
      %v754 = vpop.f32.mrb[0].mxu0
      %v755 = vpop.f32.mrb[0].mxu0
      %v756 = vpop.f32.mrb[0].mxu0
      %757 = vdwg.mxu0
      %v758 = vmul.f32 %v753, 0.25
      %v759 = vadd.f32 %v758, %v644
      %v760 = vsel %vm646, %v759, -inf
      %761 = vmax.xlane.f32.xlu0 %v760
      %v762 = vpop.xlane.xlu0 %761
      %v763 = vsub.f32 %v759, %v762
      %v764 = vmul.f32 %v763, 1.442695
      %v765 = vpow.pop %v764
      %v766 = vsel %vm646, %v765, 0.0
      %767 = vadd.xlane.f32.xlu0 %v766
      %v768 = vpop.xlane.xlu0 %767
      %v769 = vrcp.pop %v768
      %v770 = vmul.f32 %v765, %v769
      %v771 = vpack.c.bf16 %v770, %v770
      %772 = vrot.lane.b32.xlu0 %v589, 48
      %v773 = vpop.permute.xlu0 %772
      %v775 = vsel %vm646, %v771, 0
      %v778 = vsel %vm664, %v773, 0
      %780 = vmatprep.subr.bf16.mxu0 0
      %781 = vmatpush1.bf16.msra.mxu0 %v778
      %782 = vmatprep.subr.bf16.mxu0 0
      %783 = vmatpush1.bf16.msra.mxu0 0
      %784 = vmatprep.subr.bf16.mxu0 0
      %785 = vmatpush1.bf16.msra.mxu0 0
      %786 = vmatprep.subr.bf16.mxu0 0
      %787 = vmatpush1.bf16.msra.mxu0 0
      %788 = vmatprep.subr.bf16.mxu0 0
      %789 = vmatpush1.bf16.msra.mxu0 0
      %790 = vmatprep.subr.bf16.mxu0 0
      %791 = vmatpush1.bf16.msra.mxu0 0
      %792 = vmatprep.subr.bf16.mxu0 0
      %793 = vmatpush1.bf16.msra.mxu0 0
      %794 = vmatprep.subr.bf16.mxu0 0
      %795 = vmatpush1.bf16.msra.mxu0 0
      %796 = vmatprep.subr.bf16.mxu0 0
      %797 = vmatpush1.bf16.msra.mxu0 0
      %798 = vmatprep.subr.bf16.mxu0 0
      %799 = vmatpush1.bf16.msra.mxu0 0
      %800 = vmatprep.subr.bf16.mxu0 0
      %801 = vmatpush1.bf16.msra.mxu0 0
      %802 = vmatprep.subr.bf16.mxu0 0
      %803 = vmatpush1.bf16.msra.mxu0 0
      %804 = vmatprep.subr.bf16.mxu0 0
      %805 = vmatpush1.bf16.msra.mxu0 0
      %806 = vmatprep.subr.bf16.mxu0 0
      %807 = vmatpush1.bf16.msra.mxu0 0
      %808 = vmatprep.subr.bf16.mxu0 0
      %809 = vmatpush1.bf16.msra.mxu0 0
      %810 = vmatprep.subr.bf16.mxu0 0
      %811 = vmatpush1.bf16.msra.mxu0 0
      %812 = vmatprep.mubr.bf16.mxu0 0
      %813 = vmatmul.mubr.bf16.gmra.mrb[0].mxu0 %v775
      %v814 = vpop.f32.mrb[0].mxu0
      %v815 = vadd.f32 0.0, %v814
      %v816 = vpop.f32.mrb[0].mxu0
      %v817 = vpop.f32.mrb[0].mxu0
      %v818 = vpop.f32.mrb[0].mxu0
      %819 = vdwg.mxu0
      %821 = vrot.lane.b32.xlu0 %v815, 16
      %v822 = vpop.permute.xlu0 %821
      %v824 = vsel %vm593, %v703, %v822
      %v825 = vpack.c.bf16 %v824, %v824
      %v826 = vlaneseq
      %v827 = vshrl.u32 %v826, 7
      %v828 = vsub.s32 1, %v827
      %v829 = vrot.slane %v403, %v828
      %830 = vrot.lane.b32.xlu0 %v542, 32
      %v831 = vpop.permute.xlu0 %830
      %832 = vrot.lane.b32.xlu0 %v543, 32
      %v833 = vpop.permute.xlu0 %832
      %v837 = vsel %vm504, %v825, 0
      %839 = vmatprep.subr.bf16.mxu0 0
      %840 = vmatpush1.bf16.msra.mxu0 %v831
      %841 = vmatprep.subr.bf16.mxu0 0
      %842 = vmatpush1.bf16.msra.mxu0 %v833
      %843 = vmatprep.subr.bf16.mxu0 0
      %844 = vmatpush1.bf16.msra.mxu0 0
      %845 = vmatprep.subr.bf16.mxu0 0
      %846 = vmatpush1.bf16.msra.mxu0 0
      %847 = vmatprep.subr.bf16.mxu0 0
      %848 = vmatpush1.bf16.msra.mxu0 0
      %849 = vmatprep.subr.bf16.mxu0 0
      %850 = vmatpush1.bf16.msra.mxu0 0
      %851 = vmatprep.subr.bf16.mxu0 0
      %852 = vmatpush1.bf16.msra.mxu0 0
      %853 = vmatprep.subr.bf16.mxu0 0
      %854 = vmatpush1.bf16.msra.mxu0 0
      %855 = vmatprep.subr.bf16.mxu0 0
      %856 = vmatpush1.bf16.msra.mxu0 0
      %857 = vmatprep.subr.bf16.mxu0 0
      %858 = vmatpush1.bf16.msra.mxu0 0
      %859 = vmatprep.subr.bf16.mxu0 0
      %860 = vmatpush1.bf16.msra.mxu0 0
      %861 = vmatprep.subr.bf16.mxu0 0
      %862 = vmatpush1.bf16.msra.mxu0 0
      %863 = vmatprep.subr.bf16.mxu0 0
      %864 = vmatpush1.bf16.msra.mxu0 0
      %865 = vmatprep.subr.bf16.mxu0 0
      %866 = vmatpush1.bf16.msra.mxu0 0
      %867 = vmatprep.subr.bf16.mxu0 0
      %868 = vmatpush1.bf16.msra.mxu0 0
      %869 = vmatprep.subr.bf16.mxu0 0
      %870 = vmatpush1.bf16.msra.mxu0 0
      %871 = vmatprep.mubr.bf16.mxu0 0
      %872 = vmatmul.mubr.bf16.gmra.mrb[0].mxu0 %v837
      %v873 = vpop.f32.mrb[0].mxu0
      %v874 = vadd.f32 %v829, %v873
      %v875 = vpop.f32.mrb[0].mxu0
      %v876 = vpop.f32.mrb[0].mxu0
      %v877 = vpop.f32.mrb[0].mxu0
      %878 = vdwg.mxu0
      %v879 = vadd.f32 %v874, %v528
      %v880 = vsel %vm504, %v879, 0.0
      %881 = vadd.xlane.f32.xlu0 %v880
      %v882 = vpop.xlane.xlu0 %881
      %v883 = vmul.f32 %v882, %v508
      %v884 = vsub.f32 %v879, %v883
      %v885 = vmul.f32 %v884, %v884
      %v886 = vsel %vm504, %v885, 0.0
      %887 = vadd.xlane.f32.xlu0 %v886
      %v888 = vpop.xlane.xlu0 %887
      %v889 = vmul.f32 %v888, %v508
      %v890 = vadd.f32 %v889, 1e-05
      %v891 = vrsqrt.pop %v890
      %v892 = vmul.f32 %v884, %v891
      %v893 = vlaneseq
      %v894 = vshrl.u32 %v893, 7
      %v895 = vsub.s32 6, %v894
      %v896 = vrot.slane %v403, %v895
      %v897 = vmul.f32 %v892, %v896
      %v898 = vlaneseq
      %v899 = vshrl.u32 %v898, 7
      %v900 = vsub.s32 7, %v899
      %v901 = vrot.slane %v403, %v900
      %v902 = vadd.f32 %v897, %v901
      %904 = vrot.lane.b32.xlu0 %v199, 96
      %v905 = vpop.permute.xlu0 %904
      %v907 = vmul.f32 %v902, %v905
      %v908 = vpack.c.bf16 %v907, %v907
      %v909 = vlaneseq
      %v910 = vshrl.u32 %v909, 7
      %v911 = vsub.s32 2, %v910
      %v912 = vrot.slane %v403, %v911
      %v913 = vadd.f32 %v912, 0.0
      %v915 = vsel %vm646, %v419, 0
      %v918 = vsel %vm664, %v908, 0
      %920 = vmatprep.subr.bf16.mxu0 0
      %921 = vmatpush1.bf16.msra.mxu0 %v918
      %922 = vmatprep.subr.bf16.mxu0 0
      %923 = vmatpush1.bf16.msra.mxu0 0
      %924 = vmatprep.subr.bf16.mxu0 0
      %925 = vmatpush1.bf16.msra.mxu0 0
      %926 = vmatprep.subr.bf16.mxu0 0
      %927 = vmatpush1.bf16.msra.mxu0 0
      %928 = vmatprep.subr.bf16.mxu0 0
      %929 = vmatpush1.bf16.msra.mxu0 0
      %930 = vmatprep.subr.bf16.mxu0 0
      %931 = vmatpush1.bf16.msra.mxu0 0
      %932 = vmatprep.subr.bf16.mxu0 0
      %933 = vmatpush1.bf16.msra.mxu0 0
      %934 = vmatprep.subr.bf16.mxu0 0
      %935 = vmatpush1.bf16.msra.mxu0 0
      %936 = vmatprep.subr.bf16.mxu0 0
      %937 = vmatpush1.bf16.msra.mxu0 0
      %938 = vmatprep.subr.bf16.mxu0 0
      %939 = vmatpush1.bf16.msra.mxu0 0
      %940 = vmatprep.subr.bf16.mxu0 0
      %941 = vmatpush1.bf16.msra.mxu0 0
      %942 = vmatprep.subr.bf16.mxu0 0
      %943 = vmatpush1.bf16.msra.mxu0 0
      %944 = vmatprep.subr.bf16.mxu0 0
      %945 = vmatpush1.bf16.msra.mxu0 0
      %946 = vmatprep.subr.bf16.mxu0 0
      %947 = vmatpush1.bf16.msra.mxu0 0
      %948 = vmatprep.subr.bf16.mxu0 0
      %949 = vmatpush1.bf16.msra.mxu0 0
      %950 = vmatprep.subr.bf16.mxu0 0
      %951 = vmatpush1.bf16.msra.mxu0 0
      %952 = vmatprep.mubr.bf16.mxu0 0
      %953 = vmatmul.mubr.bf16.gmra.mrb[0].mxu0 %v915
      %v954 = vpop.f32.mrb[0].mxu0
      %v955 = vadd.f32 0.0, %v954
      %v956 = vpop.f32.mrb[0].mxu0
      %v957 = vpop.f32.mrb[0].mxu0
      %v958 = vpop.f32.mrb[0].mxu0
      %959 = vdwg.mxu0
      %v960 = vpack.c.bf16 %v955, %v955
      %v965 = vunpack.c.l.b16 %v227
      %v966 = vunpack.c.l.b16 %v228
      %v967 = vunpack.c.l.b16 %v229
      %v968 = vunpack.c.l.b16 %v230
      %v969 = vpack.c.b16 %v966, %v965
      %v970 = vpack.c.b16 %v968, %v967
      %v974 = vsel %vm504, %v960, 0
      %976 = vmatprep.subr.bf16.mxu0 0
      %977 = vmatpush1.bf16.msra.mxu0 %v969
      %978 = vmatprep.subr.bf16.mxu0 0
      %979 = vmatpush1.bf16.msra.mxu0 %v970
      %980 = vmatprep.subr.bf16.mxu0 0
      %981 = vmatpush1.bf16.msra.mxu0 0
      %982 = vmatprep.subr.bf16.mxu0 0
      %983 = vmatpush1.bf16.msra.mxu0 0
      %984 = vmatprep.subr.bf16.mxu0 0
      %985 = vmatpush1.bf16.msra.mxu0 0
      %986 = vmatprep.subr.bf16.mxu0 0
      %987 = vmatpush1.bf16.msra.mxu0 0
      %988 = vmatprep.subr.bf16.mxu0 0
      %989 = vmatpush1.bf16.msra.mxu0 0
      %990 = vmatprep.subr.bf16.mxu0 0
      %991 = vmatpush1.bf16.msra.mxu0 0
      %992 = vmatprep.subr.bf16.mxu0 0
      %993 = vmatpush1.bf16.msra.mxu0 0
      %994 = vmatprep.subr.bf16.mxu0 0
      %995 = vmatpush1.bf16.msra.mxu0 0
      %996 = vmatprep.subr.bf16.mxu0 0
      %997 = vmatpush1.bf16.msra.mxu0 0
      %998 = vmatprep.subr.bf16.mxu0 0
      %999 = vmatpush1.bf16.msra.mxu0 0
      %1000 = vmatprep.subr.bf16.mxu0 0
      %1001 = vmatpush1.bf16.msra.mxu0 0
      %1002 = vmatprep.subr.bf16.mxu0 0
      %1003 = vmatpush1.bf16.msra.mxu0 0
      %1004 = vmatprep.subr.bf16.mxu0 0
      %1005 = vmatpush1.bf16.msra.mxu0 0
      %1006 = vmatprep.subr.bf16.mxu0 0
      %1007 = vmatpush1.bf16.msra.mxu0 0
      %1008 = vmatprep.mubr.bf16.mxu0 0
      %1009 = vmatmul.mubr.bf16.gmra.mrb[0].mxu0 %v974
      %v1010 = vpop.f32.mrb[0].mxu0
      %v1011 = vadd.f32 0.0, %v1010
      %v1012 = vpop.f32.mrb[0].mxu0
      %v1013 = vpop.f32.mrb[0].mxu0
      %v1014 = vpop.f32.mrb[0].mxu0
      %1015 = vdwg.mxu0
      %v1016 = vadd.f32 %v913, %v1011
      %v1018 = vsel %vm646, %v424, 0
      %1020 = vmatprep.subr.bf16.mxu0 0
      %1021 = vmatpush1.bf16.msra.mxu0 %v918
      %1022 = vmatprep.subr.bf16.mxu0 0
      %1023 = vmatpush1.bf16.msra.mxu0 0
      %1024 = vmatprep.subr.bf16.mxu0 0
      %1025 = vmatpush1.bf16.msra.mxu0 0
      %1026 = vmatprep.subr.bf16.mxu0 0
      %1027 = vmatpush1.bf16.msra.mxu0 0
      %1028 = vmatprep.subr.bf16.mxu0 0
      %1029 = vmatpush1.bf16.msra.mxu0 0
      %1030 = vmatprep.subr.bf16.mxu0 0
      %1031 = vmatpush1.bf16.msra.mxu0 0
      %1032 = vmatprep.subr.bf16.mxu0 0
      %1033 = vmatpush1.bf16.msra.mxu0 0
      %1034 = vmatprep.subr.bf16.mxu0 0
      %1035 = vmatpush1.bf16.msra.mxu0 0
      %1036 = vmatprep.subr.bf16.mxu0 0
      %1037 = vmatpush1.bf16.msra.mxu0 0
      %1038 = vmatprep.subr.bf16.mxu0 0
      %1039 = vmatpush1.bf16.msra.mxu0 0
      %1040 = vmatprep.subr.bf16.mxu0 0
      %1041 = vmatpush1.bf16.msra.mxu0 0
      %1042 = vmatprep.subr.bf16.mxu0 0
      %1043 = vmatpush1.bf16.msra.mxu0 0
      %1044 = vmatprep.subr.bf16.mxu0 0
      %1045 = vmatpush1.bf16.msra.mxu0 0
      %1046 = vmatprep.subr.bf16.mxu0 0
      %1047 = vmatpush1.bf16.msra.mxu0 0
      %1048 = vmatprep.subr.bf16.mxu0 0
      %1049 = vmatpush1.bf16.msra.mxu0 0
      %1050 = vmatprep.subr.bf16.mxu0 0
      %1051 = vmatpush1.bf16.msra.mxu0 0
      %1052 = vmatprep.mubr.bf16.mxu0 0
      %1053 = vmatmul.mubr.bf16.gmra.mrb[0].mxu0 %v1018
      %v1054 = vpop.f32.mrb[0].mxu0
      %v1055 = vadd.f32 0.0, %v1054
      %v1056 = vpop.f32.mrb[0].mxu0
      %v1057 = vpop.f32.mrb[0].mxu0
      %v1058 = vpop.f32.mrb[0].mxu0
      %1059 = vdwg.mxu0
      %v1060 = vpack.c.bf16 %v1055, %v1055
      %v1065 = vunpack.c.l.b16 %v231
      %v1066 = vunpack.c.l.b16 %v232
      %v1067 = vunpack.c.l.b16 %v233
      %v1068 = vunpack.c.l.b16 %v234
      %v1069 = vpack.c.b16 %v1066, %v1065
      %v1070 = vpack.c.b16 %v1068, %v1067
      %v1074 = vsel %vm504, %v1060, 0
      %1076 = vmatprep.subr.bf16.mxu0 0
      %1077 = vmatpush1.bf16.msra.mxu0 %v1069
      %1078 = vmatprep.subr.bf16.mxu0 0
      %1079 = vmatpush1.bf16.msra.mxu0 %v1070
      %1080 = vmatprep.subr.bf16.mxu0 0
      %1081 = vmatpush1.bf16.msra.mxu0 0
      %1082 = vmatprep.subr.bf16.mxu0 0
      %1083 = vmatpush1.bf16.msra.mxu0 0
      %1084 = vmatprep.subr.bf16.mxu0 0
      %1085 = vmatpush1.bf16.msra.mxu0 0
      %1086 = vmatprep.subr.bf16.mxu0 0
      %1087 = vmatpush1.bf16.msra.mxu0 0
      %1088 = vmatprep.subr.bf16.mxu0 0
      %1089 = vmatpush1.bf16.msra.mxu0 0
      %1090 = vmatprep.subr.bf16.mxu0 0
      %1091 = vmatpush1.bf16.msra.mxu0 0
      %1092 = vmatprep.subr.bf16.mxu0 0
      %1093 = vmatpush1.bf16.msra.mxu0 0
      %1094 = vmatprep.subr.bf16.mxu0 0
      %1095 = vmatpush1.bf16.msra.mxu0 0
      %1096 = vmatprep.subr.bf16.mxu0 0
      %1097 = vmatpush1.bf16.msra.mxu0 0
      %1098 = vmatprep.subr.bf16.mxu0 0
      %1099 = vmatpush1.bf16.msra.mxu0 0
      %1100 = vmatprep.subr.bf16.mxu0 0
      %1101 = vmatpush1.bf16.msra.mxu0 0
      %1102 = vmatprep.subr.bf16.mxu0 0
      %1103 = vmatpush1.bf16.msra.mxu0 0
      %1104 = vmatprep.subr.bf16.mxu0 0
      %1105 = vmatpush1.bf16.msra.mxu0 0
      %1106 = vmatprep.subr.bf16.mxu0 0
      %1107 = vmatpush1.bf16.msra.mxu0 0
      %1108 = vmatprep.mubr.bf16.mxu0 0
      %1109 = vmatmul.mubr.bf16.gmra.mrb[0].mxu0 %v1074
      %v1110 = vpop.f32.mrb[0].mxu0
      %v1111 = vadd.f32 0.0, %v1110
      %v1112 = vpop.f32.mrb[0].mxu0
      %v1113 = vpop.f32.mrb[0].mxu0
      %v1114 = vpop.f32.mrb[0].mxu0
      %1115 = vdwg.mxu0
      %v1116 = vadd.f32 %v1016, %v1111
      %v1118 = vsel %vm646, %v429, 0
      %1120 = vmatprep.subr.bf16.mxu0 0
      %1121 = vmatpush1.bf16.msra.mxu0 %v918
      %1122 = vmatprep.subr.bf16.mxu0 0
      %1123 = vmatpush1.bf16.msra.mxu0 0
      %1124 = vmatprep.subr.bf16.mxu0 0
      %1125 = vmatpush1.bf16.msra.mxu0 0
      %1126 = vmatprep.subr.bf16.mxu0 0
      %1127 = vmatpush1.bf16.msra.mxu0 0
      %1128 = vmatprep.subr.bf16.mxu0 0
      %1129 = vmatpush1.bf16.msra.mxu0 0
      %1130 = vmatprep.subr.bf16.mxu0 0
      %1131 = vmatpush1.bf16.msra.mxu0 0
      %1132 = vmatprep.subr.bf16.mxu0 0
      %1133 = vmatpush1.bf16.msra.mxu0 0
      %1134 = vmatprep.subr.bf16.mxu0 0
      %1135 = vmatpush1.bf16.msra.mxu0 0
      %1136 = vmatprep.subr.bf16.mxu0 0
      %1137 = vmatpush1.bf16.msra.mxu0 0
      %1138 = vmatprep.subr.bf16.mxu0 0
      %1139 = vmatpush1.bf16.msra.mxu0 0
      %1140 = vmatprep.subr.bf16.mxu0 0
      %1141 = vmatpush1.bf16.msra.mxu0 0
      %1142 = vmatprep.subr.bf16.mxu0 0
      %1143 = vmatpush1.bf16.msra.mxu0 0
      %1144 = vmatprep.subr.bf16.mxu0 0
      %1145 = vmatpush1.bf16.msra.mxu0 0
      %1146 = vmatprep.subr.bf16.mxu0 0
      %1147 = vmatpush1.bf16.msra.mxu0 0
      %1148 = vmatprep.subr.bf16.mxu0 0
      %1149 = vmatpush1.bf16.msra.mxu0 0
      %1150 = vmatprep.subr.bf16.mxu0 0
      %1151 = vmatpush1.bf16.msra.mxu0 0
      %1152 = vmatprep.mubr.bf16.mxu0 0
      %1153 = vmatmul.mubr.bf16.gmra.mrb[0].mxu0 %v1118
      %v1154 = vpop.f32.mrb[0].mxu0
      %v1155 = vadd.f32 0.0, %v1154
      %v1156 = vpop.f32.mrb[0].mxu0
      %v1157 = vpop.f32.mrb[0].mxu0
      %v1158 = vpop.f32.mrb[0].mxu0
      %1159 = vdwg.mxu0
      %v1160 = vpack.c.bf16 %v1155, %v1155
      %v1165 = vunpack.c.l.b16 %v235
      %v1166 = vunpack.c.l.b16 %v236
      %v1167 = vunpack.c.l.b16 %v237
      %v1168 = vunpack.c.l.b16 %v238
      %v1169 = vpack.c.b16 %v1166, %v1165
      %v1170 = vpack.c.b16 %v1168, %v1167
      %v1174 = vsel %vm504, %v1160, 0
      %1176 = vmatprep.subr.bf16.mxu0 0
      %1177 = vmatpush1.bf16.msra.mxu0 %v1169
      %1178 = vmatprep.subr.bf16.mxu0 0
      %1179 = vmatpush1.bf16.msra.mxu0 %v1170
      %1180 = vmatprep.subr.bf16.mxu0 0
      %1181 = vmatpush1.bf16.msra.mxu0 0
      %1182 = vmatprep.subr.bf16.mxu0 0
      %1183 = vmatpush1.bf16.msra.mxu0 0
      %1184 = vmatprep.subr.bf16.mxu0 0
      %1185 = vmatpush1.bf16.msra.mxu0 0
      %1186 = vmatprep.subr.bf16.mxu0 0
      %1187 = vmatpush1.bf16.msra.mxu0 0
      %1188 = vmatprep.subr.bf16.mxu0 0
      %1189 = vmatpush1.bf16.msra.mxu0 0
      %1190 = vmatprep.subr.bf16.mxu0 0
      %1191 = vmatpush1.bf16.msra.mxu0 0
      %1192 = vmatprep.subr.bf16.mxu0 0
      %1193 = vmatpush1.bf16.msra.mxu0 0
      %1194 = vmatprep.subr.bf16.mxu0 0
      %1195 = vmatpush1.bf16.msra.mxu0 0
      %1196 = vmatprep.subr.bf16.mxu0 0
      %1197 = vmatpush1.bf16.msra.mxu0 0
      %1198 = vmatprep.subr.bf16.mxu0 0
      %1199 = vmatpush1.bf16.msra.mxu0 0
      %1200 = vmatprep.subr.bf16.mxu0 0
      %1201 = vmatpush1.bf16.msra.mxu0 0
      %1202 = vmatprep.subr.bf16.mxu0 0
      %1203 = vmatpush1.bf16.msra.mxu0 0
      %1204 = vmatprep.subr.bf16.mxu0 0
      %1205 = vmatpush1.bf16.msra.mxu0 0
      %1206 = vmatprep.subr.bf16.mxu0 0
      %1207 = vmatpush1.bf16.msra.mxu0 0
      %1208 = vmatprep.mubr.bf16.mxu0 0
      %1209 = vmatmul.mubr.bf16.gmra.mrb[0].mxu0 %v1174
      %v1210 = vpop.f32.mrb[0].mxu0
      %v1211 = vadd.f32 0.0, %v1210
      %v1212 = vpop.f32.mrb[0].mxu0
      %v1213 = vpop.f32.mrb[0].mxu0
      %v1214 = vpop.f32.mrb[0].mxu0
      %1215 = vdwg.mxu0
      %v1216 = vadd.f32 %v1116, %v1211
      %v1218 = vsel %vm646, %v434, 0
      %1220 = vmatprep.subr.bf16.mxu0 0
      %1221 = vmatpush1.bf16.msra.mxu0 %v918
      %1222 = vmatprep.subr.bf16.mxu0 0
      %1223 = vmatpush1.bf16.msra.mxu0 0
      %1224 = vmatprep.subr.bf16.mxu0 0
      %1225 = vmatpush1.bf16.msra.mxu0 0
      %1226 = vmatprep.subr.bf16.mxu0 0
      %1227 = vmatpush1.bf16.msra.mxu0 0
      %1228 = vmatprep.subr.bf16.mxu0 0
      %1229 = vmatpush1.bf16.msra.mxu0 0
      %1230 = vmatprep.subr.bf16.mxu0 0
      %1231 = vmatpush1.bf16.msra.mxu0 0
      %1232 = vmatprep.subr.bf16.mxu0 0
      %1233 = vmatpush1.bf16.msra.mxu0 0
      %1234 = vmatprep.subr.bf16.mxu0 0
      %1235 = vmatpush1.bf16.msra.mxu0 0
      %1236 = vmatprep.subr.bf16.mxu0 0
      %1237 = vmatpush1.bf16.msra.mxu0 0
      %1238 = vmatprep.subr.bf16.mxu0 0
      %1239 = vmatpush1.bf16.msra.mxu0 0
      %1240 = vmatprep.subr.bf16.mxu0 0
      %1241 = vmatpush1.bf16.msra.mxu0 0
      %1242 = vmatprep.subr.bf16.mxu0 0
      %1243 = vmatpush1.bf16.msra.mxu0 0
      %1244 = vmatprep.subr.bf16.mxu0 0
      %1245 = vmatpush1.bf16.msra.mxu0 0
      %1246 = vmatprep.subr.bf16.mxu0 0
      %1247 = vmatpush1.bf16.msra.mxu0 0
      %1248 = vmatprep.subr.bf16.mxu0 0
      %1249 = vmatpush1.bf16.msra.mxu0 0
      %1250 = vmatprep.subr.bf16.mxu0 0
      %1251 = vmatpush1.bf16.msra.mxu0 0
      %1252 = vmatprep.mubr.bf16.mxu0 0
      %1253 = vmatmul.mubr.bf16.gmra.mrb[0].mxu0 %v1218
      %v1254 = vpop.f32.mrb[0].mxu0
      %v1255 = vadd.f32 0.0, %v1254
      %v1256 = vpop.f32.mrb[0].mxu0
      %v1257 = vpop.f32.mrb[0].mxu0
      %v1258 = vpop.f32.mrb[0].mxu0
      %1259 = vdwg.mxu0
      %v1260 = vpack.c.bf16 %v1255, %v1255
      %v1265 = vunpack.c.l.b16 %v239
      %v1266 = vunpack.c.l.b16 %v240
      %v1267 = vunpack.c.l.b16 %v241
      %v1268 = vunpack.c.l.b16 %v242
      %v1269 = vpack.c.b16 %v1266, %v1265
      %v1270 = vpack.c.b16 %v1268, %v1267
      %v1274 = vsel %vm504, %v1260, 0
      %1276 = vmatprep.subr.bf16.mxu0 0
      %1277 = vmatpush1.bf16.msra.mxu0 %v1269
      %1278 = vmatprep.subr.bf16.mxu0 0
      %1279 = vmatpush1.bf16.msra.mxu0 %v1270
      %1280 = vmatprep.subr.bf16.mxu0 0
      %1281 = vmatpush1.bf16.msra.mxu0 0
      %1282 = vmatprep.subr.bf16.mxu0 0
      %1283 = vmatpush1.bf16.msra.mxu0 0
      %1284 = vmatprep.subr.bf16.mxu0 0
      %1285 = vmatpush1.bf16.msra.mxu0 0
      %1286 = vmatprep.subr.bf16.mxu0 0
      %1287 = vmatpush1.bf16.msra.mxu0 0
      %1288 = vmatprep.subr.bf16.mxu0 0
      %1289 = vmatpush1.bf16.msra.mxu0 0
      %1290 = vmatprep.subr.bf16.mxu0 0
      %1291 = vmatpush1.bf16.msra.mxu0 0
      %1292 = vmatprep.subr.bf16.mxu0 0
      %1293 = vmatpush1.bf16.msra.mxu0 0
      %1294 = vmatprep.subr.bf16.mxu0 0
      %1295 = vmatpush1.bf16.msra.mxu0 0
      %1296 = vmatprep.subr.bf16.mxu0 0
      %1297 = vmatpush1.bf16.msra.mxu0 0
      %1298 = vmatprep.subr.bf16.mxu0 0
      %1299 = vmatpush1.bf16.msra.mxu0 0
      %1300 = vmatprep.subr.bf16.mxu0 0
      %1301 = vmatpush1.bf16.msra.mxu0 0
      %1302 = vmatprep.subr.bf16.mxu0 0
      %1303 = vmatpush1.bf16.msra.mxu0 0
      %1304 = vmatprep.subr.bf16.mxu0 0
      %1305 = vmatpush1.bf16.msra.mxu0 0
      %1306 = vmatprep.subr.bf16.mxu0 0
      %1307 = vmatpush1.bf16.msra.mxu0 0
      %1308 = vmatprep.mubr.bf16.mxu0 0
      %1309 = vmatmul.mubr.bf16.gmra.mrb[0].mxu0 %v1274
      %v1310 = vpop.f32.mrb[0].mxu0
      %v1311 = vadd.f32 0.0, %v1310
      %v1312 = vpop.f32.mrb[0].mxu0
      %v1313 = vpop.f32.mrb[0].mxu0
      %v1314 = vpop.f32.mrb[0].mxu0
      %1315 = vdwg.mxu0
      %v1316 = vadd.f32 %v1216, %v1311
      %v1318 = vsel %vm646, %v438, 0
      %1320 = vmatprep.subr.bf16.mxu0 0
      %1321 = vmatpush1.bf16.msra.mxu0 %v918
      %1322 = vmatprep.subr.bf16.mxu0 0
      %1323 = vmatpush1.bf16.msra.mxu0 0
      %1324 = vmatprep.subr.bf16.mxu0 0
      %1325 = vmatpush1.bf16.msra.mxu0 0
      %1326 = vmatprep.subr.bf16.mxu0 0
      %1327 = vmatpush1.bf16.msra.mxu0 0
      %1328 = vmatprep.subr.bf16.mxu0 0
      %1329 = vmatpush1.bf16.msra.mxu0 0
      %1330 = vmatprep.subr.bf16.mxu0 0
      %1331 = vmatpush1.bf16.msra.mxu0 0
      %1332 = vmatprep.subr.bf16.mxu0 0
      %1333 = vmatpush1.bf16.msra.mxu0 0
      %1334 = vmatprep.subr.bf16.mxu0 0
      %1335 = vmatpush1.bf16.msra.mxu0 0
      %1336 = vmatprep.subr.bf16.mxu0 0
      %1337 = vmatpush1.bf16.msra.mxu0 0
      %1338 = vmatprep.subr.bf16.mxu0 0
      %1339 = vmatpush1.bf16.msra.mxu0 0
      %1340 = vmatprep.subr.bf16.mxu0 0
      %1341 = vmatpush1.bf16.msra.mxu0 0
      %1342 = vmatprep.subr.bf16.mxu0 0
      %1343 = vmatpush1.bf16.msra.mxu0 0
      %1344 = vmatprep.subr.bf16.mxu0 0
      %1345 = vmatpush1.bf16.msra.mxu0 0
      %1346 = vmatprep.subr.bf16.mxu0 0
      %1347 = vmatpush1.bf16.msra.mxu0 0
      %1348 = vmatprep.subr.bf16.mxu0 0
      %1349 = vmatpush1.bf16.msra.mxu0 0
      %1350 = vmatprep.subr.bf16.mxu0 0
      %1351 = vmatpush1.bf16.msra.mxu0 0
      %1352 = vmatprep.mubr.bf16.mxu0 0
      %1353 = vmatmul.mubr.bf16.gmra.mrb[0].mxu0 %v1318
      %v1354 = vpop.f32.mrb[0].mxu0
      %v1355 = vadd.f32 0.0, %v1354
      %v1356 = vpop.f32.mrb[0].mxu0
      %v1357 = vpop.f32.mrb[0].mxu0
      %v1358 = vpop.f32.mrb[0].mxu0
      %1359 = vdwg.mxu0
      %v1360 = vpack.c.bf16 %v1355, %v1355
      %v1365 = vunpack.c.l.b16 %v243
      %v1366 = vunpack.c.l.b16 %v244
      %v1367 = vunpack.c.l.b16 %v245
      %v1368 = vunpack.c.l.b16 %v246
      %v1369 = vpack.c.b16 %v1366, %v1365
      %v1370 = vpack.c.b16 %v1368, %v1367
      %v1374 = vsel %vm504, %v1360, 0
      %1376 = vmatprep.subr.bf16.mxu0 0
      %1377 = vmatpush1.bf16.msra.mxu0 %v1369
      %1378 = vmatprep.subr.bf16.mxu0 0
      %1379 = vmatpush1.bf16.msra.mxu0 %v1370
      %1380 = vmatprep.subr.bf16.mxu0 0
      %1381 = vmatpush1.bf16.msra.mxu0 0
      %1382 = vmatprep.subr.bf16.mxu0 0
      %1383 = vmatpush1.bf16.msra.mxu0 0
      %1384 = vmatprep.subr.bf16.mxu0 0
      %1385 = vmatpush1.bf16.msra.mxu0 0
      %1386 = vmatprep.subr.bf16.mxu0 0
      %1387 = vmatpush1.bf16.msra.mxu0 0
      %1388 = vmatprep.subr.bf16.mxu0 0
      %1389 = vmatpush1.bf16.msra.mxu0 0
      %1390 = vmatprep.subr.bf16.mxu0 0
      %1391 = vmatpush1.bf16.msra.mxu0 0
      %1392 = vmatprep.subr.bf16.mxu0 0
      %1393 = vmatpush1.bf16.msra.mxu0 0
      %1394 = vmatprep.subr.bf16.mxu0 0
      %1395 = vmatpush1.bf16.msra.mxu0 0
      %1396 = vmatprep.subr.bf16.mxu0 0
      %1397 = vmatpush1.bf16.msra.mxu0 0
      %1398 = vmatprep.subr.bf16.mxu0 0
      %1399 = vmatpush1.bf16.msra.mxu0 0
      %1400 = vmatprep.subr.bf16.mxu0 0
      %1401 = vmatpush1.bf16.msra.mxu0 0
      %1402 = vmatprep.subr.bf16.mxu0 0
      %1403 = vmatpush1.bf16.msra.mxu0 0
      %1404 = vmatprep.subr.bf16.mxu0 0
      %1405 = vmatpush1.bf16.msra.mxu0 0
      %1406 = vmatprep.subr.bf16.mxu0 0
      %1407 = vmatpush1.bf16.msra.mxu0 0
      %1408 = vmatprep.mubr.bf16.mxu0 0
      %1409 = vmatmul.mubr.bf16.gmra.mrb[0].mxu0 %v1374
      %v1410 = vpop.f32.mrb[0].mxu0
      %v1411 = vadd.f32 0.0, %v1410
      %v1412 = vpop.f32.mrb[0].mxu0
      %v1413 = vpop.f32.mrb[0].mxu0
      %v1414 = vpop.f32.mrb[0].mxu0
      %1415 = vdwg.mxu0
      %v1416 = vadd.f32 %v1316, %v1411
      %v1418 = vsel %vm646, %v443, 0
      %1420 = vmatprep.subr.bf16.mxu0 0
      %1421 = vmatpush1.bf16.msra.mxu0 %v918
      %1422 = vmatprep.subr.bf16.mxu0 0
      %1423 = vmatpush1.bf16.msra.mxu0 0
      %1424 = vmatprep.subr.bf16.mxu0 0
      %1425 = vmatpush1.bf16.msra.mxu0 0
      %1426 = vmatprep.subr.bf16.mxu0 0
      %1427 = vmatpush1.bf16.msra.mxu0 0
      %1428 = vmatprep.subr.bf16.mxu0 0
      %1429 = vmatpush1.bf16.msra.mxu0 0
      %1430 = vmatprep.subr.bf16.mxu0 0
      %1431 = vmatpush1.bf16.msra.mxu0 0
      %1432 = vmatprep.subr.bf16.mxu0 0
      %1433 = vmatpush1.bf16.msra.mxu0 0
      %1434 = vmatprep.subr.bf16.mxu0 0
      %1435 = vmatpush1.bf16.msra.mxu0 0
      %1436 = vmatprep.subr.bf16.mxu0 0
      %1437 = vmatpush1.bf16.msra.mxu0 0
      %1438 = vmatprep.subr.bf16.mxu0 0
      %1439 = vmatpush1.bf16.msra.mxu0 0
      %1440 = vmatprep.subr.bf16.mxu0 0
      %1441 = vmatpush1.bf16.msra.mxu0 0
      %1442 = vmatprep.subr.bf16.mxu0 0
      %1443 = vmatpush1.bf16.msra.mxu0 0
      %1444 = vmatprep.subr.bf16.mxu0 0
      %1445 = vmatpush1.bf16.msra.mxu0 0
      %1446 = vmatprep.subr.bf16.mxu0 0
      %1447 = vmatpush1.bf16.msra.mxu0 0
      %1448 = vmatprep.subr.bf16.mxu0 0
      %1449 = vmatpush1.bf16.msra.mxu0 0
      %1450 = vmatprep.subr.bf16.mxu0 0
      %1451 = vmatpush1.bf16.msra.mxu0 0
      %1452 = vmatprep.mubr.bf16.mxu0 0
      %1453 = vmatmul.mubr.bf16.gmra.mrb[0].mxu0 %v1418
      %v1454 = vpop.f32.mrb[0].mxu0
      %v1455 = vadd.f32 0.0, %v1454
      %v1456 = vpop.f32.mrb[0].mxu0
      %v1457 = vpop.f32.mrb[0].mxu0
      %v1458 = vpop.f32.mrb[0].mxu0
      %1459 = vdwg.mxu0
      %v1460 = vpack.c.bf16 %v1455, %v1455
      %v1465 = vunpack.c.l.b16 %v247
      %v1466 = vunpack.c.l.b16 %v248
      %v1467 = vunpack.c.l.b16 %v249
      %v1468 = vunpack.c.l.b16 %v250
      %v1469 = vpack.c.b16 %v1466, %v1465
      %v1470 = vpack.c.b16 %v1468, %v1467
      %v1474 = vsel %vm504, %v1460, 0
      %1476 = vmatprep.subr.bf16.mxu0 0
      %1477 = vmatpush1.bf16.msra.mxu0 %v1469
      %1478 = vmatprep.subr.bf16.mxu0 0
      %1479 = vmatpush1.bf16.msra.mxu0 %v1470
      %1480 = vmatprep.subr.bf16.mxu0 0
      %1481 = vmatpush1.bf16.msra.mxu0 0
      %1482 = vmatprep.subr.bf16.mxu0 0
      %1483 = vmatpush1.bf16.msra.mxu0 0
      %1484 = vmatprep.subr.bf16.mxu0 0
      %1485 = vmatpush1.bf16.msra.mxu0 0
      %1486 = vmatprep.subr.bf16.mxu0 0
      %1487 = vmatpush1.bf16.msra.mxu0 0
      %1488 = vmatprep.subr.bf16.mxu0 0
      %1489 = vmatpush1.bf16.msra.mxu0 0
      %1490 = vmatprep.subr.bf16.mxu0 0
      %1491 = vmatpush1.bf16.msra.mxu0 0
      %1492 = vmatprep.subr.bf16.mxu0 0
      %1493 = vmatpush1.bf16.msra.mxu0 0
      %1494 = vmatprep.subr.bf16.mxu0 0
      %1495 = vmatpush1.bf16.msra.mxu0 0
      %1496 = vmatprep.subr.bf16.mxu0 0
      %1497 = vmatpush1.bf16.msra.mxu0 0
      %1498 = vmatprep.subr.bf16.mxu0 0
      %1499 = vmatpush1.bf16.msra.mxu0 0
      %1500 = vmatprep.subr.bf16.mxu0 0
      %1501 = vmatpush1.bf16.msra.mxu0 0
      %1502 = vmatprep.subr.bf16.mxu0 0
      %1503 = vmatpush1.bf16.msra.mxu0 0
      %1504 = vmatprep.subr.bf16.mxu0 0
      %1505 = vmatpush1.bf16.msra.mxu0 0
      %1506 = vmatprep.subr.bf16.mxu0 0
      %1507 = vmatpush1.bf16.msra.mxu0 0
      %1508 = vmatprep.mubr.bf16.mxu0 0
      %1509 = vmatmul.mubr.bf16.gmra.mrb[0].mxu0 %v1474
      %v1510 = vpop.f32.mrb[0].mxu0
      %v1511 = vadd.f32 0.0, %v1510
      %v1512 = vpop.f32.mrb[0].mxu0
      %v1513 = vpop.f32.mrb[0].mxu0
      %v1514 = vpop.f32.mrb[0].mxu0
      %1515 = vdwg.mxu0
      %v1516 = vadd.f32 %v1416, %v1511
      %v1518 = vsel %vm646, %v448, 0
      %1520 = vmatprep.subr.bf16.mxu0 0
      %1521 = vmatpush1.bf16.msra.mxu0 %v918
      %1522 = vmatprep.subr.bf16.mxu0 0
      %1523 = vmatpush1.bf16.msra.mxu0 0
      %1524 = vmatprep.subr.bf16.mxu0 0
      %1525 = vmatpush1.bf16.msra.mxu0 0
      %1526 = vmatprep.subr.bf16.mxu0 0
      %1527 = vmatpush1.bf16.msra.mxu0 0
      %1528 = vmatprep.subr.bf16.mxu0 0
      %1529 = vmatpush1.bf16.msra.mxu0 0
      %1530 = vmatprep.subr.bf16.mxu0 0
      %1531 = vmatpush1.bf16.msra.mxu0 0
      %1532 = vmatprep.subr.bf16.mxu0 0
      %1533 = vmatpush1.bf16.msra.mxu0 0
      %1534 = vmatprep.subr.bf16.mxu0 0
      %1535 = vmatpush1.bf16.msra.mxu0 0
      %1536 = vmatprep.subr.bf16.mxu0 0
      %1537 = vmatpush1.bf16.msra.mxu0 0
      %1538 = vmatprep.subr.bf16.mxu0 0
      %1539 = vmatpush1.bf16.msra.mxu0 0
      %1540 = vmatprep.subr.bf16.mxu0 0
      %1541 = vmatpush1.bf16.msra.mxu0 0
      %1542 = vmatprep.subr.bf16.mxu0 0
      %1543 = vmatpush1.bf16.msra.mxu0 0
      %1544 = vmatprep.subr.bf16.mxu0 0
      %1545 = vmatpush1.bf16.msra.mxu0 0
      %1546 = vmatprep.subr.bf16.mxu0 0
      %1547 = vmatpush1.bf16.msra.mxu0 0
      %1548 = vmatprep.subr.bf16.mxu0 0
      %1549 = vmatpush1.bf16.msra.mxu0 0
      %1550 = vmatprep.subr.bf16.mxu0 0
      %1551 = vmatpush1.bf16.msra.mxu0 0
      %1552 = vmatprep.mubr.bf16.mxu0 0
      %1553 = vmatmul.mubr.bf16.gmra.mrb[0].mxu0 %v1518
      %v1554 = vpop.f32.mrb[0].mxu0
      %v1555 = vadd.f32 0.0, %v1554
      %v1556 = vpop.f32.mrb[0].mxu0
      %v1557 = vpop.f32.mrb[0].mxu0
      %v1558 = vpop.f32.mrb[0].mxu0
      %1559 = vdwg.mxu0
      %v1560 = vpack.c.bf16 %v1555, %v1555
      %v1565 = vunpack.c.l.b16 %v251
      %v1566 = vunpack.c.l.b16 %v252
      %v1567 = vunpack.c.l.b16 %v253
      %v1568 = vunpack.c.l.b16 %v254
      %v1569 = vpack.c.b16 %v1566, %v1565
      %v1570 = vpack.c.b16 %v1568, %v1567
      %v1574 = vsel %vm504, %v1560, 0
      %1576 = vmatprep.subr.bf16.mxu0 0
      %1577 = vmatpush1.bf16.msra.mxu0 %v1569
      %1578 = vmatprep.subr.bf16.mxu0 0
      %1579 = vmatpush1.bf16.msra.mxu0 %v1570
      %1580 = vmatprep.subr.bf16.mxu0 0
      %1581 = vmatpush1.bf16.msra.mxu0 0
      %1582 = vmatprep.subr.bf16.mxu0 0
      %1583 = vmatpush1.bf16.msra.mxu0 0
      %1584 = vmatprep.subr.bf16.mxu0 0
      %1585 = vmatpush1.bf16.msra.mxu0 0
      %1586 = vmatprep.subr.bf16.mxu0 0
      %1587 = vmatpush1.bf16.msra.mxu0 0
      %1588 = vmatprep.subr.bf16.mxu0 0
      %1589 = vmatpush1.bf16.msra.mxu0 0
      %1590 = vmatprep.subr.bf16.mxu0 0
      %1591 = vmatpush1.bf16.msra.mxu0 0
      %1592 = vmatprep.subr.bf16.mxu0 0
      %1593 = vmatpush1.bf16.msra.mxu0 0
      %1594 = vmatprep.subr.bf16.mxu0 0
      %1595 = vmatpush1.bf16.msra.mxu0 0
      %1596 = vmatprep.subr.bf16.mxu0 0
      %1597 = vmatpush1.bf16.msra.mxu0 0
      %1598 = vmatprep.subr.bf16.mxu0 0
      %1599 = vmatpush1.bf16.msra.mxu0 0
      %1600 = vmatprep.subr.bf16.mxu0 0
      %1601 = vmatpush1.bf16.msra.mxu0 0
      %1602 = vmatprep.subr.bf16.mxu0 0
      %1603 = vmatpush1.bf16.msra.mxu0 0
      %1604 = vmatprep.subr.bf16.mxu0 0
      %1605 = vmatpush1.bf16.msra.mxu0 0
      %1606 = vmatprep.subr.bf16.mxu0 0
      %1607 = vmatpush1.bf16.msra.mxu0 0
      %1608 = vmatprep.mubr.bf16.mxu0 0
      %1609 = vmatmul.mubr.bf16.gmra.mrb[0].mxu0 %v1574
      %v1610 = vpop.f32.mrb[0].mxu0
      %v1611 = vadd.f32 0.0, %v1610
      %v1612 = vpop.f32.mrb[0].mxu0
      %v1613 = vpop.f32.mrb[0].mxu0
      %v1614 = vpop.f32.mrb[0].mxu0
      %1615 = vdwg.mxu0
      %v1616 = vadd.f32 %v1516, %v1611
      %v1618 = vsel %vm646, %v453, 0
      %1620 = vmatprep.subr.bf16.mxu0 0
      %1621 = vmatpush1.bf16.msra.mxu0 %v918
      %1622 = vmatprep.subr.bf16.mxu0 0
      %1623 = vmatpush1.bf16.msra.mxu0 0
      %1624 = vmatprep.subr.bf16.mxu0 0
      %1625 = vmatpush1.bf16.msra.mxu0 0
      %1626 = vmatprep.subr.bf16.mxu0 0
      %1627 = vmatpush1.bf16.msra.mxu0 0
      %1628 = vmatprep.subr.bf16.mxu0 0
      %1629 = vmatpush1.bf16.msra.mxu0 0
      %1630 = vmatprep.subr.bf16.mxu0 0
      %1631 = vmatpush1.bf16.msra.mxu0 0
      %1632 = vmatprep.subr.bf16.mxu0 0
      %1633 = vmatpush1.bf16.msra.mxu0 0
      %1634 = vmatprep.subr.bf16.mxu0 0
      %1635 = vmatpush1.bf16.msra.mxu0 0
      %1636 = vmatprep.subr.bf16.mxu0 0
      %1637 = vmatpush1.bf16.msra.mxu0 0
      %1638 = vmatprep.subr.bf16.mxu0 0
      %1639 = vmatpush1.bf16.msra.mxu0 0
      %1640 = vmatprep.subr.bf16.mxu0 0
      %1641 = vmatpush1.bf16.msra.mxu0 0
      %1642 = vmatprep.subr.bf16.mxu0 0
      %1643 = vmatpush1.bf16.msra.mxu0 0
      %1644 = vmatprep.subr.bf16.mxu0 0
      %1645 = vmatpush1.bf16.msra.mxu0 0
      %1646 = vmatprep.subr.bf16.mxu0 0
      %1647 = vmatpush1.bf16.msra.mxu0 0
      %1648 = vmatprep.subr.bf16.mxu0 0
      %1649 = vmatpush1.bf16.msra.mxu0 0
      %1650 = vmatprep.subr.bf16.mxu0 0
      %1651 = vmatpush1.bf16.msra.mxu0 0
      %1652 = vmatprep.mubr.bf16.mxu0 0
      %1653 = vmatmul.mubr.bf16.gmra.mrb[0].mxu0 %v1618
      %v1654 = vpop.f32.mrb[0].mxu0
      %v1655 = vadd.f32 0.0, %v1654
      %v1656 = vpop.f32.mrb[0].mxu0
      %v1657 = vpop.f32.mrb[0].mxu0
      %v1658 = vpop.f32.mrb[0].mxu0
      %1659 = vdwg.mxu0
      %v1660 = vpack.c.bf16 %v1655, %v1655
      %v1665 = vunpack.c.l.b16 %v255
      %v1666 = vunpack.c.l.b16 %v256
      %v1667 = vunpack.c.l.b16 %v257
      %v1668 = vunpack.c.l.b16 %v258
      %v1669 = vpack.c.b16 %v1666, %v1665
      %v1670 = vpack.c.b16 %v1668, %v1667
      %v1674 = vsel %vm504, %v1660, 0
      %1676 = vmatprep.subr.bf16.mxu0 0
      %1677 = vmatpush1.bf16.msra.mxu0 %v1669
      %1678 = vmatprep.subr.bf16.mxu0 0
      %1679 = vmatpush1.bf16.msra.mxu0 %v1670
      %1680 = vmatprep.subr.bf16.mxu0 0
      %1681 = vmatpush1.bf16.msra.mxu0 0
      %1682 = vmatprep.subr.bf16.mxu0 0
      %1683 = vmatpush1.bf16.msra.mxu0 0
      %1684 = vmatprep.subr.bf16.mxu0 0
      %1685 = vmatpush1.bf16.msra.mxu0 0
      %1686 = vmatprep.subr.bf16.mxu0 0
      %1687 = vmatpush1.bf16.msra.mxu0 0
      %1688 = vmatprep.subr.bf16.mxu0 0
      %1689 = vmatpush1.bf16.msra.mxu0 0
      %1690 = vmatprep.subr.bf16.mxu0 0
      %1691 = vmatpush1.bf16.msra.mxu0 0
      %1692 = vmatprep.subr.bf16.mxu0 0
      %1693 = vmatpush1.bf16.msra.mxu0 0
      %1694 = vmatprep.subr.bf16.mxu0 0
      %1695 = vmatpush1.bf16.msra.mxu0 0
      %1696 = vmatprep.subr.bf16.mxu0 0
      %1697 = vmatpush1.bf16.msra.mxu0 0
      %1698 = vmatprep.subr.bf16.mxu0 0
      %1699 = vmatpush1.bf16.msra.mxu0 0
      %1700 = vmatprep.subr.bf16.mxu0 0
      %1701 = vmatpush1.bf16.msra.mxu0 0
      %1702 = vmatprep.subr.bf16.mxu0 0
      %1703 = vmatpush1.bf16.msra.mxu0 0
      %1704 = vmatprep.subr.bf16.mxu0 0
      %1705 = vmatpush1.bf16.msra.mxu0 0
      %1706 = vmatprep.subr.bf16.mxu0 0
      %1707 = vmatpush1.bf16.msra.mxu0 0
      %1708 = vmatprep.mubr.bf16.mxu0 0
      %1709 = vmatmul.mubr.bf16.gmra.mrb[0].mxu0 %v1674
      %v1710 = vpop.f32.mrb[0].mxu0
      %v1711 = vadd.f32 0.0, %v1710
      %v1712 = vpop.f32.mrb[0].mxu0
      %v1713 = vpop.f32.mrb[0].mxu0
      %v1714 = vpop.f32.mrb[0].mxu0
      %1715 = vdwg.mxu0
      %v1716 = vadd.f32 %v1616, %v1711
      %v1718 = vsel %vm646, %v458, 0
      %1720 = vmatprep.subr.bf16.mxu0 0
      %1721 = vmatpush1.bf16.msra.mxu0 %v918
      %1722 = vmatprep.subr.bf16.mxu0 0
      %1723 = vmatpush1.bf16.msra.mxu0 0
      %1724 = vmatprep.subr.bf16.mxu0 0
      %1725 = vmatpush1.bf16.msra.mxu0 0
      %1726 = vmatprep.subr.bf16.mxu0 0
      %1727 = vmatpush1.bf16.msra.mxu0 0
      %1728 = vmatprep.subr.bf16.mxu0 0
      %1729 = vmatpush1.bf16.msra.mxu0 0
      %1730 = vmatprep.subr.bf16.mxu0 0
      %1731 = vmatpush1.bf16.msra.mxu0 0
      %1732 = vmatprep.subr.bf16.mxu0 0
      %1733 = vmatpush1.bf16.msra.mxu0 0
      %1734 = vmatprep.subr.bf16.mxu0 0
      %1735 = vmatpush1.bf16.msra.mxu0 0
      %1736 = vmatprep.subr.bf16.mxu0 0
      %1737 = vmatpush1.bf16.msra.mxu0 0
      %1738 = vmatprep.subr.bf16.mxu0 0
      %1739 = vmatpush1.bf16.msra.mxu0 0
      %1740 = vmatprep.subr.bf16.mxu0 0
      %1741 = vmatpush1.bf16.msra.mxu0 0
      %1742 = vmatprep.subr.bf16.mxu0 0
      %1743 = vmatpush1.bf16.msra.mxu0 0
      %1744 = vmatprep.subr.bf16.mxu0 0
      %1745 = vmatpush1.bf16.msra.mxu0 0
      %1746 = vmatprep.subr.bf16.mxu0 0
      %1747 = vmatpush1.bf16.msra.mxu0 0
      %1748 = vmatprep.subr.bf16.mxu0 0
      %1749 = vmatpush1.bf16.msra.mxu0 0
      %1750 = vmatprep.subr.bf16.mxu0 0
      %1751 = vmatpush1.bf16.msra.mxu0 0
      %1752 = vmatprep.mubr.bf16.mxu0 0
      %1753 = vmatmul.mubr.bf16.gmra.mrb[0].mxu0 %v1718
      %v1754 = vpop.f32.mrb[0].mxu0
      %v1755 = vadd.f32 0.0, %v1754
      %v1756 = vpop.f32.mrb[0].mxu0
      %v1757 = vpop.f32.mrb[0].mxu0
      %v1758 = vpop.f32.mrb[0].mxu0
      %1759 = vdwg.mxu0
      %v1760 = vpack.c.bf16 %v1755, %v1755
      %v1765 = vunpack.c.l.b16 %v259
      %v1766 = vunpack.c.l.b16 %v260
      %v1767 = vunpack.c.l.b16 %v261
      %v1768 = vunpack.c.l.b16 %v262
      %v1769 = vpack.c.b16 %v1766, %v1765
      %v1770 = vpack.c.b16 %v1768, %v1767
      %v1774 = vsel %vm504, %v1760, 0
      %1776 = vmatprep.subr.bf16.mxu0 0
      %1777 = vmatpush1.bf16.msra.mxu0 %v1769
      %1778 = vmatprep.subr.bf16.mxu0 0
      %1779 = vmatpush1.bf16.msra.mxu0 %v1770
      %1780 = vmatprep.subr.bf16.mxu0 0
      %1781 = vmatpush1.bf16.msra.mxu0 0
      %1782 = vmatprep.subr.bf16.mxu0 0
      %1783 = vmatpush1.bf16.msra.mxu0 0
      %1784 = vmatprep.subr.bf16.mxu0 0
      %1785 = vmatpush1.bf16.msra.mxu0 0
      %1786 = vmatprep.subr.bf16.mxu0 0
      %1787 = vmatpush1.bf16.msra.mxu0 0
      %1788 = vmatprep.subr.bf16.mxu0 0
      %1789 = vmatpush1.bf16.msra.mxu0 0
      %1790 = vmatprep.subr.bf16.mxu0 0
      %1791 = vmatpush1.bf16.msra.mxu0 0
      %1792 = vmatprep.subr.bf16.mxu0 0
      %1793 = vmatpush1.bf16.msra.mxu0 0
      %1794 = vmatprep.subr.bf16.mxu0 0
      %1795 = vmatpush1.bf16.msra.mxu0 0
      %1796 = vmatprep.subr.bf16.mxu0 0
      %1797 = vmatpush1.bf16.msra.mxu0 0
      %1798 = vmatprep.subr.bf16.mxu0 0
      %1799 = vmatpush1.bf16.msra.mxu0 0
      %1800 = vmatprep.subr.bf16.mxu0 0
      %1801 = vmatpush1.bf16.msra.mxu0 0
      %1802 = vmatprep.subr.bf16.mxu0 0
      %1803 = vmatpush1.bf16.msra.mxu0 0
      %1804 = vmatprep.subr.bf16.mxu0 0
      %1805 = vmatpush1.bf16.msra.mxu0 0
      %1806 = vmatprep.subr.bf16.mxu0 0
      %1807 = vmatpush1.bf16.msra.mxu0 0
      %1808 = vmatprep.mubr.bf16.mxu0 0
      %1809 = vmatmul.mubr.bf16.gmra.mrb[0].mxu0 %v1774
      %v1810 = vpop.f32.mrb[0].mxu0
      %v1811 = vadd.f32 0.0, %v1810
      %v1812 = vpop.f32.mrb[0].mxu0
      %v1813 = vpop.f32.mrb[0].mxu0
      %v1814 = vpop.f32.mrb[0].mxu0
      %1815 = vdwg.mxu0
      %v1816 = vadd.f32 %v1716, %v1811
      %v1817 = vmax.f32 %v1816, 0.0
      %v1818 = vpack.c.bf16 %v1817, %v1817
      %v1819 = vlaneseq
      %v1820 = vshrl.u32 %v1819, 7
      %v1821 = vsub.s32 3, %v1820
      %v1822 = vrot.slane %v403, %v1821
      %v1831 = vunpack.c.l.b16 %v263
      %v1832 = vunpack.c.l.b16 %v264
      %v1833 = vunpack.c.l.b16 %v265
      %v1834 = vunpack.c.l.b16 %v266
      %v1835 = vunpack.c.l.b16 %v267
      %v1836 = vunpack.c.l.b16 %v268
      %v1837 = vunpack.c.l.b16 %v269
      %v1838 = vunpack.c.l.b16 %v270
      %v1839 = vpack.c.b16 %v1832, %v1831
      %v1840 = vpack.c.b16 %v1834, %v1833
      %v1841 = vpack.c.b16 %v1836, %v1835
      %v1842 = vpack.c.b16 %v1838, %v1837
      %vm1847 = vcmask 523264
      %v1849 = vsel %vm1847, %v1818, 0
      %1851 = vmatprep.subr.bf16.mxu0 0
      %1852 = vmatpush1.bf16.msra.mxu0 %v1839
      %1853 = vmatprep.subr.bf16.mxu0 0
      %1854 = vmatpush1.bf16.msra.mxu0 %v1840
      %1855 = vmatprep.subr.bf16.mxu0 0
      %1856 = vmatpush1.bf16.msra.mxu0 %v1841
      %1857 = vmatprep.subr.bf16.mxu0 0
      %1858 = vmatpush1.bf16.msra.mxu0 %v1842
      %1859 = vmatprep.subr.bf16.mxu0 0
      %1860 = vmatpush1.bf16.msra.mxu0 0
      %1861 = vmatprep.subr.bf16.mxu0 0
      %1862 = vmatpush1.bf16.msra.mxu0 0
      %1863 = vmatprep.subr.bf16.mxu0 0
      %1864 = vmatpush1.bf16.msra.mxu0 0
      %1865 = vmatprep.subr.bf16.mxu0 0
      %1866 = vmatpush1.bf16.msra.mxu0 0
      %1867 = vmatprep.subr.bf16.mxu0 0
      %1868 = vmatpush1.bf16.msra.mxu0 0
      %1869 = vmatprep.subr.bf16.mxu0 0
      %1870 = vmatpush1.bf16.msra.mxu0 0
      %1871 = vmatprep.subr.bf16.mxu0 0
      %1872 = vmatpush1.bf16.msra.mxu0 0
      %1873 = vmatprep.subr.bf16.mxu0 0
      %1874 = vmatpush1.bf16.msra.mxu0 0
      %1875 = vmatprep.subr.bf16.mxu0 0
      %1876 = vmatpush1.bf16.msra.mxu0 0
      %1877 = vmatprep.subr.bf16.mxu0 0
      %1878 = vmatpush1.bf16.msra.mxu0 0
      %1879 = vmatprep.subr.bf16.mxu0 0
      %1880 = vmatpush1.bf16.msra.mxu0 0
      %1881 = vmatprep.subr.bf16.mxu0 0
      %1882 = vmatpush1.bf16.msra.mxu0 0
      %1883 = vmatprep.mubr.bf16.mxu0 0
      %1884 = vmatmul.mubr.bf16.gmra.mrb[0].mxu0 %v1849
      %v1885 = vpop.f32.mrb[0].mxu0
      %v1886 = vadd.f32 %v1822, %v1885
      %v1887 = vpop.f32.mrb[0].mxu0
      %v1888 = vpop.f32.mrb[0].mxu0
      %v1889 = vpop.f32.mrb[0].mxu0
      %1890 = vdwg.mxu0
      %v1891 = vadd.f32 %v1886, %v907
      %v1892 = vmul.f32 %v1891, %v905
      %v1893 = vsel %vm504, %v1892, 0.0
      %1894 = vadd.xlane.f32.xlu0 %v1893
      %v1895 = vpop.xlane.xlu0 %1894
      %v1896 = vmul.f32 %v1895, %v508
      %v1897 = vsub.f32 %v1892, %v1896
      %v1898 = vmul.f32 %v1897, %v1897
      %v1899 = vsel %vm504, %v1898, 0.0
      %1900 = vadd.xlane.f32.xlu0 %v1899
      %v1901 = vpop.xlane.xlu0 %1900
      %v1902 = vmul.f32 %v1901, %v508
      %v1903 = vadd.f32 %v1902, 1e-05
      %v1904 = vrsqrt.pop %v1903
      %v1905 = vmul.f32 %v1897, %v1904
      %v1906 = vlaneseq
      %v1907 = vshrl.u32 %v1906, 7
      %v1908 = vsub.s32 4, %v1907
      %v1909 = vrot.slane %v404, %v1908
      %v1910 = vmul.f32 %v1905, %v1909
      %v1911 = vlaneseq
      %v1912 = vshrl.u32 %v1911, 7
      %v1913 = vsub.s32 5, %v1912
      %v1914 = vrot.slane %v404, %v1913
      %v1915 = vadd.f32 %v1910, %v1914
      %v1916 = vpack.c.bf16 %v1915, %v1915
      %v1917 = vlaneseq
      %v1918 = vshrl.u32 %v1917, 7
      %v1919 = vsub.s32 0, %v1918
      %v1920 = vrot.slane %v404, %v1919
      %v1925 = vunpack.c.l.b16 %v207
      %v1926 = vunpack.c.l.b16 %v208
      %v1927 = vunpack.c.l.b16 %v209
      %v1928 = vunpack.c.l.b16 %v210
      %v1929 = vpack.c.b16 %v1926, %v1925
      %v1930 = vpack.c.b16 %v1928, %v1927
      %v1934 = vsel %vm504, %v1916, 0
      %1936 = vmatprep.subr.bf16.mxu0 0
      %1937 = vmatpush1.bf16.msra.mxu0 %v1929
      %1938 = vmatprep.subr.bf16.mxu0 0
      %1939 = vmatpush1.bf16.msra.mxu0 %v1930
      %1940 = vmatprep.subr.bf16.mxu0 0
      %1941 = vmatpush1.bf16.msra.mxu0 0
      %1942 = vmatprep.subr.bf16.mxu0 0
      %1943 = vmatpush1.bf16.msra.mxu0 0
      %1944 = vmatprep.subr.bf16.mxu0 0
      %1945 = vmatpush1.bf16.msra.mxu0 0
      %1946 = vmatprep.subr.bf16.mxu0 0
      %1947 = vmatpush1.bf16.msra.mxu0 0
      %1948 = vmatprep.subr.bf16.mxu0 0
      %1949 = vmatpush1.bf16.msra.mxu0 0
      %1950 = vmatprep.subr.bf16.mxu0 0
      %1951 = vmatpush1.bf16.msra.mxu0 0
      %1952 = vmatprep.subr.bf16.mxu0 0
      %1953 = vmatpush1.bf16.msra.mxu0 0
      %1954 = vmatprep.subr.bf16.mxu0 0
      %1955 = vmatpush1.bf16.msra.mxu0 0
      %1956 = vmatprep.subr.bf16.mxu0 0
      %1957 = vmatpush1.bf16.msra.mxu0 0
      %1958 = vmatprep.subr.bf16.mxu0 0
      %1959 = vmatpush1.bf16.msra.mxu0 0
      %1960 = vmatprep.subr.bf16.mxu0 0
      %1961 = vmatpush1.bf16.msra.mxu0 0
      %1962 = vmatprep.subr.bf16.mxu0 0
      %1963 = vmatpush1.bf16.msra.mxu0 0
      %1964 = vmatprep.subr.bf16.mxu0 0
      %1965 = vmatpush1.bf16.msra.mxu0 0
      %1966 = vmatprep.subr.bf16.mxu0 0
      %1967 = vmatpush1.bf16.msra.mxu0 0
      %1968 = vmatprep.mubr.bf16.mxu0 0
      %1969 = vmatmul.mubr.bf16.gmra.mrb[0].mxu0 %v1934
      %v1970 = vpop.f32.mrb[0].mxu0
      %v1971 = vadd.f32 %v1920, %v1970
      %v1972 = vpop.f32.mrb[0].mxu0
      %v1973 = vpop.f32.mrb[0].mxu0
      %v1974 = vpop.f32.mrb[0].mxu0
      %1975 = vdwg.mxu0
      %v1976 = vpack.c.bf16 %v1971, %v1971
      %1978 = vrot.lane.b32.xlu0 %v1976, 96
      %v1979 = vpop.permute.xlu0 %1978
      %v1981 = vsel %vm593, %v1976, 0
      %v1984 = vsel %vm593, %v1979, 0
      %1986 = vmatprep.subr.bf16.mxu0 0
      %1987 = vmatpush1.bf16.xpose.msra.mxu0 %v1984
      %1988 = vmatprep.subr.bf16.mxu0 0
      %1989 = vmatpush1.bf16.xpose.msra.mxu0 0
      %1990 = vmatprep.subr.bf16.mxu0 0
      %1991 = vmatpush1.bf16.xpose.msra.mxu0 0
      %1992 = vmatprep.subr.bf16.mxu0 0
      %1993 = vmatpush1.bf16.xpose.msra.mxu0 0
      %1994 = vmatprep.subr.bf16.mxu0 0
      %1995 = vmatpush1.bf16.xpose.msra.mxu0 0
      %1996 = vmatprep.subr.bf16.mxu0 0
      %1997 = vmatpush1.bf16.xpose.msra.mxu0 0
      %1998 = vmatprep.subr.bf16.mxu0 0
      %1999 = vmatpush1.bf16.xpose.msra.mxu0 0
      %2000 = vmatprep.subr.bf16.mxu0 0
      %2001 = vmatpush1.bf16.xpose.msra.mxu0 0
      %2002 = vmatprep.subr.bf16.mxu0 0
      %2003 = vmatpush1.bf16.xpose.msra.mxu0 0
      %2004 = vmatprep.subr.bf16.mxu0 0
      %2005 = vmatpush1.bf16.xpose.msra.mxu0 0
      %2006 = vmatprep.subr.bf16.mxu0 0
      %2007 = vmatpush1.bf16.xpose.msra.mxu0 0
      %2008 = vmatprep.subr.bf16.mxu0 0
      %2009 = vmatpush1.bf16.xpose.msra.mxu0 0
      %2010 = vmatprep.subr.bf16.mxu0 0
      %2011 = vmatpush1.bf16.xpose.msra.mxu0 0
      %2012 = vmatprep.subr.bf16.mxu0 0
      %2013 = vmatpush1.bf16.xpose.msra.mxu0 0
      %2014 = vmatprep.subr.bf16.mxu0 0
      %2015 = vmatpush1.bf16.xpose.msra.mxu0 0
      %2016 = vmatprep.subr.bf16.mxu0 0
      %2017 = vmatpush1.bf16.xpose.msra.mxu0 0
      %2018 = vmatprep.mubr.bf16.mxu0 0
      %2019 = vmatmul.mubr.bf16.gmra.mrb[0].mxu0 %v1981
      %v2020 = vpop.f32.mrb[0].mxu0
      %v2021 = vadd.f32 0.0, %v2020
      %v2022 = vpop.f32.mrb[0].mxu0
      %v2023 = vpop.f32.mrb[0].mxu0
      %v2024 = vpop.f32.mrb[0].mxu0
      %2025 = vdwg.mxu0
      %v2026 = vmul.f32 %v2021, 0.25
      %v2027 = vadd.f32 %v2026, %v644
      %v2028 = vsel %vm646, %v2027, -inf
      %2029 = vmax.xlane.f32.xlu0 %v2028
      %v2030 = vpop.xlane.xlu0 %2029
      %v2031 = vsub.f32 %v2027, %v2030
      %v2032 = vmul.f32 %v2031, 1.442695
      %v2033 = vpow.pop %v2032
      %v2034 = vsel %vm646, %v2033, 0.0
      %2035 = vadd.xlane.f32.xlu0 %v2034
      %v2036 = vpop.xlane.xlu0 %2035
      %v2037 = vrcp.pop %v2036
      %v2038 = vmul.f32 %v2033, %v2037
      %v2039 = vpack.c.bf16 %v2038, %v2038
      %2040 = vrot.lane.b32.xlu0 %v1976, 64
      %v2041 = vpop.permute.xlu0 %2040
      %v2043 = vsel %vm646, %v2039, 0
      %v2046 = vsel %vm664, %v2041, 0
      %2048 = vmatprep.subr.bf16.mxu0 0
      %2049 = vmatpush1.bf16.msra.mxu0 %v2046
      %2050 = vmatprep.subr.bf16.mxu0 0
      %2051 = vmatpush1.bf16.msra.mxu0 0
      %2052 = vmatprep.subr.bf16.mxu0 0
      %2053 = vmatpush1.bf16.msra.mxu0 0
      %2054 = vmatprep.subr.bf16.mxu0 0
      %2055 = vmatpush1.bf16.msra.mxu0 0
      %2056 = vmatprep.subr.bf16.mxu0 0
      %2057 = vmatpush1.bf16.msra.mxu0 0
      %2058 = vmatprep.subr.bf16.mxu0 0
      %2059 = vmatpush1.bf16.msra.mxu0 0
      %2060 = vmatprep.subr.bf16.mxu0 0
      %2061 = vmatpush1.bf16.msra.mxu0 0
      %2062 = vmatprep.subr.bf16.mxu0 0
      %2063 = vmatpush1.bf16.msra.mxu0 0
      %2064 = vmatprep.subr.bf16.mxu0 0
      %2065 = vmatpush1.bf16.msra.mxu0 0
      %2066 = vmatprep.subr.bf16.mxu0 0
      %2067 = vmatpush1.bf16.msra.mxu0 0
      %2068 = vmatprep.subr.bf16.mxu0 0
      %2069 = vmatpush1.bf16.msra.mxu0 0
      %2070 = vmatprep.subr.bf16.mxu0 0
      %2071 = vmatpush1.bf16.msra.mxu0 0
      %2072 = vmatprep.subr.bf16.mxu0 0
      %2073 = vmatpush1.bf16.msra.mxu0 0
      %2074 = vmatprep.subr.bf16.mxu0 0
      %2075 = vmatpush1.bf16.msra.mxu0 0
      %2076 = vmatprep.subr.bf16.mxu0 0
      %2077 = vmatpush1.bf16.msra.mxu0 0
      %2078 = vmatprep.subr.bf16.mxu0 0
      %2079 = vmatpush1.bf16.msra.mxu0 0
      %2080 = vmatprep.mubr.bf16.mxu0 0
      %2081 = vmatmul.mubr.bf16.gmra.mrb[0].mxu0 %v2043
      %v2082 = vpop.f32.mrb[0].mxu0
      %v2083 = vadd.f32 0.0, %v2082
      %v2084 = vpop.f32.mrb[0].mxu0
      %v2085 = vpop.f32.mrb[0].mxu0
      %v2086 = vpop.f32.mrb[0].mxu0
      %2087 = vdwg.mxu0
      %2088 = vrot.lane.b32.xlu0 %v1976, 112
      %v2089 = vpop.permute.xlu0 %2088
      %2090 = vrot.lane.b32.xlu0 %v1976, 80
      %v2091 = vpop.permute.xlu0 %2090
      %v2093 = vsel %vm593, %v2089, 0
      %v2096 = vsel %vm593, %v2091, 0
      %2098 = vmatprep.subr.bf16.mxu0 0
      %2099 = vmatpush1.bf16.xpose.msra.mxu0 %v2096
      %2100 = vmatprep.subr.bf16.mxu0 0
      %2101 = vmatpush1.bf16.xpose.msra.mxu0 0
      %2102 = vmatprep.subr.bf16.mxu0 0
      %2103 = vmatpush1.bf16.xpose.msra.mxu0 0
      %2104 = vmatprep.subr.bf16.mxu0 0
      %2105 = vmatpush1.bf16.xpose.msra.mxu0 0
      %2106 = vmatprep.subr.bf16.mxu0 0
      %2107 = vmatpush1.bf16.xpose.msra.mxu0 0
      %2108 = vmatprep.subr.bf16.mxu0 0
      %2109 = vmatpush1.bf16.xpose.msra.mxu0 0
      %2110 = vmatprep.subr.bf16.mxu0 0
      %2111 = vmatpush1.bf16.xpose.msra.mxu0 0
      %2112 = vmatprep.subr.bf16.mxu0 0
      %2113 = vmatpush1.bf16.xpose.msra.mxu0 0
      %2114 = vmatprep.subr.bf16.mxu0 0
      %2115 = vmatpush1.bf16.xpose.msra.mxu0 0
      %2116 = vmatprep.subr.bf16.mxu0 0
      %2117 = vmatpush1.bf16.xpose.msra.mxu0 0
      %2118 = vmatprep.subr.bf16.mxu0 0
      %2119 = vmatpush1.bf16.xpose.msra.mxu0 0
      %2120 = vmatprep.subr.bf16.mxu0 0
      %2121 = vmatpush1.bf16.xpose.msra.mxu0 0
      %2122 = vmatprep.subr.bf16.mxu0 0
      %2123 = vmatpush1.bf16.xpose.msra.mxu0 0
      %2124 = vmatprep.subr.bf16.mxu0 0
      %2125 = vmatpush1.bf16.xpose.msra.mxu0 0
      %2126 = vmatprep.subr.bf16.mxu0 0
      %2127 = vmatpush1.bf16.xpose.msra.mxu0 0
      %2128 = vmatprep.subr.bf16.mxu0 0
      %2129 = vmatpush1.bf16.xpose.msra.mxu0 0
      %2130 = vmatprep.mubr.bf16.mxu0 0
      %2131 = vmatmul.mubr.bf16.gmra.mrb[0].mxu0 %v2093
      %v2132 = vpop.f32.mrb[0].mxu0
      %v2133 = vadd.f32 0.0, %v2132
      %v2134 = vpop.f32.mrb[0].mxu0
      %v2135 = vpop.f32.mrb[0].mxu0
      %v2136 = vpop.f32.mrb[0].mxu0
      %2137 = vdwg.mxu0
      %v2138 = vmul.f32 %v2133, 0.25
      %v2139 = vadd.f32 %v2138, %v644
      %v2140 = vsel %vm646, %v2139, -inf
      %2141 = vmax.xlane.f32.xlu0 %v2140
      %v2142 = vpop.xlane.xlu0 %2141
      %v2143 = vsub.f32 %v2139, %v2142
      %v2144 = vmul.f32 %v2143, 1.442695
      %v2145 = vpow.pop %v2144
      %v2146 = vsel %vm646, %v2145, 0.0
      %2147 = vadd.xlane.f32.xlu0 %v2146
      %v2148 = vpop.xlane.xlu0 %2147
      %v2149 = vrcp.pop %v2148
      %v2150 = vmul.f32 %v2145, %v2149
      %v2151 = vpack.c.bf16 %v2150, %v2150
      %2152 = vrot.lane.b32.xlu0 %v1976, 48
      %v2153 = vpop.permute.xlu0 %2152
      %v2155 = vsel %vm646, %v2151, 0
      %v2158 = vsel %vm664, %v2153, 0
      %2160 = vmatprep.subr.bf16.mxu0 0
      %2161 = vmatpush1.bf16.msra.mxu0 %v2158
      %2162 = vmatprep.subr.bf16.mxu0 0
      %2163 = vmatpush1.bf16.msra.mxu0 0
      %2164 = vmatprep.subr.bf16.mxu0 0
      %2165 = vmatpush1.bf16.msra.mxu0 0
      %2166 = vmatprep.subr.bf16.mxu0 0
      %2167 = vmatpush1.bf16.msra.mxu0 0
      %2168 = vmatprep.subr.bf16.mxu0 0
      %2169 = vmatpush1.bf16.msra.mxu0 0
      %2170 = vmatprep.subr.bf16.mxu0 0
      %2171 = vmatpush1.bf16.msra.mxu0 0
      %2172 = vmatprep.subr.bf16.mxu0 0
      %2173 = vmatpush1.bf16.msra.mxu0 0
      %2174 = vmatprep.subr.bf16.mxu0 0
      %2175 = vmatpush1.bf16.msra.mxu0 0
      %2176 = vmatprep.subr.bf16.mxu0 0
      %2177 = vmatpush1.bf16.msra.mxu0 0
      %2178 = vmatprep.subr.bf16.mxu0 0
      %2179 = vmatpush1.bf16.msra.mxu0 0
      %2180 = vmatprep.subr.bf16.mxu0 0
      %2181 = vmatpush1.bf16.msra.mxu0 0
      %2182 = vmatprep.subr.bf16.mxu0 0
      %2183 = vmatpush1.bf16.msra.mxu0 0
      %2184 = vmatprep.subr.bf16.mxu0 0
      %2185 = vmatpush1.bf16.msra.mxu0 0
      %2186 = vmatprep.subr.bf16.mxu0 0
      %2187 = vmatpush1.bf16.msra.mxu0 0
      %2188 = vmatprep.subr.bf16.mxu0 0
      %2189 = vmatpush1.bf16.msra.mxu0 0
      %2190 = vmatprep.subr.bf16.mxu0 0
      %2191 = vmatpush1.bf16.msra.mxu0 0
      %2192 = vmatprep.mubr.bf16.mxu0 0
      %2193 = vmatmul.mubr.bf16.gmra.mrb[0].mxu0 %v2155
      %v2194 = vpop.f32.mrb[0].mxu0
      %v2195 = vadd.f32 0.0, %v2194
      %v2196 = vpop.f32.mrb[0].mxu0
      %v2197 = vpop.f32.mrb[0].mxu0
      %v2198 = vpop.f32.mrb[0].mxu0
      %2199 = vdwg.mxu0
      %2201 = vrot.lane.b32.xlu0 %v2195, 16
      %v2202 = vpop.permute.xlu0 %2201
      %v2204 = vsel %vm593, %v2083, %v2202
      %v2205 = vpack.c.bf16 %v2204, %v2204
      %v2206 = vlaneseq
      %v2207 = vshrl.u32 %v2206, 7
      %v2208 = vsub.s32 1, %v2207
      %v2209 = vrot.slane %v404, %v2208
      %2210 = vrot.lane.b32.xlu0 %v1929, 32
      %v2211 = vpop.permute.xlu0 %2210
      %2212 = vrot.lane.b32.xlu0 %v1930, 32
      %v2213 = vpop.permute.xlu0 %2212
      %v2217 = vsel %vm504, %v2205, 0
      %2219 = vmatprep.subr.bf16.mxu0 0
      %2220 = vmatpush1.bf16.msra.mxu0 %v2211
      %2221 = vmatprep.subr.bf16.mxu0 0
      %2222 = vmatpush1.bf16.msra.mxu0 %v2213
      %2223 = vmatprep.subr.bf16.mxu0 0
      %2224 = vmatpush1.bf16.msra.mxu0 0
      %2225 = vmatprep.subr.bf16.mxu0 0
      %2226 = vmatpush1.bf16.msra.mxu0 0
      %2227 = vmatprep.subr.bf16.mxu0 0
      %2228 = vmatpush1.bf16.msra.mxu0 0
      %2229 = vmatprep.subr.bf16.mxu0 0
      %2230 = vmatpush1.bf16.msra.mxu0 0
      %2231 = vmatprep.subr.bf16.mxu0 0
      %2232 = vmatpush1.bf16.msra.mxu0 0
      %2233 = vmatprep.subr.bf16.mxu0 0
      %2234 = vmatpush1.bf16.msra.mxu0 0
      %2235 = vmatprep.subr.bf16.mxu0 0
      %2236 = vmatpush1.bf16.msra.mxu0 0
      %2237 = vmatprep.subr.bf16.mxu0 0
      %2238 = vmatpush1.bf16.msra.mxu0 0
      %2239 = vmatprep.subr.bf16.mxu0 0
      %2240 = vmatpush1.bf16.msra.mxu0 0
      %2241 = vmatprep.subr.bf16.mxu0 0
      %2242 = vmatpush1.bf16.msra.mxu0 0
      %2243 = vmatprep.subr.bf16.mxu0 0
      %2244 = vmatpush1.bf16.msra.mxu0 0
      %2245 = vmatprep.subr.bf16.mxu0 0
      %2246 = vmatpush1.bf16.msra.mxu0 0
      %2247 = vmatprep.subr.bf16.mxu0 0
      %2248 = vmatpush1.bf16.msra.mxu0 0
      %2249 = vmatprep.subr.bf16.mxu0 0
      %2250 = vmatpush1.bf16.msra.mxu0 0
      %2251 = vmatprep.mubr.bf16.mxu0 0
      %2252 = vmatmul.mubr.bf16.gmra.mrb[0].mxu0 %v2217
      %v2253 = vpop.f32.mrb[0].mxu0
      %v2254 = vadd.f32 %v2209, %v2253
      %v2255 = vpop.f32.mrb[0].mxu0
      %v2256 = vpop.f32.mrb[0].mxu0
      %v2257 = vpop.f32.mrb[0].mxu0
      %2258 = vdwg.mxu0
      %v2259 = vadd.f32 %v2254, %v1915
      %v2260 = vsel %vm504, %v2259, 0.0
      %2261 = vadd.xlane.f32.xlu0 %v2260
      %v2262 = vpop.xlane.xlu0 %2261
      %v2263 = vmul.f32 %v2262, %v508
      %v2264 = vsub.f32 %v2259, %v2263
      %v2265 = vmul.f32 %v2264, %v2264
      %v2266 = vsel %vm504, %v2265, 0.0
      %2267 = vadd.xlane.f32.xlu0 %v2266
      %v2268 = vpop.xlane.xlu0 %2267
      %v2269 = vmul.f32 %v2268, %v508
      %v2270 = vadd.f32 %v2269, 1e-05
      %v2271 = vrsqrt.pop %v2270
      %v2272 = vmul.f32 %v2264, %v2271
      %v2273 = vlaneseq
      %v2274 = vshrl.u32 %v2273, 7
      %v2275 = vsub.s32 6, %v2274
      %v2276 = vrot.slane %v404, %v2275
      %v2277 = vmul.f32 %v2272, %v2276
      %v2278 = vlaneseq
      %v2279 = vshrl.u32 %v2278, 7
      %v2280 = vsub.s32 7, %v2279
      %v2281 = vrot.slane %v404, %v2280
      %v2282 = vadd.f32 %v2277, %v2281
      %v2283 = vmul.f32 %v2282, %v905
      %v2284 = vpack.c.bf16 %v2283, %v2283
      %v2285 = vlaneseq
      %v2286 = vshrl.u32 %v2285, 7
      %v2287 = vsub.s32 2, %v2286
      %v2288 = vrot.slane %v404, %v2287
      %v2289 = vadd.f32 %v2288, 0.0
      %v2291 = vsel %vm664, %v2284, 0
      %2293 = vmatprep.subr.bf16.mxu0 0
      %2294 = vmatpush1.bf16.msra.mxu0 %v2291
      %2295 = vmatprep.subr.bf16.mxu0 0
      %2296 = vmatpush1.bf16.msra.mxu0 0
      %2297 = vmatprep.subr.bf16.mxu0 0
      %2298 = vmatpush1.bf16.msra.mxu0 0
      %2299 = vmatprep.subr.bf16.mxu0 0
      %2300 = vmatpush1.bf16.msra.mxu0 0
      %2301 = vmatprep.subr.bf16.mxu0 0
      %2302 = vmatpush1.bf16.msra.mxu0 0
      %2303 = vmatprep.subr.bf16.mxu0 0
      %2304 = vmatpush1.bf16.msra.mxu0 0
      %2305 = vmatprep.subr.bf16.mxu0 0
      %2306 = vmatpush1.bf16.msra.mxu0 0
      %2307 = vmatprep.subr.bf16.mxu0 0
      %2308 = vmatpush1.bf16.msra.mxu0 0
      %2309 = vmatprep.subr.bf16.mxu0 0
      %2310 = vmatpush1.bf16.msra.mxu0 0
      %2311 = vmatprep.subr.bf16.mxu0 0
      %2312 = vmatpush1.bf16.msra.mxu0 0
      %2313 = vmatprep.subr.bf16.mxu0 0
      %2314 = vmatpush1.bf16.msra.mxu0 0
      %2315 = vmatprep.subr.bf16.mxu0 0
      %2316 = vmatpush1.bf16.msra.mxu0 0
      %2317 = vmatprep.subr.bf16.mxu0 0
      %2318 = vmatpush1.bf16.msra.mxu0 0
      %2319 = vmatprep.subr.bf16.mxu0 0
      %2320 = vmatpush1.bf16.msra.mxu0 0
      %2321 = vmatprep.subr.bf16.mxu0 0
      %2322 = vmatpush1.bf16.msra.mxu0 0
      %2323 = vmatprep.subr.bf16.mxu0 0
      %2324 = vmatpush1.bf16.msra.mxu0 0
      %2325 = vmatprep.mubr.bf16.mxu0 0
      %2326 = vmatmul.mubr.bf16.gmra.mrb[0].mxu0 %v915
      %v2327 = vpop.f32.mrb[0].mxu0
      %v2328 = vadd.f32 0.0, %v2327
      %v2329 = vpop.f32.mrb[0].mxu0
      %v2330 = vpop.f32.mrb[0].mxu0
      %v2331 = vpop.f32.mrb[0].mxu0
      %2332 = vdwg.mxu0
      %v2333 = vpack.c.bf16 %v2328, %v2328
      %v2338 = vunpack.c.l.b16 %v271
      %v2339 = vunpack.c.l.b16 %v272
      %v2340 = vunpack.c.l.b16 %v273
      %v2341 = vunpack.c.l.b16 %v274
      %v2342 = vpack.c.b16 %v2339, %v2338
      %v2343 = vpack.c.b16 %v2341, %v2340
      %v2347 = vsel %vm504, %v2333, 0
      %2349 = vmatprep.subr.bf16.mxu0 0
      %2350 = vmatpush1.bf16.msra.mxu0 %v2342
      %2351 = vmatprep.subr.bf16.mxu0 0
      %2352 = vmatpush1.bf16.msra.mxu0 %v2343
      %2353 = vmatprep.subr.bf16.mxu0 0
      %2354 = vmatpush1.bf16.msra.mxu0 0
      %2355 = vmatprep.subr.bf16.mxu0 0
      %2356 = vmatpush1.bf16.msra.mxu0 0
      %2357 = vmatprep.subr.bf16.mxu0 0
      %2358 = vmatpush1.bf16.msra.mxu0 0
      %2359 = vmatprep.subr.bf16.mxu0 0
      %2360 = vmatpush1.bf16.msra.mxu0 0
      %2361 = vmatprep.subr.bf16.mxu0 0
      %2362 = vmatpush1.bf16.msra.mxu0 0
      %2363 = vmatprep.subr.bf16.mxu0 0
      %2364 = vmatpush1.bf16.msra.mxu0 0
      %2365 = vmatprep.subr.bf16.mxu0 0
      %2366 = vmatpush1.bf16.msra.mxu0 0
      %2367 = vmatprep.subr.bf16.mxu0 0
      %2368 = vmatpush1.bf16.msra.mxu0 0
      %2369 = vmatprep.subr.bf16.mxu0 0
      %2370 = vmatpush1.bf16.msra.mxu0 0
      %2371 = vmatprep.subr.bf16.mxu0 0
      %2372 = vmatpush1.bf16.msra.mxu0 0
      %2373 = vmatprep.subr.bf16.mxu0 0
      %2374 = vmatpush1.bf16.msra.mxu0 0
      %2375 = vmatprep.subr.bf16.mxu0 0
      %2376 = vmatpush1.bf16.msra.mxu0 0
      %2377 = vmatprep.subr.bf16.mxu0 0
      %2378 = vmatpush1.bf16.msra.mxu0 0
      %2379 = vmatprep.subr.bf16.mxu0 0
      %2380 = vmatpush1.bf16.msra.mxu0 0
      %2381 = vmatprep.mubr.bf16.mxu0 0
      %2382 = vmatmul.mubr.bf16.gmra.mrb[0].mxu0 %v2347
      %v2383 = vpop.f32.mrb[0].mxu0
      %v2384 = vadd.f32 0.0, %v2383
      %v2385 = vpop.f32.mrb[0].mxu0
      %v2386 = vpop.f32.mrb[0].mxu0
      %v2387 = vpop.f32.mrb[0].mxu0
      %2388 = vdwg.mxu0
      %v2389 = vadd.f32 %v2289, %v2384
      %2390 = vmatprep.subr.bf16.mxu0 0
      %2391 = vmatpush1.bf16.msra.mxu0 %v2291
      %2392 = vmatprep.subr.bf16.mxu0 0
      %2393 = vmatpush1.bf16.msra.mxu0 0
      %2394 = vmatprep.subr.bf16.mxu0 0
      %2395 = vmatpush1.bf16.msra.mxu0 0
      %2396 = vmatprep.subr.bf16.mxu0 0
      %2397 = vmatpush1.bf16.msra.mxu0 0
      %2398 = vmatprep.subr.bf16.mxu0 0
      %2399 = vmatpush1.bf16.msra.mxu0 0
      %2400 = vmatprep.subr.bf16.mxu0 0
      %2401 = vmatpush1.bf16.msra.mxu0 0
      %2402 = vmatprep.subr.bf16.mxu0 0
      %2403 = vmatpush1.bf16.msra.mxu0 0
      %2404 = vmatprep.subr.bf16.mxu0 0
      %2405 = vmatpush1.bf16.msra.mxu0 0
      %2406 = vmatprep.subr.bf16.mxu0 0
      %2407 = vmatpush1.bf16.msra.mxu0 0
      %2408 = vmatprep.subr.bf16.mxu0 0
      %2409 = vmatpush1.bf16.msra.mxu0 0
      %2410 = vmatprep.subr.bf16.mxu0 0
      %2411 = vmatpush1.bf16.msra.mxu0 0
      %2412 = vmatprep.subr.bf16.mxu0 0
      %2413 = vmatpush1.bf16.msra.mxu0 0
      %2414 = vmatprep.subr.bf16.mxu0 0
      %2415 = vmatpush1.bf16.msra.mxu0 0
      %2416 = vmatprep.subr.bf16.mxu0 0
      %2417 = vmatpush1.bf16.msra.mxu0 0
      %2418 = vmatprep.subr.bf16.mxu0 0
      %2419 = vmatpush1.bf16.msra.mxu0 0
      %2420 = vmatprep.subr.bf16.mxu0 0
      %2421 = vmatpush1.bf16.msra.mxu0 0
      %2422 = vmatprep.mubr.bf16.mxu0 0
      %2423 = vmatmul.mubr.bf16.gmra.mrb[0].mxu0 %v1018
      %v2424 = vpop.f32.mrb[0].mxu0
      %v2425 = vadd.f32 0.0, %v2424
      %v2426 = vpop.f32.mrb[0].mxu0
      %v2427 = vpop.f32.mrb[0].mxu0
      %v2428 = vpop.f32.mrb[0].mxu0
      %2429 = vdwg.mxu0
      %v2430 = vpack.c.bf16 %v2425, %v2425
      %v2435 = vunpack.c.l.b16 %v275
      %v2436 = vunpack.c.l.b16 %v276
      %v2437 = vunpack.c.l.b16 %v277
      %v2438 = vunpack.c.l.b16 %v278
      %v2439 = vpack.c.b16 %v2436, %v2435
      %v2440 = vpack.c.b16 %v2438, %v2437
      %v2444 = vsel %vm504, %v2430, 0
      %2446 = vmatprep.subr.bf16.mxu0 0
      %2447 = vmatpush1.bf16.msra.mxu0 %v2439
      %2448 = vmatprep.subr.bf16.mxu0 0
      %2449 = vmatpush1.bf16.msra.mxu0 %v2440
      %2450 = vmatprep.subr.bf16.mxu0 0
      %2451 = vmatpush1.bf16.msra.mxu0 0
      %2452 = vmatprep.subr.bf16.mxu0 0
      %2453 = vmatpush1.bf16.msra.mxu0 0
      %2454 = vmatprep.subr.bf16.mxu0 0
      %2455 = vmatpush1.bf16.msra.mxu0 0
      %2456 = vmatprep.subr.bf16.mxu0 0
      %2457 = vmatpush1.bf16.msra.mxu0 0
      %2458 = vmatprep.subr.bf16.mxu0 0
      %2459 = vmatpush1.bf16.msra.mxu0 0
      %2460 = vmatprep.subr.bf16.mxu0 0
      %2461 = vmatpush1.bf16.msra.mxu0 0
      %2462 = vmatprep.subr.bf16.mxu0 0
      %2463 = vmatpush1.bf16.msra.mxu0 0
      %2464 = vmatprep.subr.bf16.mxu0 0
      %2465 = vmatpush1.bf16.msra.mxu0 0
      %2466 = vmatprep.subr.bf16.mxu0 0
      %2467 = vmatpush1.bf16.msra.mxu0 0
      %2468 = vmatprep.subr.bf16.mxu0 0
      %2469 = vmatpush1.bf16.msra.mxu0 0
      %2470 = vmatprep.subr.bf16.mxu0 0
      %2471 = vmatpush1.bf16.msra.mxu0 0
      %2472 = vmatprep.subr.bf16.mxu0 0
      %2473 = vmatpush1.bf16.msra.mxu0 0
      %2474 = vmatprep.subr.bf16.mxu0 0
      %2475 = vmatpush1.bf16.msra.mxu0 0
      %2476 = vmatprep.subr.bf16.mxu0 0
      %2477 = vmatpush1.bf16.msra.mxu0 0
      %2478 = vmatprep.mubr.bf16.mxu0 0
      %2479 = vmatmul.mubr.bf16.gmra.mrb[0].mxu0 %v2444
      %v2480 = vpop.f32.mrb[0].mxu0
      %v2481 = vadd.f32 0.0, %v2480
      %v2482 = vpop.f32.mrb[0].mxu0
      %v2483 = vpop.f32.mrb[0].mxu0
      %v2484 = vpop.f32.mrb[0].mxu0
      %2485 = vdwg.mxu0
      %v2486 = vadd.f32 %v2389, %v2481
      %2487 = vmatprep.subr.bf16.mxu0 0
      %2488 = vmatpush1.bf16.msra.mxu0 %v2291
      %2489 = vmatprep.subr.bf16.mxu0 0
      %2490 = vmatpush1.bf16.msra.mxu0 0
      %2491 = vmatprep.subr.bf16.mxu0 0
      %2492 = vmatpush1.bf16.msra.mxu0 0
      %2493 = vmatprep.subr.bf16.mxu0 0
      %2494 = vmatpush1.bf16.msra.mxu0 0
      %2495 = vmatprep.subr.bf16.mxu0 0
      %2496 = vmatpush1.bf16.msra.mxu0 0
      %2497 = vmatprep.subr.bf16.mxu0 0
      %2498 = vmatpush1.bf16.msra.mxu0 0
      %2499 = vmatprep.subr.bf16.mxu0 0
      %2500 = vmatpush1.bf16.msra.mxu0 0
      %2501 = vmatprep.subr.bf16.mxu0 0
      %2502 = vmatpush1.bf16.msra.mxu0 0
      %2503 = vmatprep.subr.bf16.mxu0 0
      %2504 = vmatpush1.bf16.msra.mxu0 0
      %2505 = vmatprep.subr.bf16.mxu0 0
      %2506 = vmatpush1.bf16.msra.mxu0 0
      %2507 = vmatprep.subr.bf16.mxu0 0
      %2508 = vmatpush1.bf16.msra.mxu0 0
      %2509 = vmatprep.subr.bf16.mxu0 0
      %2510 = vmatpush1.bf16.msra.mxu0 0
      %2511 = vmatprep.subr.bf16.mxu0 0
      %2512 = vmatpush1.bf16.msra.mxu0 0
      %2513 = vmatprep.subr.bf16.mxu0 0
      %2514 = vmatpush1.bf16.msra.mxu0 0
      %2515 = vmatprep.subr.bf16.mxu0 0
      %2516 = vmatpush1.bf16.msra.mxu0 0
      %2517 = vmatprep.subr.bf16.mxu0 0
      %2518 = vmatpush1.bf16.msra.mxu0 0
      %2519 = vmatprep.mubr.bf16.mxu0 0
      %2520 = vmatmul.mubr.bf16.gmra.mrb[0].mxu0 %v1118
      %v2521 = vpop.f32.mrb[0].mxu0
      %v2522 = vadd.f32 0.0, %v2521
      %v2523 = vpop.f32.mrb[0].mxu0
      %v2524 = vpop.f32.mrb[0].mxu0
      %v2525 = vpop.f32.mrb[0].mxu0
      %2526 = vdwg.mxu0
      %v2527 = vpack.c.bf16 %v2522, %v2522
      %v2532 = vunpack.c.l.b16 %v279
      %v2533 = vunpack.c.l.b16 %v280
      %v2534 = vunpack.c.l.b16 %v281
      %v2535 = vunpack.c.l.b16 %v282
      %v2536 = vpack.c.b16 %v2533, %v2532
      %v2537 = vpack.c.b16 %v2535, %v2534
      %v2541 = vsel %vm504, %v2527, 0
      %2543 = vmatprep.subr.bf16.mxu0 0
      %2544 = vmatpush1.bf16.msra.mxu0 %v2536
      %2545 = vmatprep.subr.bf16.mxu0 0
      %2546 = vmatpush1.bf16.msra.mxu0 %v2537
      %2547 = vmatprep.subr.bf16.mxu0 0
      %2548 = vmatpush1.bf16.msra.mxu0 0
      %2549 = vmatprep.subr.bf16.mxu0 0
      %2550 = vmatpush1.bf16.msra.mxu0 0
      %2551 = vmatprep.subr.bf16.mxu0 0
      %2552 = vmatpush1.bf16.msra.mxu0 0
      %2553 = vmatprep.subr.bf16.mxu0 0
      %2554 = vmatpush1.bf16.msra.mxu0 0
      %2555 = vmatprep.subr.bf16.mxu0 0
      %2556 = vmatpush1.bf16.msra.mxu0 0
      %2557 = vmatprep.subr.bf16.mxu0 0
      %2558 = vmatpush1.bf16.msra.mxu0 0
      %2559 = vmatprep.subr.bf16.mxu0 0
      %2560 = vmatpush1.bf16.msra.mxu0 0
      %2561 = vmatprep.subr.bf16.mxu0 0
      %2562 = vmatpush1.bf16.msra.mxu0 0
      %2563 = vmatprep.subr.bf16.mxu0 0
      %2564 = vmatpush1.bf16.msra.mxu0 0
      %2565 = vmatprep.subr.bf16.mxu0 0
      %2566 = vmatpush1.bf16.msra.mxu0 0
      %2567 = vmatprep.subr.bf16.mxu0 0
      %2568 = vmatpush1.bf16.msra.mxu0 0
      %2569 = vmatprep.subr.bf16.mxu0 0
      %2570 = vmatpush1.bf16.msra.mxu0 0
      %2571 = vmatprep.subr.bf16.mxu0 0
      %2572 = vmatpush1.bf16.msra.mxu0 0
      %2573 = vmatprep.subr.bf16.mxu0 0
      %2574 = vmatpush1.bf16.msra.mxu0 0
      %2575 = vmatprep.mubr.bf16.mxu0 0
      %2576 = vmatmul.mubr.bf16.gmra.mrb[0].mxu0 %v2541
      %v2577 = vpop.f32.mrb[0].mxu0
      %v2578 = vadd.f32 0.0, %v2577
      %v2579 = vpop.f32.mrb[0].mxu0
      %v2580 = vpop.f32.mrb[0].mxu0
      %v2581 = vpop.f32.mrb[0].mxu0
      %2582 = vdwg.mxu0
      %v2583 = vadd.f32 %v2486, %v2578
      %2584 = vmatprep.subr.bf16.mxu0 0
      %2585 = vmatpush1.bf16.msra.mxu0 %v2291
      %2586 = vmatprep.subr.bf16.mxu0 0
      %2587 = vmatpush1.bf16.msra.mxu0 0
      %2588 = vmatprep.subr.bf16.mxu0 0
      %2589 = vmatpush1.bf16.msra.mxu0 0
      %2590 = vmatprep.subr.bf16.mxu0 0
      %2591 = vmatpush1.bf16.msra.mxu0 0
      %2592 = vmatprep.subr.bf16.mxu0 0
      %2593 = vmatpush1.bf16.msra.mxu0 0
      %2594 = vmatprep.subr.bf16.mxu0 0
      %2595 = vmatpush1.bf16.msra.mxu0 0
      %2596 = vmatprep.subr.bf16.mxu0 0
      %2597 = vmatpush1.bf16.msra.mxu0 0
      %2598 = vmatprep.subr.bf16.mxu0 0
      %2599 = vmatpush1.bf16.msra.mxu0 0
      %2600 = vmatprep.subr.bf16.mxu0 0
      %2601 = vmatpush1.bf16.msra.mxu0 0
      %2602 = vmatprep.subr.bf16.mxu0 0
      %2603 = vmatpush1.bf16.msra.mxu0 0
      %2604 = vmatprep.subr.bf16.mxu0 0
      %2605 = vmatpush1.bf16.msra.mxu0 0
      %2606 = vmatprep.subr.bf16.mxu0 0
      %2607 = vmatpush1.bf16.msra.mxu0 0
      %2608 = vmatprep.subr.bf16.mxu0 0
      %2609 = vmatpush1.bf16.msra.mxu0 0
      %2610 = vmatprep.subr.bf16.mxu0 0
      %2611 = vmatpush1.bf16.msra.mxu0 0
      %2612 = vmatprep.subr.bf16.mxu0 0
      %2613 = vmatpush1.bf16.msra.mxu0 0
      %2614 = vmatprep.subr.bf16.mxu0 0
      %2615 = vmatpush1.bf16.msra.mxu0 0
      %2616 = vmatprep.mubr.bf16.mxu0 0
      %2617 = vmatmul.mubr.bf16.gmra.mrb[0].mxu0 %v1218
      %v2618 = vpop.f32.mrb[0].mxu0
      %v2619 = vadd.f32 0.0, %v2618
      %v2620 = vpop.f32.mrb[0].mxu0
      %v2621 = vpop.f32.mrb[0].mxu0
      %v2622 = vpop.f32.mrb[0].mxu0
      %2623 = vdwg.mxu0
      %v2624 = vpack.c.bf16 %v2619, %v2619
      %v2629 = vunpack.c.l.b16 %v283
      %v2630 = vunpack.c.l.b16 %v284
      %v2631 = vunpack.c.l.b16 %v285
      %v2632 = vunpack.c.l.b16 %v286
      %v2633 = vpack.c.b16 %v2630, %v2629
      %v2634 = vpack.c.b16 %v2632, %v2631
      %v2638 = vsel %vm504, %v2624, 0
      %2640 = vmatprep.subr.bf16.mxu0 0
      %2641 = vmatpush1.bf16.msra.mxu0 %v2633
      %2642 = vmatprep.subr.bf16.mxu0 0
      %2643 = vmatpush1.bf16.msra.mxu0 %v2634
      %2644 = vmatprep.subr.bf16.mxu0 0
      %2645 = vmatpush1.bf16.msra.mxu0 0
      %2646 = vmatprep.subr.bf16.mxu0 0
      %2647 = vmatpush1.bf16.msra.mxu0 0
      %2648 = vmatprep.subr.bf16.mxu0 0
      %2649 = vmatpush1.bf16.msra.mxu0 0
      %2650 = vmatprep.subr.bf16.mxu0 0
      %2651 = vmatpush1.bf16.msra.mxu0 0
      %2652 = vmatprep.subr.bf16.mxu0 0
      %2653 = vmatpush1.bf16.msra.mxu0 0
      %2654 = vmatprep.subr.bf16.mxu0 0
      %2655 = vmatpush1.bf16.msra.mxu0 0
      %2656 = vmatprep.subr.bf16.mxu0 0
      %2657 = vmatpush1.bf16.msra.mxu0 0
      %2658 = vmatprep.subr.bf16.mxu0 0
      %2659 = vmatpush1.bf16.msra.mxu0 0
      %2660 = vmatprep.subr.bf16.mxu0 0
      %2661 = vmatpush1.bf16.msra.mxu0 0
      %2662 = vmatprep.subr.bf16.mxu0 0
      %2663 = vmatpush1.bf16.msra.mxu0 0
      %2664 = vmatprep.subr.bf16.mxu0 0
      %2665 = vmatpush1.bf16.msra.mxu0 0
      %2666 = vmatprep.subr.bf16.mxu0 0
      %2667 = vmatpush1.bf16.msra.mxu0 0
      %2668 = vmatprep.subr.bf16.mxu0 0
      %2669 = vmatpush1.bf16.msra.mxu0 0
      %2670 = vmatprep.subr.bf16.mxu0 0
      %2671 = vmatpush1.bf16.msra.mxu0 0
      %2672 = vmatprep.mubr.bf16.mxu0 0
      %2673 = vmatmul.mubr.bf16.gmra.mrb[0].mxu0 %v2638
      %v2674 = vpop.f32.mrb[0].mxu0
      %v2675 = vadd.f32 0.0, %v2674
      %v2676 = vpop.f32.mrb[0].mxu0
      %v2677 = vpop.f32.mrb[0].mxu0
      %v2678 = vpop.f32.mrb[0].mxu0
      %2679 = vdwg.mxu0
      %v2680 = vadd.f32 %v2583, %v2675
      %2681 = vmatprep.subr.bf16.mxu0 0
      %2682 = vmatpush1.bf16.msra.mxu0 %v2291
      %2683 = vmatprep.subr.bf16.mxu0 0
      %2684 = vmatpush1.bf16.msra.mxu0 0
      %2685 = vmatprep.subr.bf16.mxu0 0
      %2686 = vmatpush1.bf16.msra.mxu0 0
      %2687 = vmatprep.subr.bf16.mxu0 0
      %2688 = vmatpush1.bf16.msra.mxu0 0
      %2689 = vmatprep.subr.bf16.mxu0 0
      %2690 = vmatpush1.bf16.msra.mxu0 0
      %2691 = vmatprep.subr.bf16.mxu0 0
      %2692 = vmatpush1.bf16.msra.mxu0 0
      %2693 = vmatprep.subr.bf16.mxu0 0
      %2694 = vmatpush1.bf16.msra.mxu0 0
      %2695 = vmatprep.subr.bf16.mxu0 0
      %2696 = vmatpush1.bf16.msra.mxu0 0
      %2697 = vmatprep.subr.bf16.mxu0 0
      %2698 = vmatpush1.bf16.msra.mxu0 0
      %2699 = vmatprep.subr.bf16.mxu0 0
      %2700 = vmatpush1.bf16.msra.mxu0 0
      %2701 = vmatprep.subr.bf16.mxu0 0
      %2702 = vmatpush1.bf16.msra.mxu0 0
      %2703 = vmatprep.subr.bf16.mxu0 0
      %2704 = vmatpush1.bf16.msra.mxu0 0
      %2705 = vmatprep.subr.bf16.mxu0 0
      %2706 = vmatpush1.bf16.msra.mxu0 0
      %2707 = vmatprep.subr.bf16.mxu0 0
      %2708 = vmatpush1.bf16.msra.mxu0 0
      %2709 = vmatprep.subr.bf16.mxu0 0
      %2710 = vmatpush1.bf16.msra.mxu0 0
      %2711 = vmatprep.subr.bf16.mxu0 0
      %2712 = vmatpush1.bf16.msra.mxu0 0
      %2713 = vmatprep.mubr.bf16.mxu0 0
      %2714 = vmatmul.mubr.bf16.gmra.mrb[0].mxu0 %v1318
      %v2715 = vpop.f32.mrb[0].mxu0
      %v2716 = vadd.f32 0.0, %v2715
      %v2717 = vpop.f32.mrb[0].mxu0
      %v2718 = vpop.f32.mrb[0].mxu0
      %v2719 = vpop.f32.mrb[0].mxu0
      %2720 = vdwg.mxu0
      %v2721 = vpack.c.bf16 %v2716, %v2716
      %v2726 = vunpack.c.l.b16 %v287
      %v2727 = vunpack.c.l.b16 %v288
      %v2728 = vunpack.c.l.b16 %v289
      %v2729 = vunpack.c.l.b16 %v290
      %v2730 = vpack.c.b16 %v2727, %v2726
      %v2731 = vpack.c.b16 %v2729, %v2728
      %v2735 = vsel %vm504, %v2721, 0
      %2737 = vmatprep.subr.bf16.mxu0 0
      %2738 = vmatpush1.bf16.msra.mxu0 %v2730
      %2739 = vmatprep.subr.bf16.mxu0 0
      %2740 = vmatpush1.bf16.msra.mxu0 %v2731
      %2741 = vmatprep.subr.bf16.mxu0 0
      %2742 = vmatpush1.bf16.msra.mxu0 0
      %2743 = vmatprep.subr.bf16.mxu0 0
      %2744 = vmatpush1.bf16.msra.mxu0 0
      %2745 = vmatprep.subr.bf16.mxu0 0
      %2746 = vmatpush1.bf16.msra.mxu0 0
      %2747 = vmatprep.subr.bf16.mxu0 0
      %2748 = vmatpush1.bf16.msra.mxu0 0
      %2749 = vmatprep.subr.bf16.mxu0 0
      %2750 = vmatpush1.bf16.msra.mxu0 0
      %2751 = vmatprep.subr.bf16.mxu0 0
      %2752 = vmatpush1.bf16.msra.mxu0 0
      %2753 = vmatprep.subr.bf16.mxu0 0
      %2754 = vmatpush1.bf16.msra.mxu0 0
      %2755 = vmatprep.subr.bf16.mxu0 0
      %2756 = vmatpush1.bf16.msra.mxu0 0
      %2757 = vmatprep.subr.bf16.mxu0 0
      %2758 = vmatpush1.bf16.msra.mxu0 0
      %2759 = vmatprep.subr.bf16.mxu0 0
      %2760 = vmatpush1.bf16.msra.mxu0 0
      %2761 = vmatprep.subr.bf16.mxu0 0
      %2762 = vmatpush1.bf16.msra.mxu0 0
      %2763 = vmatprep.subr.bf16.mxu0 0
      %2764 = vmatpush1.bf16.msra.mxu0 0
      %2765 = vmatprep.subr.bf16.mxu0 0
      %2766 = vmatpush1.bf16.msra.mxu0 0
      %2767 = vmatprep.subr.bf16.mxu0 0
      %2768 = vmatpush1.bf16.msra.mxu0 0
      %2769 = vmatprep.mubr.bf16.mxu0 0
      %2770 = vmatmul.mubr.bf16.gmra.mrb[0].mxu0 %v2735
      %v2771 = vpop.f32.mrb[0].mxu0
      %v2772 = vadd.f32 0.0, %v2771
      %v2773 = vpop.f32.mrb[0].mxu0
      %v2774 = vpop.f32.mrb[0].mxu0
      %v2775 = vpop.f32.mrb[0].mxu0
      %2776 = vdwg.mxu0
      %v2777 = vadd.f32 %v2680, %v2772
      %2778 = vmatprep.subr.bf16.mxu0 0
      %2779 = vmatpush1.bf16.msra.mxu0 %v2291
      %2780 = vmatprep.subr.bf16.mxu0 0
      %2781 = vmatpush1.bf16.msra.mxu0 0
      %2782 = vmatprep.subr.bf16.mxu0 0
      %2783 = vmatpush1.bf16.msra.mxu0 0
      %2784 = vmatprep.subr.bf16.mxu0 0
      %2785 = vmatpush1.bf16.msra.mxu0 0
      %2786 = vmatprep.subr.bf16.mxu0 0
      %2787 = vmatpush1.bf16.msra.mxu0 0
      %2788 = vmatprep.subr.bf16.mxu0 0
      %2789 = vmatpush1.bf16.msra.mxu0 0
      %2790 = vmatprep.subr.bf16.mxu0 0
      %2791 = vmatpush1.bf16.msra.mxu0 0
      %2792 = vmatprep.subr.bf16.mxu0 0
      %2793 = vmatpush1.bf16.msra.mxu0 0
      %2794 = vmatprep.subr.bf16.mxu0 0
      %2795 = vmatpush1.bf16.msra.mxu0 0
      %2796 = vmatprep.subr.bf16.mxu0 0
      %2797 = vmatpush1.bf16.msra.mxu0 0
      %2798 = vmatprep.subr.bf16.mxu0 0
      %2799 = vmatpush1.bf16.msra.mxu0 0
      %2800 = vmatprep.subr.bf16.mxu0 0
      %2801 = vmatpush1.bf16.msra.mxu0 0
      %2802 = vmatprep.subr.bf16.mxu0 0
      %2803 = vmatpush1.bf16.msra.mxu0 0
      %2804 = vmatprep.subr.bf16.mxu0 0
      %2805 = vmatpush1.bf16.msra.mxu0 0
      %2806 = vmatprep.subr.bf16.mxu0 0
      %2807 = vmatpush1.bf16.msra.mxu0 0
      %2808 = vmatprep.subr.bf16.mxu0 0
      %2809 = vmatpush1.bf16.msra.mxu0 0
      %2810 = vmatprep.mubr.bf16.mxu0 0
      %2811 = vmatmul.mubr.bf16.gmra.mrb[0].mxu0 %v1418
      %v2812 = vpop.f32.mrb[0].mxu0
      %v2813 = vadd.f32 0.0, %v2812
      %v2814 = vpop.f32.mrb[0].mxu0
      %v2815 = vpop.f32.mrb[0].mxu0
      %v2816 = vpop.f32.mrb[0].mxu0
      %2817 = vdwg.mxu0
      %v2818 = vpack.c.bf16 %v2813, %v2813
      %v2823 = vunpack.c.l.b16 %v291
      %v2824 = vunpack.c.l.b16 %v292
      %v2825 = vunpack.c.l.b16 %v293
      %v2826 = vunpack.c.l.b16 %v294
      %v2827 = vpack.c.b16 %v2824, %v2823
      %v2828 = vpack.c.b16 %v2826, %v2825
      %v2832 = vsel %vm504, %v2818, 0
      %2834 = vmatprep.subr.bf16.mxu0 0
      %2835 = vmatpush1.bf16.msra.mxu0 %v2827
      %2836 = vmatprep.subr.bf16.mxu0 0
      %2837 = vmatpush1.bf16.msra.mxu0 %v2828
      %2838 = vmatprep.subr.bf16.mxu0 0
      %2839 = vmatpush1.bf16.msra.mxu0 0
      %2840 = vmatprep.subr.bf16.mxu0 0
      %2841 = vmatpush1.bf16.msra.mxu0 0
      %2842 = vmatprep.subr.bf16.mxu0 0
      %2843 = vmatpush1.bf16.msra.mxu0 0
      %2844 = vmatprep.subr.bf16.mxu0 0
      %2845 = vmatpush1.bf16.msra.mxu0 0
      %2846 = vmatprep.subr.bf16.mxu0 0
      %2847 = vmatpush1.bf16.msra.mxu0 0
      %2848 = vmatprep.subr.bf16.mxu0 0
      %2849 = vmatpush1.bf16.msra.mxu0 0
      %2850 = vmatprep.subr.bf16.mxu0 0
      %2851 = vmatpush1.bf16.msra.mxu0 0
      %2852 = vmatprep.subr.bf16.mxu0 0
      %2853 = vmatpush1.bf16.msra.mxu0 0
      %2854 = vmatprep.subr.bf16.mxu0 0
      %2855 = vmatpush1.bf16.msra.mxu0 0
      %2856 = vmatprep.subr.bf16.mxu0 0
      %2857 = vmatpush1.bf16.msra.mxu0 0
      %2858 = vmatprep.subr.bf16.mxu0 0
      %2859 = vmatpush1.bf16.msra.mxu0 0
      %2860 = vmatprep.subr.bf16.mxu0 0
      %2861 = vmatpush1.bf16.msra.mxu0 0
      %2862 = vmatprep.subr.bf16.mxu0 0
      %2863 = vmatpush1.bf16.msra.mxu0 0
      %2864 = vmatprep.subr.bf16.mxu0 0
      %2865 = vmatpush1.bf16.msra.mxu0 0
      %2866 = vmatprep.mubr.bf16.mxu0 0
      %2867 = vmatmul.mubr.bf16.gmra.mrb[0].mxu0 %v2832
      %v2868 = vpop.f32.mrb[0].mxu0
      %v2869 = vadd.f32 0.0, %v2868
      %v2870 = vpop.f32.mrb[0].mxu0
      %v2871 = vpop.f32.mrb[0].mxu0
      %v2872 = vpop.f32.mrb[0].mxu0
      %2873 = vdwg.mxu0
      %v2874 = vadd.f32 %v2777, %v2869
      %2875 = vmatprep.subr.bf16.mxu0 0
      %2876 = vmatpush1.bf16.msra.mxu0 %v2291
      %2877 = vmatprep.subr.bf16.mxu0 0
      %2878 = vmatpush1.bf16.msra.mxu0 0
      %2879 = vmatprep.subr.bf16.mxu0 0
      %2880 = vmatpush1.bf16.msra.mxu0 0
      %2881 = vmatprep.subr.bf16.mxu0 0
      %2882 = vmatpush1.bf16.msra.mxu0 0
      %2883 = vmatprep.subr.bf16.mxu0 0
      %2884 = vmatpush1.bf16.msra.mxu0 0
      %2885 = vmatprep.subr.bf16.mxu0 0
      %2886 = vmatpush1.bf16.msra.mxu0 0
      %2887 = vmatprep.subr.bf16.mxu0 0
      %2888 = vmatpush1.bf16.msra.mxu0 0
      %2889 = vmatprep.subr.bf16.mxu0 0
      %2890 = vmatpush1.bf16.msra.mxu0 0
      %2891 = vmatprep.subr.bf16.mxu0 0
      %2892 = vmatpush1.bf16.msra.mxu0 0
      %2893 = vmatprep.subr.bf16.mxu0 0
      %2894 = vmatpush1.bf16.msra.mxu0 0
      %2895 = vmatprep.subr.bf16.mxu0 0
      %2896 = vmatpush1.bf16.msra.mxu0 0
      %2897 = vmatprep.subr.bf16.mxu0 0
      %2898 = vmatpush1.bf16.msra.mxu0 0
      %2899 = vmatprep.subr.bf16.mxu0 0
      %2900 = vmatpush1.bf16.msra.mxu0 0
      %2901 = vmatprep.subr.bf16.mxu0 0
      %2902 = vmatpush1.bf16.msra.mxu0 0
      %2903 = vmatprep.subr.bf16.mxu0 0
      %2904 = vmatpush1.bf16.msra.mxu0 0
      %2905 = vmatprep.subr.bf16.mxu0 0
      %2906 = vmatpush1.bf16.msra.mxu0 0
      %2907 = vmatprep.mubr.bf16.mxu0 0
      %2908 = vmatmul.mubr.bf16.gmra.mrb[0].mxu0 %v1518
      %v2909 = vpop.f32.mrb[0].mxu0
      %v2910 = vadd.f32 0.0, %v2909
      %v2911 = vpop.f32.mrb[0].mxu0
      %v2912 = vpop.f32.mrb[0].mxu0
      %v2913 = vpop.f32.mrb[0].mxu0
      %2914 = vdwg.mxu0
      %v2915 = vpack.c.bf16 %v2910, %v2910
      %v2920 = vunpack.c.l.b16 %v295
      %v2921 = vunpack.c.l.b16 %v296
      %v2922 = vunpack.c.l.b16 %v297
      %v2923 = vunpack.c.l.b16 %v298
      %v2924 = vpack.c.b16 %v2921, %v2920
      %v2925 = vpack.c.b16 %v2923, %v2922
      %v2929 = vsel %vm504, %v2915, 0
      %2931 = vmatprep.subr.bf16.mxu0 0
      %2932 = vmatpush1.bf16.msra.mxu0 %v2924
      %2933 = vmatprep.subr.bf16.mxu0 0
      %2934 = vmatpush1.bf16.msra.mxu0 %v2925
      %2935 = vmatprep.subr.bf16.mxu0 0
      %2936 = vmatpush1.bf16.msra.mxu0 0
      %2937 = vmatprep.subr.bf16.mxu0 0
      %2938 = vmatpush1.bf16.msra.mxu0 0
      %2939 = vmatprep.subr.bf16.mxu0 0
      %2940 = vmatpush1.bf16.msra.mxu0 0
      %2941 = vmatprep.subr.bf16.mxu0 0
      %2942 = vmatpush1.bf16.msra.mxu0 0
      %2943 = vmatprep.subr.bf16.mxu0 0
      %2944 = vmatpush1.bf16.msra.mxu0 0
      %2945 = vmatprep.subr.bf16.mxu0 0
      %2946 = vmatpush1.bf16.msra.mxu0 0
      %2947 = vmatprep.subr.bf16.mxu0 0
      %2948 = vmatpush1.bf16.msra.mxu0 0
      %2949 = vmatprep.subr.bf16.mxu0 0
      %2950 = vmatpush1.bf16.msra.mxu0 0
      %2951 = vmatprep.subr.bf16.mxu0 0
      %2952 = vmatpush1.bf16.msra.mxu0 0
      %2953 = vmatprep.subr.bf16.mxu0 0
      %2954 = vmatpush1.bf16.msra.mxu0 0
      %2955 = vmatprep.subr.bf16.mxu0 0
      %2956 = vmatpush1.bf16.msra.mxu0 0
      %2957 = vmatprep.subr.bf16.mxu0 0
      %2958 = vmatpush1.bf16.msra.mxu0 0
      %2959 = vmatprep.subr.bf16.mxu0 0
      %2960 = vmatpush1.bf16.msra.mxu0 0
      %2961 = vmatprep.subr.bf16.mxu0 0
      %2962 = vmatpush1.bf16.msra.mxu0 0
      %2963 = vmatprep.mubr.bf16.mxu0 0
      %2964 = vmatmul.mubr.bf16.gmra.mrb[0].mxu0 %v2929
      %v2965 = vpop.f32.mrb[0].mxu0
      %v2966 = vadd.f32 0.0, %v2965
      %v2967 = vpop.f32.mrb[0].mxu0
      %v2968 = vpop.f32.mrb[0].mxu0
      %v2969 = vpop.f32.mrb[0].mxu0
      %2970 = vdwg.mxu0
      %v2971 = vadd.f32 %v2874, %v2966
      %2972 = vmatprep.subr.bf16.mxu0 0
      %2973 = vmatpush1.bf16.msra.mxu0 %v2291
      %2974 = vmatprep.subr.bf16.mxu0 0
      %2975 = vmatpush1.bf16.msra.mxu0 0
      %2976 = vmatprep.subr.bf16.mxu0 0
      %2977 = vmatpush1.bf16.msra.mxu0 0
      %2978 = vmatprep.subr.bf16.mxu0 0
      %2979 = vmatpush1.bf16.msra.mxu0 0
      %2980 = vmatprep.subr.bf16.mxu0 0
      %2981 = vmatpush1.bf16.msra.mxu0 0
      %2982 = vmatprep.subr.bf16.mxu0 0
      %2983 = vmatpush1.bf16.msra.mxu0 0
      %2984 = vmatprep.subr.bf16.mxu0 0
      %2985 = vmatpush1.bf16.msra.mxu0 0
      %2986 = vmatprep.subr.bf16.mxu0 0
      %2987 = vmatpush1.bf16.msra.mxu0 0
      %2988 = vmatprep.subr.bf16.mxu0 0
      %2989 = vmatpush1.bf16.msra.mxu0 0
      %2990 = vmatprep.subr.bf16.mxu0 0
      %2991 = vmatpush1.bf16.msra.mxu0 0
      %2992 = vmatprep.subr.bf16.mxu0 0
      %2993 = vmatpush1.bf16.msra.mxu0 0
      %2994 = vmatprep.subr.bf16.mxu0 0
      %2995 = vmatpush1.bf16.msra.mxu0 0
      %2996 = vmatprep.subr.bf16.mxu0 0
      %2997 = vmatpush1.bf16.msra.mxu0 0
      %2998 = vmatprep.subr.bf16.mxu0 0
      %2999 = vmatpush1.bf16.msra.mxu0 0
      %3000 = vmatprep.subr.bf16.mxu0 0
      %3001 = vmatpush1.bf16.msra.mxu0 0
      %3002 = vmatprep.subr.bf16.mxu0 0
      %3003 = vmatpush1.bf16.msra.mxu0 0
      %3004 = vmatprep.mubr.bf16.mxu0 0
      %3005 = vmatmul.mubr.bf16.gmra.mrb[0].mxu0 %v1618
      %v3006 = vpop.f32.mrb[0].mxu0
      %v3007 = vadd.f32 0.0, %v3006
      %v3008 = vpop.f32.mrb[0].mxu0
      %v3009 = vpop.f32.mrb[0].mxu0
      %v3010 = vpop.f32.mrb[0].mxu0
      %3011 = vdwg.mxu0
      %v3012 = vpack.c.bf16 %v3007, %v3007
      %v3017 = vunpack.c.l.b16 %v299
      %v3018 = vunpack.c.l.b16 %v300
      %v3019 = vunpack.c.l.b16 %v301
      %v3020 = vunpack.c.l.b16 %v302
      %v3021 = vpack.c.b16 %v3018, %v3017
      %v3022 = vpack.c.b16 %v3020, %v3019
      %v3026 = vsel %vm504, %v3012, 0
      %3028 = vmatprep.subr.bf16.mxu0 0
      %3029 = vmatpush1.bf16.msra.mxu0 %v3021
      %3030 = vmatprep.subr.bf16.mxu0 0
      %3031 = vmatpush1.bf16.msra.mxu0 %v3022
      %3032 = vmatprep.subr.bf16.mxu0 0
      %3033 = vmatpush1.bf16.msra.mxu0 0
      %3034 = vmatprep.subr.bf16.mxu0 0
      %3035 = vmatpush1.bf16.msra.mxu0 0
      %3036 = vmatprep.subr.bf16.mxu0 0
      %3037 = vmatpush1.bf16.msra.mxu0 0
      %3038 = vmatprep.subr.bf16.mxu0 0
      %3039 = vmatpush1.bf16.msra.mxu0 0
      %3040 = vmatprep.subr.bf16.mxu0 0
      %3041 = vmatpush1.bf16.msra.mxu0 0
      %3042 = vmatprep.subr.bf16.mxu0 0
      %3043 = vmatpush1.bf16.msra.mxu0 0
      %3044 = vmatprep.subr.bf16.mxu0 0
      %3045 = vmatpush1.bf16.msra.mxu0 0
      %3046 = vmatprep.subr.bf16.mxu0 0
      %3047 = vmatpush1.bf16.msra.mxu0 0
      %3048 = vmatprep.subr.bf16.mxu0 0
      %3049 = vmatpush1.bf16.msra.mxu0 0
      %3050 = vmatprep.subr.bf16.mxu0 0
      %3051 = vmatpush1.bf16.msra.mxu0 0
      %3052 = vmatprep.subr.bf16.mxu0 0
      %3053 = vmatpush1.bf16.msra.mxu0 0
      %3054 = vmatprep.subr.bf16.mxu0 0
      %3055 = vmatpush1.bf16.msra.mxu0 0
      %3056 = vmatprep.subr.bf16.mxu0 0
      %3057 = vmatpush1.bf16.msra.mxu0 0
      %3058 = vmatprep.subr.bf16.mxu0 0
      %3059 = vmatpush1.bf16.msra.mxu0 0
      %3060 = vmatprep.mubr.bf16.mxu0 0
      %3061 = vmatmul.mubr.bf16.gmra.mrb[0].mxu0 %v3026
      %v3062 = vpop.f32.mrb[0].mxu0
      %v3063 = vadd.f32 0.0, %v3062
      %v3064 = vpop.f32.mrb[0].mxu0
      %v3065 = vpop.f32.mrb[0].mxu0
      %v3066 = vpop.f32.mrb[0].mxu0
      %3067 = vdwg.mxu0
      %v3068 = vadd.f32 %v2971, %v3063
      %3069 = vmatprep.subr.bf16.mxu0 0
      %3070 = vmatpush1.bf16.msra.mxu0 %v2291
      %3071 = vmatprep.subr.bf16.mxu0 0
      %3072 = vmatpush1.bf16.msra.mxu0 0
      %3073 = vmatprep.subr.bf16.mxu0 0
      %3074 = vmatpush1.bf16.msra.mxu0 0
      %3075 = vmatprep.subr.bf16.mxu0 0
      %3076 = vmatpush1.bf16.msra.mxu0 0
      %3077 = vmatprep.subr.bf16.mxu0 0
      %3078 = vmatpush1.bf16.msra.mxu0 0
      %3079 = vmatprep.subr.bf16.mxu0 0
      %3080 = vmatpush1.bf16.msra.mxu0 0
      %3081 = vmatprep.subr.bf16.mxu0 0
      %3082 = vmatpush1.bf16.msra.mxu0 0
      %3083 = vmatprep.subr.bf16.mxu0 0
      %3084 = vmatpush1.bf16.msra.mxu0 0
      %3085 = vmatprep.subr.bf16.mxu0 0
      %3086 = vmatpush1.bf16.msra.mxu0 0
      %3087 = vmatprep.subr.bf16.mxu0 0
      %3088 = vmatpush1.bf16.msra.mxu0 0
      %3089 = vmatprep.subr.bf16.mxu0 0
      %3090 = vmatpush1.bf16.msra.mxu0 0
      %3091 = vmatprep.subr.bf16.mxu0 0
      %3092 = vmatpush1.bf16.msra.mxu0 0
      %3093 = vmatprep.subr.bf16.mxu0 0
      %3094 = vmatpush1.bf16.msra.mxu0 0
      %3095 = vmatprep.subr.bf16.mxu0 0
      %3096 = vmatpush1.bf16.msra.mxu0 0
      %3097 = vmatprep.subr.bf16.mxu0 0
      %3098 = vmatpush1.bf16.msra.mxu0 0
      %3099 = vmatprep.subr.bf16.mxu0 0
      %3100 = vmatpush1.bf16.msra.mxu0 0
      %3101 = vmatprep.mubr.bf16.mxu0 0
      %3102 = vmatmul.mubr.bf16.gmra.mrb[0].mxu0 %v1718
      %v3103 = vpop.f32.mrb[0].mxu0
      %v3104 = vadd.f32 0.0, %v3103
      %v3105 = vpop.f32.mrb[0].mxu0
      %v3106 = vpop.f32.mrb[0].mxu0
      %v3107 = vpop.f32.mrb[0].mxu0
      %3108 = vdwg.mxu0
      %v3109 = vpack.c.bf16 %v3104, %v3104
      %v3114 = vunpack.c.l.b16 %v303
      %v3115 = vunpack.c.l.b16 %v304
      %v3116 = vunpack.c.l.b16 %v305
      %v3117 = vunpack.c.l.b16 %v306
      %v3118 = vpack.c.b16 %v3115, %v3114
      %v3119 = vpack.c.b16 %v3117, %v3116
      %v3123 = vsel %vm504, %v3109, 0
      %3125 = vmatprep.subr.bf16.mxu0 0
      %3126 = vmatpush1.bf16.msra.mxu0 %v3118
      %3127 = vmatprep.subr.bf16.mxu0 0
      %3128 = vmatpush1.bf16.msra.mxu0 %v3119
      %3129 = vmatprep.subr.bf16.mxu0 0
      %3130 = vmatpush1.bf16.msra.mxu0 0
      %3131 = vmatprep.subr.bf16.mxu0 0
      %3132 = vmatpush1.bf16.msra.mxu0 0
      %3133 = vmatprep.subr.bf16.mxu0 0
      %3134 = vmatpush1.bf16.msra.mxu0 0
      %3135 = vmatprep.subr.bf16.mxu0 0
      %3136 = vmatpush1.bf16.msra.mxu0 0
      %3137 = vmatprep.subr.bf16.mxu0 0
      %3138 = vmatpush1.bf16.msra.mxu0 0
      %3139 = vmatprep.subr.bf16.mxu0 0
      %3140 = vmatpush1.bf16.msra.mxu0 0
      %3141 = vmatprep.subr.bf16.mxu0 0
      %3142 = vmatpush1.bf16.msra.mxu0 0
      %3143 = vmatprep.subr.bf16.mxu0 0
      %3144 = vmatpush1.bf16.msra.mxu0 0
      %3145 = vmatprep.subr.bf16.mxu0 0
      %3146 = vmatpush1.bf16.msra.mxu0 0
      %3147 = vmatprep.subr.bf16.mxu0 0
      %3148 = vmatpush1.bf16.msra.mxu0 0
      %3149 = vmatprep.subr.bf16.mxu0 0
      %3150 = vmatpush1.bf16.msra.mxu0 0
      %3151 = vmatprep.subr.bf16.mxu0 0
      %3152 = vmatpush1.bf16.msra.mxu0 0
      %3153 = vmatprep.subr.bf16.mxu0 0
      %3154 = vmatpush1.bf16.msra.mxu0 0
      %3155 = vmatprep.subr.bf16.mxu0 0
      %3156 = vmatpush1.bf16.msra.mxu0 0
      %3157 = vmatprep.mubr.bf16.mxu0 0
      %3158 = vmatmul.mubr.bf16.gmra.mrb[0].mxu0 %v3123
      %v3159 = vpop.f32.mrb[0].mxu0
      %v3160 = vadd.f32 0.0, %v3159
      %v3161 = vpop.f32.mrb[0].mxu0
      %v3162 = vpop.f32.mrb[0].mxu0
      %v3163 = vpop.f32.mrb[0].mxu0
      %3164 = vdwg.mxu0
      %v3165 = vadd.f32 %v3068, %v3160
      %v3166 = vmax.f32 %v3165, 0.0
      %v3167 = vpack.c.bf16 %v3166, %v3166
      %v3168 = vlaneseq
      %v3169 = vshrl.u32 %v3168, 7
      %v3170 = vsub.s32 3, %v3169
      %v3171 = vrot.slane %v404, %v3170
      %v3180 = vunpack.c.l.b16 %v307
      %v3181 = vunpack.c.l.b16 %v308
      %v3182 = vunpack.c.l.b16 %v309
      %v3183 = vunpack.c.l.b16 %v310
      %v3184 = vunpack.c.l.b16 %v311
      %v3185 = vunpack.c.l.b16 %v312
      %v3186 = vunpack.c.l.b16 %v313
      %v3187 = vunpack.c.l.b16 %v314
      %v3188 = vpack.c.b16 %v3181, %v3180
      %v3189 = vpack.c.b16 %v3183, %v3182
      %v3190 = vpack.c.b16 %v3185, %v3184
      %v3191 = vpack.c.b16 %v3187, %v3186
      %v3197 = vsel %vm1847, %v3167, 0
      %3199 = vmatprep.subr.bf16.mxu0 0
      %3200 = vmatpush1.bf16.msra.mxu0 %v3188
      %3201 = vmatprep.subr.bf16.mxu0 0
      %3202 = vmatpush1.bf16.msra.mxu0 %v3189
      %3203 = vmatprep.subr.bf16.mxu0 0
      %3204 = vmatpush1.bf16.msra.mxu0 %v3190
      %3205 = vmatprep.subr.bf16.mxu0 0
      %3206 = vmatpush1.bf16.msra.mxu0 %v3191
      %3207 = vmatprep.subr.bf16.mxu0 0
      %3208 = vmatpush1.bf16.msra.mxu0 0
      %3209 = vmatprep.subr.bf16.mxu0 0
      %3210 = vmatpush1.bf16.msra.mxu0 0
      %3211 = vmatprep.subr.bf16.mxu0 0
      %3212 = vmatpush1.bf16.msra.mxu0 0
      %3213 = vmatprep.subr.bf16.mxu0 0
      %3214 = vmatpush1.bf16.msra.mxu0 0
      %3215 = vmatprep.subr.bf16.mxu0 0
      %3216 = vmatpush1.bf16.msra.mxu0 0
      %3217 = vmatprep.subr.bf16.mxu0 0
      %3218 = vmatpush1.bf16.msra.mxu0 0
      %3219 = vmatprep.subr.bf16.mxu0 0
      %3220 = vmatpush1.bf16.msra.mxu0 0
      %3221 = vmatprep.subr.bf16.mxu0 0
      %3222 = vmatpush1.bf16.msra.mxu0 0
      %3223 = vmatprep.subr.bf16.mxu0 0
      %3224 = vmatpush1.bf16.msra.mxu0 0
      %3225 = vmatprep.subr.bf16.mxu0 0
      %3226 = vmatpush1.bf16.msra.mxu0 0
      %3227 = vmatprep.subr.bf16.mxu0 0
      %3228 = vmatpush1.bf16.msra.mxu0 0
      %3229 = vmatprep.subr.bf16.mxu0 0
      %3230 = vmatpush1.bf16.msra.mxu0 0
      %3231 = vmatprep.mubr.bf16.mxu0 0
      %3232 = vmatmul.mubr.bf16.gmra.mrb[0].mxu0 %v3197
      %v3233 = vpop.f32.mrb[0].mxu0
      %v3234 = vadd.f32 %v3171, %v3233
      %v3235 = vpop.f32.mrb[0].mxu0
      %v3236 = vpop.f32.mrb[0].mxu0
      %v3237 = vpop.f32.mrb[0].mxu0
      %3238 = vdwg.mxu0
      %v3239 = vadd.f32 %v3234, %v2283
      %v3240 = vmul.f32 %v3239, %v905
      %v3241 = vpack.c.bf16 %v3240, %v3240
      %v3242 = vlaneseq
      %v3243 = vshrl.u32 %v3242, 7
      %v3244 = vsub.s32 2, %v3243
      %v3245 = vrot.slane %v407, %v3244
      %v3250 = vunpack.c.l.b16 %v223
      %v3251 = vunpack.c.l.b16 %v224
      %v3252 = vunpack.c.l.b16 %v225
      %v3253 = vunpack.c.l.b16 %v226
      %v3254 = vpack.c.b16 %v3251, %v3250
      %v3255 = vpack.c.b16 %v3253, %v3252
      %v3259 = vsel %vm504, %v3241, 0
      %3261 = vmatprep.subr.bf16.mxu0 0
      %3262 = vmatpush1.bf16.msra.mxu0 %v3254
      %3263 = vmatprep.subr.bf16.mxu0 0
      %3264 = vmatpush1.bf16.msra.mxu0 %v3255
      %3265 = vmatprep.subr.bf16.mxu0 0
      %3266 = vmatpush1.bf16.msra.mxu0 0
      %3267 = vmatprep.subr.bf16.mxu0 0
      %3268 = vmatpush1.bf16.msra.mxu0 0
      %3269 = vmatprep.subr.bf16.mxu0 0
      %3270 = vmatpush1.bf16.msra.mxu0 0
      %3271 = vmatprep.subr.bf16.mxu0 0
      %3272 = vmatpush1.bf16.msra.mxu0 0
      %3273 = vmatprep.subr.bf16.mxu0 0
      %3274 = vmatpush1.bf16.msra.mxu0 0
      %3275 = vmatprep.subr.bf16.mxu0 0
      %3276 = vmatpush1.bf16.msra.mxu0 0
      %3277 = vmatprep.subr.bf16.mxu0 0
      %3278 = vmatpush1.bf16.msra.mxu0 0
      %3279 = vmatprep.subr.bf16.mxu0 0
      %3280 = vmatpush1.bf16.msra.mxu0 0
      %3281 = vmatprep.subr.bf16.mxu0 0
      %3282 = vmatpush1.bf16.msra.mxu0 0
      %3283 = vmatprep.subr.bf16.mxu0 0
      %3284 = vmatpush1.bf16.msra.mxu0 0
      %3285 = vmatprep.subr.bf16.mxu0 0
      %3286 = vmatpush1.bf16.msra.mxu0 0
      %3287 = vmatprep.subr.bf16.mxu0 0
      %3288 = vmatpush1.bf16.msra.mxu0 0
      %3289 = vmatprep.subr.bf16.mxu0 0
      %3290 = vmatpush1.bf16.msra.mxu0 0
      %3291 = vmatprep.subr.bf16.mxu0 0
      %3292 = vmatpush1.bf16.msra.mxu0 0
      %3293 = vmatprep.mubr.bf16.mxu0 0
      %3294 = vmatmul.mubr.bf16.gmra.mrb[0].mxu0 %v3259
      %v3295 = vpop.f32.mrb[0].mxu0
      %v3296 = vadd.f32 %v3245, %v3295
      %v3297 = vpop.f32.mrb[0].mxu0
      %v3298 = vpop.f32.mrb[0].mxu0
      %v3299 = vpop.f32.mrb[0].mxu0
      %3300 = vdwg.mxu0
      %v3301 = vmax.f32 %v3296, 0.0
      %v3302 = vlaneseq
      %v3303 = vshrl.u32 %v3302, 7
      %v3304 = vsub.s32 1, %v3303
      %v3305 = vrot.slane %v407, %v3304
      %v3306 = vmul.f32 %v3301, %v3305
      %v3307 = vsel %vm593, %v3306, 0.0
      %3308 = vadd.xlane.f32.xlu0 %v3307
      %v3309 = vpop.xlane.xlu0 %3308
      %v3310 = vlaneseq
      %v3311 = vshrl.u32 %v3310, 7
      %v3312 = vsub.s32 3, %v3311
      %v3313 = vrot.slane %v407, %v3312
      %v3314 = vadd.f32 %v3309, %v3313
      %v3315 = vmul.f32 %v3314, %v905
      %v3316 = vcvt.s32.f32 %v412
      %v3317 = vcvt.s32.f32 %v459
      %v3318 = vlaneseq
      %v3319 = vshrl.u32 %v3318, 7
      %v3320 = vsub.s32 3, %v3319
      %v3321 = vrot.slane %v202, %v3320
      %vm3322 = vcmp.ge.f32.partialorder %v3316, %v3321
      %vm3323 = vcmp.ge.f32.partialorder %v3317, %v3321
      %v3324 = vlaneseq
      %v3325 = vshrl.u32 %v3324, 7
      %v3326 = vsub.s32 2, %v3325
      %v3327 = vrot.slane %v202, %v3326
      %vm3328 = vcmp.lt.f32.partialorder %v3316, %v3327
      %vm3329 = vcmp.lt.f32.partialorder %v3317, %v3327
      %vm3330 = vmand %vm3322, %vm3328
      %vm3331 = vmand %vm3323, %vm3329
      %v3332 = vsel %vm3330, 1, 0
      %v3333 = vsel %vm3331, 1, 0
      %v3334 = vcvt.s32.f32 %v3332
      %v3335 = vcvt.s32.f32 %v3333
      %v3336 = vpack.c.bf16 %v3335, %v3334
      %v3338 = vsel %vm646, %v3336, 0
      %v3340 = vsel %vm664, %v3241, 0
      %3342 = vmatprep.subr.bf16.mxu0 0
      %3343 = vmatpush1.bf16.msra.mxu0 %v3340
      %3344 = vmatprep.subr.bf16.mxu0 0
      %3345 = vmatpush1.bf16.msra.mxu0 0
      %3346 = vmatprep.subr.bf16.mxu0 0
      %3347 = vmatpush1.bf16.msra.mxu0 0
      %3348 = vmatprep.subr.bf16.mxu0 0
      %3349 = vmatpush1.bf16.msra.mxu0 0
      %3350 = vmatprep.subr.bf16.mxu0 0
      %3351 = vmatpush1.bf16.msra.mxu0 0
      %3352 = vmatprep.subr.bf16.mxu0 0
      %3353 = vmatpush1.bf16.msra.mxu0 0
      %3354 = vmatprep.subr.bf16.mxu0 0
      %3355 = vmatpush1.bf16.msra.mxu0 0
      %3356 = vmatprep.subr.bf16.mxu0 0
      %3357 = vmatpush1.bf16.msra.mxu0 0
      %3358 = vmatprep.subr.bf16.mxu0 0
      %3359 = vmatpush1.bf16.msra.mxu0 0
      %3360 = vmatprep.subr.bf16.mxu0 0
      %3361 = vmatpush1.bf16.msra.mxu0 0
      %3362 = vmatprep.subr.bf16.mxu0 0
      %3363 = vmatpush1.bf16.msra.mxu0 0
      %3364 = vmatprep.subr.bf16.mxu0 0
      %3365 = vmatpush1.bf16.msra.mxu0 0
      %3366 = vmatprep.subr.bf16.mxu0 0
      %3367 = vmatpush1.bf16.msra.mxu0 0
      %3368 = vmatprep.subr.bf16.mxu0 0
      %3369 = vmatpush1.bf16.msra.mxu0 0
      %3370 = vmatprep.subr.bf16.mxu0 0
      %3371 = vmatpush1.bf16.msra.mxu0 0
      %3372 = vmatprep.subr.bf16.mxu0 0
      %3373 = vmatpush1.bf16.msra.mxu0 0
      %3374 = vmatprep.mubr.bf16.mxu0 0
      %3375 = vmatmul.mubr.bf16.gmra.mrb[0].mxu0 %v3338
      %v3376 = vpop.f32.mrb[0].mxu0
      %v3377 = vadd.f32 0.0, %v3376
      %v3378 = vpop.f32.mrb[0].mxu0
      %v3379 = vpop.f32.mrb[0].mxu0
      %v3380 = vadd.f32 0.0, %v3379
      %v3381 = vpop.f32.mrb[0].mxu0
      %3382 = vdwg.mxu0
      %v3383 = vpack.c.bf16 %v3380, %v3377
      %v3384 = vlaneseq
      %v3385 = vshrl.u32 %v3384, 7
      %v3386 = vsub.s32 5, %v3385
      %v3387 = vrot.slane %v407, %v3386
      %3388 = vrot.lane.b32.xlu0 %v3254, 112
      %v3389 = vpop.permute.xlu0 %3388
      %3390 = vrot.lane.b32.xlu0 %v3255, 112
      %v3391 = vpop.permute.xlu0 %3390
      %v3395 = vsel %vm504, %v3383, 0
      %3397 = vmatprep.subr.bf16.mxu0 0
      %3398 = vmatpush1.bf16.msra.mxu0 %v3389
      %3399 = vmatprep.subr.bf16.mxu0 0
      %3400 = vmatpush1.bf16.msra.mxu0 %v3391
      %3401 = vmatprep.subr.bf16.mxu0 0
      %3402 = vmatpush1.bf16.msra.mxu0 0
      %3403 = vmatprep.subr.bf16.mxu0 0
      %3404 = vmatpush1.bf16.msra.mxu0 0
      %3405 = vmatprep.subr.bf16.mxu0 0
      %3406 = vmatpush1.bf16.msra.mxu0 0
      %3407 = vmatprep.subr.bf16.mxu0 0
      %3408 = vmatpush1.bf16.msra.mxu0 0
      %3409 = vmatprep.subr.bf16.mxu0 0
      %3410 = vmatpush1.bf16.msra.mxu0 0
      %3411 = vmatprep.subr.bf16.mxu0 0
      %3412 = vmatpush1.bf16.msra.mxu0 0
      %3413 = vmatprep.subr.bf16.mxu0 0
      %3414 = vmatpush1.bf16.msra.mxu0 0
      %3415 = vmatprep.subr.bf16.mxu0 0
      %3416 = vmatpush1.bf16.msra.mxu0 0
      %3417 = vmatprep.subr.bf16.mxu0 0
      %3418 = vmatpush1.bf16.msra.mxu0 0
      %3419 = vmatprep.subr.bf16.mxu0 0
      %3420 = vmatpush1.bf16.msra.mxu0 0
      %3421 = vmatprep.subr.bf16.mxu0 0
      %3422 = vmatpush1.bf16.msra.mxu0 0
      %3423 = vmatprep.subr.bf16.mxu0 0
      %3424 = vmatpush1.bf16.msra.mxu0 0
      %3425 = vmatprep.subr.bf16.mxu0 0
      %3426 = vmatpush1.bf16.msra.mxu0 0
      %3427 = vmatprep.subr.bf16.mxu0 0
      %3428 = vmatpush1.bf16.msra.mxu0 0
      %3429 = vmatprep.mubr.bf16.mxu0 0
      %3430 = vmatmul.mubr.bf16.gmra.mrb[0].mxu0 %v3395
      %v3431 = vpop.f32.mrb[0].mxu0
      %v3432 = vadd.f32 %v3387, %v3431
      %v3433 = vpop.f32.mrb[0].mxu0
      %v3434 = vpop.f32.mrb[0].mxu0
      %v3435 = vadd.f32 %v3387, %v3434
      %v3436 = vpop.f32.mrb[0].mxu0
      %3437 = vdwg.mxu0
      %v3438 = vmax.f32 %v3432, 0.0
      %v3439 = vmax.f32 %v3435, 0.0
      %v3440 = vlaneseq
      %v3441 = vshrl.u32 %v3440, 7
      %v3442 = vsub.s32 4, %v3441
      %v3443 = vrot.slane %v407, %v3442
      %v3444 = vmul.f32 %v3438, %v3443
      %v3445 = vmul.f32 %v3439, %v3443
      %v3446 = vsel %vm593, %v3444, 0.0
      %3447 = vadd.xlane.f32.xlu0 %v3446
      %v3448 = vpop.xlane.xlu0 %3447
      %v3449 = vsel %vm593, %v3445, 0.0
      %3450 = vadd.xlane.f32.xlu0 %v3449
      %v3451 = vpop.xlane.xlu0 %3450
      %v3452 = vlaneseq
      %v3453 = vshrl.u32 %v3452, 7
      %v3454 = vsub.s32 6, %v3453
      %v3455 = vrot.slane %v407, %v3454
      %v3456 = vadd.f32 %v3448, %v3455
      %v3457 = vadd.f32 %v3451, %v3455
      %3460 = vrot.lane.b32.xlu0 %v200, 96
      %v3461 = vpop.permute.xlu0 %3460
      %3462 = vrot.lane.b32.xlu0 %v201, 96
      %v3463 = vpop.permute.xlu0 %3462
      %v3466 = vmul.f32 %v3456, %v3461
      %v3467 = vmul.f32 %v3457, %v3463
      %v3468 = vlaneseq
      %v3469 = vshrl.u32 %v3468, 7
      %v3470 = vsub.s32 0, %v3469
      %v3471 = vrot.slane %v408, %v3470
      %3472 = vrot.lane.b32.xlu0 %v3254, 96
      %v3473 = vpop.permute.xlu0 %3472
      %3474 = vrot.lane.b32.xlu0 %v3255, 96
      %v3475 = vpop.permute.xlu0 %3474
      %3478 = vmatprep.subr.bf16.mxu0 0
      %3479 = vmatpush1.bf16.msra.mxu0 %v3473
      %3480 = vmatprep.subr.bf16.mxu0 0
      %3481 = vmatpush1.bf16.msra.mxu0 %v3475
      %3482 = vmatprep.subr.bf16.mxu0 0
      %3483 = vmatpush1.bf16.msra.mxu0 0
      %3484 = vmatprep.subr.bf16.mxu0 0
      %3485 = vmatpush1.bf16.msra.mxu0 0
      %3486 = vmatprep.subr.bf16.mxu0 0
      %3487 = vmatpush1.bf16.msra.mxu0 0
      %3488 = vmatprep.subr.bf16.mxu0 0
      %3489 = vmatpush1.bf16.msra.mxu0 0
      %3490 = vmatprep.subr.bf16.mxu0 0
      %3491 = vmatpush1.bf16.msra.mxu0 0
      %3492 = vmatprep.subr.bf16.mxu0 0
      %3493 = vmatpush1.bf16.msra.mxu0 0
      %3494 = vmatprep.subr.bf16.mxu0 0
      %3495 = vmatpush1.bf16.msra.mxu0 0
      %3496 = vmatprep.subr.bf16.mxu0 0
      %3497 = vmatpush1.bf16.msra.mxu0 0
      %3498 = vmatprep.subr.bf16.mxu0 0
      %3499 = vmatpush1.bf16.msra.mxu0 0
      %3500 = vmatprep.subr.bf16.mxu0 0
      %3501 = vmatpush1.bf16.msra.mxu0 0
      %3502 = vmatprep.subr.bf16.mxu0 0
      %3503 = vmatpush1.bf16.msra.mxu0 0
      %3504 = vmatprep.subr.bf16.mxu0 0
      %3505 = vmatpush1.bf16.msra.mxu0 0
      %3506 = vmatprep.subr.bf16.mxu0 0
      %3507 = vmatpush1.bf16.msra.mxu0 0
      %3508 = vmatprep.subr.bf16.mxu0 0
      %3509 = vmatpush1.bf16.msra.mxu0 0
      %3510 = vmatprep.mubr.bf16.mxu0 0
      %3511 = vmatmul.mubr.bf16.gmra.mrb[0].mxu0 %v3395
      %v3512 = vpop.f32.mrb[0].mxu0
      %v3513 = vadd.f32 %v3471, %v3512
      %v3514 = vpop.f32.mrb[0].mxu0
      %v3515 = vpop.f32.mrb[0].mxu0
      %v3516 = vadd.f32 %v3471, %v3515
      %v3517 = vpop.f32.mrb[0].mxu0
      %3518 = vdwg.mxu0
      %v3519 = vmax.f32 %v3513, 0.0
      %v3520 = vmax.f32 %v3516, 0.0
      %v3521 = vlaneseq
      %v3522 = vshrl.u32 %v3521, 7
      %v3523 = vsub.s32 7, %v3522
      %v3524 = vrot.slane %v407, %v3523
      %v3525 = vmul.f32 %v3519, %v3524
      %v3526 = vmul.f32 %v3520, %v3524
      %v3527 = vsel %vm593, %v3525, 0.0
      %3528 = vadd.xlane.f32.xlu0 %v3527
      %v3529 = vpop.xlane.xlu0 %3528
      %v3530 = vsel %vm593, %v3526, 0.0
      %3531 = vadd.xlane.f32.xlu0 %v3530
      %v3532 = vpop.xlane.xlu0 %3531
      %v3533 = vlaneseq
      %v3534 = vshrl.u32 %v3533, 7
      %v3535 = vsub.s32 1, %v3534
      %v3536 = vrot.slane %v408, %v3535
      %v3537 = vadd.f32 %v3529, %v3536
      %v3538 = vadd.f32 %v3532, %v3536
      %v3539 = vmul.f32 %v3537, %v3461
      %v3540 = vmul.f32 %v3538, %v3463
      %v3541 = vadd.f32 %v3377, %v200
      %v3542 = vadd.f32 %v3380, %v201
      %v3543 = vsel %vm504, %v3541, 0.0
      %3544 = vadd.xlane.f32.xlu0 %v3543
      %v3545 = vpop.xlane.xlu0 %3544
      %v3546 = vsel %vm504, %v3542, 0.0
      %3547 = vadd.xlane.f32.xlu0 %v3546
      %v3548 = vpop.xlane.xlu0 %3547
      %v3549 = vmul.f32 %v3545, %v508
      %v3550 = vmul.f32 %v3548, %v508
      %v3551 = vsub.f32 %v3541, %v3549
      %v3552 = vsub.f32 %v3542, %v3550
      %v3553 = vmul.f32 %v3551, %v3551
      %v3554 = vmul.f32 %v3552, %v3552
      %v3555 = vsel %vm504, %v3553, 0.0
      %3556 = vadd.xlane.f32.xlu0 %v3555
      %v3557 = vpop.xlane.xlu0 %3556
      %v3558 = vsel %vm504, %v3554, 0.0
      %3559 = vadd.xlane.f32.xlu0 %v3558
      %v3560 = vpop.xlane.xlu0 %3559
      %v3561 = vmul.f32 %v3557, %v508
      %v3562 = vmul.f32 %v3560, %v508
      %v3563 = vadd.f32 %v3561, 1e-05
      %v3564 = vadd.f32 %v3562, 1e-05
      %v3565 = vrsqrt.pop %v3563
      %v3566 = vrsqrt.pop %v3564
      %v3567 = vmul.f32 %v3551, %v3565
      %v3568 = vmul.f32 %v3552, %v3566
      %v3569 = vlaneseq
      %v3570 = vshrl.u32 %v3569, 7
      %v3571 = vsub.s32 4, %v3570
      %v3572 = vrot.slane %v405, %v3571
      %v3573 = vmul.f32 %v3567, %v3572
      %v3574 = vmul.f32 %v3568, %v3572
      %v3575 = vlaneseq
      %v3576 = vshrl.u32 %v3575, 7
      %v3577 = vsub.s32 5, %v3576
      %v3578 = vrot.slane %v405, %v3577
      %v3579 = vadd.f32 %v3573, %v3578
      %v3580 = vadd.f32 %v3574, %v3578
      %v3581 = vpack.c.bf16 %v3580, %v3579
      %v3582 = vlaneseq
      %v3583 = vshrl.u32 %v3582, 7
      %v3584 = vsub.s32 0, %v3583
      %v3585 = vrot.slane %v405, %v3584
      %v3590 = vunpack.c.l.b16 %v211
      %v3591 = vunpack.c.l.b16 %v212
      %v3592 = vunpack.c.l.b16 %v213
      %v3593 = vunpack.c.l.b16 %v214
      %v3594 = vpack.c.b16 %v3591, %v3590
      %v3595 = vpack.c.b16 %v3593, %v3592
      %v3599 = vsel %vm504, %v3581, 0
      %3601 = vmatprep.subr.bf16.mxu0 0
      %3602 = vmatpush1.bf16.msra.mxu0 %v3594
      %3603 = vmatprep.subr.bf16.mxu0 0
      %3604 = vmatpush1.bf16.msra.mxu0 %v3595
      %3605 = vmatprep.subr.bf16.mxu0 0
      %3606 = vmatpush1.bf16.msra.mxu0 0
      %3607 = vmatprep.subr.bf16.mxu0 0
      %3608 = vmatpush1.bf16.msra.mxu0 0
      %3609 = vmatprep.subr.bf16.mxu0 0
      %3610 = vmatpush1.bf16.msra.mxu0 0
      %3611 = vmatprep.subr.bf16.mxu0 0
      %3612 = vmatpush1.bf16.msra.mxu0 0
      %3613 = vmatprep.subr.bf16.mxu0 0
      %3614 = vmatpush1.bf16.msra.mxu0 0
      %3615 = vmatprep.subr.bf16.mxu0 0
      %3616 = vmatpush1.bf16.msra.mxu0 0
      %3617 = vmatprep.subr.bf16.mxu0 0
      %3618 = vmatpush1.bf16.msra.mxu0 0
      %3619 = vmatprep.subr.bf16.mxu0 0
      %3620 = vmatpush1.bf16.msra.mxu0 0
      %3621 = vmatprep.subr.bf16.mxu0 0
      %3622 = vmatpush1.bf16.msra.mxu0 0
      %3623 = vmatprep.subr.bf16.mxu0 0
      %3624 = vmatpush1.bf16.msra.mxu0 0
      %3625 = vmatprep.subr.bf16.mxu0 0
      %3626 = vmatpush1.bf16.msra.mxu0 0
      %3627 = vmatprep.subr.bf16.mxu0 0
      %3628 = vmatpush1.bf16.msra.mxu0 0
      %3629 = vmatprep.subr.bf16.mxu0 0
      %3630 = vmatpush1.bf16.msra.mxu0 0
      %3631 = vmatprep.subr.bf16.mxu0 0
      %3632 = vmatpush1.bf16.msra.mxu0 0
      %3633 = vmatprep.mubr.bf16.mxu0 0
      %3634 = vmatmul.mubr.bf16.gmra.mrb[0].mxu0 %v3599
      %v3635 = vpop.f32.mrb[0].mxu0
      %v3636 = vadd.f32 %v3585, %v3635
      %v3637 = vpop.f32.mrb[0].mxu0
      %v3638 = vpop.f32.mrb[0].mxu0
      %v3639 = vadd.f32 %v3585, %v3638
      %v3640 = vpop.f32.mrb[0].mxu0
      %3641 = vdwg.mxu0
      %v3642 = vpack.c.bf16 %v3639, %v3636
      %3644 = vrot.lane.b32.xlu0 %v3642, 96
      %v3645 = vpop.permute.xlu0 %3644
      %v3647 = vsel %vm593, %v3642, 0
      %v3650 = vsel %vm593, %v3645, 0
      %3652 = vmatprep.subr.bf16.mxu0 0
      %3653 = vmatpush1.bf16.xpose.msra.mxu0 %v3650
      %3654 = vmatprep.subr.bf16.mxu0 0
      %3655 = vmatpush1.bf16.xpose.msra.mxu0 0
      %3656 = vmatprep.subr.bf16.mxu0 0
      %3657 = vmatpush1.bf16.xpose.msra.mxu0 0
      %3658 = vmatprep.subr.bf16.mxu0 0
      %3659 = vmatpush1.bf16.xpose.msra.mxu0 0
      %3660 = vmatprep.subr.bf16.mxu0 0
      %3661 = vmatpush1.bf16.xpose.msra.mxu0 0
      %3662 = vmatprep.subr.bf16.mxu0 0
      %3663 = vmatpush1.bf16.xpose.msra.mxu0 0
      %3664 = vmatprep.subr.bf16.mxu0 0
      %3665 = vmatpush1.bf16.xpose.msra.mxu0 0
      %3666 = vmatprep.subr.bf16.mxu0 0
      %3667 = vmatpush1.bf16.xpose.msra.mxu0 0
      %3668 = vmatprep.subr.bf16.mxu0 0
      %3669 = vmatpush1.bf16.xpose.msra.mxu0 0
      %3670 = vmatprep.subr.bf16.mxu0 0
      %3671 = vmatpush1.bf16.xpose.msra.mxu0 0
      %3672 = vmatprep.subr.bf16.mxu0 0
      %3673 = vmatpush1.bf16.xpose.msra.mxu0 0
      %3674 = vmatprep.subr.bf16.mxu0 0
      %3675 = vmatpush1.bf16.xpose.msra.mxu0 0
      %3676 = vmatprep.subr.bf16.mxu0 0
      %3677 = vmatpush1.bf16.xpose.msra.mxu0 0
      %3678 = vmatprep.subr.bf16.mxu0 0
      %3679 = vmatpush1.bf16.xpose.msra.mxu0 0
      %3680 = vmatprep.subr.bf16.mxu0 0
      %3681 = vmatpush1.bf16.xpose.msra.mxu0 0
      %3682 = vmatprep.subr.bf16.mxu0 0
      %3683 = vmatpush1.bf16.xpose.msra.mxu0 0
      %3684 = vmatprep.mubr.bf16.mxu0 0
      %3685 = vmatmul.mubr.bf16.gmra.mrb[0].mxu0 %v3647
      %v3686 = vpop.f32.mrb[0].mxu0
      %v3687 = vadd.f32 0.0, %v3686
      %v3688 = vpop.f32.mrb[0].mxu0
      %v3689 = vpop.f32.mrb[0].mxu0
      %v3690 = vadd.f32 0.0, %v3689
      %v3691 = vpop.f32.mrb[0].mxu0
      %3692 = vdwg.mxu0
      %v3693 = vmul.f32 %v3687, 0.25
      %v3694 = vmul.f32 %v3690, 0.25
      %v3695 = vlaneseq
      %v3696 = vshrl.u32 %v3695, 7
      %v3697 = vsub.s32 1, %v3696
      %v3698 = vrot.slane %v410, %v3697
      %v3699 = vadd.f32 %v3693, %v3698
      %v3700 = vadd.f32 %v3694, %v3698
      %v3701 = vsel %vm593, %v3699, -inf
      %3702 = vmax.xlane.f32.xlu0 %v3701
      %v3703 = vpop.xlane.xlu0 %3702
      %v3704 = vsel %vm593, %v3700, -inf
      %3705 = vmax.xlane.f32.xlu0 %v3704
      %v3706 = vpop.xlane.xlu0 %3705
      %v3707 = vsub.f32 %v3699, %v3703
      %v3708 = vsub.f32 %v3700, %v3706
      %v3709 = vmul.f32 %v3707, 1.442695
      %v3710 = vpow.pop %v3709
      %v3711 = vmul.f32 %v3708, 1.442695
      %v3712 = vpow.pop %v3711
      %v3713 = vsel %vm593, %v3710, 0.0
      %3714 = vadd.xlane.f32.xlu0 %v3713
      %v3715 = vpop.xlane.xlu0 %3714
      %v3716 = vsel %vm593, %v3712, 0.0
      %3717 = vadd.xlane.f32.xlu0 %v3716
      %v3718 = vpop.xlane.xlu0 %3717
      %v3719 = vrcp.pop %v3715
      %v3720 = vrcp.pop %v3718
      %v3721 = vmul.f32 %v3710, %v3719
      %v3722 = vmul.f32 %v3712, %v3720
      %v3723 = vpack.c.bf16 %v3722, %v3721
      %3724 = vrot.lane.b32.xlu0 %v3642, 64
      %v3725 = vpop.permute.xlu0 %3724
      %v3728 = vsel %vm593, %v3723, 0
      %3730 = vmatprep.subr.bf16.mxu0 0
      %3731 = vmatpush1.bf16.msra.mxu0 %v3725
      %3732 = vmatprep.subr.bf16.mxu0 0
      %3733 = vmatpush1.bf16.msra.mxu0 0
      %3734 = vmatprep.subr.bf16.mxu0 0
      %3735 = vmatpush1.bf16.msra.mxu0 0
      %3736 = vmatprep.subr.bf16.mxu0 0
      %3737 = vmatpush1.bf16.msra.mxu0 0
      %3738 = vmatprep.subr.bf16.mxu0 0
      %3739 = vmatpush1.bf16.msra.mxu0 0
      %3740 = vmatprep.subr.bf16.mxu0 0
      %3741 = vmatpush1.bf16.msra.mxu0 0
      %3742 = vmatprep.subr.bf16.mxu0 0
      %3743 = vmatpush1.bf16.msra.mxu0 0
      %3744 = vmatprep.subr.bf16.mxu0 0
      %3745 = vmatpush1.bf16.msra.mxu0 0
      %3746 = vmatprep.subr.bf16.mxu0 0
      %3747 = vmatpush1.bf16.msra.mxu0 0
      %3748 = vmatprep.subr.bf16.mxu0 0
      %3749 = vmatpush1.bf16.msra.mxu0 0
      %3750 = vmatprep.subr.bf16.mxu0 0
      %3751 = vmatpush1.bf16.msra.mxu0 0
      %3752 = vmatprep.subr.bf16.mxu0 0
      %3753 = vmatpush1.bf16.msra.mxu0 0
      %3754 = vmatprep.subr.bf16.mxu0 0
      %3755 = vmatpush1.bf16.msra.mxu0 0
      %3756 = vmatprep.subr.bf16.mxu0 0
      %3757 = vmatpush1.bf16.msra.mxu0 0
      %3758 = vmatprep.subr.bf16.mxu0 0
      %3759 = vmatpush1.bf16.msra.mxu0 0
      %3760 = vmatprep.subr.bf16.mxu0 0
      %3761 = vmatpush1.bf16.msra.mxu0 0
      %3762 = vmatprep.mubr.bf16.mxu0 0
      %3763 = vmatmul.mubr.bf16.gmra.mrb[0].mxu0 %v3728
      %v3764 = vpop.f32.mrb[0].mxu0
      %v3765 = vadd.f32 0.0, %v3764
      %v3766 = vpop.f32.mrb[0].mxu0
      %v3767 = vpop.f32.mrb[0].mxu0
      %v3768 = vadd.f32 0.0, %v3767
      %v3769 = vpop.f32.mrb[0].mxu0
      %3770 = vdwg.mxu0
      %3771 = vrot.lane.b32.xlu0 %v3642, 112
      %v3772 = vpop.permute.xlu0 %3771
      %3773 = vrot.lane.b32.xlu0 %v3642, 80
      %v3774 = vpop.permute.xlu0 %3773
      %v3776 = vsel %vm593, %v3772, 0
      %v3779 = vsel %vm593, %v3774, 0
      %3781 = vmatprep.subr.bf16.mxu0 0
      %3782 = vmatpush1.bf16.xpose.msra.mxu0 %v3779
      %3783 = vmatprep.subr.bf16.mxu0 0
      %3784 = vmatpush1.bf16.xpose.msra.mxu0 0
      %3785 = vmatprep.subr.bf16.mxu0 0
      %3786 = vmatpush1.bf16.xpose.msra.mxu0 0
      %3787 = vmatprep.subr.bf16.mxu0 0
      %3788 = vmatpush1.bf16.xpose.msra.mxu0 0
      %3789 = vmatprep.subr.bf16.mxu0 0
      %3790 = vmatpush1.bf16.xpose.msra.mxu0 0
      %3791 = vmatprep.subr.bf16.mxu0 0
      %3792 = vmatpush1.bf16.xpose.msra.mxu0 0
      %3793 = vmatprep.subr.bf16.mxu0 0
      %3794 = vmatpush1.bf16.xpose.msra.mxu0 0
      %3795 = vmatprep.subr.bf16.mxu0 0
      %3796 = vmatpush1.bf16.xpose.msra.mxu0 0
      %3797 = vmatprep.subr.bf16.mxu0 0
      %3798 = vmatpush1.bf16.xpose.msra.mxu0 0
      %3799 = vmatprep.subr.bf16.mxu0 0
      %3800 = vmatpush1.bf16.xpose.msra.mxu0 0
      %3801 = vmatprep.subr.bf16.mxu0 0
      %3802 = vmatpush1.bf16.xpose.msra.mxu0 0
      %3803 = vmatprep.subr.bf16.mxu0 0
      %3804 = vmatpush1.bf16.xpose.msra.mxu0 0
      %3805 = vmatprep.subr.bf16.mxu0 0
      %3806 = vmatpush1.bf16.xpose.msra.mxu0 0
      %3807 = vmatprep.subr.bf16.mxu0 0
      %3808 = vmatpush1.bf16.xpose.msra.mxu0 0
      %3809 = vmatprep.subr.bf16.mxu0 0
      %3810 = vmatpush1.bf16.xpose.msra.mxu0 0
      %3811 = vmatprep.subr.bf16.mxu0 0
      %3812 = vmatpush1.bf16.xpose.msra.mxu0 0
      %3813 = vmatprep.mubr.bf16.mxu0 0
      %3814 = vmatmul.mubr.bf16.gmra.mrb[0].mxu0 %v3776
      %v3815 = vpop.f32.mrb[0].mxu0
      %v3816 = vadd.f32 0.0, %v3815
      %v3817 = vpop.f32.mrb[0].mxu0
      %v3818 = vpop.f32.mrb[0].mxu0
      %v3819 = vadd.f32 0.0, %v3818
      %v3820 = vpop.f32.mrb[0].mxu0
      %3821 = vdwg.mxu0
      %v3822 = vmul.f32 %v3816, 0.25
      %v3823 = vmul.f32 %v3819, 0.25
      %v3824 = vadd.f32 %v3822, %v3698
      %v3825 = vadd.f32 %v3823, %v3698
      %v3826 = vsel %vm593, %v3824, -inf
      %3827 = vmax.xlane.f32.xlu0 %v3826
      %v3828 = vpop.xlane.xlu0 %3827
      %v3829 = vsel %vm593, %v3825, -inf
      %3830 = vmax.xlane.f32.xlu0 %v3829
      %v3831 = vpop.xlane.xlu0 %3830
      %v3832 = vsub.f32 %v3824, %v3828
      %v3833 = vsub.f32 %v3825, %v3831
      %v3834 = vmul.f32 %v3832, 1.442695
      %v3835 = vpow.pop %v3834
      %v3836 = vmul.f32 %v3833, 1.442695
      %v3837 = vpow.pop %v3836
      %v3838 = vsel %vm593, %v3835, 0.0
      %3839 = vadd.xlane.f32.xlu0 %v3838
      %v3840 = vpop.xlane.xlu0 %3839
      %v3841 = vsel %vm593, %v3837, 0.0
      %3842 = vadd.xlane.f32.xlu0 %v3841
      %v3843 = vpop.xlane.xlu0 %3842
      %v3844 = vrcp.pop %v3840
      %v3845 = vrcp.pop %v3843
      %v3846 = vmul.f32 %v3835, %v3844
      %v3847 = vmul.f32 %v3837, %v3845
      %v3848 = vpack.c.bf16 %v3847, %v3846
      %3849 = vrot.lane.b32.xlu0 %v3642, 48
      %v3850 = vpop.permute.xlu0 %3849
      %v3853 = vsel %vm593, %v3848, 0
      %3855 = vmatprep.subr.bf16.mxu0 0
      %3856 = vmatpush1.bf16.msra.mxu0 %v3850
      %3857 = vmatprep.subr.bf16.mxu0 0
      %3858 = vmatpush1.bf16.msra.mxu0 0
      %3859 = vmatprep.subr.bf16.mxu0 0
      %3860 = vmatpush1.bf16.msra.mxu0 0
      %3861 = vmatprep.subr.bf16.mxu0 0
      %3862 = vmatpush1.bf16.msra.mxu0 0
      %3863 = vmatprep.subr.bf16.mxu0 0
      %3864 = vmatpush1.bf16.msra.mxu0 0
      %3865 = vmatprep.subr.bf16.mxu0 0
      %3866 = vmatpush1.bf16.msra.mxu0 0
      %3867 = vmatprep.subr.bf16.mxu0 0
      %3868 = vmatpush1.bf16.msra.mxu0 0
      %3869 = vmatprep.subr.bf16.mxu0 0
      %3870 = vmatpush1.bf16.msra.mxu0 0
      %3871 = vmatprep.subr.bf16.mxu0 0
      %3872 = vmatpush1.bf16.msra.mxu0 0
      %3873 = vmatprep.subr.bf16.mxu0 0
      %3874 = vmatpush1.bf16.msra.mxu0 0
      %3875 = vmatprep.subr.bf16.mxu0 0
      %3876 = vmatpush1.bf16.msra.mxu0 0
      %3877 = vmatprep.subr.bf16.mxu0 0
      %3878 = vmatpush1.bf16.msra.mxu0 0
      %3879 = vmatprep.subr.bf16.mxu0 0
      %3880 = vmatpush1.bf16.msra.mxu0 0
      %3881 = vmatprep.subr.bf16.mxu0 0
      %3882 = vmatpush1.bf16.msra.mxu0 0
      %3883 = vmatprep.subr.bf16.mxu0 0
      %3884 = vmatpush1.bf16.msra.mxu0 0
      %3885 = vmatprep.subr.bf16.mxu0 0
      %3886 = vmatpush1.bf16.msra.mxu0 0
      %3887 = vmatprep.mubr.bf16.mxu0 0
      %3888 = vmatmul.mubr.bf16.gmra.mrb[0].mxu0 %v3853
      %v3889 = vpop.f32.mrb[0].mxu0
      %v3890 = vadd.f32 0.0, %v3889
      %v3891 = vpop.f32.mrb[0].mxu0
      %v3892 = vpop.f32.mrb[0].mxu0
      %v3893 = vadd.f32 0.0, %v3892
      %v3894 = vpop.f32.mrb[0].mxu0
      %3895 = vdwg.mxu0
      %3898 = vrot.lane.b32.xlu0 %v3890, 16
      %v3899 = vpop.permute.xlu0 %3898
      %3900 = vrot.lane.b32.xlu0 %v3893, 16
      %v3901 = vpop.permute.xlu0 %3900
      %v3904 = vsel %vm593, %v3765, %v3899
      %v3905 = vsel %vm593, %v3768, %v3901
      %v3906 = vpack.c.bf16 %v3905, %v3904
      %v3907 = vlaneseq
      %v3908 = vshrl.u32 %v3907, 7
      %v3909 = vsub.s32 1, %v3908
      %v3910 = vrot.slane %v405, %v3909
      %3911 = vrot.lane.b32.xlu0 %v3594, 32
      %v3912 = vpop.permute.xlu0 %3911
      %3913 = vrot.lane.b32.xlu0 %v3595, 32
      %v3914 = vpop.permute.xlu0 %3913
      %v3918 = vsel %vm504, %v3906, 0
      %3920 = vmatprep.subr.bf16.mxu0 0
      %3921 = vmatpush1.bf16.msra.mxu0 %v3912
      %3922 = vmatprep.subr.bf16.mxu0 0
      %3923 = vmatpush1.bf16.msra.mxu0 %v3914
      %3924 = vmatprep.subr.bf16.mxu0 0
      %3925 = vmatpush1.bf16.msra.mxu0 0
      %3926 = vmatprep.subr.bf16.mxu0 0
      %3927 = vmatpush1.bf16.msra.mxu0 0
      %3928 = vmatprep.subr.bf16.mxu0 0
      %3929 = vmatpush1.bf16.msra.mxu0 0
      %3930 = vmatprep.subr.bf16.mxu0 0
      %3931 = vmatpush1.bf16.msra.mxu0 0
      %3932 = vmatprep.subr.bf16.mxu0 0
      %3933 = vmatpush1.bf16.msra.mxu0 0
      %3934 = vmatprep.subr.bf16.mxu0 0
      %3935 = vmatpush1.bf16.msra.mxu0 0
      %3936 = vmatprep.subr.bf16.mxu0 0
      %3937 = vmatpush1.bf16.msra.mxu0 0
      %3938 = vmatprep.subr.bf16.mxu0 0
      %3939 = vmatpush1.bf16.msra.mxu0 0
      %3940 = vmatprep.subr.bf16.mxu0 0
      %3941 = vmatpush1.bf16.msra.mxu0 0
      %3942 = vmatprep.subr.bf16.mxu0 0
      %3943 = vmatpush1.bf16.msra.mxu0 0
      %3944 = vmatprep.subr.bf16.mxu0 0
      %3945 = vmatpush1.bf16.msra.mxu0 0
      %3946 = vmatprep.subr.bf16.mxu0 0
      %3947 = vmatpush1.bf16.msra.mxu0 0
      %3948 = vmatprep.subr.bf16.mxu0 0
      %3949 = vmatpush1.bf16.msra.mxu0 0
      %3950 = vmatprep.subr.bf16.mxu0 0
      %3951 = vmatpush1.bf16.msra.mxu0 0
      %3952 = vmatprep.mubr.bf16.mxu0 0
      %3953 = vmatmul.mubr.bf16.gmra.mrb[0].mxu0 %v3918
      %v3954 = vpop.f32.mrb[0].mxu0
      %v3955 = vadd.f32 %v3910, %v3954
      %v3956 = vpop.f32.mrb[0].mxu0
      %v3957 = vpop.f32.mrb[0].mxu0
      %v3958 = vadd.f32 %v3910, %v3957
      %v3959 = vpop.f32.mrb[0].mxu0
      %3960 = vdwg.mxu0
      %v3961 = vadd.f32 %v3955, %v3579
      %v3962 = vadd.f32 %v3958, %v3580
      %v3963 = vsel %vm504, %v3961, 0.0
      %3964 = vadd.xlane.f32.xlu0 %v3963
      %v3965 = vpop.xlane.xlu0 %3964
      %v3966 = vsel %vm504, %v3962, 0.0
      %3967 = vadd.xlane.f32.xlu0 %v3966
      %v3968 = vpop.xlane.xlu0 %3967
      %v3969 = vmul.f32 %v3965, %v508
      %v3970 = vmul.f32 %v3968, %v508
      %v3971 = vsub.f32 %v3961, %v3969
      %v3972 = vsub.f32 %v3962, %v3970
      %v3973 = vmul.f32 %v3971, %v3971
      %v3974 = vmul.f32 %v3972, %v3972
      %v3975 = vsel %vm504, %v3973, 0.0
      %3976 = vadd.xlane.f32.xlu0 %v3975
      %v3977 = vpop.xlane.xlu0 %3976
      %v3978 = vsel %vm504, %v3974, 0.0
      %3979 = vadd.xlane.f32.xlu0 %v3978
      %v3980 = vpop.xlane.xlu0 %3979
      %v3981 = vmul.f32 %v3977, %v508
      %v3982 = vmul.f32 %v3980, %v508
      %v3983 = vadd.f32 %v3981, 1e-05
      %v3984 = vadd.f32 %v3982, 1e-05
      %v3985 = vrsqrt.pop %v3983
      %v3986 = vrsqrt.pop %v3984
      %v3987 = vmul.f32 %v3971, %v3985
      %v3988 = vmul.f32 %v3972, %v3986
      %v3989 = vlaneseq
      %v3990 = vshrl.u32 %v3989, 7
      %v3991 = vsub.s32 6, %v3990
      %v3992 = vrot.slane %v405, %v3991
      %v3993 = vmul.f32 %v3987, %v3992
      %v3994 = vmul.f32 %v3988, %v3992
      %v3995 = vlaneseq
      %v3996 = vshrl.u32 %v3995, 7
      %v3997 = vsub.s32 7, %v3996
      %v3998 = vrot.slane %v405, %v3997
      %v3999 = vadd.f32 %v3993, %v3998
      %v4000 = vadd.f32 %v3994, %v3998
      %v4001 = vmul.f32 %v3999, %v3461
      %v4002 = vmul.f32 %v4000, %v3463
      %v4003 = vpack.c.bf16 %v4002, %v4001
      %v4004 = vlaneseq
      %v4005 = vshrl.u32 %v4004, 7
      %v4006 = vsub.s32 2, %v4005
      %v4007 = vrot.slane %v405, %v4006
      %v4008 = vadd.f32 %v4007, 0.0
      %v4010 = vsel %vm593, %v464, 0
      %4012 = vmatprep.subr.bf16.mxu0 0
      %4013 = vmatpush1.bf16.msra.mxu0 %v4003
      %4014 = vmatprep.subr.bf16.mxu0 0
      %4015 = vmatpush1.bf16.msra.mxu0 0
      %4016 = vmatprep.subr.bf16.mxu0 0
      %4017 = vmatpush1.bf16.msra.mxu0 0
      %4018 = vmatprep.subr.bf16.mxu0 0
      %4019 = vmatpush1.bf16.msra.mxu0 0
      %4020 = vmatprep.subr.bf16.mxu0 0
      %4021 = vmatpush1.bf16.msra.mxu0 0
      %4022 = vmatprep.subr.bf16.mxu0 0
      %4023 = vmatpush1.bf16.msra.mxu0 0
      %4024 = vmatprep.subr.bf16.mxu0 0
      %4025 = vmatpush1.bf16.msra.mxu0 0
      %4026 = vmatprep.subr.bf16.mxu0 0
      %4027 = vmatpush1.bf16.msra.mxu0 0
      %4028 = vmatprep.subr.bf16.mxu0 0
      %4029 = vmatpush1.bf16.msra.mxu0 0
      %4030 = vmatprep.subr.bf16.mxu0 0
      %4031 = vmatpush1.bf16.msra.mxu0 0
      %4032 = vmatprep.subr.bf16.mxu0 0
      %4033 = vmatpush1.bf16.msra.mxu0 0
      %4034 = vmatprep.subr.bf16.mxu0 0
      %4035 = vmatpush1.bf16.msra.mxu0 0
      %4036 = vmatprep.subr.bf16.mxu0 0
      %4037 = vmatpush1.bf16.msra.mxu0 0
      %4038 = vmatprep.subr.bf16.mxu0 0
      %4039 = vmatpush1.bf16.msra.mxu0 0
      %4040 = vmatprep.subr.bf16.mxu0 0
      %4041 = vmatpush1.bf16.msra.mxu0 0
      %4042 = vmatprep.subr.bf16.mxu0 0
      %4043 = vmatpush1.bf16.msra.mxu0 0
      %4044 = vmatprep.mubr.bf16.mxu0 0
      %4045 = vmatmul.mubr.bf16.gmra.mrb[0].mxu0 %v4010
      %v4046 = vpop.f32.mrb[0].mxu0
      %v4047 = vadd.f32 0.0, %v4046
      %v4048 = vpop.f32.mrb[0].mxu0
      %v4049 = vpop.f32.mrb[0].mxu0
      %v4050 = vadd.f32 0.0, %v4049
      %v4051 = vpop.f32.mrb[0].mxu0
      %4052 = vdwg.mxu0
      %v4053 = vpack.c.bf16 %v4050, %v4047
      %v4058 = vunpack.c.l.b16 %v315
      %v4059 = vunpack.c.l.b16 %v316
      %v4060 = vunpack.c.l.b16 %v317
      %v4061 = vunpack.c.l.b16 %v318
      %v4062 = vpack.c.b16 %v4059, %v4058
      %v4063 = vpack.c.b16 %v4061, %v4060
      %v4067 = vsel %vm504, %v4053, 0
      %4069 = vmatprep.subr.bf16.mxu0 0
      %4070 = vmatpush1.bf16.msra.mxu0 %v4062
      %4071 = vmatprep.subr.bf16.mxu0 0
      %4072 = vmatpush1.bf16.msra.mxu0 %v4063
      %4073 = vmatprep.subr.bf16.mxu0 0
      %4074 = vmatpush1.bf16.msra.mxu0 0
      %4075 = vmatprep.subr.bf16.mxu0 0
      %4076 = vmatpush1.bf16.msra.mxu0 0
      %4077 = vmatprep.subr.bf16.mxu0 0
      %4078 = vmatpush1.bf16.msra.mxu0 0
      %4079 = vmatprep.subr.bf16.mxu0 0
      %4080 = vmatpush1.bf16.msra.mxu0 0
      %4081 = vmatprep.subr.bf16.mxu0 0
      %4082 = vmatpush1.bf16.msra.mxu0 0
      %4083 = vmatprep.subr.bf16.mxu0 0
      %4084 = vmatpush1.bf16.msra.mxu0 0
      %4085 = vmatprep.subr.bf16.mxu0 0
      %4086 = vmatpush1.bf16.msra.mxu0 0
      %4087 = vmatprep.subr.bf16.mxu0 0
      %4088 = vmatpush1.bf16.msra.mxu0 0
      %4089 = vmatprep.subr.bf16.mxu0 0
      %4090 = vmatpush1.bf16.msra.mxu0 0
      %4091 = vmatprep.subr.bf16.mxu0 0
      %4092 = vmatpush1.bf16.msra.mxu0 0
      %4093 = vmatprep.subr.bf16.mxu0 0
      %4094 = vmatpush1.bf16.msra.mxu0 0
      %4095 = vmatprep.subr.bf16.mxu0 0
      %4096 = vmatpush1.bf16.msra.mxu0 0
      %4097 = vmatprep.subr.bf16.mxu0 0
      %4098 = vmatpush1.bf16.msra.mxu0 0
      %4099 = vmatprep.subr.bf16.mxu0 0
      %4100 = vmatpush1.bf16.msra.mxu0 0
      %4101 = vmatprep.mubr.bf16.mxu0 0
      %4102 = vmatmul.mubr.bf16.gmra.mrb[0].mxu0 %v4067
      %v4103 = vpop.f32.mrb[0].mxu0
      %v4104 = vadd.f32 0.0, %v4103
      %v4105 = vpop.f32.mrb[0].mxu0
      %v4106 = vpop.f32.mrb[0].mxu0
      %v4107 = vadd.f32 0.0, %v4106
      %v4108 = vpop.f32.mrb[0].mxu0
      %4109 = vdwg.mxu0
      %v4110 = vadd.f32 %v4008, %v4104
      %v4111 = vadd.f32 %v4008, %v4107
      %v4113 = vsel %vm593, %v469, 0
      %4115 = vmatprep.subr.bf16.mxu0 0
      %4116 = vmatpush1.bf16.msra.mxu0 %v4003
      %4117 = vmatprep.subr.bf16.mxu0 0
      %4118 = vmatpush1.bf16.msra.mxu0 0
      %4119 = vmatprep.subr.bf16.mxu0 0
      %4120 = vmatpush1.bf16.msra.mxu0 0
      %4121 = vmatprep.subr.bf16.mxu0 0
      %4122 = vmatpush1.bf16.msra.mxu0 0
      %4123 = vmatprep.subr.bf16.mxu0 0
      %4124 = vmatpush1.bf16.msra.mxu0 0
      %4125 = vmatprep.subr.bf16.mxu0 0
      %4126 = vmatpush1.bf16.msra.mxu0 0
      %4127 = vmatprep.subr.bf16.mxu0 0
      %4128 = vmatpush1.bf16.msra.mxu0 0
      %4129 = vmatprep.subr.bf16.mxu0 0
      %4130 = vmatpush1.bf16.msra.mxu0 0
      %4131 = vmatprep.subr.bf16.mxu0 0
      %4132 = vmatpush1.bf16.msra.mxu0 0
      %4133 = vmatprep.subr.bf16.mxu0 0
      %4134 = vmatpush1.bf16.msra.mxu0 0
      %4135 = vmatprep.subr.bf16.mxu0 0
      %4136 = vmatpush1.bf16.msra.mxu0 0
      %4137 = vmatprep.subr.bf16.mxu0 0
      %4138 = vmatpush1.bf16.msra.mxu0 0
      %4139 = vmatprep.subr.bf16.mxu0 0
      %4140 = vmatpush1.bf16.msra.mxu0 0
      %4141 = vmatprep.subr.bf16.mxu0 0
      %4142 = vmatpush1.bf16.msra.mxu0 0
      %4143 = vmatprep.subr.bf16.mxu0 0
      %4144 = vmatpush1.bf16.msra.mxu0 0
      %4145 = vmatprep.subr.bf16.mxu0 0
      %4146 = vmatpush1.bf16.msra.mxu0 0
      %4147 = vmatprep.mubr.bf16.mxu0 0
      %4148 = vmatmul.mubr.bf16.gmra.mrb[0].mxu0 %v4113
      %v4149 = vpop.f32.mrb[0].mxu0
      %v4150 = vadd.f32 0.0, %v4149
      %v4151 = vpop.f32.mrb[0].mxu0
      %v4152 = vpop.f32.mrb[0].mxu0
      %v4153 = vadd.f32 0.0, %v4152
      %v4154 = vpop.f32.mrb[0].mxu0
      %4155 = vdwg.mxu0
      %v4156 = vpack.c.bf16 %v4153, %v4150
      %v4161 = vunpack.c.l.b16 %v319
      %v4162 = vunpack.c.l.b16 %v320
      %v4163 = vunpack.c.l.b16 %v321
      %v4164 = vunpack.c.l.b16 %v322
      %v4165 = vpack.c.b16 %v4162, %v4161
      %v4166 = vpack.c.b16 %v4164, %v4163
      %v4170 = vsel %vm504, %v4156, 0
      %4172 = vmatprep.subr.bf16.mxu0 0
      %4173 = vmatpush1.bf16.msra.mxu0 %v4165
      %4174 = vmatprep.subr.bf16.mxu0 0
      %4175 = vmatpush1.bf16.msra.mxu0 %v4166
      %4176 = vmatprep.subr.bf16.mxu0 0
      %4177 = vmatpush1.bf16.msra.mxu0 0
      %4178 = vmatprep.subr.bf16.mxu0 0
      %4179 = vmatpush1.bf16.msra.mxu0 0
      %4180 = vmatprep.subr.bf16.mxu0 0
      %4181 = vmatpush1.bf16.msra.mxu0 0
      %4182 = vmatprep.subr.bf16.mxu0 0
      %4183 = vmatpush1.bf16.msra.mxu0 0
      %4184 = vmatprep.subr.bf16.mxu0 0
      %4185 = vmatpush1.bf16.msra.mxu0 0
      %4186 = vmatprep.subr.bf16.mxu0 0
      %4187 = vmatpush1.bf16.msra.mxu0 0
      %4188 = vmatprep.subr.bf16.mxu0 0
      %4189 = vmatpush1.bf16.msra.mxu0 0
      %4190 = vmatprep.subr.bf16.mxu0 0
      %4191 = vmatpush1.bf16.msra.mxu0 0
      %4192 = vmatprep.subr.bf16.mxu0 0
      %4193 = vmatpush1.bf16.msra.mxu0 0
      %4194 = vmatprep.subr.bf16.mxu0 0
      %4195 = vmatpush1.bf16.msra.mxu0 0
      %4196 = vmatprep.subr.bf16.mxu0 0
      %4197 = vmatpush1.bf16.msra.mxu0 0
      %4198 = vmatprep.subr.bf16.mxu0 0
      %4199 = vmatpush1.bf16.msra.mxu0 0
      %4200 = vmatprep.subr.bf16.mxu0 0
      %4201 = vmatpush1.bf16.msra.mxu0 0
      %4202 = vmatprep.subr.bf16.mxu0 0
      %4203 = vmatpush1.bf16.msra.mxu0 0
      %4204 = vmatprep.mubr.bf16.mxu0 0
      %4205 = vmatmul.mubr.bf16.gmra.mrb[0].mxu0 %v4170
      %v4206 = vpop.f32.mrb[0].mxu0
      %v4207 = vadd.f32 0.0, %v4206
      %v4208 = vpop.f32.mrb[0].mxu0
      %v4209 = vpop.f32.mrb[0].mxu0
      %v4210 = vadd.f32 0.0, %v4209
      %v4211 = vpop.f32.mrb[0].mxu0
      %4212 = vdwg.mxu0
      %v4213 = vadd.f32 %v4110, %v4207
      %v4214 = vadd.f32 %v4111, %v4210
      %v4216 = vsel %vm593, %v474, 0
      %4218 = vmatprep.subr.bf16.mxu0 0
      %4219 = vmatpush1.bf16.msra.mxu0 %v4003
      %4220 = vmatprep.subr.bf16.mxu0 0
      %4221 = vmatpush1.bf16.msra.mxu0 0
      %4222 = vmatprep.subr.bf16.mxu0 0
      %4223 = vmatpush1.bf16.msra.mxu0 0
      %4224 = vmatprep.subr.bf16.mxu0 0
      %4225 = vmatpush1.bf16.msra.mxu0 0
      %4226 = vmatprep.subr.bf16.mxu0 0
      %4227 = vmatpush1.bf16.msra.mxu0 0
      %4228 = vmatprep.subr.bf16.mxu0 0
      %4229 = vmatpush1.bf16.msra.mxu0 0
      %4230 = vmatprep.subr.bf16.mxu0 0
      %4231 = vmatpush1.bf16.msra.mxu0 0
      %4232 = vmatprep.subr.bf16.mxu0 0
      %4233 = vmatpush1.bf16.msra.mxu0 0
      %4234 = vmatprep.subr.bf16.mxu0 0
      %4235 = vmatpush1.bf16.msra.mxu0 0
      %4236 = vmatprep.subr.bf16.mxu0 0
      %4237 = vmatpush1.bf16.msra.mxu0 0
      %4238 = vmatprep.subr.bf16.mxu0 0
      %4239 = vmatpush1.bf16.msra.mxu0 0
      %4240 = vmatprep.subr.bf16.mxu0 0
      %4241 = vmatpush1.bf16.msra.mxu0 0
      %4242 = vmatprep.subr.bf16.mxu0 0
      %4243 = vmatpush1.bf16.msra.mxu0 0
      %4244 = vmatprep.subr.bf16.mxu0 0
      %4245 = vmatpush1.bf16.msra.mxu0 0
      %4246 = vmatprep.subr.bf16.mxu0 0
      %4247 = vmatpush1.bf16.msra.mxu0 0
      %4248 = vmatprep.subr.bf16.mxu0 0
      %4249 = vmatpush1.bf16.msra.mxu0 0
      %4250 = vmatprep.mubr.bf16.mxu0 0
      %4251 = vmatmul.mubr.bf16.gmra.mrb[0].mxu0 %v4216
      %v4252 = vpop.f32.mrb[0].mxu0
      %v4253 = vadd.f32 0.0, %v4252
      %v4254 = vpop.f32.mrb[0].mxu0
      %v4255 = vpop.f32.mrb[0].mxu0
      %v4256 = vadd.f32 0.0, %v4255
      %v4257 = vpop.f32.mrb[0].mxu0
      %4258 = vdwg.mxu0
      %v4259 = vpack.c.bf16 %v4256, %v4253
      %v4264 = vunpack.c.l.b16 %v323
      %v4265 = vunpack.c.l.b16 %v324
      %v4266 = vunpack.c.l.b16 %v325
      %v4267 = vunpack.c.l.b16 %v326
      %v4268 = vpack.c.b16 %v4265, %v4264
      %v4269 = vpack.c.b16 %v4267, %v4266
      %v4273 = vsel %vm504, %v4259, 0
      %4275 = vmatprep.subr.bf16.mxu0 0
      %4276 = vmatpush1.bf16.msra.mxu0 %v4268
      %4277 = vmatprep.subr.bf16.mxu0 0
      %4278 = vmatpush1.bf16.msra.mxu0 %v4269
      %4279 = vmatprep.subr.bf16.mxu0 0
      %4280 = vmatpush1.bf16.msra.mxu0 0
      %4281 = vmatprep.subr.bf16.mxu0 0
      %4282 = vmatpush1.bf16.msra.mxu0 0
      %4283 = vmatprep.subr.bf16.mxu0 0
      %4284 = vmatpush1.bf16.msra.mxu0 0
      %4285 = vmatprep.subr.bf16.mxu0 0
      %4286 = vmatpush1.bf16.msra.mxu0 0
      %4287 = vmatprep.subr.bf16.mxu0 0
      %4288 = vmatpush1.bf16.msra.mxu0 0
      %4289 = vmatprep.subr.bf16.mxu0 0
      %4290 = vmatpush1.bf16.msra.mxu0 0
      %4291 = vmatprep.subr.bf16.mxu0 0
      %4292 = vmatpush1.bf16.msra.mxu0 0
      %4293 = vmatprep.subr.bf16.mxu0 0
      %4294 = vmatpush1.bf16.msra.mxu0 0
      %4295 = vmatprep.subr.bf16.mxu0 0
      %4296 = vmatpush1.bf16.msra.mxu0 0
      %4297 = vmatprep.subr.bf16.mxu0 0
      %4298 = vmatpush1.bf16.msra.mxu0 0
      %4299 = vmatprep.subr.bf16.mxu0 0
      %4300 = vmatpush1.bf16.msra.mxu0 0
      %4301 = vmatprep.subr.bf16.mxu0 0
      %4302 = vmatpush1.bf16.msra.mxu0 0
      %4303 = vmatprep.subr.bf16.mxu0 0
      %4304 = vmatpush1.bf16.msra.mxu0 0
      %4305 = vmatprep.subr.bf16.mxu0 0
      %4306 = vmatpush1.bf16.msra.mxu0 0
      %4307 = vmatprep.mubr.bf16.mxu0 0
      %4308 = vmatmul.mubr.bf16.gmra.mrb[0].mxu0 %v4273
      %v4309 = vpop.f32.mrb[0].mxu0
      %v4310 = vadd.f32 0.0, %v4309
      %v4311 = vpop.f32.mrb[0].mxu0
      %v4312 = vpop.f32.mrb[0].mxu0
      %v4313 = vadd.f32 0.0, %v4312
      %v4314 = vpop.f32.mrb[0].mxu0
      %4315 = vdwg.mxu0
      %v4316 = vadd.f32 %v4213, %v4310
      %v4317 = vadd.f32 %v4214, %v4313
      %v4319 = vsel %vm593, %v479, 0
      %4321 = vmatprep.subr.bf16.mxu0 0
      %4322 = vmatpush1.bf16.msra.mxu0 %v4003
      %4323 = vmatprep.subr.bf16.mxu0 0
      %4324 = vmatpush1.bf16.msra.mxu0 0
      %4325 = vmatprep.subr.bf16.mxu0 0
      %4326 = vmatpush1.bf16.msra.mxu0 0
      %4327 = vmatprep.subr.bf16.mxu0 0
      %4328 = vmatpush1.bf16.msra.mxu0 0
      %4329 = vmatprep.subr.bf16.mxu0 0
      %4330 = vmatpush1.bf16.msra.mxu0 0
      %4331 = vmatprep.subr.bf16.mxu0 0
      %4332 = vmatpush1.bf16.msra.mxu0 0
      %4333 = vmatprep.subr.bf16.mxu0 0
      %4334 = vmatpush1.bf16.msra.mxu0 0
      %4335 = vmatprep.subr.bf16.mxu0 0
      %4336 = vmatpush1.bf16.msra.mxu0 0
      %4337 = vmatprep.subr.bf16.mxu0 0
      %4338 = vmatpush1.bf16.msra.mxu0 0
      %4339 = vmatprep.subr.bf16.mxu0 0
      %4340 = vmatpush1.bf16.msra.mxu0 0
      %4341 = vmatprep.subr.bf16.mxu0 0
      %4342 = vmatpush1.bf16.msra.mxu0 0
      %4343 = vmatprep.subr.bf16.mxu0 0
      %4344 = vmatpush1.bf16.msra.mxu0 0
      %4345 = vmatprep.subr.bf16.mxu0 0
      %4346 = vmatpush1.bf16.msra.mxu0 0
      %4347 = vmatprep.subr.bf16.mxu0 0
      %4348 = vmatpush1.bf16.msra.mxu0 0
      %4349 = vmatprep.subr.bf16.mxu0 0
      %4350 = vmatpush1.bf16.msra.mxu0 0
      %4351 = vmatprep.subr.bf16.mxu0 0
      %4352 = vmatpush1.bf16.msra.mxu0 0
      %4353 = vmatprep.mubr.bf16.mxu0 0
      %4354 = vmatmul.mubr.bf16.gmra.mrb[0].mxu0 %v4319
      %v4355 = vpop.f32.mrb[0].mxu0
      %v4356 = vadd.f32 0.0, %v4355
      %v4357 = vpop.f32.mrb[0].mxu0
      %v4358 = vpop.f32.mrb[0].mxu0
      %v4359 = vadd.f32 0.0, %v4358
      %v4360 = vpop.f32.mrb[0].mxu0
      %4361 = vdwg.mxu0
      %v4362 = vpack.c.bf16 %v4359, %v4356
      %v4367 = vunpack.c.l.b16 %v327
      %v4368 = vunpack.c.l.b16 %v328
      %v4369 = vunpack.c.l.b16 %v329
      %v4370 = vunpack.c.l.b16 %v330
      %v4371 = vpack.c.b16 %v4368, %v4367
      %v4372 = vpack.c.b16 %v4370, %v4369
      %v4376 = vsel %vm504, %v4362, 0
      %4378 = vmatprep.subr.bf16.mxu0 0
      %4379 = vmatpush1.bf16.msra.mxu0 %v4371
      %4380 = vmatprep.subr.bf16.mxu0 0
      %4381 = vmatpush1.bf16.msra.mxu0 %v4372
      %4382 = vmatprep.subr.bf16.mxu0 0
      %4383 = vmatpush1.bf16.msra.mxu0 0
      %4384 = vmatprep.subr.bf16.mxu0 0
      %4385 = vmatpush1.bf16.msra.mxu0 0
      %4386 = vmatprep.subr.bf16.mxu0 0
      %4387 = vmatpush1.bf16.msra.mxu0 0
      %4388 = vmatprep.subr.bf16.mxu0 0
      %4389 = vmatpush1.bf16.msra.mxu0 0
      %4390 = vmatprep.subr.bf16.mxu0 0
      %4391 = vmatpush1.bf16.msra.mxu0 0
      %4392 = vmatprep.subr.bf16.mxu0 0
      %4393 = vmatpush1.bf16.msra.mxu0 0
      %4394 = vmatprep.subr.bf16.mxu0 0
      %4395 = vmatpush1.bf16.msra.mxu0 0
      %4396 = vmatprep.subr.bf16.mxu0 0
      %4397 = vmatpush1.bf16.msra.mxu0 0
      %4398 = vmatprep.subr.bf16.mxu0 0
      %4399 = vmatpush1.bf16.msra.mxu0 0
      %4400 = vmatprep.subr.bf16.mxu0 0
      %4401 = vmatpush1.bf16.msra.mxu0 0
      %4402 = vmatprep.subr.bf16.mxu0 0
      %4403 = vmatpush1.bf16.msra.mxu0 0
      %4404 = vmatprep.subr.bf16.mxu0 0
      %4405 = vmatpush1.bf16.msra.mxu0 0
      %4406 = vmatprep.subr.bf16.mxu0 0
      %4407 = vmatpush1.bf16.msra.mxu0 0
      %4408 = vmatprep.subr.bf16.mxu0 0
      %4409 = vmatpush1.bf16.msra.mxu0 0
      %4410 = vmatprep.mubr.bf16.mxu0 0
      %4411 = vmatmul.mubr.bf16.gmra.mrb[0].mxu0 %v4376
      %v4412 = vpop.f32.mrb[0].mxu0
      %v4413 = vadd.f32 0.0, %v4412
      %v4414 = vpop.f32.mrb[0].mxu0
      %v4415 = vpop.f32.mrb[0].mxu0
      %v4416 = vadd.f32 0.0, %v4415
      %v4417 = vpop.f32.mrb[0].mxu0
      %4418 = vdwg.mxu0
      %v4419 = vadd.f32 %v4316, %v4413
      %v4420 = vadd.f32 %v4317, %v4416
      %v4422 = vsel %vm593, %v483, 0
      %4424 = vmatprep.subr.bf16.mxu0 0
      %4425 = vmatpush1.bf16.msra.mxu0 %v4003
      %4426 = vmatprep.subr.bf16.mxu0 0
      %4427 = vmatpush1.bf16.msra.mxu0 0
      %4428 = vmatprep.subr.bf16.mxu0 0
      %4429 = vmatpush1.bf16.msra.mxu0 0
      %4430 = vmatprep.subr.bf16.mxu0 0
      %4431 = vmatpush1.bf16.msra.mxu0 0
      %4432 = vmatprep.subr.bf16.mxu0 0
      %4433 = vmatpush1.bf16.msra.mxu0 0
      %4434 = vmatprep.subr.bf16.mxu0 0
      %4435 = vmatpush1.bf16.msra.mxu0 0
      %4436 = vmatprep.subr.bf16.mxu0 0
      %4437 = vmatpush1.bf16.msra.mxu0 0
      %4438 = vmatprep.subr.bf16.mxu0 0
      %4439 = vmatpush1.bf16.msra.mxu0 0
      %4440 = vmatprep.subr.bf16.mxu0 0
      %4441 = vmatpush1.bf16.msra.mxu0 0
      %4442 = vmatprep.subr.bf16.mxu0 0
      %4443 = vmatpush1.bf16.msra.mxu0 0
      %4444 = vmatprep.subr.bf16.mxu0 0
      %4445 = vmatpush1.bf16.msra.mxu0 0
      %4446 = vmatprep.subr.bf16.mxu0 0
      %4447 = vmatpush1.bf16.msra.mxu0 0
      %4448 = vmatprep.subr.bf16.mxu0 0
      %4449 = vmatpush1.bf16.msra.mxu0 0
      %4450 = vmatprep.subr.bf16.mxu0 0
      %4451 = vmatpush1.bf16.msra.mxu0 0
      %4452 = vmatprep.subr.bf16.mxu0 0
      %4453 = vmatpush1.bf16.msra.mxu0 0
      %4454 = vmatprep.subr.bf16.mxu0 0
      %4455 = vmatpush1.bf16.msra.mxu0 0
      %4456 = vmatprep.mubr.bf16.mxu0 0
      %4457 = vmatmul.mubr.bf16.gmra.mrb[0].mxu0 %v4422
      %v4458 = vpop.f32.mrb[0].mxu0
      %v4459 = vadd.f32 0.0, %v4458
      %v4460 = vpop.f32.mrb[0].mxu0
      %v4461 = vpop.f32.mrb[0].mxu0
      %v4462 = vadd.f32 0.0, %v4461
      %v4463 = vpop.f32.mrb[0].mxu0
      %4464 = vdwg.mxu0
      %v4465 = vpack.c.bf16 %v4462, %v4459
      %v4470 = vunpack.c.l.b16 %v331
      %v4471 = vunpack.c.l.b16 %v332
      %v4472 = vunpack.c.l.b16 %v333
      %v4473 = vunpack.c.l.b16 %v334
      %v4474 = vpack.c.b16 %v4471, %v4470
      %v4475 = vpack.c.b16 %v4473, %v4472
      %v4479 = vsel %vm504, %v4465, 0
      %4481 = vmatprep.subr.bf16.mxu0 0
      %4482 = vmatpush1.bf16.msra.mxu0 %v4474
      %4483 = vmatprep.subr.bf16.mxu0 0
      %4484 = vmatpush1.bf16.msra.mxu0 %v4475
      %4485 = vmatprep.subr.bf16.mxu0 0
      %4486 = vmatpush1.bf16.msra.mxu0 0
      %4487 = vmatprep.subr.bf16.mxu0 0
      %4488 = vmatpush1.bf16.msra.mxu0 0
      %4489 = vmatprep.subr.bf16.mxu0 0
      %4490 = vmatpush1.bf16.msra.mxu0 0
      %4491 = vmatprep.subr.bf16.mxu0 0
      %4492 = vmatpush1.bf16.msra.mxu0 0
      %4493 = vmatprep.subr.bf16.mxu0 0
      %4494 = vmatpush1.bf16.msra.mxu0 0
      %4495 = vmatprep.subr.bf16.mxu0 0
      %4496 = vmatpush1.bf16.msra.mxu0 0
      %4497 = vmatprep.subr.bf16.mxu0 0
      %4498 = vmatpush1.bf16.msra.mxu0 0
      %4499 = vmatprep.subr.bf16.mxu0 0
      %4500 = vmatpush1.bf16.msra.mxu0 0
      %4501 = vmatprep.subr.bf16.mxu0 0
      %4502 = vmatpush1.bf16.msra.mxu0 0
      %4503 = vmatprep.subr.bf16.mxu0 0
      %4504 = vmatpush1.bf16.msra.mxu0 0
      %4505 = vmatprep.subr.bf16.mxu0 0
      %4506 = vmatpush1.bf16.msra.mxu0 0
      %4507 = vmatprep.subr.bf16.mxu0 0
      %4508 = vmatpush1.bf16.msra.mxu0 0
      %4509 = vmatprep.subr.bf16.mxu0 0
      %4510 = vmatpush1.bf16.msra.mxu0 0
      %4511 = vmatprep.subr.bf16.mxu0 0
      %4512 = vmatpush1.bf16.msra.mxu0 0
      %4513 = vmatprep.mubr.bf16.mxu0 0
      %4514 = vmatmul.mubr.bf16.gmra.mrb[0].mxu0 %v4479
      %v4515 = vpop.f32.mrb[0].mxu0
      %v4516 = vadd.f32 0.0, %v4515
      %v4517 = vpop.f32.mrb[0].mxu0
      %v4518 = vpop.f32.mrb[0].mxu0
      %v4519 = vadd.f32 0.0, %v4518
      %v4520 = vpop.f32.mrb[0].mxu0
      %4521 = vdwg.mxu0
      %v4522 = vadd.f32 %v4419, %v4516
      %v4523 = vadd.f32 %v4420, %v4519
      %v4525 = vsel %vm593, %v488, 0
      %4527 = vmatprep.subr.bf16.mxu0 0
      %4528 = vmatpush1.bf16.msra.mxu0 %v4003
      %4529 = vmatprep.subr.bf16.mxu0 0
      %4530 = vmatpush1.bf16.msra.mxu0 0
      %4531 = vmatprep.subr.bf16.mxu0 0
      %4532 = vmatpush1.bf16.msra.mxu0 0
      %4533 = vmatprep.subr.bf16.mxu0 0
      %4534 = vmatpush1.bf16.msra.mxu0 0
      %4535 = vmatprep.subr.bf16.mxu0 0
      %4536 = vmatpush1.bf16.msra.mxu0 0
      %4537 = vmatprep.subr.bf16.mxu0 0
      %4538 = vmatpush1.bf16.msra.mxu0 0
      %4539 = vmatprep.subr.bf16.mxu0 0
      %4540 = vmatpush1.bf16.msra.mxu0 0
      %4541 = vmatprep.subr.bf16.mxu0 0
      %4542 = vmatpush1.bf16.msra.mxu0 0
      %4543 = vmatprep.subr.bf16.mxu0 0
      %4544 = vmatpush1.bf16.msra.mxu0 0
      %4545 = vmatprep.subr.bf16.mxu0 0
      %4546 = vmatpush1.bf16.msra.mxu0 0
      %4547 = vmatprep.subr.bf16.mxu0 0
      %4548 = vmatpush1.bf16.msra.mxu0 0
      %4549 = vmatprep.subr.bf16.mxu0 0
      %4550 = vmatpush1.bf16.msra.mxu0 0
      %4551 = vmatprep.subr.bf16.mxu0 0
      %4552 = vmatpush1.bf16.msra.mxu0 0
      %4553 = vmatprep.subr.bf16.mxu0 0
      %4554 = vmatpush1.bf16.msra.mxu0 0
      %4555 = vmatprep.subr.bf16.mxu0 0
      %4556 = vmatpush1.bf16.msra.mxu0 0
      %4557 = vmatprep.subr.bf16.mxu0 0
      %4558 = vmatpush1.bf16.msra.mxu0 0
      %4559 = vmatprep.mubr.bf16.mxu0 0
      %4560 = vmatmul.mubr.bf16.gmra.mrb[0].mxu0 %v4525
      %v4561 = vpop.f32.mrb[0].mxu0
      %v4562 = vadd.f32 0.0, %v4561
      %v4563 = vpop.f32.mrb[0].mxu0
      %v4564 = vpop.f32.mrb[0].mxu0
      %v4565 = vadd.f32 0.0, %v4564
      %v4566 = vpop.f32.mrb[0].mxu0
      %4567 = vdwg.mxu0
      %v4568 = vpack.c.bf16 %v4565, %v4562
      %v4573 = vunpack.c.l.b16 %v335
      %v4574 = vunpack.c.l.b16 %v336
      %v4575 = vunpack.c.l.b16 %v337
      %v4576 = vunpack.c.l.b16 %v338
      %v4577 = vpack.c.b16 %v4574, %v4573
      %v4578 = vpack.c.b16 %v4576, %v4575
      %v4582 = vsel %vm504, %v4568, 0
      %4584 = vmatprep.subr.bf16.mxu0 0
      %4585 = vmatpush1.bf16.msra.mxu0 %v4577
      %4586 = vmatprep.subr.bf16.mxu0 0
      %4587 = vmatpush1.bf16.msra.mxu0 %v4578
      %4588 = vmatprep.subr.bf16.mxu0 0
      %4589 = vmatpush1.bf16.msra.mxu0 0
      %4590 = vmatprep.subr.bf16.mxu0 0
      %4591 = vmatpush1.bf16.msra.mxu0 0
      %4592 = vmatprep.subr.bf16.mxu0 0
      %4593 = vmatpush1.bf16.msra.mxu0 0
      %4594 = vmatprep.subr.bf16.mxu0 0
      %4595 = vmatpush1.bf16.msra.mxu0 0
      %4596 = vmatprep.subr.bf16.mxu0 0
      %4597 = vmatpush1.bf16.msra.mxu0 0
      %4598 = vmatprep.subr.bf16.mxu0 0
      %4599 = vmatpush1.bf16.msra.mxu0 0
      %4600 = vmatprep.subr.bf16.mxu0 0
      %4601 = vmatpush1.bf16.msra.mxu0 0
      %4602 = vmatprep.subr.bf16.mxu0 0
      %4603 = vmatpush1.bf16.msra.mxu0 0
      %4604 = vmatprep.subr.bf16.mxu0 0
      %4605 = vmatpush1.bf16.msra.mxu0 0
      %4606 = vmatprep.subr.bf16.mxu0 0
      %4607 = vmatpush1.bf16.msra.mxu0 0
      %4608 = vmatprep.subr.bf16.mxu0 0
      %4609 = vmatpush1.bf16.msra.mxu0 0
      %4610 = vmatprep.subr.bf16.mxu0 0
      %4611 = vmatpush1.bf16.msra.mxu0 0
      %4612 = vmatprep.subr.bf16.mxu0 0
      %4613 = vmatpush1.bf16.msra.mxu0 0
      %4614 = vmatprep.subr.bf16.mxu0 0
      %4615 = vmatpush1.bf16.msra.mxu0 0
      %4616 = vmatprep.mubr.bf16.mxu0 0
      %4617 = vmatmul.mubr.bf16.gmra.mrb[0].mxu0 %v4582
      %v4618 = vpop.f32.mrb[0].mxu0
      %v4619 = vadd.f32 0.0, %v4618
      %v4620 = vpop.f32.mrb[0].mxu0
      %v4621 = vpop.f32.mrb[0].mxu0
      %v4622 = vadd.f32 0.0, %v4621
      %v4623 = vpop.f32.mrb[0].mxu0
      %4624 = vdwg.mxu0
      %v4625 = vadd.f32 %v4522, %v4619
      %v4626 = vadd.f32 %v4523, %v4622
      %v4628 = vsel %vm593, %v493, 0
      %4630 = vmatprep.subr.bf16.mxu0 0
      %4631 = vmatpush1.bf16.msra.mxu0 %v4003
      %4632 = vmatprep.subr.bf16.mxu0 0
      %4633 = vmatpush1.bf16.msra.mxu0 0
      %4634 = vmatprep.subr.bf16.mxu0 0
      %4635 = vmatpush1.bf16.msra.mxu0 0
      %4636 = vmatprep.subr.bf16.mxu0 0
      %4637 = vmatpush1.bf16.msra.mxu0 0
      %4638 = vmatprep.subr.bf16.mxu0 0
      %4639 = vmatpush1.bf16.msra.mxu0 0
      %4640 = vmatprep.subr.bf16.mxu0 0
      %4641 = vmatpush1.bf16.msra.mxu0 0
      %4642 = vmatprep.subr.bf16.mxu0 0
      %4643 = vmatpush1.bf16.msra.mxu0 0
      %4644 = vmatprep.subr.bf16.mxu0 0
      %4645 = vmatpush1.bf16.msra.mxu0 0
      %4646 = vmatprep.subr.bf16.mxu0 0
      %4647 = vmatpush1.bf16.msra.mxu0 0
      %4648 = vmatprep.subr.bf16.mxu0 0
      %4649 = vmatpush1.bf16.msra.mxu0 0
      %4650 = vmatprep.subr.bf16.mxu0 0
      %4651 = vmatpush1.bf16.msra.mxu0 0
      %4652 = vmatprep.subr.bf16.mxu0 0
      %4653 = vmatpush1.bf16.msra.mxu0 0
      %4654 = vmatprep.subr.bf16.mxu0 0
      %4655 = vmatpush1.bf16.msra.mxu0 0
      %4656 = vmatprep.subr.bf16.mxu0 0
      %4657 = vmatpush1.bf16.msra.mxu0 0
      %4658 = vmatprep.subr.bf16.mxu0 0
      %4659 = vmatpush1.bf16.msra.mxu0 0
      %4660 = vmatprep.subr.bf16.mxu0 0
      %4661 = vmatpush1.bf16.msra.mxu0 0
      %4662 = vmatprep.mubr.bf16.mxu0 0
      %4663 = vmatmul.mubr.bf16.gmra.mrb[0].mxu0 %v4628
      %v4664 = vpop.f32.mrb[0].mxu0
      %v4665 = vadd.f32 0.0, %v4664
      %v4666 = vpop.f32.mrb[0].mxu0
      %v4667 = vpop.f32.mrb[0].mxu0
      %v4668 = vadd.f32 0.0, %v4667
      %v4669 = vpop.f32.mrb[0].mxu0
      %4670 = vdwg.mxu0
      %v4671 = vpack.c.bf16 %v4668, %v4665
      %v4676 = vunpack.c.l.b16 %v339
      %v4677 = vunpack.c.l.b16 %v340
      %v4678 = vunpack.c.l.b16 %v341
      %v4679 = vunpack.c.l.b16 %v342
      %v4680 = vpack.c.b16 %v4677, %v4676
      %v4681 = vpack.c.b16 %v4679, %v4678
      %v4685 = vsel %vm504, %v4671, 0
      %4687 = vmatprep.subr.bf16.mxu0 0
      %4688 = vmatpush1.bf16.msra.mxu0 %v4680
      %4689 = vmatprep.subr.bf16.mxu0 0
      %4690 = vmatpush1.bf16.msra.mxu0 %v4681
      %4691 = vmatprep.subr.bf16.mxu0 0
      %4692 = vmatpush1.bf16.msra.mxu0 0
      %4693 = vmatprep.subr.bf16.mxu0 0
      %4694 = vmatpush1.bf16.msra.mxu0 0
      %4695 = vmatprep.subr.bf16.mxu0 0
      %4696 = vmatpush1.bf16.msra.mxu0 0
      %4697 = vmatprep.subr.bf16.mxu0 0
      %4698 = vmatpush1.bf16.msra.mxu0 0
      %4699 = vmatprep.subr.bf16.mxu0 0
      %4700 = vmatpush1.bf16.msra.mxu0 0
      %4701 = vmatprep.subr.bf16.mxu0 0
      %4702 = vmatpush1.bf16.msra.mxu0 0
      %4703 = vmatprep.subr.bf16.mxu0 0
      %4704 = vmatpush1.bf16.msra.mxu0 0
      %4705 = vmatprep.subr.bf16.mxu0 0
      %4706 = vmatpush1.bf16.msra.mxu0 0
      %4707 = vmatprep.subr.bf16.mxu0 0
      %4708 = vmatpush1.bf16.msra.mxu0 0
      %4709 = vmatprep.subr.bf16.mxu0 0
      %4710 = vmatpush1.bf16.msra.mxu0 0
      %4711 = vmatprep.subr.bf16.mxu0 0
      %4712 = vmatpush1.bf16.msra.mxu0 0
      %4713 = vmatprep.subr.bf16.mxu0 0
      %4714 = vmatpush1.bf16.msra.mxu0 0
      %4715 = vmatprep.subr.bf16.mxu0 0
      %4716 = vmatpush1.bf16.msra.mxu0 0
      %4717 = vmatprep.subr.bf16.mxu0 0
      %4718 = vmatpush1.bf16.msra.mxu0 0
      %4719 = vmatprep.mubr.bf16.mxu0 0
      %4720 = vmatmul.mubr.bf16.gmra.mrb[0].mxu0 %v4685
      %v4721 = vpop.f32.mrb[0].mxu0
      %v4722 = vadd.f32 0.0, %v4721
      %v4723 = vpop.f32.mrb[0].mxu0
      %v4724 = vpop.f32.mrb[0].mxu0
      %v4725 = vadd.f32 0.0, %v4724
      %v4726 = vpop.f32.mrb[0].mxu0
      %4727 = vdwg.mxu0
      %v4728 = vadd.f32 %v4625, %v4722
      %v4729 = vadd.f32 %v4626, %v4725
      %v4731 = vsel %vm593, %v498, 0
      %4733 = vmatprep.subr.bf16.mxu0 0
      %4734 = vmatpush1.bf16.msra.mxu0 %v4003
      %4735 = vmatprep.subr.bf16.mxu0 0
      %4736 = vmatpush1.bf16.msra.mxu0 0
      %4737 = vmatprep.subr.bf16.mxu0 0
      %4738 = vmatpush1.bf16.msra.mxu0 0
      %4739 = vmatprep.subr.bf16.mxu0 0
      %4740 = vmatpush1.bf16.msra.mxu0 0
      %4741 = vmatprep.subr.bf16.mxu0 0
      %4742 = vmatpush1.bf16.msra.mxu0 0
      %4743 = vmatprep.subr.bf16.mxu0 0
      %4744 = vmatpush1.bf16.msra.mxu0 0
      %4745 = vmatprep.subr.bf16.mxu0 0
      %4746 = vmatpush1.bf16.msra.mxu0 0
      %4747 = vmatprep.subr.bf16.mxu0 0
      %4748 = vmatpush1.bf16.msra.mxu0 0
      %4749 = vmatprep.subr.bf16.mxu0 0
      %4750 = vmatpush1.bf16.msra.mxu0 0
      %4751 = vmatprep.subr.bf16.mxu0 0
      %4752 = vmatpush1.bf16.msra.mxu0 0
      %4753 = vmatprep.subr.bf16.mxu0 0
      %4754 = vmatpush1.bf16.msra.mxu0 0
      %4755 = vmatprep.subr.bf16.mxu0 0
      %4756 = vmatpush1.bf16.msra.mxu0 0
      %4757 = vmatprep.subr.bf16.mxu0 0
      %4758 = vmatpush1.bf16.msra.mxu0 0
      %4759 = vmatprep.subr.bf16.mxu0 0
      %4760 = vmatpush1.bf16.msra.mxu0 0
      %4761 = vmatprep.subr.bf16.mxu0 0
      %4762 = vmatpush1.bf16.msra.mxu0 0
      %4763 = vmatprep.subr.bf16.mxu0 0
      %4764 = vmatpush1.bf16.msra.mxu0 0
      %4765 = vmatprep.mubr.bf16.mxu0 0
      %4766 = vmatmul.mubr.bf16.gmra.mrb[0].mxu0 %v4731
      %v4767 = vpop.f32.mrb[0].mxu0
      %v4768 = vadd.f32 0.0, %v4767
      %v4769 = vpop.f32.mrb[0].mxu0
      %v4770 = vpop.f32.mrb[0].mxu0
      %v4771 = vadd.f32 0.0, %v4770
      %v4772 = vpop.f32.mrb[0].mxu0
      %4773 = vdwg.mxu0
      %v4774 = vpack.c.bf16 %v4771, %v4768
      %v4779 = vunpack.c.l.b16 %v343
      %v4780 = vunpack.c.l.b16 %v344
      %v4781 = vunpack.c.l.b16 %v345
      %v4782 = vunpack.c.l.b16 %v346
      %v4783 = vpack.c.b16 %v4780, %v4779
      %v4784 = vpack.c.b16 %v4782, %v4781
      %v4788 = vsel %vm504, %v4774, 0
      %4790 = vmatprep.subr.bf16.mxu0 0
      %4791 = vmatpush1.bf16.msra.mxu0 %v4783
      %4792 = vmatprep.subr.bf16.mxu0 0
      %4793 = vmatpush1.bf16.msra.mxu0 %v4784
      %4794 = vmatprep.subr.bf16.mxu0 0
      %4795 = vmatpush1.bf16.msra.mxu0 0
      %4796 = vmatprep.subr.bf16.mxu0 0
      %4797 = vmatpush1.bf16.msra.mxu0 0
      %4798 = vmatprep.subr.bf16.mxu0 0
      %4799 = vmatpush1.bf16.msra.mxu0 0
      %4800 = vmatprep.subr.bf16.mxu0 0
      %4801 = vmatpush1.bf16.msra.mxu0 0
      %4802 = vmatprep.subr.bf16.mxu0 0
      %4803 = vmatpush1.bf16.msra.mxu0 0
      %4804 = vmatprep.subr.bf16.mxu0 0
      %4805 = vmatpush1.bf16.msra.mxu0 0
      %4806 = vmatprep.subr.bf16.mxu0 0
      %4807 = vmatpush1.bf16.msra.mxu0 0
      %4808 = vmatprep.subr.bf16.mxu0 0
      %4809 = vmatpush1.bf16.msra.mxu0 0
      %4810 = vmatprep.subr.bf16.mxu0 0
      %4811 = vmatpush1.bf16.msra.mxu0 0
      %4812 = vmatprep.subr.bf16.mxu0 0
      %4813 = vmatpush1.bf16.msra.mxu0 0
      %4814 = vmatprep.subr.bf16.mxu0 0
      %4815 = vmatpush1.bf16.msra.mxu0 0
      %4816 = vmatprep.subr.bf16.mxu0 0
      %4817 = vmatpush1.bf16.msra.mxu0 0
      %4818 = vmatprep.subr.bf16.mxu0 0
      %4819 = vmatpush1.bf16.msra.mxu0 0
      %4820 = vmatprep.subr.bf16.mxu0 0
      %4821 = vmatpush1.bf16.msra.mxu0 0
      %4822 = vmatprep.mubr.bf16.mxu0 0
      %4823 = vmatmul.mubr.bf16.gmra.mrb[0].mxu0 %v4788
      %v4824 = vpop.f32.mrb[0].mxu0
      %v4825 = vadd.f32 0.0, %v4824
      %v4826 = vpop.f32.mrb[0].mxu0
      %v4827 = vpop.f32.mrb[0].mxu0
      %v4828 = vadd.f32 0.0, %v4827
      %v4829 = vpop.f32.mrb[0].mxu0
      %4830 = vdwg.mxu0
      %v4831 = vadd.f32 %v4728, %v4825
      %v4832 = vadd.f32 %v4729, %v4828
      %v4834 = vsel %vm593, %v503, 0
      %4836 = vmatprep.subr.bf16.mxu0 0
      %4837 = vmatpush1.bf16.msra.mxu0 %v4003
      %4838 = vmatprep.subr.bf16.mxu0 0
      %4839 = vmatpush1.bf16.msra.mxu0 0
      %4840 = vmatprep.subr.bf16.mxu0 0
      %4841 = vmatpush1.bf16.msra.mxu0 0
      %4842 = vmatprep.subr.bf16.mxu0 0
      %4843 = vmatpush1.bf16.msra.mxu0 0
      %4844 = vmatprep.subr.bf16.mxu0 0
      %4845 = vmatpush1.bf16.msra.mxu0 0
      %4846 = vmatprep.subr.bf16.mxu0 0
      %4847 = vmatpush1.bf16.msra.mxu0 0
      %4848 = vmatprep.subr.bf16.mxu0 0
      %4849 = vmatpush1.bf16.msra.mxu0 0
      %4850 = vmatprep.subr.bf16.mxu0 0
      %4851 = vmatpush1.bf16.msra.mxu0 0
      %4852 = vmatprep.subr.bf16.mxu0 0
      %4853 = vmatpush1.bf16.msra.mxu0 0
      %4854 = vmatprep.subr.bf16.mxu0 0
      %4855 = vmatpush1.bf16.msra.mxu0 0
      %4856 = vmatprep.subr.bf16.mxu0 0
      %4857 = vmatpush1.bf16.msra.mxu0 0
      %4858 = vmatprep.subr.bf16.mxu0 0
      %4859 = vmatpush1.bf16.msra.mxu0 0
      %4860 = vmatprep.subr.bf16.mxu0 0
      %4861 = vmatpush1.bf16.msra.mxu0 0
      %4862 = vmatprep.subr.bf16.mxu0 0
      %4863 = vmatpush1.bf16.msra.mxu0 0
      %4864 = vmatprep.subr.bf16.mxu0 0
      %4865 = vmatpush1.bf16.msra.mxu0 0
      %4866 = vmatprep.subr.bf16.mxu0 0
      %4867 = vmatpush1.bf16.msra.mxu0 0
      %4868 = vmatprep.mubr.bf16.mxu0 0
      %4869 = vmatmul.mubr.bf16.gmra.mrb[0].mxu0 %v4834
      %v4870 = vpop.f32.mrb[0].mxu0
      %v4871 = vadd.f32 0.0, %v4870
      %v4872 = vpop.f32.mrb[0].mxu0
      %v4873 = vpop.f32.mrb[0].mxu0
      %v4874 = vadd.f32 0.0, %v4873
      %v4875 = vpop.f32.mrb[0].mxu0
      %4876 = vdwg.mxu0
      %v4877 = vpack.c.bf16 %v4874, %v4871
      %v4882 = vunpack.c.l.b16 %v347
      %v4883 = vunpack.c.l.b16 %v348
      %v4884 = vunpack.c.l.b16 %v349
      %v4885 = vunpack.c.l.b16 %v350
      %v4886 = vpack.c.b16 %v4883, %v4882
      %v4887 = vpack.c.b16 %v4885, %v4884
      %v4891 = vsel %vm504, %v4877, 0
      %4893 = vmatprep.subr.bf16.mxu0 0
      %4894 = vmatpush1.bf16.msra.mxu0 %v4886
      %4895 = vmatprep.subr.bf16.mxu0 0
      %4896 = vmatpush1.bf16.msra.mxu0 %v4887
      %4897 = vmatprep.subr.bf16.mxu0 0
      %4898 = vmatpush1.bf16.msra.mxu0 0
      %4899 = vmatprep.subr.bf16.mxu0 0
      %4900 = vmatpush1.bf16.msra.mxu0 0
      %4901 = vmatprep.subr.bf16.mxu0 0
      %4902 = vmatpush1.bf16.msra.mxu0 0
      %4903 = vmatprep.subr.bf16.mxu0 0
      %4904 = vmatpush1.bf16.msra.mxu0 0
      %4905 = vmatprep.subr.bf16.mxu0 0
      %4906 = vmatpush1.bf16.msra.mxu0 0
      %4907 = vmatprep.subr.bf16.mxu0 0
      %4908 = vmatpush1.bf16.msra.mxu0 0
      %4909 = vmatprep.subr.bf16.mxu0 0
      %4910 = vmatpush1.bf16.msra.mxu0 0
      %4911 = vmatprep.subr.bf16.mxu0 0
      %4912 = vmatpush1.bf16.msra.mxu0 0
      %4913 = vmatprep.subr.bf16.mxu0 0
      %4914 = vmatpush1.bf16.msra.mxu0 0
      %4915 = vmatprep.subr.bf16.mxu0 0
      %4916 = vmatpush1.bf16.msra.mxu0 0
      %4917 = vmatprep.subr.bf16.mxu0 0
      %4918 = vmatpush1.bf16.msra.mxu0 0
      %4919 = vmatprep.subr.bf16.mxu0 0
      %4920 = vmatpush1.bf16.msra.mxu0 0
      %4921 = vmatprep.subr.bf16.mxu0 0
      %4922 = vmatpush1.bf16.msra.mxu0 0
      %4923 = vmatprep.subr.bf16.mxu0 0
      %4924 = vmatpush1.bf16.msra.mxu0 0
      %4925 = vmatprep.mubr.bf16.mxu0 0
      %4926 = vmatmul.mubr.bf16.gmra.mrb[0].mxu0 %v4891
      %v4927 = vpop.f32.mrb[0].mxu0
      %v4928 = vadd.f32 0.0, %v4927
      %v4929 = vpop.f32.mrb[0].mxu0
      %v4930 = vpop.f32.mrb[0].mxu0
      %v4931 = vadd.f32 0.0, %v4930
      %v4932 = vpop.f32.mrb[0].mxu0
      %4933 = vdwg.mxu0
      %v4934 = vadd.f32 %v4831, %v4928
      %v4935 = vadd.f32 %v4832, %v4931
      %v4936 = vmax.f32 %v4934, 0.0
      %v4937 = vmax.f32 %v4935, 0.0
      %v4938 = vpack.c.bf16 %v4937, %v4936
      %v4939 = vlaneseq
      %v4940 = vshrl.u32 %v4939, 7
      %v4941 = vsub.s32 3, %v4940
      %v4942 = vrot.slane %v405, %v4941
      %v4951 = vunpack.c.l.b16 %v351
      %v4952 = vunpack.c.l.b16 %v352
      %v4953 = vunpack.c.l.b16 %v353
      %v4954 = vunpack.c.l.b16 %v354
      %v4955 = vunpack.c.l.b16 %v355
      %v4956 = vunpack.c.l.b16 %v356
      %v4957 = vunpack.c.l.b16 %v357
      %v4958 = vunpack.c.l.b16 %v358
      %v4959 = vpack.c.b16 %v4952, %v4951
      %v4960 = vpack.c.b16 %v4954, %v4953
      %v4961 = vpack.c.b16 %v4956, %v4955
      %v4962 = vpack.c.b16 %v4958, %v4957
      %v4968 = vsel %vm1847, %v4938, 0
      %4970 = vmatprep.subr.bf16.mxu0 0
      %4971 = vmatpush1.bf16.msra.mxu0 %v4959
      %4972 = vmatprep.subr.bf16.mxu0 0
      %4973 = vmatpush1.bf16.msra.mxu0 %v4960
      %4974 = vmatprep.subr.bf16.mxu0 0
      %4975 = vmatpush1.bf16.msra.mxu0 %v4961
      %4976 = vmatprep.subr.bf16.mxu0 0
      %4977 = vmatpush1.bf16.msra.mxu0 %v4962
      %4978 = vmatprep.subr.bf16.mxu0 0
      %4979 = vmatpush1.bf16.msra.mxu0 0
      %4980 = vmatprep.subr.bf16.mxu0 0
      %4981 = vmatpush1.bf16.msra.mxu0 0
      %4982 = vmatprep.subr.bf16.mxu0 0
      %4983 = vmatpush1.bf16.msra.mxu0 0
      %4984 = vmatprep.subr.bf16.mxu0 0
      %4985 = vmatpush1.bf16.msra.mxu0 0
      %4986 = vmatprep.subr.bf16.mxu0 0
      %4987 = vmatpush1.bf16.msra.mxu0 0
      %4988 = vmatprep.subr.bf16.mxu0 0
      %4989 = vmatpush1.bf16.msra.mxu0 0
      %4990 = vmatprep.subr.bf16.mxu0 0
      %4991 = vmatpush1.bf16.msra.mxu0 0
      %4992 = vmatprep.subr.bf16.mxu0 0
      %4993 = vmatpush1.bf16.msra.mxu0 0
      %4994 = vmatprep.subr.bf16.mxu0 0
      %4995 = vmatpush1.bf16.msra.mxu0 0
      %4996 = vmatprep.subr.bf16.mxu0 0
      %4997 = vmatpush1.bf16.msra.mxu0 0
      %4998 = vmatprep.subr.bf16.mxu0 0
      %4999 = vmatpush1.bf16.msra.mxu0 0
      %5000 = vmatprep.subr.bf16.mxu0 0
      %5001 = vmatpush1.bf16.msra.mxu0 0
      %5002 = vmatprep.mubr.bf16.mxu0 0
      %5003 = vmatmul.mubr.bf16.gmra.mrb[0].mxu0 %v4968
      %v5004 = vpop.f32.mrb[0].mxu0
      %v5005 = vadd.f32 %v4942, %v5004
      %v5006 = vpop.f32.mrb[0].mxu0
      %v5007 = vpop.f32.mrb[0].mxu0
      %v5008 = vadd.f32 %v4942, %v5007
      %v5009 = vpop.f32.mrb[0].mxu0
      %5010 = vdwg.mxu0
      %v5011 = vadd.f32 %v5005, %v4001
      %v5012 = vadd.f32 %v5008, %v4002
      %v5013 = vmul.f32 %v5011, %v3461
      %v5014 = vmul.f32 %v5012, %v3463
      %v5015 = vsel %vm504, %v5013, 0.0
      %5016 = vadd.xlane.f32.xlu0 %v5015
      %v5017 = vpop.xlane.xlu0 %5016
      %v5018 = vsel %vm504, %v5014, 0.0
      %5019 = vadd.xlane.f32.xlu0 %v5018
      %v5020 = vpop.xlane.xlu0 %5019
      %v5021 = vmul.f32 %v5017, %v508
      %v5022 = vmul.f32 %v5020, %v508
      %v5023 = vsub.f32 %v5013, %v5021
      %v5024 = vsub.f32 %v5014, %v5022
      %v5025 = vmul.f32 %v5023, %v5023
      %v5026 = vmul.f32 %v5024, %v5024
      %v5027 = vsel %vm504, %v5025, 0.0
      %5028 = vadd.xlane.f32.xlu0 %v5027
      %v5029 = vpop.xlane.xlu0 %5028
      %v5030 = vsel %vm504, %v5026, 0.0
      %5031 = vadd.xlane.f32.xlu0 %v5030
      %v5032 = vpop.xlane.xlu0 %5031
      %v5033 = vmul.f32 %v5029, %v508
      %v5034 = vmul.f32 %v5032, %v508
      %v5035 = vadd.f32 %v5033, 1e-05
      %v5036 = vadd.f32 %v5034, 1e-05
      %v5037 = vrsqrt.pop %v5035
      %v5038 = vrsqrt.pop %v5036
      %v5039 = vmul.f32 %v5023, %v5037
      %v5040 = vmul.f32 %v5024, %v5038
      %v5041 = vlaneseq
      %v5042 = vshrl.u32 %v5041, 7
      %v5043 = vsub.s32 4, %v5042
      %v5044 = vrot.slane %v406, %v5043
      %v5045 = vmul.f32 %v5039, %v5044
      %v5046 = vmul.f32 %v5040, %v5044
      %v5047 = vlaneseq
      %v5048 = vshrl.u32 %v5047, 7
      %v5049 = vsub.s32 5, %v5048
      %v5050 = vrot.slane %v406, %v5049
      %v5051 = vadd.f32 %v5045, %v5050
      %v5052 = vadd.f32 %v5046, %v5050
      %v5053 = vpack.c.bf16 %v5052, %v5051
      %v5054 = vlaneseq
      %v5055 = vshrl.u32 %v5054, 7
      %v5056 = vsub.s32 0, %v5055
      %v5057 = vrot.slane %v406, %v5056
      %v5062 = vunpack.c.l.b16 %v215
      %v5063 = vunpack.c.l.b16 %v216
      %v5064 = vunpack.c.l.b16 %v217
      %v5065 = vunpack.c.l.b16 %v218
      %v5066 = vpack.c.b16 %v5063, %v5062
      %v5067 = vpack.c.b16 %v5065, %v5064
      %v5071 = vsel %vm504, %v5053, 0
      %5073 = vmatprep.subr.bf16.mxu0 0
      %5074 = vmatpush1.bf16.msra.mxu0 %v5066
      %5075 = vmatprep.subr.bf16.mxu0 0
      %5076 = vmatpush1.bf16.msra.mxu0 %v5067
      %5077 = vmatprep.subr.bf16.mxu0 0
      %5078 = vmatpush1.bf16.msra.mxu0 0
      %5079 = vmatprep.subr.bf16.mxu0 0
      %5080 = vmatpush1.bf16.msra.mxu0 0
      %5081 = vmatprep.subr.bf16.mxu0 0
      %5082 = vmatpush1.bf16.msra.mxu0 0
      %5083 = vmatprep.subr.bf16.mxu0 0
      %5084 = vmatpush1.bf16.msra.mxu0 0
      %5085 = vmatprep.subr.bf16.mxu0 0
      %5086 = vmatpush1.bf16.msra.mxu0 0
      %5087 = vmatprep.subr.bf16.mxu0 0
      %5088 = vmatpush1.bf16.msra.mxu0 0
      %5089 = vmatprep.subr.bf16.mxu0 0
      %5090 = vmatpush1.bf16.msra.mxu0 0
      %5091 = vmatprep.subr.bf16.mxu0 0
      %5092 = vmatpush1.bf16.msra.mxu0 0
      %5093 = vmatprep.subr.bf16.mxu0 0
      %5094 = vmatpush1.bf16.msra.mxu0 0
      %5095 = vmatprep.subr.bf16.mxu0 0
      %5096 = vmatpush1.bf16.msra.mxu0 0
      %5097 = vmatprep.subr.bf16.mxu0 0
      %5098 = vmatpush1.bf16.msra.mxu0 0
      %5099 = vmatprep.subr.bf16.mxu0 0
      %5100 = vmatpush1.bf16.msra.mxu0 0
      %5101 = vmatprep.subr.bf16.mxu0 0
      %5102 = vmatpush1.bf16.msra.mxu0 0
      %5103 = vmatprep.subr.bf16.mxu0 0
      %5104 = vmatpush1.bf16.msra.mxu0 0
      %5105 = vmatprep.mubr.bf16.mxu0 0
      %5106 = vmatmul.mubr.bf16.gmra.mrb[0].mxu0 %v5071
      %v5107 = vpop.f32.mrb[0].mxu0
      %v5108 = vadd.f32 %v5057, %v5107
      %v5109 = vpop.f32.mrb[0].mxu0
      %v5110 = vpop.f32.mrb[0].mxu0
      %v5111 = vadd.f32 %v5057, %v5110
      %v5112 = vpop.f32.mrb[0].mxu0
      %5113 = vdwg.mxu0
      %v5114 = vpack.c.bf16 %v5111, %v5108
      %5116 = vrot.lane.b32.xlu0 %v5114, 96
      %v5117 = vpop.permute.xlu0 %5116
      %v5119 = vsel %vm593, %v5114, 0
      %v5122 = vsel %vm593, %v5117, 0
      %5124 = vmatprep.subr.bf16.mxu0 0
      %5125 = vmatpush1.bf16.xpose.msra.mxu0 %v5122
      %5126 = vmatprep.subr.bf16.mxu0 0
      %5127 = vmatpush1.bf16.xpose.msra.mxu0 0
      %5128 = vmatprep.subr.bf16.mxu0 0
      %5129 = vmatpush1.bf16.xpose.msra.mxu0 0
      %5130 = vmatprep.subr.bf16.mxu0 0
      %5131 = vmatpush1.bf16.xpose.msra.mxu0 0
      %5132 = vmatprep.subr.bf16.mxu0 0
      %5133 = vmatpush1.bf16.xpose.msra.mxu0 0
      %5134 = vmatprep.subr.bf16.mxu0 0
      %5135 = vmatpush1.bf16.xpose.msra.mxu0 0
      %5136 = vmatprep.subr.bf16.mxu0 0
      %5137 = vmatpush1.bf16.xpose.msra.mxu0 0
      %5138 = vmatprep.subr.bf16.mxu0 0
      %5139 = vmatpush1.bf16.xpose.msra.mxu0 0
      %5140 = vmatprep.subr.bf16.mxu0 0
      %5141 = vmatpush1.bf16.xpose.msra.mxu0 0
      %5142 = vmatprep.subr.bf16.mxu0 0
      %5143 = vmatpush1.bf16.xpose.msra.mxu0 0
      %5144 = vmatprep.subr.bf16.mxu0 0
      %5145 = vmatpush1.bf16.xpose.msra.mxu0 0
      %5146 = vmatprep.subr.bf16.mxu0 0
      %5147 = vmatpush1.bf16.xpose.msra.mxu0 0
      %5148 = vmatprep.subr.bf16.mxu0 0
      %5149 = vmatpush1.bf16.xpose.msra.mxu0 0
      %5150 = vmatprep.subr.bf16.mxu0 0
      %5151 = vmatpush1.bf16.xpose.msra.mxu0 0
      %5152 = vmatprep.subr.bf16.mxu0 0
      %5153 = vmatpush1.bf16.xpose.msra.mxu0 0
      %5154 = vmatprep.subr.bf16.mxu0 0
      %5155 = vmatpush1.bf16.xpose.msra.mxu0 0
      %5156 = vmatprep.mubr.bf16.mxu0 0
      %5157 = vmatmul.mubr.bf16.gmra.mrb[0].mxu0 %v5119
      %v5158 = vpop.f32.mrb[0].mxu0
      %v5159 = vadd.f32 0.0, %v5158
      %v5160 = vpop.f32.mrb[0].mxu0
      %v5161 = vpop.f32.mrb[0].mxu0
      %v5162 = vadd.f32 0.0, %v5161
      %v5163 = vpop.f32.mrb[0].mxu0
      %5164 = vdwg.mxu0
      %v5165 = vmul.f32 %v5159, 0.25
      %v5166 = vmul.f32 %v5162, 0.25
      %v5167 = vadd.f32 %v5165, %v3698
      %v5168 = vadd.f32 %v5166, %v3698
      %v5169 = vsel %vm593, %v5167, -inf
      %5170 = vmax.xlane.f32.xlu0 %v5169
      %v5171 = vpop.xlane.xlu0 %5170
      %v5172 = vsel %vm593, %v5168, -inf
      %5173 = vmax.xlane.f32.xlu0 %v5172
      %v5174 = vpop.xlane.xlu0 %5173
      %v5175 = vsub.f32 %v5167, %v5171
      %v5176 = vsub.f32 %v5168, %v5174
      %v5177 = vmul.f32 %v5175, 1.442695
      %v5178 = vpow.pop %v5177
      %v5179 = vmul.f32 %v5176, 1.442695
      %v5180 = vpow.pop %v5179
      %v5181 = vsel %vm593, %v5178, 0.0
      %5182 = vadd.xlane.f32.xlu0 %v5181
      %v5183 = vpop.xlane.xlu0 %5182
      %v5184 = vsel %vm593, %v5180, 0.0
      %5185 = vadd.xlane.f32.xlu0 %v5184
      %v5186 = vpop.xlane.xlu0 %5185
      %v5187 = vrcp.pop %v5183
      %v5188 = vrcp.pop %v5186
      %v5189 = vmul.f32 %v5178, %v5187
      %v5190 = vmul.f32 %v5180, %v5188
      %v5191 = vpack.c.bf16 %v5190, %v5189
      %5192 = vrot.lane.b32.xlu0 %v5114, 64
      %v5193 = vpop.permute.xlu0 %5192
      %v5196 = vsel %vm593, %v5191, 0
      %5198 = vmatprep.subr.bf16.mxu0 0
      %5199 = vmatpush1.bf16.msra.mxu0 %v5193
      %5200 = vmatprep.subr.bf16.mxu0 0
      %5201 = vmatpush1.bf16.msra.mxu0 0
      %5202 = vmatprep.subr.bf16.mxu0 0
      %5203 = vmatpush1.bf16.msra.mxu0 0
      %5204 = vmatprep.subr.bf16.mxu0 0
      %5205 = vmatpush1.bf16.msra.mxu0 0
      %5206 = vmatprep.subr.bf16.mxu0 0
      %5207 = vmatpush1.bf16.msra.mxu0 0
      %5208 = vmatprep.subr.bf16.mxu0 0
      %5209 = vmatpush1.bf16.msra.mxu0 0
      %5210 = vmatprep.subr.bf16.mxu0 0
      %5211 = vmatpush1.bf16.msra.mxu0 0
      %5212 = vmatprep.subr.bf16.mxu0 0
      %5213 = vmatpush1.bf16.msra.mxu0 0
      %5214 = vmatprep.subr.bf16.mxu0 0
      %5215 = vmatpush1.bf16.msra.mxu0 0
      %5216 = vmatprep.subr.bf16.mxu0 0
      %5217 = vmatpush1.bf16.msra.mxu0 0
      %5218 = vmatprep.subr.bf16.mxu0 0
      %5219 = vmatpush1.bf16.msra.mxu0 0
      %5220 = vmatprep.subr.bf16.mxu0 0
      %5221 = vmatpush1.bf16.msra.mxu0 0
      %5222 = vmatprep.subr.bf16.mxu0 0
      %5223 = vmatpush1.bf16.msra.mxu0 0
      %5224 = vmatprep.subr.bf16.mxu0 0
      %5225 = vmatpush1.bf16.msra.mxu0 0
      %5226 = vmatprep.subr.bf16.mxu0 0
      %5227 = vmatpush1.bf16.msra.mxu0 0
      %5228 = vmatprep.subr.bf16.mxu0 0
      %5229 = vmatpush1.bf16.msra.mxu0 0
      %5230 = vmatprep.mubr.bf16.mxu0 0
      %5231 = vmatmul.mubr.bf16.gmra.mrb[0].mxu0 %v5196
      %v5232 = vpop.f32.mrb[0].mxu0
      %v5233 = vadd.f32 0.0, %v5232
      %v5234 = vpop.f32.mrb[0].mxu0
      %v5235 = vpop.f32.mrb[0].mxu0
      %v5236 = vadd.f32 0.0, %v5235
      %v5237 = vpop.f32.mrb[0].mxu0
      %5238 = vdwg.mxu0
      %5239 = vrot.lane.b32.xlu0 %v5114, 112
      %v5240 = vpop.permute.xlu0 %5239
      %5241 = vrot.lane.b32.xlu0 %v5114, 80
      %v5242 = vpop.permute.xlu0 %5241
      %v5244 = vsel %vm593, %v5240, 0
      %v5247 = vsel %vm593, %v5242, 0
      %5249 = vmatprep.subr.bf16.mxu0 0
      %5250 = vmatpush1.bf16.xpose.msra.mxu0 %v5247
      %5251 = vmatprep.subr.bf16.mxu0 0
      %5252 = vmatpush1.bf16.xpose.msra.mxu0 0
      %5253 = vmatprep.subr.bf16.mxu0 0
      %5254 = vmatpush1.bf16.xpose.msra.mxu0 0
      %5255 = vmatprep.subr.bf16.mxu0 0
      %5256 = vmatpush1.bf16.xpose.msra.mxu0 0
      %5257 = vmatprep.subr.bf16.mxu0 0
      %5258 = vmatpush1.bf16.xpose.msra.mxu0 0
      %5259 = vmatprep.subr.bf16.mxu0 0
      %5260 = vmatpush1.bf16.xpose.msra.mxu0 0
      %5261 = vmatprep.subr.bf16.mxu0 0
      %5262 = vmatpush1.bf16.xpose.msra.mxu0 0
      %5263 = vmatprep.subr.bf16.mxu0 0
      %5264 = vmatpush1.bf16.xpose.msra.mxu0 0
      %5265 = vmatprep.subr.bf16.mxu0 0
      %5266 = vmatpush1.bf16.xpose.msra.mxu0 0
      %5267 = vmatprep.subr.bf16.mxu0 0
      %5268 = vmatpush1.bf16.xpose.msra.mxu0 0
      %5269 = vmatprep.subr.bf16.mxu0 0
      %5270 = vmatpush1.bf16.xpose.msra.mxu0 0
      %5271 = vmatprep.subr.bf16.mxu0 0
      %5272 = vmatpush1.bf16.xpose.msra.mxu0 0
      %5273 = vmatprep.subr.bf16.mxu0 0
      %5274 = vmatpush1.bf16.xpose.msra.mxu0 0
      %5275 = vmatprep.subr.bf16.mxu0 0
      %5276 = vmatpush1.bf16.xpose.msra.mxu0 0
      %5277 = vmatprep.subr.bf16.mxu0 0
      %5278 = vmatpush1.bf16.xpose.msra.mxu0 0
      %5279 = vmatprep.subr.bf16.mxu0 0
      %5280 = vmatpush1.bf16.xpose.msra.mxu0 0
      %5281 = vmatprep.mubr.bf16.mxu0 0
      %5282 = vmatmul.mubr.bf16.gmra.mrb[0].mxu0 %v5244
      %v5283 = vpop.f32.mrb[0].mxu0
      %v5284 = vadd.f32 0.0, %v5283
      %v5285 = vpop.f32.mrb[0].mxu0
      %v5286 = vpop.f32.mrb[0].mxu0
      %v5287 = vadd.f32 0.0, %v5286
      %v5288 = vpop.f32.mrb[0].mxu0
      %5289 = vdwg.mxu0
      %v5290 = vmul.f32 %v5284, 0.25
      %v5291 = vmul.f32 %v5287, 0.25
      %v5292 = vadd.f32 %v5290, %v3698
      %v5293 = vadd.f32 %v5291, %v3698
      %v5294 = vsel %vm593, %v5292, -inf
      %5295 = vmax.xlane.f32.xlu0 %v5294
      %v5296 = vpop.xlane.xlu0 %5295
      %v5297 = vsel %vm593, %v5293, -inf
      %5298 = vmax.xlane.f32.xlu0 %v5297
      %v5299 = vpop.xlane.xlu0 %5298
      %v5300 = vsub.f32 %v5292, %v5296
      %v5301 = vsub.f32 %v5293, %v5299
      %v5302 = vmul.f32 %v5300, 1.442695
      %v5303 = vpow.pop %v5302
      %v5304 = vmul.f32 %v5301, 1.442695
      %v5305 = vpow.pop %v5304
      %v5306 = vsel %vm593, %v5303, 0.0
      %5307 = vadd.xlane.f32.xlu0 %v5306
      %v5308 = vpop.xlane.xlu0 %5307
      %v5309 = vsel %vm593, %v5305, 0.0
      %5310 = vadd.xlane.f32.xlu0 %v5309
      %v5311 = vpop.xlane.xlu0 %5310
      %v5312 = vrcp.pop %v5308
      %v5313 = vrcp.pop %v5311
      %v5314 = vmul.f32 %v5303, %v5312
      %v5315 = vmul.f32 %v5305, %v5313
      %v5316 = vpack.c.bf16 %v5315, %v5314
      %5317 = vrot.lane.b32.xlu0 %v5114, 48
      %v5318 = vpop.permute.xlu0 %5317
      %v5321 = vsel %vm593, %v5316, 0
      %5323 = vmatprep.subr.bf16.mxu0 0
      %5324 = vmatpush1.bf16.msra.mxu0 %v5318
      %5325 = vmatprep.subr.bf16.mxu0 0
      %5326 = vmatpush1.bf16.msra.mxu0 0
      %5327 = vmatprep.subr.bf16.mxu0 0
      %5328 = vmatpush1.bf16.msra.mxu0 0
      %5329 = vmatprep.subr.bf16.mxu0 0
      %5330 = vmatpush1.bf16.msra.mxu0 0
      %5331 = vmatprep.subr.bf16.mxu0 0
      %5332 = vmatpush1.bf16.msra.mxu0 0
      %5333 = vmatprep.subr.bf16.mxu0 0
      %5334 = vmatpush1.bf16.msra.mxu0 0
      %5335 = vmatprep.subr.bf16.mxu0 0
      %5336 = vmatpush1.bf16.msra.mxu0 0
      %5337 = vmatprep.subr.bf16.mxu0 0
      %5338 = vmatpush1.bf16.msra.mxu0 0
      %5339 = vmatprep.subr.bf16.mxu0 0
      %5340 = vmatpush1.bf16.msra.mxu0 0
      %5341 = vmatprep.subr.bf16.mxu0 0
      %5342 = vmatpush1.bf16.msra.mxu0 0
      %5343 = vmatprep.subr.bf16.mxu0 0
      %5344 = vmatpush1.bf16.msra.mxu0 0
      %5345 = vmatprep.subr.bf16.mxu0 0
      %5346 = vmatpush1.bf16.msra.mxu0 0
      %5347 = vmatprep.subr.bf16.mxu0 0
      %5348 = vmatpush1.bf16.msra.mxu0 0
      %5349 = vmatprep.subr.bf16.mxu0 0
      %5350 = vmatpush1.bf16.msra.mxu0 0
      %5351 = vmatprep.subr.bf16.mxu0 0
      %5352 = vmatpush1.bf16.msra.mxu0 0
      %5353 = vmatprep.subr.bf16.mxu0 0
      %5354 = vmatpush1.bf16.msra.mxu0 0
      %5355 = vmatprep.mubr.bf16.mxu0 0
      %5356 = vmatmul.mubr.bf16.gmra.mrb[0].mxu0 %v5321
      %v5357 = vpop.f32.mrb[0].mxu0
      %v5358 = vadd.f32 0.0, %v5357
      %v5359 = vpop.f32.mrb[0].mxu0
      %v5360 = vpop.f32.mrb[0].mxu0
      %v5361 = vadd.f32 0.0, %v5360
      %v5362 = vpop.f32.mrb[0].mxu0
      %5363 = vdwg.mxu0
      %5366 = vrot.lane.b32.xlu0 %v5358, 16
      %v5367 = vpop.permute.xlu0 %5366
      %5368 = vrot.lane.b32.xlu0 %v5361, 16
      %v5369 = vpop.permute.xlu0 %5368
      %v5372 = vsel %vm593, %v5233, %v5367
      %v5373 = vsel %vm593, %v5236, %v5369
      %v5374 = vpack.c.bf16 %v5373, %v5372
      %v5375 = vlaneseq
      %v5376 = vshrl.u32 %v5375, 7
      %v5377 = vsub.s32 1, %v5376
      %v5378 = vrot.slane %v406, %v5377
      %5379 = vrot.lane.b32.xlu0 %v5066, 32
      %v5380 = vpop.permute.xlu0 %5379
      %5381 = vrot.lane.b32.xlu0 %v5067, 32
      %v5382 = vpop.permute.xlu0 %5381
      %v5386 = vsel %vm504, %v5374, 0
      %5388 = vmatprep.subr.bf16.mxu0 0
      %5389 = vmatpush1.bf16.msra.mxu0 %v5380
      %5390 = vmatprep.subr.bf16.mxu0 0
      %5391 = vmatpush1.bf16.msra.mxu0 %v5382
      %5392 = vmatprep.subr.bf16.mxu0 0
      %5393 = vmatpush1.bf16.msra.mxu0 0
      %5394 = vmatprep.subr.bf16.mxu0 0
      %5395 = vmatpush1.bf16.msra.mxu0 0
      %5396 = vmatprep.subr.bf16.mxu0 0
      %5397 = vmatpush1.bf16.msra.mxu0 0
      %5398 = vmatprep.subr.bf16.mxu0 0
      %5399 = vmatpush1.bf16.msra.mxu0 0
      %5400 = vmatprep.subr.bf16.mxu0 0
      %5401 = vmatpush1.bf16.msra.mxu0 0
      %5402 = vmatprep.subr.bf16.mxu0 0
      %5403 = vmatpush1.bf16.msra.mxu0 0
      %5404 = vmatprep.subr.bf16.mxu0 0
      %5405 = vmatpush1.bf16.msra.mxu0 0
      %5406 = vmatprep.subr.bf16.mxu0 0
      %5407 = vmatpush1.bf16.msra.mxu0 0
      %5408 = vmatprep.subr.bf16.mxu0 0
      %5409 = vmatpush1.bf16.msra.mxu0 0
      %5410 = vmatprep.subr.bf16.mxu0 0
      %5411 = vmatpush1.bf16.msra.mxu0 0
      %5412 = vmatprep.subr.bf16.mxu0 0
      %5413 = vmatpush1.bf16.msra.mxu0 0
      %5414 = vmatprep.subr.bf16.mxu0 0
      %5415 = vmatpush1.bf16.msra.mxu0 0
      %5416 = vmatprep.subr.bf16.mxu0 0
      %5417 = vmatpush1.bf16.msra.mxu0 0
      %5418 = vmatprep.subr.bf16.mxu0 0
      %5419 = vmatpush1.bf16.msra.mxu0 0
      %5420 = vmatprep.mubr.bf16.mxu0 0
      %5421 = vmatmul.mubr.bf16.gmra.mrb[0].mxu0 %v5386
      %v5422 = vpop.f32.mrb[0].mxu0
      %v5423 = vadd.f32 %v5378, %v5422
      %v5424 = vpop.f32.mrb[0].mxu0
      %v5425 = vpop.f32.mrb[0].mxu0
      %v5426 = vadd.f32 %v5378, %v5425
      %v5427 = vpop.f32.mrb[0].mxu0
      %5428 = vdwg.mxu0
      %v5429 = vadd.f32 %v5423, %v5051
      %v5430 = vadd.f32 %v5426, %v5052
      %v5431 = vsel %vm504, %v5429, 0.0
      %5432 = vadd.xlane.f32.xlu0 %v5431
      %v5433 = vpop.xlane.xlu0 %5432
      %v5434 = vsel %vm504, %v5430, 0.0
      %5435 = vadd.xlane.f32.xlu0 %v5434
      %v5436 = vpop.xlane.xlu0 %5435
      %v5437 = vmul.f32 %v5433, %v508
      %v5438 = vmul.f32 %v5436, %v508
      %v5439 = vsub.f32 %v5429, %v5437
      %v5440 = vsub.f32 %v5430, %v5438
      %v5441 = vmul.f32 %v5439, %v5439
      %v5442 = vmul.f32 %v5440, %v5440
      %v5443 = vsel %vm504, %v5441, 0.0
      %5444 = vadd.xlane.f32.xlu0 %v5443
      %v5445 = vpop.xlane.xlu0 %5444
      %v5446 = vsel %vm504, %v5442, 0.0
      %5447 = vadd.xlane.f32.xlu0 %v5446
      %v5448 = vpop.xlane.xlu0 %5447
      %v5449 = vmul.f32 %v5445, %v508
      %v5450 = vmul.f32 %v5448, %v508
      %v5451 = vadd.f32 %v5449, 1e-05
      %v5452 = vadd.f32 %v5450, 1e-05
      %v5453 = vrsqrt.pop %v5451
      %v5454 = vrsqrt.pop %v5452
      %v5455 = vmul.f32 %v5439, %v5453
      %v5456 = vmul.f32 %v5440, %v5454
      %v5457 = vlaneseq
      %v5458 = vshrl.u32 %v5457, 7
      %v5459 = vsub.s32 6, %v5458
      %v5460 = vrot.slane %v406, %v5459
      %v5461 = vmul.f32 %v5455, %v5460
      %v5462 = vmul.f32 %v5456, %v5460
      %v5463 = vlaneseq
      %v5464 = vshrl.u32 %v5463, 7
      %v5465 = vsub.s32 7, %v5464
      %v5466 = vrot.slane %v406, %v5465
      %v5467 = vadd.f32 %v5461, %v5466
      %v5468 = vadd.f32 %v5462, %v5466
      %v5469 = vmul.f32 %v5467, %v3461
      %v5470 = vmul.f32 %v5468, %v3463
      %v5471 = vpack.c.bf16 %v5470, %v5469
      %v5472 = vlaneseq
      %v5473 = vshrl.u32 %v5472, 7
      %v5474 = vsub.s32 2, %v5473
      %v5475 = vrot.slane %v406, %v5474
      %v5476 = vadd.f32 %v5475, 0.0
      %5477 = vmatprep.subr.bf16.mxu0 0
      %5478 = vmatpush1.bf16.msra.mxu0 %v5471
      %5479 = vmatprep.subr.bf16.mxu0 0
      %5480 = vmatpush1.bf16.msra.mxu0 0
      %5481 = vmatprep.subr.bf16.mxu0 0
      %5482 = vmatpush1.bf16.msra.mxu0 0
      %5483 = vmatprep.subr.bf16.mxu0 0
      %5484 = vmatpush1.bf16.msra.mxu0 0
      %5485 = vmatprep.subr.bf16.mxu0 0
      %5486 = vmatpush1.bf16.msra.mxu0 0
      %5487 = vmatprep.subr.bf16.mxu0 0
      %5488 = vmatpush1.bf16.msra.mxu0 0
      %5489 = vmatprep.subr.bf16.mxu0 0
      %5490 = vmatpush1.bf16.msra.mxu0 0
      %5491 = vmatprep.subr.bf16.mxu0 0
      %5492 = vmatpush1.bf16.msra.mxu0 0
      %5493 = vmatprep.subr.bf16.mxu0 0
      %5494 = vmatpush1.bf16.msra.mxu0 0
      %5495 = vmatprep.subr.bf16.mxu0 0
      %5496 = vmatpush1.bf16.msra.mxu0 0
      %5497 = vmatprep.subr.bf16.mxu0 0
      %5498 = vmatpush1.bf16.msra.mxu0 0
      %5499 = vmatprep.subr.bf16.mxu0 0
      %5500 = vmatpush1.bf16.msra.mxu0 0
      %5501 = vmatprep.subr.bf16.mxu0 0
      %5502 = vmatpush1.bf16.msra.mxu0 0
      %5503 = vmatprep.subr.bf16.mxu0 0
      %5504 = vmatpush1.bf16.msra.mxu0 0
      %5505 = vmatprep.subr.bf16.mxu0 0
      %5506 = vmatpush1.bf16.msra.mxu0 0
      %5507 = vmatprep.subr.bf16.mxu0 0
      %5508 = vmatpush1.bf16.msra.mxu0 0
      %5509 = vmatprep.mubr.bf16.mxu0 0
      %5510 = vmatmul.mubr.bf16.gmra.mrb[0].mxu0 %v4010
      %v5511 = vpop.f32.mrb[0].mxu0
      %v5512 = vadd.f32 0.0, %v5511
      %v5513 = vpop.f32.mrb[0].mxu0
      %v5514 = vpop.f32.mrb[0].mxu0
      %v5515 = vadd.f32 0.0, %v5514
      %v5516 = vpop.f32.mrb[0].mxu0
      %5517 = vdwg.mxu0
      %v5518 = vpack.c.bf16 %v5515, %v5512
      %v5523 = vunpack.c.l.b16 %v359
      %v5524 = vunpack.c.l.b16 %v360
      %v5525 = vunpack.c.l.b16 %v361
      %v5526 = vunpack.c.l.b16 %v362
      %v5527 = vpack.c.b16 %v5524, %v5523
      %v5528 = vpack.c.b16 %v5526, %v5525
      %v5532 = vsel %vm504, %v5518, 0
      %5534 = vmatprep.subr.bf16.mxu0 0
      %5535 = vmatpush1.bf16.msra.mxu0 %v5527
      %5536 = vmatprep.subr.bf16.mxu0 0
      %5537 = vmatpush1.bf16.msra.mxu0 %v5528
      %5538 = vmatprep.subr.bf16.mxu0 0
      %5539 = vmatpush1.bf16.msra.mxu0 0
      %5540 = vmatprep.subr.bf16.mxu0 0
      %5541 = vmatpush1.bf16.msra.mxu0 0
      %5542 = vmatprep.subr.bf16.mxu0 0
      %5543 = vmatpush1.bf16.msra.mxu0 0
      %5544 = vmatprep.subr.bf16.mxu0 0
      %5545 = vmatpush1.bf16.msra.mxu0 0
      %5546 = vmatprep.subr.bf16.mxu0 0
      %5547 = vmatpush1.bf16.msra.mxu0 0
      %5548 = vmatprep.subr.bf16.mxu0 0
      %5549 = vmatpush1.bf16.msra.mxu0 0
      %5550 = vmatprep.subr.bf16.mxu0 0
      %5551 = vmatpush1.bf16.msra.mxu0 0
      %5552 = vmatprep.subr.bf16.mxu0 0
      %5553 = vmatpush1.bf16.msra.mxu0 0
      %5554 = vmatprep.subr.bf16.mxu0 0
      %5555 = vmatpush1.bf16.msra.mxu0 0
      %5556 = vmatprep.subr.bf16.mxu0 0
      %5557 = vmatpush1.bf16.msra.mxu0 0
      %5558 = vmatprep.subr.bf16.mxu0 0
      %5559 = vmatpush1.bf16.msra.mxu0 0
      %5560 = vmatprep.subr.bf16.mxu0 0
      %5561 = vmatpush1.bf16.msra.mxu0 0
      %5562 = vmatprep.subr.bf16.mxu0 0
      %5563 = vmatpush1.bf16.msra.mxu0 0
      %5564 = vmatprep.subr.bf16.mxu0 0
      %5565 = vmatpush1.bf16.msra.mxu0 0
      %5566 = vmatprep.mubr.bf16.mxu0 0
      %5567 = vmatmul.mubr.bf16.gmra.mrb[0].mxu0 %v5532
      %v5568 = vpop.f32.mrb[0].mxu0
      %v5569 = vadd.f32 0.0, %v5568
      %v5570 = vpop.f32.mrb[0].mxu0
      %v5571 = vpop.f32.mrb[0].mxu0
      %v5572 = vadd.f32 0.0, %v5571
      %v5573 = vpop.f32.mrb[0].mxu0
      %5574 = vdwg.mxu0
      %v5575 = vadd.f32 %v5476, %v5569
      %v5576 = vadd.f32 %v5476, %v5572
      %5577 = vmatprep.subr.bf16.mxu0 0
      %5578 = vmatpush1.bf16.msra.mxu0 %v5471
      %5579 = vmatprep.subr.bf16.mxu0 0
      %5580 = vmatpush1.bf16.msra.mxu0 0
      %5581 = vmatprep.subr.bf16.mxu0 0
      %5582 = vmatpush1.bf16.msra.mxu0 0
      %5583 = vmatprep.subr.bf16.mxu0 0
      %5584 = vmatpush1.bf16.msra.mxu0 0
      %5585 = vmatprep.subr.bf16.mxu0 0
      %5586 = vmatpush1.bf16.msra.mxu0 0
      %5587 = vmatprep.subr.bf16.mxu0 0
      %5588 = vmatpush1.bf16.msra.mxu0 0
      %5589 = vmatprep.subr.bf16.mxu0 0
      %5590 = vmatpush1.bf16.msra.mxu0 0
      %5591 = vmatprep.subr.bf16.mxu0 0
      %5592 = vmatpush1.bf16.msra.mxu0 0
      %5593 = vmatprep.subr.bf16.mxu0 0
      %5594 = vmatpush1.bf16.msra.mxu0 0
      %5595 = vmatprep.subr.bf16.mxu0 0
      %5596 = vmatpush1.bf16.msra.mxu0 0
      %5597 = vmatprep.subr.bf16.mxu0 0
      %5598 = vmatpush1.bf16.msra.mxu0 0
      %5599 = vmatprep.subr.bf16.mxu0 0
      %5600 = vmatpush1.bf16.msra.mxu0 0
      %5601 = vmatprep.subr.bf16.mxu0 0
      %5602 = vmatpush1.bf16.msra.mxu0 0
      %5603 = vmatprep.subr.bf16.mxu0 0
      %5604 = vmatpush1.bf16.msra.mxu0 0
      %5605 = vmatprep.subr.bf16.mxu0 0
      %5606 = vmatpush1.bf16.msra.mxu0 0
      %5607 = vmatprep.subr.bf16.mxu0 0
      %5608 = vmatpush1.bf16.msra.mxu0 0
      %5609 = vmatprep.mubr.bf16.mxu0 0
      %5610 = vmatmul.mubr.bf16.gmra.mrb[0].mxu0 %v4113
      %v5611 = vpop.f32.mrb[0].mxu0
      %v5612 = vadd.f32 0.0, %v5611
      %v5613 = vpop.f32.mrb[0].mxu0
      %v5614 = vpop.f32.mrb[0].mxu0
      %v5615 = vadd.f32 0.0, %v5614
      %v5616 = vpop.f32.mrb[0].mxu0
      %5617 = vdwg.mxu0
      %v5618 = vpack.c.bf16 %v5615, %v5612
      %v5623 = vunpack.c.l.b16 %v363
      %v5624 = vunpack.c.l.b16 %v364
      %v5625 = vunpack.c.l.b16 %v365
      %v5626 = vunpack.c.l.b16 %v366
      %v5627 = vpack.c.b16 %v5624, %v5623
      %v5628 = vpack.c.b16 %v5626, %v5625
      %v5632 = vsel %vm504, %v5618, 0
      %5634 = vmatprep.subr.bf16.mxu0 0
      %5635 = vmatpush1.bf16.msra.mxu0 %v5627
      %5636 = vmatprep.subr.bf16.mxu0 0
      %5637 = vmatpush1.bf16.msra.mxu0 %v5628
      %5638 = vmatprep.subr.bf16.mxu0 0
      %5639 = vmatpush1.bf16.msra.mxu0 0
      %5640 = vmatprep.subr.bf16.mxu0 0
      %5641 = vmatpush1.bf16.msra.mxu0 0
      %5642 = vmatprep.subr.bf16.mxu0 0
      %5643 = vmatpush1.bf16.msra.mxu0 0
      %5644 = vmatprep.subr.bf16.mxu0 0
      %5645 = vmatpush1.bf16.msra.mxu0 0
      %5646 = vmatprep.subr.bf16.mxu0 0
      %5647 = vmatpush1.bf16.msra.mxu0 0
      %5648 = vmatprep.subr.bf16.mxu0 0
      %5649 = vmatpush1.bf16.msra.mxu0 0
      %5650 = vmatprep.subr.bf16.mxu0 0
      %5651 = vmatpush1.bf16.msra.mxu0 0
      %5652 = vmatprep.subr.bf16.mxu0 0
      %5653 = vmatpush1.bf16.msra.mxu0 0
      %5654 = vmatprep.subr.bf16.mxu0 0
      %5655 = vmatpush1.bf16.msra.mxu0 0
      %5656 = vmatprep.subr.bf16.mxu0 0
      %5657 = vmatpush1.bf16.msra.mxu0 0
      %5658 = vmatprep.subr.bf16.mxu0 0
      %5659 = vmatpush1.bf16.msra.mxu0 0
      %5660 = vmatprep.subr.bf16.mxu0 0
      %5661 = vmatpush1.bf16.msra.mxu0 0
      %5662 = vmatprep.subr.bf16.mxu0 0
      %5663 = vmatpush1.bf16.msra.mxu0 0
      %5664 = vmatprep.subr.bf16.mxu0 0
      %5665 = vmatpush1.bf16.msra.mxu0 0
      %5666 = vmatprep.mubr.bf16.mxu0 0
      %5667 = vmatmul.mubr.bf16.gmra.mrb[0].mxu0 %v5632
      %v5668 = vpop.f32.mrb[0].mxu0
      %v5669 = vadd.f32 0.0, %v5668
      %v5670 = vpop.f32.mrb[0].mxu0
      %v5671 = vpop.f32.mrb[0].mxu0
      %v5672 = vadd.f32 0.0, %v5671
      %v5673 = vpop.f32.mrb[0].mxu0
      %5674 = vdwg.mxu0
      %v5675 = vadd.f32 %v5575, %v5669
      %v5676 = vadd.f32 %v5576, %v5672
      %5677 = vmatprep.subr.bf16.mxu0 0
      %5678 = vmatpush1.bf16.msra.mxu0 %v5471
      %5679 = vmatprep.subr.bf16.mxu0 0
      %5680 = vmatpush1.bf16.msra.mxu0 0
      %5681 = vmatprep.subr.bf16.mxu0 0
      %5682 = vmatpush1.bf16.msra.mxu0 0
      %5683 = vmatprep.subr.bf16.mxu0 0
      %5684 = vmatpush1.bf16.msra.mxu0 0
      %5685 = vmatprep.subr.bf16.mxu0 0
      %5686 = vmatpush1.bf16.msra.mxu0 0
      %5687 = vmatprep.subr.bf16.mxu0 0
      %5688 = vmatpush1.bf16.msra.mxu0 0
      %5689 = vmatprep.subr.bf16.mxu0 0
      %5690 = vmatpush1.bf16.msra.mxu0 0
      %5691 = vmatprep.subr.bf16.mxu0 0
      %5692 = vmatpush1.bf16.msra.mxu0 0
      %5693 = vmatprep.subr.bf16.mxu0 0
      %5694 = vmatpush1.bf16.msra.mxu0 0
      %5695 = vmatprep.subr.bf16.mxu0 0
      %5696 = vmatpush1.bf16.msra.mxu0 0
      %5697 = vmatprep.subr.bf16.mxu0 0
      %5698 = vmatpush1.bf16.msra.mxu0 0
      %5699 = vmatprep.subr.bf16.mxu0 0
      %5700 = vmatpush1.bf16.msra.mxu0 0
      %5701 = vmatprep.subr.bf16.mxu0 0
      %5702 = vmatpush1.bf16.msra.mxu0 0
      %5703 = vmatprep.subr.bf16.mxu0 0
      %5704 = vmatpush1.bf16.msra.mxu0 0
      %5705 = vmatprep.subr.bf16.mxu0 0
      %5706 = vmatpush1.bf16.msra.mxu0 0
      %5707 = vmatprep.subr.bf16.mxu0 0
      %5708 = vmatpush1.bf16.msra.mxu0 0
      %5709 = vmatprep.mubr.bf16.mxu0 0
      %5710 = vmatmul.mubr.bf16.gmra.mrb[0].mxu0 %v4216
      %v5711 = vpop.f32.mrb[0].mxu0
      %v5712 = vadd.f32 0.0, %v5711
      %v5713 = vpop.f32.mrb[0].mxu0
      %v5714 = vpop.f32.mrb[0].mxu0
      %v5715 = vadd.f32 0.0, %v5714
      %v5716 = vpop.f32.mrb[0].mxu0
      %5717 = vdwg.mxu0
      %v5718 = vpack.c.bf16 %v5715, %v5712
      %v5723 = vunpack.c.l.b16 %v367
      %v5724 = vunpack.c.l.b16 %v368
      %v5725 = vunpack.c.l.b16 %v369
      %v5726 = vunpack.c.l.b16 %v370
      %v5727 = vpack.c.b16 %v5724, %v5723
      %v5728 = vpack.c.b16 %v5726, %v5725
      %v5732 = vsel %vm504, %v5718, 0
      %5734 = vmatprep.subr.bf16.mxu0 0
      %5735 = vmatpush1.bf16.msra.mxu0 %v5727
      %5736 = vmatprep.subr.bf16.mxu0 0
      %5737 = vmatpush1.bf16.msra.mxu0 %v5728
      %5738 = vmatprep.subr.bf16.mxu0 0
      %5739 = vmatpush1.bf16.msra.mxu0 0
      %5740 = vmatprep.subr.bf16.mxu0 0
      %5741 = vmatpush1.bf16.msra.mxu0 0
      %5742 = vmatprep.subr.bf16.mxu0 0
      %5743 = vmatpush1.bf16.msra.mxu0 0
      %5744 = vmatprep.subr.bf16.mxu0 0
      %5745 = vmatpush1.bf16.msra.mxu0 0
      %5746 = vmatprep.subr.bf16.mxu0 0
      %5747 = vmatpush1.bf16.msra.mxu0 0
      %5748 = vmatprep.subr.bf16.mxu0 0
      %5749 = vmatpush1.bf16.msra.mxu0 0
      %5750 = vmatprep.subr.bf16.mxu0 0
      %5751 = vmatpush1.bf16.msra.mxu0 0
      %5752 = vmatprep.subr.bf16.mxu0 0
      %5753 = vmatpush1.bf16.msra.mxu0 0
      %5754 = vmatprep.subr.bf16.mxu0 0
      %5755 = vmatpush1.bf16.msra.mxu0 0
      %5756 = vmatprep.subr.bf16.mxu0 0
      %5757 = vmatpush1.bf16.msra.mxu0 0
      %5758 = vmatprep.subr.bf16.mxu0 0
      %5759 = vmatpush1.bf16.msra.mxu0 0
      %5760 = vmatprep.subr.bf16.mxu0 0
      %5761 = vmatpush1.bf16.msra.mxu0 0
      %5762 = vmatprep.subr.bf16.mxu0 0
      %5763 = vmatpush1.bf16.msra.mxu0 0
      %5764 = vmatprep.subr.bf16.mxu0 0
      %5765 = vmatpush1.bf16.msra.mxu0 0
      %5766 = vmatprep.mubr.bf16.mxu0 0
      %5767 = vmatmul.mubr.bf16.gmra.mrb[0].mxu0 %v5732
      %v5768 = vpop.f32.mrb[0].mxu0
      %v5769 = vadd.f32 0.0, %v5768
      %v5770 = vpop.f32.mrb[0].mxu0
      %v5771 = vpop.f32.mrb[0].mxu0
      %v5772 = vadd.f32 0.0, %v5771
      %v5773 = vpop.f32.mrb[0].mxu0
      %5774 = vdwg.mxu0
      %v5775 = vadd.f32 %v5675, %v5769
      %v5776 = vadd.f32 %v5676, %v5772
      %5777 = vmatprep.subr.bf16.mxu0 0
      %5778 = vmatpush1.bf16.msra.mxu0 %v5471
      %5779 = vmatprep.subr.bf16.mxu0 0
      %5780 = vmatpush1.bf16.msra.mxu0 0
      %5781 = vmatprep.subr.bf16.mxu0 0
      %5782 = vmatpush1.bf16.msra.mxu0 0
      %5783 = vmatprep.subr.bf16.mxu0 0
      %5784 = vmatpush1.bf16.msra.mxu0 0
      %5785 = vmatprep.subr.bf16.mxu0 0
      %5786 = vmatpush1.bf16.msra.mxu0 0
      %5787 = vmatprep.subr.bf16.mxu0 0
      %5788 = vmatpush1.bf16.msra.mxu0 0
      %5789 = vmatprep.subr.bf16.mxu0 0
      %5790 = vmatpush1.bf16.msra.mxu0 0
      %5791 = vmatprep.subr.bf16.mxu0 0
      %5792 = vmatpush1.bf16.msra.mxu0 0
      %5793 = vmatprep.subr.bf16.mxu0 0
      %5794 = vmatpush1.bf16.msra.mxu0 0
      %5795 = vmatprep.subr.bf16.mxu0 0
      %5796 = vmatpush1.bf16.msra.mxu0 0
      %5797 = vmatprep.subr.bf16.mxu0 0
      %5798 = vmatpush1.bf16.msra.mxu0 0
      %5799 = vmatprep.subr.bf16.mxu0 0
      %5800 = vmatpush1.bf16.msra.mxu0 0
      %5801 = vmatprep.subr.bf16.mxu0 0
      %5802 = vmatpush1.bf16.msra.mxu0 0
      %5803 = vmatprep.subr.bf16.mxu0 0
      %5804 = vmatpush1.bf16.msra.mxu0 0
      %5805 = vmatprep.subr.bf16.mxu0 0
      %5806 = vmatpush1.bf16.msra.mxu0 0
      %5807 = vmatprep.subr.bf16.mxu0 0
      %5808 = vmatpush1.bf16.msra.mxu0 0
      %5809 = vmatprep.mubr.bf16.mxu0 0
      %5810 = vmatmul.mubr.bf16.gmra.mrb[0].mxu0 %v4319
      %v5811 = vpop.f32.mrb[0].mxu0
      %v5812 = vadd.f32 0.0, %v5811
      %v5813 = vpop.f32.mrb[0].mxu0
      %v5814 = vpop.f32.mrb[0].mxu0
      %v5815 = vadd.f32 0.0, %v5814
      %v5816 = vpop.f32.mrb[0].mxu0
      %5817 = vdwg.mxu0
      %v5818 = vpack.c.bf16 %v5815, %v5812
      %v5823 = vunpack.c.l.b16 %v371
      %v5824 = vunpack.c.l.b16 %v372
      %v5825 = vunpack.c.l.b16 %v373
      %v5826 = vunpack.c.l.b16 %v374
      %v5827 = vpack.c.b16 %v5824, %v5823
      %v5828 = vpack.c.b16 %v5826, %v5825
      %v5832 = vsel %vm504, %v5818, 0
      %5834 = vmatprep.subr.bf16.mxu0 0
      %5835 = vmatpush1.bf16.msra.mxu0 %v5827
      %5836 = vmatprep.subr.bf16.mxu0 0
      %5837 = vmatpush1.bf16.msra.mxu0 %v5828
      %5838 = vmatprep.subr.bf16.mxu0 0
      %5839 = vmatpush1.bf16.msra.mxu0 0
      %5840 = vmatprep.subr.bf16.mxu0 0
      %5841 = vmatpush1.bf16.msra.mxu0 0
      %5842 = vmatprep.subr.bf16.mxu0 0
      %5843 = vmatpush1.bf16.msra.mxu0 0
      %5844 = vmatprep.subr.bf16.mxu0 0
      %5845 = vmatpush1.bf16.msra.mxu0 0
      %5846 = vmatprep.subr.bf16.mxu0 0
      %5847 = vmatpush1.bf16.msra.mxu0 0
      %5848 = vmatprep.subr.bf16.mxu0 0
      %5849 = vmatpush1.bf16.msra.mxu0 0
      %5850 = vmatprep.subr.bf16.mxu0 0
      %5851 = vmatpush1.bf16.msra.mxu0 0
      %5852 = vmatprep.subr.bf16.mxu0 0
      %5853 = vmatpush1.bf16.msra.mxu0 0
      %5854 = vmatprep.subr.bf16.mxu0 0
      %5855 = vmatpush1.bf16.msra.mxu0 0
      %5856 = vmatprep.subr.bf16.mxu0 0
      %5857 = vmatpush1.bf16.msra.mxu0 0
      %5858 = vmatprep.subr.bf16.mxu0 0
      %5859 = vmatpush1.bf16.msra.mxu0 0
      %5860 = vmatprep.subr.bf16.mxu0 0
      %5861 = vmatpush1.bf16.msra.mxu0 0
      %5862 = vmatprep.subr.bf16.mxu0 0
      %5863 = vmatpush1.bf16.msra.mxu0 0
      %5864 = vmatprep.subr.bf16.mxu0 0
      %5865 = vmatpush1.bf16.msra.mxu0 0
      %5866 = vmatprep.mubr.bf16.mxu0 0
      %5867 = vmatmul.mubr.bf16.gmra.mrb[0].mxu0 %v5832
      %v5868 = vpop.f32.mrb[0].mxu0
      %v5869 = vadd.f32 0.0, %v5868
      %v5870 = vpop.f32.mrb[0].mxu0
      %v5871 = vpop.f32.mrb[0].mxu0
      %v5872 = vadd.f32 0.0, %v5871
      %v5873 = vpop.f32.mrb[0].mxu0
      %5874 = vdwg.mxu0
      %v5875 = vadd.f32 %v5775, %v5869
      %v5876 = vadd.f32 %v5776, %v5872
      %5877 = vmatprep.subr.bf16.mxu0 0
      %5878 = vmatpush1.bf16.msra.mxu0 %v5471
      %5879 = vmatprep.subr.bf16.mxu0 0
      %5880 = vmatpush1.bf16.msra.mxu0 0
      %5881 = vmatprep.subr.bf16.mxu0 0
      %5882 = vmatpush1.bf16.msra.mxu0 0
      %5883 = vmatprep.subr.bf16.mxu0 0
      %5884 = vmatpush1.bf16.msra.mxu0 0
      %5885 = vmatprep.subr.bf16.mxu0 0
      %5886 = vmatpush1.bf16.msra.mxu0 0
      %5887 = vmatprep.subr.bf16.mxu0 0
      %5888 = vmatpush1.bf16.msra.mxu0 0
      %5889 = vmatprep.subr.bf16.mxu0 0
      %5890 = vmatpush1.bf16.msra.mxu0 0
      %5891 = vmatprep.subr.bf16.mxu0 0
      %5892 = vmatpush1.bf16.msra.mxu0 0
      %5893 = vmatprep.subr.bf16.mxu0 0
      %5894 = vmatpush1.bf16.msra.mxu0 0
      %5895 = vmatprep.subr.bf16.mxu0 0
      %5896 = vmatpush1.bf16.msra.mxu0 0
      %5897 = vmatprep.subr.bf16.mxu0 0
      %5898 = vmatpush1.bf16.msra.mxu0 0
      %5899 = vmatprep.subr.bf16.mxu0 0
      %5900 = vmatpush1.bf16.msra.mxu0 0
      %5901 = vmatprep.subr.bf16.mxu0 0
      %5902 = vmatpush1.bf16.msra.mxu0 0
      %5903 = vmatprep.subr.bf16.mxu0 0
      %5904 = vmatpush1.bf16.msra.mxu0 0
      %5905 = vmatprep.subr.bf16.mxu0 0
      %5906 = vmatpush1.bf16.msra.mxu0 0
      %5907 = vmatprep.subr.bf16.mxu0 0
      %5908 = vmatpush1.bf16.msra.mxu0 0
      %5909 = vmatprep.mubr.bf16.mxu0 0
      %5910 = vmatmul.mubr.bf16.gmra.mrb[0].mxu0 %v4422
      %v5911 = vpop.f32.mrb[0].mxu0
      %v5912 = vadd.f32 0.0, %v5911
      %v5913 = vpop.f32.mrb[0].mxu0
      %v5914 = vpop.f32.mrb[0].mxu0
      %v5915 = vadd.f32 0.0, %v5914
      %v5916 = vpop.f32.mrb[0].mxu0
      %5917 = vdwg.mxu0
      %v5918 = vpack.c.bf16 %v5915, %v5912
      %v5923 = vunpack.c.l.b16 %v375
      %v5924 = vunpack.c.l.b16 %v376
      %v5925 = vunpack.c.l.b16 %v377
      %v5926 = vunpack.c.l.b16 %v378
      %v5927 = vpack.c.b16 %v5924, %v5923
      %v5928 = vpack.c.b16 %v5926, %v5925
      %v5932 = vsel %vm504, %v5918, 0
      %5934 = vmatprep.subr.bf16.mxu0 0
      %5935 = vmatpush1.bf16.msra.mxu0 %v5927
      %5936 = vmatprep.subr.bf16.mxu0 0
      %5937 = vmatpush1.bf16.msra.mxu0 %v5928
      %5938 = vmatprep.subr.bf16.mxu0 0
      %5939 = vmatpush1.bf16.msra.mxu0 0
      %5940 = vmatprep.subr.bf16.mxu0 0
      %5941 = vmatpush1.bf16.msra.mxu0 0
      %5942 = vmatprep.subr.bf16.mxu0 0
      %5943 = vmatpush1.bf16.msra.mxu0 0
      %5944 = vmatprep.subr.bf16.mxu0 0
      %5945 = vmatpush1.bf16.msra.mxu0 0
      %5946 = vmatprep.subr.bf16.mxu0 0
      %5947 = vmatpush1.bf16.msra.mxu0 0
      %5948 = vmatprep.subr.bf16.mxu0 0
      %5949 = vmatpush1.bf16.msra.mxu0 0
      %5950 = vmatprep.subr.bf16.mxu0 0
      %5951 = vmatpush1.bf16.msra.mxu0 0
      %5952 = vmatprep.subr.bf16.mxu0 0
      %5953 = vmatpush1.bf16.msra.mxu0 0
      %5954 = vmatprep.subr.bf16.mxu0 0
      %5955 = vmatpush1.bf16.msra.mxu0 0
      %5956 = vmatprep.subr.bf16.mxu0 0
      %5957 = vmatpush1.bf16.msra.mxu0 0
      %5958 = vmatprep.subr.bf16.mxu0 0
      %5959 = vmatpush1.bf16.msra.mxu0 0
      %5960 = vmatprep.subr.bf16.mxu0 0
      %5961 = vmatpush1.bf16.msra.mxu0 0
      %5962 = vmatprep.subr.bf16.mxu0 0
      %5963 = vmatpush1.bf16.msra.mxu0 0
      %5964 = vmatprep.subr.bf16.mxu0 0
      %5965 = vmatpush1.bf16.msra.mxu0 0
      %5966 = vmatprep.mubr.bf16.mxu0 0
      %5967 = vmatmul.mubr.bf16.gmra.mrb[0].mxu0 %v5932
      %v5968 = vpop.f32.mrb[0].mxu0
      %v5969 = vadd.f32 0.0, %v5968
      %v5970 = vpop.f32.mrb[0].mxu0
      %v5971 = vpop.f32.mrb[0].mxu0
      %v5972 = vadd.f32 0.0, %v5971
      %v5973 = vpop.f32.mrb[0].mxu0
      %5974 = vdwg.mxu0
      %v5975 = vadd.f32 %v5875, %v5969
      %v5976 = vadd.f32 %v5876, %v5972
      %5977 = vmatprep.subr.bf16.mxu0 0
      %5978 = vmatpush1.bf16.msra.mxu0 %v5471
      %5979 = vmatprep.subr.bf16.mxu0 0
      %5980 = vmatpush1.bf16.msra.mxu0 0
      %5981 = vmatprep.subr.bf16.mxu0 0
      %5982 = vmatpush1.bf16.msra.mxu0 0
      %5983 = vmatprep.subr.bf16.mxu0 0
      %5984 = vmatpush1.bf16.msra.mxu0 0
      %5985 = vmatprep.subr.bf16.mxu0 0
      %5986 = vmatpush1.bf16.msra.mxu0 0
      %5987 = vmatprep.subr.bf16.mxu0 0
      %5988 = vmatpush1.bf16.msra.mxu0 0
      %5989 = vmatprep.subr.bf16.mxu0 0
      %5990 = vmatpush1.bf16.msra.mxu0 0
      %5991 = vmatprep.subr.bf16.mxu0 0
      %5992 = vmatpush1.bf16.msra.mxu0 0
      %5993 = vmatprep.subr.bf16.mxu0 0
      %5994 = vmatpush1.bf16.msra.mxu0 0
      %5995 = vmatprep.subr.bf16.mxu0 0
      %5996 = vmatpush1.bf16.msra.mxu0 0
      %5997 = vmatprep.subr.bf16.mxu0 0
      %5998 = vmatpush1.bf16.msra.mxu0 0
      %5999 = vmatprep.subr.bf16.mxu0 0
      %6000 = vmatpush1.bf16.msra.mxu0 0
      %6001 = vmatprep.subr.bf16.mxu0 0
      %6002 = vmatpush1.bf16.msra.mxu0 0
      %6003 = vmatprep.subr.bf16.mxu0 0
      %6004 = vmatpush1.bf16.msra.mxu0 0
      %6005 = vmatprep.subr.bf16.mxu0 0
      %6006 = vmatpush1.bf16.msra.mxu0 0
      %6007 = vmatprep.subr.bf16.mxu0 0
      %6008 = vmatpush1.bf16.msra.mxu0 0
      %6009 = vmatprep.mubr.bf16.mxu0 0
      %6010 = vmatmul.mubr.bf16.gmra.mrb[0].mxu0 %v4525
      %v6011 = vpop.f32.mrb[0].mxu0
      %v6012 = vadd.f32 0.0, %v6011
      %v6013 = vpop.f32.mrb[0].mxu0
      %v6014 = vpop.f32.mrb[0].mxu0
      %v6015 = vadd.f32 0.0, %v6014
      %v6016 = vpop.f32.mrb[0].mxu0
      %6017 = vdwg.mxu0
      %v6018 = vpack.c.bf16 %v6015, %v6012
      %v6023 = vunpack.c.l.b16 %v379
      %v6024 = vunpack.c.l.b16 %v380
      %v6025 = vunpack.c.l.b16 %v381
      %v6026 = vunpack.c.l.b16 %v382
      %v6027 = vpack.c.b16 %v6024, %v6023
      %v6028 = vpack.c.b16 %v6026, %v6025
      %v6032 = vsel %vm504, %v6018, 0
      %6034 = vmatprep.subr.bf16.mxu0 0
      %6035 = vmatpush1.bf16.msra.mxu0 %v6027
      %6036 = vmatprep.subr.bf16.mxu0 0
      %6037 = vmatpush1.bf16.msra.mxu0 %v6028
      %6038 = vmatprep.subr.bf16.mxu0 0
      %6039 = vmatpush1.bf16.msra.mxu0 0
      %6040 = vmatprep.subr.bf16.mxu0 0
      %6041 = vmatpush1.bf16.msra.mxu0 0
      %6042 = vmatprep.subr.bf16.mxu0 0
      %6043 = vmatpush1.bf16.msra.mxu0 0
      %6044 = vmatprep.subr.bf16.mxu0 0
      %6045 = vmatpush1.bf16.msra.mxu0 0
      %6046 = vmatprep.subr.bf16.mxu0 0
      %6047 = vmatpush1.bf16.msra.mxu0 0
      %6048 = vmatprep.subr.bf16.mxu0 0
      %6049 = vmatpush1.bf16.msra.mxu0 0
      %6050 = vmatprep.subr.bf16.mxu0 0
      %6051 = vmatpush1.bf16.msra.mxu0 0
      %6052 = vmatprep.subr.bf16.mxu0 0
      %6053 = vmatpush1.bf16.msra.mxu0 0
      %6054 = vmatprep.subr.bf16.mxu0 0
      %6055 = vmatpush1.bf16.msra.mxu0 0
      %6056 = vmatprep.subr.bf16.mxu0 0
      %6057 = vmatpush1.bf16.msra.mxu0 0
      %6058 = vmatprep.subr.bf16.mxu0 0
      %6059 = vmatpush1.bf16.msra.mxu0 0
      %6060 = vmatprep.subr.bf16.mxu0 0
      %6061 = vmatpush1.bf16.msra.mxu0 0
      %6062 = vmatprep.subr.bf16.mxu0 0
      %6063 = vmatpush1.bf16.msra.mxu0 0
      %6064 = vmatprep.subr.bf16.mxu0 0
      %6065 = vmatpush1.bf16.msra.mxu0 0
      %6066 = vmatprep.mubr.bf16.mxu0 0
      %6067 = vmatmul.mubr.bf16.gmra.mrb[0].mxu0 %v6032
      %v6068 = vpop.f32.mrb[0].mxu0
      %v6069 = vadd.f32 0.0, %v6068
      %v6070 = vpop.f32.mrb[0].mxu0
      %v6071 = vpop.f32.mrb[0].mxu0
      %v6072 = vadd.f32 0.0, %v6071
      %v6073 = vpop.f32.mrb[0].mxu0
      %6074 = vdwg.mxu0
      %v6075 = vadd.f32 %v5975, %v6069
      %v6076 = vadd.f32 %v5976, %v6072
      %6077 = vmatprep.subr.bf16.mxu0 0
      %6078 = vmatpush1.bf16.msra.mxu0 %v5471
      %6079 = vmatprep.subr.bf16.mxu0 0
      %6080 = vmatpush1.bf16.msra.mxu0 0
      %6081 = vmatprep.subr.bf16.mxu0 0
      %6082 = vmatpush1.bf16.msra.mxu0 0
      %6083 = vmatprep.subr.bf16.mxu0 0
      %6084 = vmatpush1.bf16.msra.mxu0 0
      %6085 = vmatprep.subr.bf16.mxu0 0
      %6086 = vmatpush1.bf16.msra.mxu0 0
      %6087 = vmatprep.subr.bf16.mxu0 0
      %6088 = vmatpush1.bf16.msra.mxu0 0
      %6089 = vmatprep.subr.bf16.mxu0 0
      %6090 = vmatpush1.bf16.msra.mxu0 0
      %6091 = vmatprep.subr.bf16.mxu0 0
      %6092 = vmatpush1.bf16.msra.mxu0 0
      %6093 = vmatprep.subr.bf16.mxu0 0
      %6094 = vmatpush1.bf16.msra.mxu0 0
      %6095 = vmatprep.subr.bf16.mxu0 0
      %6096 = vmatpush1.bf16.msra.mxu0 0
      %6097 = vmatprep.subr.bf16.mxu0 0
      %6098 = vmatpush1.bf16.msra.mxu0 0
      %6099 = vmatprep.subr.bf16.mxu0 0
      %6100 = vmatpush1.bf16.msra.mxu0 0
      %6101 = vmatprep.subr.bf16.mxu0 0
      %6102 = vmatpush1.bf16.msra.mxu0 0
      %6103 = vmatprep.subr.bf16.mxu0 0
      %6104 = vmatpush1.bf16.msra.mxu0 0
      %6105 = vmatprep.subr.bf16.mxu0 0
      %6106 = vmatpush1.bf16.msra.mxu0 0
      %6107 = vmatprep.subr.bf16.mxu0 0
      %6108 = vmatpush1.bf16.msra.mxu0 0
      %6109 = vmatprep.mubr.bf16.mxu0 0
      %6110 = vmatmul.mubr.bf16.gmra.mrb[0].mxu0 %v4628
      %v6111 = vpop.f32.mrb[0].mxu0
      %v6112 = vadd.f32 0.0, %v6111
      %v6113 = vpop.f32.mrb[0].mxu0
      %v6114 = vpop.f32.mrb[0].mxu0
      %v6115 = vadd.f32 0.0, %v6114
      %v6116 = vpop.f32.mrb[0].mxu0
      %6117 = vdwg.mxu0
      %v6118 = vpack.c.bf16 %v6115, %v6112
      %v6123 = vunpack.c.l.b16 %v383
      %v6124 = vunpack.c.l.b16 %v384
      %v6125 = vunpack.c.l.b16 %v385
      %v6126 = vunpack.c.l.b16 %v386
      %v6127 = vpack.c.b16 %v6124, %v6123
      %v6128 = vpack.c.b16 %v6126, %v6125
      %v6132 = vsel %vm504, %v6118, 0
      %6134 = vmatprep.subr.bf16.mxu0 0
      %6135 = vmatpush1.bf16.msra.mxu0 %v6127
      %6136 = vmatprep.subr.bf16.mxu0 0
      %6137 = vmatpush1.bf16.msra.mxu0 %v6128
      %6138 = vmatprep.subr.bf16.mxu0 0
      %6139 = vmatpush1.bf16.msra.mxu0 0
      %6140 = vmatprep.subr.bf16.mxu0 0
      %6141 = vmatpush1.bf16.msra.mxu0 0
      %6142 = vmatprep.subr.bf16.mxu0 0
      %6143 = vmatpush1.bf16.msra.mxu0 0
      %6144 = vmatprep.subr.bf16.mxu0 0
      %6145 = vmatpush1.bf16.msra.mxu0 0
      %6146 = vmatprep.subr.bf16.mxu0 0
      %6147 = vmatpush1.bf16.msra.mxu0 0
      %6148 = vmatprep.subr.bf16.mxu0 0
      %6149 = vmatpush1.bf16.msra.mxu0 0
      %6150 = vmatprep.subr.bf16.mxu0 0
      %6151 = vmatpush1.bf16.msra.mxu0 0
      %6152 = vmatprep.subr.bf16.mxu0 0
      %6153 = vmatpush1.bf16.msra.mxu0 0
      %6154 = vmatprep.subr.bf16.mxu0 0
      %6155 = vmatpush1.bf16.msra.mxu0 0
      %6156 = vmatprep.subr.bf16.mxu0 0
      %6157 = vmatpush1.bf16.msra.mxu0 0
      %6158 = vmatprep.subr.bf16.mxu0 0
      %6159 = vmatpush1.bf16.msra.mxu0 0
      %6160 = vmatprep.subr.bf16.mxu0 0
      %6161 = vmatpush1.bf16.msra.mxu0 0
      %6162 = vmatprep.subr.bf16.mxu0 0
      %6163 = vmatpush1.bf16.msra.mxu0 0
      %6164 = vmatprep.subr.bf16.mxu0 0
      %6165 = vmatpush1.bf16.msra.mxu0 0
      %6166 = vmatprep.mubr.bf16.mxu0 0
      %6167 = vmatmul.mubr.bf16.gmra.mrb[0].mxu0 %v6132
      %v6168 = vpop.f32.mrb[0].mxu0
      %v6169 = vadd.f32 0.0, %v6168
      %v6170 = vpop.f32.mrb[0].mxu0
      %v6171 = vpop.f32.mrb[0].mxu0
      %v6172 = vadd.f32 0.0, %v6171
      %v6173 = vpop.f32.mrb[0].mxu0
      %6174 = vdwg.mxu0
      %v6175 = vadd.f32 %v6075, %v6169
      %v6176 = vadd.f32 %v6076, %v6172
      %6177 = vmatprep.subr.bf16.mxu0 0
      %6178 = vmatpush1.bf16.msra.mxu0 %v5471
      %6179 = vmatprep.subr.bf16.mxu0 0
      %6180 = vmatpush1.bf16.msra.mxu0 0
      %6181 = vmatprep.subr.bf16.mxu0 0
      %6182 = vmatpush1.bf16.msra.mxu0 0
      %6183 = vmatprep.subr.bf16.mxu0 0
      %6184 = vmatpush1.bf16.msra.mxu0 0
      %6185 = vmatprep.subr.bf16.mxu0 0
      %6186 = vmatpush1.bf16.msra.mxu0 0
      %6187 = vmatprep.subr.bf16.mxu0 0
      %6188 = vmatpush1.bf16.msra.mxu0 0
      %6189 = vmatprep.subr.bf16.mxu0 0
      %6190 = vmatpush1.bf16.msra.mxu0 0
      %6191 = vmatprep.subr.bf16.mxu0 0
      %6192 = vmatpush1.bf16.msra.mxu0 0
      %6193 = vmatprep.subr.bf16.mxu0 0
      %6194 = vmatpush1.bf16.msra.mxu0 0
      %6195 = vmatprep.subr.bf16.mxu0 0
      %6196 = vmatpush1.bf16.msra.mxu0 0
      %6197 = vmatprep.subr.bf16.mxu0 0
      %6198 = vmatpush1.bf16.msra.mxu0 0
      %6199 = vmatprep.subr.bf16.mxu0 0
      %6200 = vmatpush1.bf16.msra.mxu0 0
      %6201 = vmatprep.subr.bf16.mxu0 0
      %6202 = vmatpush1.bf16.msra.mxu0 0
      %6203 = vmatprep.subr.bf16.mxu0 0
      %6204 = vmatpush1.bf16.msra.mxu0 0
      %6205 = vmatprep.subr.bf16.mxu0 0
      %6206 = vmatpush1.bf16.msra.mxu0 0
      %6207 = vmatprep.subr.bf16.mxu0 0
      %6208 = vmatpush1.bf16.msra.mxu0 0
      %6209 = vmatprep.mubr.bf16.mxu0 0
      %6210 = vmatmul.mubr.bf16.gmra.mrb[0].mxu0 %v4731
      %v6211 = vpop.f32.mrb[0].mxu0
      %v6212 = vadd.f32 0.0, %v6211
      %v6213 = vpop.f32.mrb[0].mxu0
      %v6214 = vpop.f32.mrb[0].mxu0
      %v6215 = vadd.f32 0.0, %v6214
      %v6216 = vpop.f32.mrb[0].mxu0
      %6217 = vdwg.mxu0
      %v6218 = vpack.c.bf16 %v6215, %v6212
      %v6223 = vunpack.c.l.b16 %v387
      %v6224 = vunpack.c.l.b16 %v388
      %v6225 = vunpack.c.l.b16 %v389
      %v6226 = vunpack.c.l.b16 %v390
      %v6227 = vpack.c.b16 %v6224, %v6223
      %v6228 = vpack.c.b16 %v6226, %v6225
      %v6232 = vsel %vm504, %v6218, 0
      %6234 = vmatprep.subr.bf16.mxu0 0
      %6235 = vmatpush1.bf16.msra.mxu0 %v6227
      %6236 = vmatprep.subr.bf16.mxu0 0
      %6237 = vmatpush1.bf16.msra.mxu0 %v6228
      %6238 = vmatprep.subr.bf16.mxu0 0
      %6239 = vmatpush1.bf16.msra.mxu0 0
      %6240 = vmatprep.subr.bf16.mxu0 0
      %6241 = vmatpush1.bf16.msra.mxu0 0
      %6242 = vmatprep.subr.bf16.mxu0 0
      %6243 = vmatpush1.bf16.msra.mxu0 0
      %6244 = vmatprep.subr.bf16.mxu0 0
      %6245 = vmatpush1.bf16.msra.mxu0 0
      %6246 = vmatprep.subr.bf16.mxu0 0
      %6247 = vmatpush1.bf16.msra.mxu0 0
      %6248 = vmatprep.subr.bf16.mxu0 0
      %6249 = vmatpush1.bf16.msra.mxu0 0
      %6250 = vmatprep.subr.bf16.mxu0 0
      %6251 = vmatpush1.bf16.msra.mxu0 0
      %6252 = vmatprep.subr.bf16.mxu0 0
      %6253 = vmatpush1.bf16.msra.mxu0 0
      %6254 = vmatprep.subr.bf16.mxu0 0
      %6255 = vmatpush1.bf16.msra.mxu0 0
      %6256 = vmatprep.subr.bf16.mxu0 0
      %6257 = vmatpush1.bf16.msra.mxu0 0
      %6258 = vmatprep.subr.bf16.mxu0 0
      %6259 = vmatpush1.bf16.msra.mxu0 0
      %6260 = vmatprep.subr.bf16.mxu0 0
      %6261 = vmatpush1.bf16.msra.mxu0 0
      %6262 = vmatprep.subr.bf16.mxu0 0
      %6263 = vmatpush1.bf16.msra.mxu0 0
      %6264 = vmatprep.subr.bf16.mxu0 0
      %6265 = vmatpush1.bf16.msra.mxu0 0
      %6266 = vmatprep.mubr.bf16.mxu0 0
      %6267 = vmatmul.mubr.bf16.gmra.mrb[0].mxu0 %v6232
      %v6268 = vpop.f32.mrb[0].mxu0
      %v6269 = vadd.f32 0.0, %v6268
      %v6270 = vpop.f32.mrb[0].mxu0
      %v6271 = vpop.f32.mrb[0].mxu0
      %v6272 = vadd.f32 0.0, %v6271
      %v6273 = vpop.f32.mrb[0].mxu0
      %6274 = vdwg.mxu0
      %v6275 = vadd.f32 %v6175, %v6269
      %v6276 = vadd.f32 %v6176, %v6272
      %6277 = vmatprep.subr.bf16.mxu0 0
      %6278 = vmatpush1.bf16.msra.mxu0 %v5471
      %6279 = vmatprep.subr.bf16.mxu0 0
      %6280 = vmatpush1.bf16.msra.mxu0 0
      %6281 = vmatprep.subr.bf16.mxu0 0
      %6282 = vmatpush1.bf16.msra.mxu0 0
      %6283 = vmatprep.subr.bf16.mxu0 0
      %6284 = vmatpush1.bf16.msra.mxu0 0
      %6285 = vmatprep.subr.bf16.mxu0 0
      %6286 = vmatpush1.bf16.msra.mxu0 0
      %6287 = vmatprep.subr.bf16.mxu0 0
      %6288 = vmatpush1.bf16.msra.mxu0 0
      %6289 = vmatprep.subr.bf16.mxu0 0
      %6290 = vmatpush1.bf16.msra.mxu0 0
      %6291 = vmatprep.subr.bf16.mxu0 0
      %6292 = vmatpush1.bf16.msra.mxu0 0
      %6293 = vmatprep.subr.bf16.mxu0 0
      %6294 = vmatpush1.bf16.msra.mxu0 0
      %6295 = vmatprep.subr.bf16.mxu0 0
      %6296 = vmatpush1.bf16.msra.mxu0 0
      %6297 = vmatprep.subr.bf16.mxu0 0
      %6298 = vmatpush1.bf16.msra.mxu0 0
      %6299 = vmatprep.subr.bf16.mxu0 0
      %6300 = vmatpush1.bf16.msra.mxu0 0
      %6301 = vmatprep.subr.bf16.mxu0 0
      %6302 = vmatpush1.bf16.msra.mxu0 0
      %6303 = vmatprep.subr.bf16.mxu0 0
      %6304 = vmatpush1.bf16.msra.mxu0 0
      %6305 = vmatprep.subr.bf16.mxu0 0
      %6306 = vmatpush1.bf16.msra.mxu0 0
      %6307 = vmatprep.subr.bf16.mxu0 0
      %6308 = vmatpush1.bf16.msra.mxu0 0
      %6309 = vmatprep.mubr.bf16.mxu0 0
      %6310 = vmatmul.mubr.bf16.gmra.mrb[0].mxu0 %v4834
      %v6311 = vpop.f32.mrb[0].mxu0
      %v6312 = vadd.f32 0.0, %v6311
      %v6313 = vpop.f32.mrb[0].mxu0
      %v6314 = vpop.f32.mrb[0].mxu0
      %v6315 = vadd.f32 0.0, %v6314
      %v6316 = vpop.f32.mrb[0].mxu0
      %6317 = vdwg.mxu0
      %v6318 = vpack.c.bf16 %v6315, %v6312
      %v6323 = vunpack.c.l.b16 %v391
      %v6324 = vunpack.c.l.b16 %v392
      %v6325 = vunpack.c.l.b16 %v393
      %v6326 = vunpack.c.l.b16 %v394
      %v6327 = vpack.c.b16 %v6324, %v6323
      %v6328 = vpack.c.b16 %v6326, %v6325
      %v6332 = vsel %vm504, %v6318, 0
      %6334 = vmatprep.subr.bf16.mxu0 0
      %6335 = vmatpush1.bf16.msra.mxu0 %v6327
      %6336 = vmatprep.subr.bf16.mxu0 0
      %6337 = vmatpush1.bf16.msra.mxu0 %v6328
      %6338 = vmatprep.subr.bf16.mxu0 0
      %6339 = vmatpush1.bf16.msra.mxu0 0
      %6340 = vmatprep.subr.bf16.mxu0 0
      %6341 = vmatpush1.bf16.msra.mxu0 0
      %6342 = vmatprep.subr.bf16.mxu0 0
      %6343 = vmatpush1.bf16.msra.mxu0 0
      %6344 = vmatprep.subr.bf16.mxu0 0
      %6345 = vmatpush1.bf16.msra.mxu0 0
      %6346 = vmatprep.subr.bf16.mxu0 0
      %6347 = vmatpush1.bf16.msra.mxu0 0
      %6348 = vmatprep.subr.bf16.mxu0 0
      %6349 = vmatpush1.bf16.msra.mxu0 0
      %6350 = vmatprep.subr.bf16.mxu0 0
      %6351 = vmatpush1.bf16.msra.mxu0 0
      %6352 = vmatprep.subr.bf16.mxu0 0
      %6353 = vmatpush1.bf16.msra.mxu0 0
      %6354 = vmatprep.subr.bf16.mxu0 0
      %6355 = vmatpush1.bf16.msra.mxu0 0
      %6356 = vmatprep.subr.bf16.mxu0 0
      %6357 = vmatpush1.bf16.msra.mxu0 0
      %6358 = vmatprep.subr.bf16.mxu0 0
      %6359 = vmatpush1.bf16.msra.mxu0 0
      %6360 = vmatprep.subr.bf16.mxu0 0
      %6361 = vmatpush1.bf16.msra.mxu0 0
      %6362 = vmatprep.subr.bf16.mxu0 0
      %6363 = vmatpush1.bf16.msra.mxu0 0
      %6364 = vmatprep.subr.bf16.mxu0 0
      %6365 = vmatpush1.bf16.msra.mxu0 0
      %6366 = vmatprep.mubr.bf16.mxu0 0
      %6367 = vmatmul.mubr.bf16.gmra.mrb[0].mxu0 %v6332
      %v6368 = vpop.f32.mrb[0].mxu0
      %v6369 = vadd.f32 0.0, %v6368
      %v6370 = vpop.f32.mrb[0].mxu0
      %v6371 = vpop.f32.mrb[0].mxu0
      %v6372 = vadd.f32 0.0, %v6371
      %v6373 = vpop.f32.mrb[0].mxu0
      %6374 = vdwg.mxu0
      %v6375 = vadd.f32 %v6275, %v6369
      %v6376 = vadd.f32 %v6276, %v6372
      %v6377 = vmax.f32 %v6375, 0.0
      %v6378 = vmax.f32 %v6376, 0.0
      %v6379 = vpack.c.bf16 %v6378, %v6377
      %v6380 = vlaneseq
      %v6381 = vshrl.u32 %v6380, 7
      %v6382 = vsub.s32 3, %v6381
      %v6383 = vrot.slane %v406, %v6382
      %v6392 = vunpack.c.l.b16 %v395
      %v6393 = vunpack.c.l.b16 %v396
      %v6394 = vunpack.c.l.b16 %v397
      %v6395 = vunpack.c.l.b16 %v398
      %v6396 = vunpack.c.l.b16 %v399
      %v6397 = vunpack.c.l.b16 %v400
      %v6398 = vunpack.c.l.b16 %v401
      %v6399 = vunpack.c.l.b16 %v402
      %v6400 = vpack.c.b16 %v6393, %v6392
      %v6401 = vpack.c.b16 %v6395, %v6394
      %v6402 = vpack.c.b16 %v6397, %v6396
      %v6403 = vpack.c.b16 %v6399, %v6398
      %v6409 = vsel %vm1847, %v6379, 0
      %6411 = vmatprep.subr.bf16.mxu0 0
      %6412 = vmatpush1.bf16.msra.mxu0 %v6400
      %6413 = vmatprep.subr.bf16.mxu0 0
      %6414 = vmatpush1.bf16.msra.mxu0 %v6401
      %6415 = vmatprep.subr.bf16.mxu0 0
      %6416 = vmatpush1.bf16.msra.mxu0 %v6402
      %6417 = vmatprep.subr.bf16.mxu0 0
      %6418 = vmatpush1.bf16.msra.mxu0 %v6403
      %6419 = vmatprep.subr.bf16.mxu0 0
      %6420 = vmatpush1.bf16.msra.mxu0 0
      %6421 = vmatprep.subr.bf16.mxu0 0
      %6422 = vmatpush1.bf16.msra.mxu0 0
      %6423 = vmatprep.subr.bf16.mxu0 0
      %6424 = vmatpush1.bf16.msra.mxu0 0
      %6425 = vmatprep.subr.bf16.mxu0 0
      %6426 = vmatpush1.bf16.msra.mxu0 0
      %6427 = vmatprep.subr.bf16.mxu0 0
      %6428 = vmatpush1.bf16.msra.mxu0 0
      %6429 = vmatprep.subr.bf16.mxu0 0
      %6430 = vmatpush1.bf16.msra.mxu0 0
      %6431 = vmatprep.subr.bf16.mxu0 0
      %6432 = vmatpush1.bf16.msra.mxu0 0
      %6433 = vmatprep.subr.bf16.mxu0 0
      %6434 = vmatpush1.bf16.msra.mxu0 0
      %6435 = vmatprep.subr.bf16.mxu0 0
      %6436 = vmatpush1.bf16.msra.mxu0 0
      %6437 = vmatprep.subr.bf16.mxu0 0
      %6438 = vmatpush1.bf16.msra.mxu0 0
      %6439 = vmatprep.subr.bf16.mxu0 0
      %6440 = vmatpush1.bf16.msra.mxu0 0
      %6441 = vmatprep.subr.bf16.mxu0 0
      %6442 = vmatpush1.bf16.msra.mxu0 0
      %6443 = vmatprep.mubr.bf16.mxu0 0
      %6444 = vmatmul.mubr.bf16.gmra.mrb[0].mxu0 %v6409
      %v6445 = vpop.f32.mrb[0].mxu0
      %v6446 = vadd.f32 %v6383, %v6445
      %v6447 = vpop.f32.mrb[0].mxu0
      %v6448 = vpop.f32.mrb[0].mxu0
      %v6449 = vadd.f32 %v6383, %v6448
      %v6450 = vpop.f32.mrb[0].mxu0
      %6451 = vdwg.mxu0
      %v6452 = vadd.f32 %v6446, %v5469
      %v6453 = vadd.f32 %v6449, %v5470
      %v6454 = vmul.f32 %v6452, %v3461
      %v6455 = vmul.f32 %v6453, %v3463
      %v6456 = vmul.f32 %v6454, %v3461
      %v6457 = vmul.f32 %v6455, %v3463
      %v6458 = vpack.c.bf16 %v6457, %v6456
      %v6459 = vlaneseq
      %v6460 = vshrl.u32 %v6459, 7
      %v6461 = vsub.s32 0, %v6460
      %v6462 = vrot.slane %v407, %v6461
      %v6467 = vunpack.c.l.b16 %v219
      %v6468 = vunpack.c.l.b16 %v220
      %v6469 = vunpack.c.l.b16 %v221
      %v6470 = vunpack.c.l.b16 %v222
      %v6471 = vpack.c.b16 %v6468, %v6467
      %v6472 = vpack.c.b16 %v6470, %v6469
      %v6476 = vsel %vm504, %v6458, 0
      %6478 = vmatprep.subr.bf16.mxu0 0
      %6479 = vmatpush1.bf16.msra.mxu0 %v6471
      %6480 = vmatprep.subr.bf16.mxu0 0
      %6481 = vmatpush1.bf16.msra.mxu0 %v6472
      %6482 = vmatprep.subr.bf16.mxu0 0
      %6483 = vmatpush1.bf16.msra.mxu0 0
      %6484 = vmatprep.subr.bf16.mxu0 0
      %6485 = vmatpush1.bf16.msra.mxu0 0
      %6486 = vmatprep.subr.bf16.mxu0 0
      %6487 = vmatpush1.bf16.msra.mxu0 0
      %6488 = vmatprep.subr.bf16.mxu0 0
      %6489 = vmatpush1.bf16.msra.mxu0 0
      %6490 = vmatprep.subr.bf16.mxu0 0
      %6491 = vmatpush1.bf16.msra.mxu0 0
      %6492 = vmatprep.subr.bf16.mxu0 0
      %6493 = vmatpush1.bf16.msra.mxu0 0
      %6494 = vmatprep.subr.bf16.mxu0 0
      %6495 = vmatpush1.bf16.msra.mxu0 0
      %6496 = vmatprep.subr.bf16.mxu0 0
      %6497 = vmatpush1.bf16.msra.mxu0 0
      %6498 = vmatprep.subr.bf16.mxu0 0
      %6499 = vmatpush1.bf16.msra.mxu0 0
      %6500 = vmatprep.subr.bf16.mxu0 0
      %6501 = vmatpush1.bf16.msra.mxu0 0
      %6502 = vmatprep.subr.bf16.mxu0 0
      %6503 = vmatpush1.bf16.msra.mxu0 0
      %6504 = vmatprep.subr.bf16.mxu0 0
      %6505 = vmatpush1.bf16.msra.mxu0 0
      %6506 = vmatprep.subr.bf16.mxu0 0
      %6507 = vmatpush1.bf16.msra.mxu0 0
      %6508 = vmatprep.subr.bf16.mxu0 0
      %6509 = vmatpush1.bf16.msra.mxu0 0
      %6510 = vmatprep.mubr.bf16.mxu0 0
      %6511 = vmatmul.mubr.bf16.gmra.mrb[0].mxu0 %v6476
      %v6512 = vpop.f32.mrb[0].mxu0
      %v6513 = vadd.f32 %v6462, %v6512
      %v6514 = vpop.f32.mrb[0].mxu0
      %v6515 = vpop.f32.mrb[0].mxu0
      %v6516 = vadd.f32 %v6462, %v6515
      %v6517 = vpop.f32.mrb[0].mxu0
      %6518 = vdwg.mxu0
      %vm6519 = vcmp.eq.s32.totalorder %v414, 125
      %6521 = vset.pattern.permute.xlu0 0
      %6522 = vperm.xlu0 %6521, %v3466
      %v6523 = vpop.permute.xlu0 %6522
      %6526 = vset.pattern.permute.xlu0 0
      %6527 = vperm.xlu0 %6526, %v3467
      %v6528 = vpop.permute.xlu0 %6527
      %v6530 = vsel %vm6519, %v6523, 0.0
      %v6531 = vsel %vm6519, %v6528, 0.0
      %v6532 = vadd.f32 %v6513, %v6530
      %v6533 = vadd.f32 %v6516, %v6531
      %vm6534 = vcmp.eq.s32.totalorder %v414, 126
      %6536 = vset.pattern.permute.xlu0 0
      %6537 = vperm.xlu0 %6536, %v3539
      %v6538 = vpop.permute.xlu0 %6537
      %6541 = vset.pattern.permute.xlu0 0
      %6542 = vperm.xlu0 %6541, %v3540
      %v6543 = vpop.permute.xlu0 %6542
      %v6545 = vsel %vm6534, %v6538, 0.0
      %v6546 = vsel %vm6534, %v6543, 0.0
      %v6547 = vadd.f32 %v6532, %v6545
      %v6548 = vadd.f32 %v6533, %v6546
      %vm6549 = vcmp.eq.s32.totalorder %v414, 127
      %6551 = vset.pattern.permute.xlu0 0
      %6552 = vperm.xlu0 %6551, %v3315
      %v6553 = vpop.permute.xlu0 %6552
      %6556 = vset.pattern.permute.xlu0 0
      %6557 = vperm.xlu0 %6556, 0.0
      %v6558 = vpop.permute.xlu0 %6557
      %v6560 = vsel %vm6549, %v6553, 0.0
      %v6561 = vsel %vm6549, %v6558, 0.0
      %v6562 = vadd.f32 %v6547, %v6560
      %v6563 = vadd.f32 %v6548, %v6561
      %6564 = vst [vmem:[%s197] sm:$0xff] %v6562
      %6565 = vst [vmem:[%s197 + $0x8] sm:$0xff] %v6563
      %p6566 = scmp.lt.s32.totalorder %s15, 1
      %s6567 = scalar_select %p6566, %s15, 1
      %s6568 = smul.addr %s6567, 2
      %s6569 = smul.addr %s6568, 8
      %s6570 = scalar_lea.vmem %s4, %s6569
      // Predicated region
      $region37: #{fastspeech_forward.1} parent=35 // pred_check
        %p6571 = pneg %p122
      $region38: #{fastspeech_forward.1} parent=35 // pred_check_branch
        %6573 = sbr.rel (%p6571) target = $region40
      $region39: #{fastspeech_forward.1} parent=35 // pred_region
        _
      $region40: #{fastspeech_forward.1} parent=35 // pred_fallthru
        _
    $region36: #{fastspeech_forward.1} parent=5 // pred_fallthru
      _
    %p6574 = scmp.le.s32.totalorder 2, %s10
    // Predicated region
    $region41: #{fastspeech_forward.1} parent=5 // pred_check
      %p6575 = pneg %p6574
    $region42: #{fastspeech_forward.1} parent=5 // pred_check_branch
      %6577 = sbr.rel (%p6575) target = $region44
    $region43: #{fastspeech_forward.1} parent=5 // pred_region
      %s6578 = ssub.s32 %s10, 2
      // Predicated region
      $region45: #{fastspeech_forward.1} parent=43 // pred_check
        %p6579 = pneg %p128
      $region46: #{fastspeech_forward.1} parent=43 // pred_check_branch
        %6581 = sbr.rel (%p6579) target = $region48
      $region47: #{fastspeech_forward.1} parent=43 // pred_region
        %p6582 = scmp.lt.s32.totalorder %s16, 1
        %s6583 = scalar_select %p6582, %s16, 1
        %s6584 = smul.addr %s6583, 2
        %s6585 = smul.addr %s6584, 8
        %s6586 = scalar_lea.vmem %s4, %s6585
      $region48: #{fastspeech_forward.1} parent=43 // pred_fallthru
        _
    $region44: #{fastspeech_forward.1} parent=5 // pred_fallthru
      _
  $region6: #{fastspeech_forward.1} parent=0 // loop_footer
    %s14 = sadd.s32 1, %s10
  $region7: #{fastspeech_forward.1} parent=0 // loop_footer_branch
    %9 = sbr.rel target = $region3
  $region8: #{fastspeech_forward.1} parent=0 // loop_exit
    _

</llo_original>
